<compile_context>
chip_gen: v7x
topology: tpu7x:2x2x1
jax: 0.10.0
libtpu: 0.0.40
codegen_flags: <defaults>
</compile_context>

<pallas_src>
import jax
import jax.numpy as jnp
import numpy as np
from jax.experimental import pallas as pl
from jax.experimental.pallas import tpu as pltpu

_VMEM_LIMIT = 32 * 1024 * 1024  # safe on v5e/v6e (128 MiB) and v7x (64 MiB physical)


# ----------------------------------------------------------------------------- kernels

def _conv_matmul_kernel(x_ref, w_ref, b_ref, o_ref):
    """im2col conv: (tm,K)bf16 @ (K,128)bf16 (f32 acc) + bias, ReLU.  Lane-dense N=128 store."""
    acc = jnp.dot(x_ref[...], w_ref[...], preferred_element_type=jnp.float32)
    o_ref[...] = jnp.maximum(acc + b_ref[...], 0.0).astype(o_ref.dtype)


def _fused_noisy_fc_kernel(x_ref, w1_ref, b1_ref, w2_ref, b2_ref, q_ref):
    """Fused NoisyLinear(fc1)+ReLU+NoisyLinear(fc2) with pre-folded noisy weights.

    Grid iterates over tn-wide tiles of fc1's output dim.  For tile j:
      h_j = relu(x @ w1_j + b1_j)          (w1 = mu + sigma*eps folded offline, bf16)
      q  += h_j @ w2_j                     (w2 likewise; partial contribution of tile j)
    q stays resident in VMEM across the (arbitrary) grid axis; fc2 bias added on last step.
    """
    j = pl.program_id(0)

    @pl.when(j == 0)
    def _():
        q_ref[...] = jnp.zeros_like(q_ref)

    h = jnp.dot(x_ref[...], w1_ref[...], preferred_element_type=jnp.float32) + b1_ref[...]
    h = jnp.maximum(h, 0.0).astype(jnp.bfloat16)
    q_ref[...] += jnp.dot(h, w2_ref[...], preferred_element_type=jnp.float32)

    @pl.when(j == pl.num_programs(0) - 1)
    def _():
        q_ref[...] = q_ref[...] + b2_ref[...]


# ----------------------------------------------------------------------------- wrappers

def conv_matmul_relu(cols, w2d, b_row):
    """cols: (M,K) bf16, w2d: (K,128) bf16, b_row: (1,128) f32 -> (M,128) bf16 (ReLU'd)."""
    M, K = cols.shape
    N = w2d.shape[1]
    # Split M into two parallel tiles when it divides cleanly (uses both TCs on v7x;
    # on single-TC v5e/v6e the extra step is ~0.35us, negligible).
    n_m = 2 if (M % 16 == 0 and M >= 512) else 1
    tm = M // n_m
    return pl.pallas_call(
        _conv_matmul_kernel,
        out_shape=jax.ShapeDtypeStruct((M, N), jnp.bfloat16),
        grid=(n_m,),
        in_specs=[
            pl.BlockSpec((tm, K), lambda i: (i, 0)),
            pl.BlockSpec((K, N), lambda i: (0, 0)),
            pl.BlockSpec((1, N), lambda i: (0, 0)),
        ],
        out_specs=pl.BlockSpec((tm, N), lambda i: (i, 0)),
        compiler_params=pltpu.CompilerParams(
            dimension_semantics=("parallel",),
            vmem_limit_bytes=_VMEM_LIMIT),
    )(cols, w2d, b_row)


def fused_noisy_fc(feats, fc):
    """feats: (M, K1) bf16 -> q: (M, A) f32.  fc1(+ReLU) and fc2 fused in one pallas_call."""
    M, K1 = feats.shape
    H = fc["w1"].shape[1]             # hidden_dim
    A = fc["w2"].shape[1]             # num_actions
    # 256-wide tiles fill the 2x256 MXU on v6e/v7x and halve grid-step overhead; on v5e the
    # compiler splits them into 128-wide MXU passes (same total work).
    if H % 256 == 0:
        tn = 256
    elif H % 128 == 0:
        tn = 128
    else:
        tn = H
    n_tiles = H // tn
    return pl.pallas_call(
        _fused_noisy_fc_kernel,
        out_shape=jax.ShapeDtypeStruct((M, A), jnp.float32),
        grid=(n_tiles,),
        in_specs=[
            pl.BlockSpec((M, K1), lambda j: (0, 0)),     # feats (bf16)
            pl.BlockSpec((K1, tn), lambda j: (0, j)),    # fc1 folded noisy weight (bf16)
            pl.BlockSpec((1, tn), lambda j: (0, j)),     # fc1 folded noisy bias tile (f32)
            pl.BlockSpec((tn, A), lambda j: (j, 0)),     # fc2 folded noisy weight (bf16)
            pl.BlockSpec((1, A), lambda j: (0, 0)),      # fc2 folded noisy bias (f32)
        ],
        out_specs=pl.BlockSpec((M, A), lambda j: (0, 0)),
        compiler_params=pltpu.CompilerParams(
            dimension_semantics=("arbitrary",),          # output accumulates across tiles
            vmem_limit_bytes=_VMEM_LIMIT),
    )(feats, fc["w1"], fc["b1"], fc["w2"], fc["b2"])


# ----------------------------------------------------------------------------- glue

def im2col(x, k, s):
    """x: NHWC -> (N*Ho*Wo, k*k*C), column order (kh, kw, C).  XLA reshape/slice glue."""
    # TODO(synk): fuse this patch extraction into the conv Pallas kernel (strided pl.ds loads
    # from the NHWC activation in pl.ANY/HBM) to avoid materializing overlapping patches.
    N, H, W, C = x.shape
    Ho = (H - k) // s + 1
    Wo = (W - k) // s + 1
    cols = []
    for i in range(k):
        for j in range(k):
            cols.append(x[:, i:i + s * (Ho - 1) + 1:s, j:j + s * (Wo - 1) + 1:s, :])
    p = jnp.stack(cols, axis=3)                      # (N, Ho, Wo, k*k, C)
    return p.reshape(N * Ho * Wo, k * k * C), (N, Ho, Wo)


def noisy_dqn_forward(kparams, x_nchw):
    x = jnp.transpose(x_nchw, (0, 2, 3, 1)).astype(jnp.bfloat16)   # NCHW -> NHWC once, bf16
    for layer in kparams["convs"]:
        cols, (n, ho, wo) = im2col(x, layer["k"], layer["s"])
        y = conv_matmul_relu(cols, layer["w2d"], layer["b_row"])   # lane-dense (rows, 128) bf16
        # Keep the 128-lane store unmasked but slice the pad channels off before the next
        # layer's im2col so K is never inflated with zero rows.
        x = y.reshape(n, ho, wo, -1)[..., :layer["out_c"]]
    # Flatten in NHWC order (fc1 weight columns were pre-permuted to match).
    feats = x.reshape(x.shape[0], -1)
    return fused_noisy_fc(feats, kparams["fc"])


# ----------------------------------------------------------------------------- params

def _scale_noise(key, size):
    x = jax.random.normal(key, (size,), dtype=jnp.float32)
    return jnp.sign(x) * jnp.sqrt(jnp.abs(x))


def init_noisy(key, in_f, out_f, std_init=0.5):
    """NoisyLinear params (torch layouts): bf16 mu/sigma, factored epsilon."""
    k1, k2, k3, k4 = jax.random.split(key, 4)
    mu_range = 1.0 / np.sqrt(in_f)
    return dict(
        wmu=jax.random.uniform(k1, (out_f, in_f), jnp.float32, -mu_range, mu_range
                               ).astype(jnp.bfloat16),
        wsig=jnp.full((out_f, in_f), std_init / np.sqrt(in_f), jnp.float32
                      ).astype(jnp.bfloat16),
        eps_in=_scale_noise(k3, in_f),
        eps_out=_scale_noise(k4, out_f),          # bias_epsilon == eps_out (torch semantics)
        bmu=jax.random.uniform(k2, (out_f,), jnp.float32, -mu_range, mu_range),
        bsig=jnp.full((out_f,), std_init / np.sqrt(out_f), jnp.float32),
    )


def init_conv(key, in_c, out_c, k):
    k1, k2 = jax.random.split(key)
    bound = 1.0 / np.sqrt(in_c * k * k)
    w = jax.random.uniform(k1, (out_c, in_c, k, k), jnp.float32, -bound, bound
                           ).astype(jnp.bfloat16)   # torch OIHW, stored bf16
    b = jax.random.uniform(k2, (out_c,), jnp.float32, -bound, bound)
    return w, b


def init_noisy_dqn(key, input_channels=4, num_actions=18, hidden_dim=512,
                   conv_layers=None, std_init=0.5, spatial=84):
    if conv_layers is None:
        conv_layers = [[32, 8, 4], [64, 4, 2], [64, 3, 1]]
    keys = jax.random.split(key, len(conv_layers) + 2)
    convs, in_c, h, w = [], input_channels, spatial, spatial
    for i, (out_c, k, s) in enumerate(conv_layers):
        wt, bt = init_conv(keys[i], in_c, out_c, k)
        convs.append(dict(w_oihw=wt, b=bt, k=k, s=s))
        in_c, h, w = out_c, (h - k) // s + 1, (w - k) // s + 1
    feature_size = in_c * h * w                      # 64*7*7 = 3136 for the defaults
    return dict(convs=convs,
                fc1=init_noisy(keys[-2], feature_size, hidden_dim, std_init),
                fc2=init_noisy(keys[-1], hidden_dim, num_actions, std_init),
                conv_out_c=in_c, conv_out_hw=(h, w), feature_size=feature_size)


def prepare_kernel_params(params, lane=128):
    """One-time packing into kernel-friendly layouts.

    Folds the factored noise into a single combined bf16 weight (and f32 bias) per NoisyLinear.
    Must be re-run after reset_noise() resamples epsilon (cheap XLA elementwise fold).
    """
    convs = []
    for layer in params["convs"]:
        w = layer["w_oihw"]                            # (O, I, k, k) bf16
        O, I, k, _ = w.shape
        o_pad = ((O + lane - 1) // lane) * lane        # lane-dense output channels
        w2d = jnp.transpose(w, (2, 3, 1, 0)).reshape(k * k * I, O)   # rows in (kh, kw, c) order
        w2d = jnp.pad(w2d, ((0, 0), (0, o_pad - O)))                       # (K, 128) bf16
        b_row = jnp.pad(layer["b"], (0, o_pad - O)).reshape(1, o_pad)      # (1, 128) f32
        convs.append(dict(w2d=w2d, b_row=b_row, k=k, s=layer["s"], out_c=O))

    # fc1 columns re-ordered from torch's NCHW flatten (c,h,w) to our NHWC flatten (h,w,c).
    C = params["conv_out_c"]
    Hf, Wf = params["conv_out_hw"]
    hh, ww, cc = np.meshgrid(np.arange(Hf), np.arange(Wf), np.arange(C), indexing="ij")
    perm = np.asarray((cc * (Hf * Wf) + hh * Wf + ww).reshape(-1))

    def fold(p):
        w = (p["wmu"].astype(jnp.float32)
             + p["wsig"].astype(jnp.float32) * jnp.outer(p["eps_out"], p["eps_in"]))
        b = (p["bmu"] + p["bsig"] * p["eps_out"]).reshape(1, -1).astype(jnp.float32)
        return w, b                                    # w: (out, in) f32 (torch layout)

    w1_full, b1 = fold(params["fc1"])
    w2_full, b2 = fold(params["fc2"])
    fc = dict(
        w1=w1_full[:, perm].T.astype(jnp.bfloat16),    # (K1, H) bf16 combined noisy weight
        b1=b1,                                         # (1, H)  f32 combined noisy bias
        w2=w2_full.T.astype(jnp.bfloat16),             # (H, A)  bf16 combined noisy weight
        b2=b2,                                         # (1, A)  f32 combined noisy bias
    )
    return dict(convs=convs, fc=fc)


# ----------------------------------------------------------------------------- reference

def reference_forward(params, x_nchw):
    """Pure-JAX f32 reference with the module's original (unpadded, unpermuted) layouts."""
    x = x_nchw.astype(jnp.float32)
    for layer in params["convs"]:
        s = layer["s"]
        x = jax.lax.conv_general_dilated(
            x, layer["w_oihw"].astype(jnp.float32), (s, s), "VALID",
            dimension_numbers=("NCHW", "OIHW", "NCHW"),
            precision=jax.lax.Precision.HIGHEST)
        x = jnp.maximum(x + layer["b"][None, :, None, None], 0.0)
    feats = x.reshape(x.shape[0], -1)

    def nl(p, v, relu):
        w = (p["wmu"].astype(jnp.float32)
             + p["wsig"].astype(jnp.float32) * jnp.outer(p["eps_out"], p["eps_in"]))
        b = p["bmu"] + p["bsig"] * p["eps_out"]
        o = jnp.dot(v, w.T, precision=jax.lax.Precision.HIGHEST) + b
        return jnp.maximum(o, 0.0) if relu else o

    return nl(params["fc2"], nl(params["fc1"], feats, True), False)


# ----------------------------------------------------------------------------- main

if __name__ == "__main__":
    key = jax.random.PRNGKey(0)
    kparam_key, kx = jax.random.split(key)
    params = init_noisy_dqn(kparam_key)          # defaults: 4 ch, 18 actions, hidden 512
    kernel_params = prepare_kernel_params(params)

    # 84x84 spatial is fixed by the module's hard-coded _get_conv_output_size; small batch.
    x = jax.random.normal(kx, (2, 4, 84, 84), dtype=jnp.float32)

    fwd = jax.jit(lambda inp: noisy_dqn_forward(kernel_params, inp))
    q = jax.block_until_ready(fwd(x))
    assert q.shape == (2, 18) and q.dtype == jnp.float32

    q_ref = jax.block_until_ready(reference_forward(params, x))
    np.testing.assert_allclose(np.asarray(q), np.asarray(q_ref), rtol=3e-2, atol=3e-2)

    print("KERNEL_OK")
</pallas_src>

<mosaic_0001>
module attributes {stable_mosaic.version = 11 : i64} {
  func.func @_conv_matmul_kernel(%arg0: i32, %arg1: memref<400x256xbf16, #tpu.memory_space<vmem>>, %arg2: memref<256x128xbf16, #tpu.memory_space<vmem>>, %arg3: memref<1x128xf32, #tpu.memory_space<vmem>>, %arg4: memref<400x128xbf16, #tpu.memory_space<vmem>>) attributes {dimension_semantics = [#tpu.dimension_semantics<parallel>], iteration_bounds = array<i64: 2>, scalar_prefetch = 0 : i64, scratch_operands = 0 : i64, tpu.core_type = #tpu.core_type<tc>, window_params = [{transform_indices = @transform_0, window_bounds = array<i64: 400, 256>}, {pipeline_mode = #tpu.pipeline_mode<synchronous>, transform_indices = @transform_1, window_bounds = array<i64: 256, 128>}, {pipeline_mode = #tpu.pipeline_mode<synchronous>, transform_indices = @transform_2, window_bounds = array<i64: 1, 128>}, {transform_indices = @transform_3, window_bounds = array<i64: 400, 128>}]} {
    %c0 = arith.constant 0 : index
    %c0_0 = arith.constant 0 : index
    %0 = vector.load %arg1[%c0, %c0_0] : memref<400x256xbf16, #tpu.memory_space<vmem>>, vector<400x256xbf16>
    %c0_1 = arith.constant 0 : index
    %c0_2 = arith.constant 0 : index
    %1 = vector.load %arg2[%c0_1, %c0_2] : memref<256x128xbf16, #tpu.memory_space<vmem>>, vector<256x128xbf16>
    %cst = arith.constant dense<0.000000e+00> : vector<400x128xf32>
    %2 = tpu.matmul %0, %1, %cst {dimension_numbers = #tpu.dot_dimension_numbers<[1], [0], [0], [1], [0, 0, 1, 1], [], []>} : vector<400x256xbf16>, vector<256x128xbf16>, vector<400x128xf32> -> vector<400x128xf32>
    %c0_3 = arith.constant 0 : index
    %c0_4 = arith.constant 0 : index
    %3 = vector.load %arg3[%c0_3, %c0_4] : memref<1x128xf32, #tpu.memory_space<vmem>>, vector<1x128xf32>
    %4 = vector.broadcast %3 : vector<1x128xf32> to vector<400x128xf32>
    %5 = arith.addf %2, %4 : vector<400x128xf32>
    %cst_5 = arith.constant 0.000000e+00 : f32
    %6 = vector.broadcast %cst_5 : f32 to vector<400x128xf32>
    %7 = arith.maximumf %5, %6 : vector<400x128xf32>
    %8 = arith.truncf %7 : vector<400x128xf32> to vector<400x128xbf16>
    %c0_6 = arith.constant 0 : index
    %c0_7 = arith.constant 0 : index
    %9 = vector.load %arg4[%c0_6, %c0_7] : memref<400x128xbf16, #tpu.memory_space<vmem>>, vector<400x128xbf16>
    tpu.vector_store %arg4[%c0_6, %c0_7], %8 {strides = array<i32>} : memref<400x128xbf16, #tpu.memory_space<vmem>>, vector<400x128xbf16>,
    return
  }
  func.func @transform_0(%arg0: i32) -> (i32, i32) {
    %c0_i32 = arith.constant 0 : i32
    %c0_i32_0 = arith.constant 0 : i32
    return %arg0, %c0_i32 : i32, i32
  }
  func.func @transform_1(%arg0: i32) -> (i32, i32) {
    %c0_i32 = arith.constant 0 : i32
    %c0_i32_0 = arith.constant 0 : i32
    %c0_i32_1 = arith.constant 0 : i32
    return %c0_i32, %c0_i32_0 : i32, i32
  }
  func.func @transform_2(%arg0: i32) -> (i32, i32) {
    %c0_i32 = arith.constant 0 : i32
    %c0_i32_0 = arith.constant 0 : i32
    %c0_i32_1 = arith.constant 0 : i32
    return %c0_i32, %c0_i32_0 : i32, i32
  }
  func.func @transform_3(%arg0: i32) -> (i32, i32) {
    %c0_i32 = arith.constant 0 : i32
    %c0_i32_0 = arith.constant 0 : i32
    return %arg0, %c0_i32 : i32, i32
  }
}

module attributes {stable_mosaic.version = 11 : i64} {
  func.func @_conv_matmul_kernel(%arg0: i32, %arg1: memref<162x512xbf16, #tpu.memory_space<vmem>>, %arg2: memref<512x128xbf16, #tpu.memory_space<vmem>>, %arg3: memref<1x128xf32, #tpu.memory_space<vmem>>, %arg4: memref<162x128xbf16, #tpu.memory_space<vmem>>) attributes {dimension_semantics = [#tpu.dimension_semantics<parallel>], iteration_bounds = array<i64: 1>, scalar_prefetch = 0 : i64, scratch_operands = 0 : i64, tpu.core_type = #tpu.core_type<tc>, window_params = [{transform_indices = @transform_0, window_bounds = array<i64: 162, 512>}, {pipeline_mode = #tpu.pipeline_mode<synchronous>, transform_indices = @transform_1, window_bounds = array<i64: 512, 128>}, {pipeline_mode = #tpu.pipeline_mode<synchronous>, transform_indices = @transform_2, window_bounds = array<i64: 1, 128>}, {transform_indices = @transform_3, window_bounds = array<i64: 162, 128>}]} {
    %c0 = arith.constant 0 : index
    %c0_0 = arith.constant 0 : index
    %0 = vector.load %arg1[%c0, %c0_0] : memref<162x512xbf16, #tpu.memory_space<vmem>>, vector<162x512xbf16>
    %c0_1 = arith.constant 0 : index
    %c0_2 = arith.constant 0 : index
    %1 = vector.load %arg2[%c0_1, %c0_2] : memref<512x128xbf16, #tpu.memory_space<vmem>>, vector<512x128xbf16>
    %cst = arith.constant dense<0.000000e+00> : vector<162x128xf32>
    %2 = tpu.matmul %0, %1, %cst {dimension_numbers = #tpu.dot_dimension_numbers<[1], [0], [0], [1], [0, 0, 1, 1], [], []>} : vector<162x512xbf16>, vector<512x128xbf16>, vector<162x128xf32> -> vector<162x128xf32>
    %c0_3 = arith.constant 0 : index
    %c0_4 = arith.constant 0 : index
    %3 = vector.load %arg3[%c0_3, %c0_4] : memref<1x128xf32, #tpu.memory_space<vmem>>, vector<1x128xf32>
    %4 = vector.broadcast %3 : vector<1x128xf32> to vector<162x128xf32>
    %5 = arith.addf %2, %4 : vector<162x128xf32>
    %cst_5 = arith.constant 0.000000e+00 : f32
    %6 = vector.broadcast %cst_5 : f32 to vector<162x128xf32>
    %7 = arith.maximumf %5, %6 : vector<162x128xf32>
    %8 = arith.truncf %7 : vector<162x128xf32> to vector<162x128xbf16>
    %c0_6 = arith.constant 0 : index
    %c0_7 = arith.constant 0 : index
    %9 = vector.load %arg4[%c0_6, %c0_7] : memref<162x128xbf16, #tpu.memory_space<vmem>>, vector<162x128xbf16>
    tpu.vector_store %arg4[%c0_6, %c0_7], %8 {strides = array<i32>} : memref<162x128xbf16, #tpu.memory_space<vmem>>, vector<162x128xbf16>,
    return
  }
  func.func @transform_0(%arg0: i32) -> (i32, i32) {
    %c0_i32 = arith.constant 0 : i32
    %c0_i32_0 = arith.constant 0 : i32
    return %arg0, %c0_i32 : i32, i32
  }
  func.func @transform_1(%arg0: i32) -> (i32, i32) {
    %c0_i32 = arith.constant 0 : i32
    %c0_i32_0 = arith.constant 0 : i32
    %c0_i32_1 = arith.constant 0 : i32
    return %c0_i32, %c0_i32_0 : i32, i32
  }
  func.func @transform_2(%arg0: i32) -> (i32, i32) {
    %c0_i32 = arith.constant 0 : i32
    %c0_i32_0 = arith.constant 0 : i32
    %c0_i32_1 = arith.constant 0 : i32
    return %c0_i32, %c0_i32_0 : i32, i32
  }
  func.func @transform_3(%arg0: i32) -> (i32, i32) {
    %c0_i32 = arith.constant 0 : i32
    %c0_i32_0 = arith.constant 0 : i32
    return %arg0, %c0_i32 : i32, i32
  }
}

module attributes {stable_mosaic.version = 11 : i64} {
  func.func @_conv_matmul_kernel(%arg0: i32, %arg1: memref<98x576xbf16, #tpu.memory_space<vmem>>, %arg2: memref<576x128xbf16, #tpu.memory_space<vmem>>, %arg3: memref<1x128xf32, #tpu.memory_space<vmem>>, %arg4: memref<98x128xbf16, #tpu.memory_space<vmem>>) attributes {dimension_semantics = [#tpu.dimension_semantics<parallel>], iteration_bounds = array<i64: 1>, scalar_prefetch = 0 : i64, scratch_operands = 0 : i64, tpu.core_type = #tpu.core_type<tc>, window_params = [{transform_indices = @transform_0, window_bounds = array<i64: 98, 576>}, {pipeline_mode = #tpu.pipeline_mode<synchronous>, transform_indices = @transform_1, window_bounds = array<i64: 576, 128>}, {pipeline_mode = #tpu.pipeline_mode<synchronous>, transform_indices = @transform_2, window_bounds = array<i64: 1, 128>}, {transform_indices = @transform_3, window_bounds = array<i64: 98, 128>}]} {
    %c0 = arith.constant 0 : index
    %c0_0 = arith.constant 0 : index
    %0 = vector.load %arg1[%c0, %c0_0] : memref<98x576xbf16, #tpu.memory_space<vmem>>, vector<98x576xbf16>
    %c0_1 = arith.constant 0 : index
    %c0_2 = arith.constant 0 : index
    %1 = vector.load %arg2[%c0_1, %c0_2] : memref<576x128xbf16, #tpu.memory_space<vmem>>, vector<576x128xbf16>
    %cst = arith.constant dense<0.000000e+00> : vector<98x128xf32>
    %2 = tpu.matmul %0, %1, %cst {dimension_numbers = #tpu.dot_dimension_numbers<[1], [0], [0], [1], [0, 0, 1, 1], [], []>} : vector<98x576xbf16>, vector<576x128xbf16>, vector<98x128xf32> -> vector<98x128xf32>
    %c0_3 = arith.constant 0 : index
    %c0_4 = arith.constant 0 : index
    %3 = vector.load %arg3[%c0_3, %c0_4] : memref<1x128xf32, #tpu.memory_space<vmem>>, vector<1x128xf32>
    %4 = vector.broadcast %3 : vector<1x128xf32> to vector<98x128xf32>
    %5 = arith.addf %2, %4 : vector<98x128xf32>
    %cst_5 = arith.constant 0.000000e+00 : f32
    %6 = vector.broadcast %cst_5 : f32 to vector<98x128xf32>
    %7 = arith.maximumf %5, %6 : vector<98x128xf32>
    %8 = arith.truncf %7 : vector<98x128xf32> to vector<98x128xbf16>
    %c0_6 = arith.constant 0 : index
    %c0_7 = arith.constant 0 : index
    %9 = vector.load %arg4[%c0_6, %c0_7] : memref<98x128xbf16, #tpu.memory_space<vmem>>, vector<98x128xbf16>
    tpu.vector_store %arg4[%c0_6, %c0_7], %8 {strides = array<i32>} : memref<98x128xbf16, #tpu.memory_space<vmem>>, vector<98x128xbf16>,
    return
  }
  func.func @transform_0(%arg0: i32) -> (i32, i32) {
    %c0_i32 = arith.constant 0 : i32
    %c0_i32_0 = arith.constant 0 : i32
    return %arg0, %c0_i32 : i32, i32
  }
  func.func @transform_1(%arg0: i32) -> (i32, i32) {
    %c0_i32 = arith.constant 0 : i32
    %c0_i32_0 = arith.constant 0 : i32
    %c0_i32_1 = arith.constant 0 : i32
    return %c0_i32, %c0_i32_0 : i32, i32
  }
  func.func @transform_2(%arg0: i32) -> (i32, i32) {
    %c0_i32 = arith.constant 0 : i32
    %c0_i32_0 = arith.constant 0 : i32
    %c0_i32_1 = arith.constant 0 : i32
    return %c0_i32, %c0_i32_0 : i32, i32
  }
  func.func @transform_3(%arg0: i32) -> (i32, i32) {
    %c0_i32 = arith.constant 0 : i32
    %c0_i32_0 = arith.constant 0 : i32
    return %arg0, %c0_i32 : i32, i32
  }
}

module attributes {stable_mosaic.version = 11 : i64} {
  func.func @_fused_noisy_fc_kernel(%arg0: i32, %arg1: memref<2x3136xbf16, #tpu.memory_space<vmem>>, %arg2: memref<3136x256xbf16, #tpu.memory_space<vmem>>, %arg3: memref<1x256xf32, #tpu.memory_space<vmem>>, %arg4: memref<256x18xbf16, #tpu.memory_space<vmem>>, %arg5: memref<1x18xf32, #tpu.memory_space<vmem>>, %arg6: memref<2x18xf32, #tpu.memory_space<vmem>>) attributes {dimension_semantics = [#tpu.dimension_semantics<arbitrary>], iteration_bounds = array<i64: 2>, scalar_prefetch = 0 : i64, scratch_operands = 0 : i64, tpu.core_type = #tpu.core_type<tc>, window_params = [{pipeline_mode = #tpu.pipeline_mode<synchronous>, transform_indices = @transform_0, window_bounds = array<i64: 2, 3136>}, {transform_indices = @transform_1, window_bounds = array<i64: 3136, 256>}, {transform_indices = @transform_2, window_bounds = array<i64: 1, 256>}, {transform_indices = @transform_3, window_bounds = array<i64: 256, 18>}, {pipeline_mode = #tpu.pipeline_mode<synchronous>, transform_indices = @transform_4, window_bounds = array<i64: 1, 18>}, {pipeline_mode = #tpu.pipeline_mode<synchronous>, transform_indices = @transform_5, window_bounds = array<i64: 2, 18>}]} {
    %c0_i32 = arith.constant 0 : i32
    %0 = arith.cmpi eq, %arg0, %c0_i32 : i32
    %1 = arith.extui %0 : i1 to i32
    %c0_i32_0 = arith.constant 0 : i32
    %2 = arith.cmpi ne, %1, %c0_i32_0 : i32
    scf.if %2 {
      %cst_15 = arith.constant 0.000000e+00 : f32
      %20 = vector.broadcast %cst_15 : f32 to vector<2x18xf32>
      %c0_16 = arith.constant 0 : index
      %c0_17 = arith.constant 0 : index
      %21 = vector.load %arg6[%c0_16, %c0_17] : memref<2x18xf32, #tpu.memory_space<vmem>>, vector<2x18xf32>
      tpu.vector_store %arg6[%c0_16, %c0_17], %20 {strides = array<i32>} : memref<2x18xf32, #tpu.memory_space<vmem>>, vector<2x18xf32>,
    } else {
    }
    %c0 = arith.constant 0 : index
    %c0_1 = arith.constant 0 : index
    %3 = vector.load %arg1[%c0, %c0_1] : memref<2x3136xbf16, #tpu.memory_space<vmem>>, vector<2x3136xbf16>
    %c0_2 = arith.constant 0 : index
    %c0_3 = arith.constant 0 : index
    %4 = vector.load %arg2[%c0_2, %c0_3] : memref<3136x256xbf16, #tpu.memory_space<vmem>>, vector<3136x256xbf16>
    %cst = arith.constant dense<0.000000e+00> : vector<2x256xf32>
    %5 = tpu.matmul %3, %4, %cst {dimension_numbers = #tpu.dot_dimension_numbers<[1], [0], [0], [1], [0, 0, 1, 1], [], []>} : vector<2x3136xbf16>, vector<3136x256xbf16>, vector<2x256xf32> -> vector<2x256xf32>
    %c0_4 = arith.constant 0 : index
    %c0_5 = arith.constant 0 : index
    %6 = vector.load %arg3[%c0_4, %c0_5] : memref<1x256xf32, #tpu.memory_space<vmem>>, vector<1x256xf32>
    %7 = vector.broadcast %6 : vector<1x256xf32> to vector<2x256xf32>
    %8 = arith.addf %5, %7 : vector<2x256xf32>
    %cst_6 = arith.constant 0.000000e+00 : f32
    %9 = vector.broadcast %cst_6 : f32 to vector<2x256xf32>
    %10 = arith.maximumf %8, %9 : vector<2x256xf32>
    %11 = arith.truncf %10 : vector<2x256xf32> to vector<2x256xbf16>
    %c0_7 = arith.constant 0 : index
    %c0_8 = arith.constant 0 : index
    %12 = vector.load %arg6[%c0_7, %c0_8] : memref<2x18xf32, #tpu.memory_space<vmem>>, vector<2x18xf32>
    %c0_9 = arith.constant 0 : index
    %c0_10 = arith.constant 0 : index
    %13 = vector.load %arg4[%c0_9, %c0_10] : memref<256x18xbf16, #tpu.memory_space<vmem>>, vector<256x18xbf16>
    %cst_11 = arith.constant dense<0.000000e+00> : vector<2x18xf32>
    %14 = tpu.matmul %11, %13, %cst_11 {dimension_numbers = #tpu.dot_dimension_numbers<[1], [0], [0], [1], [0, 0, 1, 1], [], []>} : vector<2x256xbf16>, vector<256x18xbf16>, vector<2x18xf32> -> vector<2x18xf32>
    %15 = arith.addf %12, %14 : vector<2x18xf32>
    %c0_12 = arith.constant 0 : index
    %c0_13 = arith.constant 0 : index
    %16 = vector.load %arg6[%c0_12, %c0_13] : memref<2x18xf32, #tpu.memory_space<vmem>>, vector<2x18xf32>
    tpu.vector_store %arg6[%c0_12, %c0_13], %15 {strides = array<i32>} : memref<2x18xf32, #tpu.memory_space<vmem>>, vector<2x18xf32>,
    %c1_i32 = arith.constant 1 : i32
    %17 = arith.cmpi eq, %arg0, %c1_i32 : i32
    %18 = arith.extui %17 : i1 to i32
    %c0_i32_14 = arith.constant 0 : i32
    %19 = arith.cmpi ne, %18, %c0_i32_14 : i32
    scf.if %19 {
      %c0_15 = arith.constant 0 : index
      %c0_16 = arith.constant 0 : index
      %20 = vector.load %arg6[%c0_15, %c0_16] : memref<2x18xf32, #tpu.memory_space<vmem>>, vector<2x18xf32>
      %c0_17 = arith.constant 0 : index
      %c0_18 = arith.constant 0 : index
      %21 = vector.load %arg5[%c0_17, %c0_18] : memref<1x18xf32, #tpu.memory_space<vmem>>, vector<1x18xf32>
      %22 = vector.broadcast %21 : vector<1x18xf32> to vector<2x18xf32>
      %23 = arith.addf %20, %22 : vector<2x18xf32>
      %c0_19 = arith.constant 0 : index
      %c0_20 = arith.constant 0 : index
      %24 = vector.load %arg6[%c0_19, %c0_20] : memref<2x18xf32, #tpu.memory_space<vmem>>, vector<2x18xf32>
      tpu.vector_store %arg6[%c0_19, %c0_20], %23 {strides = array<i32>} : memref<2x18xf32, #tpu.memory_space<vmem>>, vector<2x18xf32>,
    } else {
    }
    return
  }
  func.func @transform_0(%arg0: i32) -> (i32, i32) {
    %c0_i32 = arith.constant 0 : i32
    %c0_i32_0 = arith.constant 0 : i32
    %c0_i32_1 = arith.constant 0 : i32
    return %c0_i32, %c0_i32_0 : i32, i32
  }
  func.func @transform_1(%arg0: i32) -> (i32, i32) {
    %c0_i32 = arith.constant 0 : i32
    %c0_i32_0 = arith.constant 0 : i32
    return %c0_i32, %arg0 : i32, i32
  }
  func.func @transform_2(%arg0: i32) -> (i32, i32) {
    %c0_i32 = arith.constant 0 : i32
    %c0_i32_0 = arith.constant 0 : i32
    return %c0_i32, %arg0 : i32, i32
  }
  func.func @transform_3(%arg0: i32) -> (i32, i32) {
    %c0_i32 = arith.constant 0 : i32
    %c0_i32_0 = arith.constant 0 : i32
    return %arg0, %c0_i32 : i32, i32
  }
  func.func @transform_4(%arg0: i32) -> (i32, i32) {
    %c0_i32 = arith.constant 0 : i32
    %c0_i32_0 = arith.constant 0 : i32
    %c0_i32_1 = arith.constant 0 : i32
    return %c0_i32, %c0_i32_0 : i32, i32
  }
  func.func @transform_5(%arg0: i32) -> (i32, i32) {
    %c0_i32 = arith.constant 0 : i32
    %c0_i32_0 = arith.constant 0 : i32
    %c0_i32_1 = arith.constant 0 : i32
    return %c0_i32, %c0_i32_0 : i32, i32
  }
}

</mosaic_0001>

<llo_original>
// kernel: _lambda_.4
$region0: #{_lambda_.4}
  #allocation0 [shape = 'u32[]', space=smem, size = 0x4, offset = 0x4, fixed_abs, tag = 'smem constant byte address 0x4 - core index']
  #allocation1 [shape = 'u32[144,128]{1,0:T(1,128)}', space=vmem, size = 0x12000, scoped, tag = 'internal scratch']
  %s0 = inlined_call_operand.vmem [shape: bf16[800,256], index: 0, kind: input, shape index: {}]
  %s1 = inlined_call_operand.vmem [shape: bf16[256,128], index: 1, kind: input, shape index: {}]
  %s2 = inlined_call_operand.vmem [shape: f32[1,128], index: 2, kind: input, shape index: {}]
  %s3 = inlined_call_operand.vmem [shape: bf16[800,128], index: 3, kind: output, shape index: {}]
  %s4 = sld [smem:[#allocation0]]
  $region45: #{_lambda_.4} parent=0
    _
  %s6 = ssub.s32 1, %s4
  %s7 = scalar_select 0, %s6, %s4
  loop: start=0, step=1, limit=4
  $region2: #{_lambda_.4} parent=0 // loop_pre_header
    _
  $region3: #{_lambda_.4} parent=0 // loop_header
    %s9 = sphi 0, %s13
    %p10 = scmp.ge.s32.totalorder %s9, 4
    %s19 = sphi 0, %s21
    %s22 = sphi 0, %s19
    %s23 = sphi 0, %s22
    %s39 = sphi 0, %s23
    %s43 = sphi 0, %s43
    %s45 = sphi 0, %s43
    %s46 = sphi 0, %s45
    %s60 = sphi 0, %s46
    %s64 = sphi 0, %s64
    %s66 = sphi 0, %s64
    %s67 = sphi 0, %s66
    %s81 = sphi 0, %s67
    %s87 = sphi 0, %s89
    %s90 = sphi 0, %s87
    %s91 = sphi 0, %s90
    %s107 = sphi 0, %s91
  $region4: #{_lambda_.4} parent=0 // loop_header_branch
    %12 = sbr.rel (%p10) target = $region8
  $region5: #{_lambda_.4} parent=0 // loop_body
    %s14 = ssub.s32 %s9, 1
    %s15 = ssub.s32 %s9, 2
    %s16 = sadd.s32 %s9, 1
    %s17 = ssub.s32 %s9, %s16
    %p18 = scmp.eq.s32.totalorder %s17, 0
    %s20 = sadd.s32 %s19, 1
    %s21 = scalar_select %p18, %s19, %s20
    %p24 = pneg %p18
    %p25 = scmp.eq.s32.totalorder %s9, 1
    %p26 = por %p24, %p25
    %p27 = scmp.ne.s32.totalorder %s19, %s22
    %p28 = scmp.eq.s32.totalorder %s9, 0
    %p29 = por %p27, %p28
    %p30 = scmp.ne.s32.totalorder %s19, %s22
    %p31 = scmp.eq.s32.totalorder %s14, 1
    %p32 = por %p30, %p31
    %p33 = scmp.ne.s32.totalorder %s22, %s23
    %p34 = scmp.eq.s32.totalorder %s14, 0
    %p35 = por %p33, %p34
    %p36 = scmp.ne.s32.totalorder %s22, %s23
    %p37 = scmp.eq.s32.totalorder %s15, 1
    %p38 = por %p36, %p37
    %p40 = scmp.ne.s32.totalorder %s23, %s39
    %p41 = scmp.eq.s32.totalorder %s15, 0
    %p42 = por %p40, %p41
    %s44 = sadd.s32 %s43, 1
    %p47 = scmp.eq.s32.totalorder %s9, 1
    %p48 = scmp.ne.s32.totalorder %s43, %s45
    %p49 = scmp.eq.s32.totalorder %s9, 0
    %p50 = por %p48, %p49
    %p51 = scmp.ne.s32.totalorder %s43, %s45
    %p52 = scmp.eq.s32.totalorder %s14, 1
    %p53 = por %p51, %p52
    %p54 = scmp.ne.s32.totalorder %s45, %s46
    %p55 = scmp.eq.s32.totalorder %s14, 0
    %p56 = por %p54, %p55
    %p57 = scmp.ne.s32.totalorder %s45, %s46
    %p58 = scmp.eq.s32.totalorder %s15, 1
    %p59 = por %p57, %p58
    %p61 = scmp.ne.s32.totalorder %s46, %s60
    %p62 = scmp.eq.s32.totalorder %s15, 0
    %p63 = por %p61, %p62
    %s65 = sadd.s32 %s64, 1
    %p68 = scmp.eq.s32.totalorder %s9, 1
    %p69 = scmp.ne.s32.totalorder %s64, %s66
    %p70 = scmp.eq.s32.totalorder %s9, 0
    %p71 = por %p69, %p70
    %p72 = scmp.ne.s32.totalorder %s64, %s66
    %p73 = scmp.eq.s32.totalorder %s14, 1
    %p74 = por %p72, %p73
    %p75 = scmp.ne.s32.totalorder %s66, %s67
    %p76 = scmp.eq.s32.totalorder %s14, 0
    %p77 = por %p75, %p76
    %p78 = scmp.ne.s32.totalorder %s66, %s67
    %p79 = scmp.eq.s32.totalorder %s15, 1
    %p80 = por %p78, %p79
    %p82 = scmp.ne.s32.totalorder %s67, %s81
    %p83 = scmp.eq.s32.totalorder %s15, 0
    %p84 = por %p82, %p83
    %s85 = ssub.s32 %s9, %s16
    %p86 = scmp.eq.s32.totalorder %s85, 0
    %s88 = sadd.s32 %s87, 1
    %s89 = scalar_select %p86, %s87, %s88
    %p92 = pneg %p86
    %p93 = scmp.eq.s32.totalorder %s9, 1
    %p94 = por %p92, %p93
    %p95 = scmp.ne.s32.totalorder %s87, %s90
    %p96 = scmp.eq.s32.totalorder %s9, 0
    %p97 = por %p95, %p96
    %p98 = scmp.ne.s32.totalorder %s87, %s90
    %p99 = scmp.eq.s32.totalorder %s14, 1
    %p100 = por %p98, %p99
    %p101 = scmp.ne.s32.totalorder %s90, %s91
    %p102 = scmp.eq.s32.totalorder %s14, 0
    %p103 = por %p101, %p102
    %p104 = scmp.ne.s32.totalorder %s90, %s91
    %p105 = scmp.eq.s32.totalorder %s15, 1
    %p106 = por %p104, %p105
    %p108 = scmp.ne.s32.totalorder %s91, %s107
    %p109 = scmp.eq.s32.totalorder %s15, 0
    %p110 = por %p108, %p109
    %p111 = scmp.le.s32.totalorder 1, %s9
    %p112 = scmp.lt.s32.totalorder %s9, 3
    %p113 = pnand %p111, %p112
    %p114 = pneg %p113
    // Predicated region
    $region9: #{_lambda_.4} parent=5 // pred_check
      _
    $region10: #{_lambda_.4} parent=5 // pred_check_branch
      %116 = sbr.rel (%p113) target = $region12
    $region11: #{_lambda_.4} parent=5 // pred_region
      %s117 = ssub.s32 %s9, 1
      // Predicated region
      $region13: #{_lambda_.4} parent=11 // pred_check
        %p118 = pneg %p56
      $region14: #{_lambda_.4} parent=11 // pred_check_branch
        %120 = sbr.rel (%p118) target = $region16
      $region15: #{_lambda_.4} parent=11 // pred_region
        _
      $region16: #{_lambda_.4} parent=11 // pred_fallthru
        _
      // Predicated region
      $region17: #{_lambda_.4} parent=11 // pred_check
        %p121 = pneg %p77
      $region18: #{_lambda_.4} parent=11 // pred_check_branch
        %123 = sbr.rel (%p121) target = $region20
      $region19: #{_lambda_.4} parent=11 // pred_region
        _
      $region20: #{_lambda_.4} parent=11 // pred_fallthru
        _
    $region12: #{_lambda_.4} parent=5 // pred_fallthru
      _
    %p124 = scmp.lt.s32.totalorder %s9, 2
    // Predicated region
    $region21: #{_lambda_.4} parent=5 // pred_check
      %p125 = pneg %p124
    $region22: #{_lambda_.4} parent=5 // pred_check_branch
      %127 = sbr.rel (%p125) target = $region24
    $region23: #{_lambda_.4} parent=5 // pred_region
      // Predicated region
      $region25: #{_lambda_.4} parent=23 // pred_check
        %p128 = pneg %p29
      $region26: #{_lambda_.4} parent=23 // pred_check_branch
        %130 = sbr.rel (%p128) target = $region28
      $region27: #{_lambda_.4} parent=23 // pred_region
        %s131 = smul.u32 50, %s9
        %p132 = scmp.lt.s32.totalorder %s131, 99
        %s133 = scalar_select %p132, %s131, 99
        %s134 = smul.addr %s133, 2
        %s135 = smul.addr %s134, 4
        %s136 = scalar_lea.vmem %s0, %s135
        %s137 = smul.u32 50, %s9
      $region28: #{_lambda_.4} parent=23 // pred_fallthru
        _
    $region24: #{_lambda_.4} parent=5 // pred_fallthru
      _
    %p138 = scmp.le.s32.totalorder 1, %s9
    %p139 = scmp.lt.s32.totalorder %s9, 3
    %p140 = pnand %p138, %p139
    %p141 = pneg %p140
    // Predicated region
    $region29: #{_lambda_.4} parent=5 // pred_check
      _
    $region30: #{_lambda_.4} parent=5 // pred_check_branch
      %143 = sbr.rel (%p140) target = $region32
    $region31: #{_lambda_.4} parent=5 // pred_region
      %s144 = ssub.s32 %s9, 1
      %s145 = smul.u32 50, %s14
      %p146 = scmp.lt.s32.totalorder %s145, 99
      %s147 = scalar_select %p146, %s145, 99
      %s148 = smul.addr %s147, 2
      %s149 = smul.addr %s148, 4
      %s150 = scalar_lea.vmem %s0, %s149
      %p151 = pneg %p35
      %p152 = pneg %p32
      %p153 = pneg %p56
      %p154 = pneg %p53
      %p155 = pneg %p77
      %p156 = pneg %p74
      %p157 = pneg %p103
      %p158 = pneg %p100
      %s159 = smul.u32 50, %s14
      %p160 = scmp.lt.s32.totalorder %s159, 99
      %s161 = scalar_select %p160, %s159, 99
      %s162 = smul.addr %s161, 4
      %s163 = scalar_lea.vmem %s3, %s162
      %s164 = smul.u32 50, %s14
      %p165 = scmp.lt.s32.totalorder %s164, 99
      %s166 = scalar_select %p165, %s164, 99
      %s167 = smul.addr %s166, 2
      %s168 = smul.addr %s167, 4
      %s169 = scalar_lea.vmem %s0, %s168
      %s170 = smul.u32 50, %s14
      %s171 = smul.u32 50, %s14
      %p172 = scmp.lt.s32.totalorder %s171, 99
      %s173 = scalar_select %p172, %s171, 99
      %s174 = smul.addr %s173, 4
      %s175 = scalar_lea.vmem %s3, %s174
      %s176 = smul.u32 50, %s14
      %v178 = vld [vmem:[%s169] sm:$0xff]
      %v179 = vld [vmem:[%s169 + $0x8] sm:$0xff]
      %v180 = vld [vmem:[%s169 + $0x10] sm:$0xff]
      %v181 = vld [vmem:[%s169 + $0x18] sm:$0xff]
      %v182 = vld [vmem:[%s169 + $0x20] sm:$0xff]
      %v183 = vld [vmem:[%s169 + $0x28] sm:$0xff]
      %v184 = vld [vmem:[%s169 + $0x30] sm:$0xff]
      %v185 = vld [vmem:[%s169 + $0x38] sm:$0xff]
      %v186 = vld [vmem:[%s169 + $0x40] sm:$0xff]
      %v187 = vld [vmem:[%s169 + $0x48] sm:$0xff]
      %v188 = vld [vmem:[%s169 + $0x50] sm:$0xff]
      %v189 = vld [vmem:[%s169 + $0x58] sm:$0xff]
      %v190 = vld [vmem:[%s169 + $0x60] sm:$0xff]
      %v191 = vld [vmem:[%s169 + $0x68] sm:$0xff]
      %v192 = vld [vmem:[%s169 + $0x70] sm:$0xff]
      %v193 = vld [vmem:[%s169 + $0x78] sm:$0xff]
      %v194 = vld [vmem:[%s169 + $0x80] sm:$0xff]
      %v195 = vld [vmem:[%s169 + $0x88] sm:$0xff]
      %v196 = vld [vmem:[%s169 + $0x90] sm:$0xff]
      %v197 = vld [vmem:[%s169 + $0x98] sm:$0xff]
      %v198 = vld [vmem:[%s169 + $0xa0] sm:$0xff]
      %v199 = vld [vmem:[%s169 + $0xa8] sm:$0xff]
      %v200 = vld [vmem:[%s169 + $0xb0] sm:$0xff]
      %v201 = vld [vmem:[%s169 + $0xb8] sm:$0xff]
      %v202 = vld [vmem:[%s169 + $0xc0] sm:$0xff]
      %v203 = vld [vmem:[%s169 + $0xc8] sm:$0xff]
      %v204 = vld [vmem:[%s169 + $0xd0] sm:$0xff]
      %v205 = vld [vmem:[%s169 + $0xd8] sm:$0xff]
      %v206 = vld [vmem:[%s169 + $0xe0] sm:$0xff]
      %v207 = vld [vmem:[%s169 + $0xe8] sm:$0xff]
      %v208 = vld [vmem:[%s169 + $0xf0] sm:$0xff]
      %v209 = vld [vmem:[%s169 + $0xf8] sm:$0xff]
      %v210 = vld [vmem:[%s169 + $0x100] sm:$0xff]
      %v211 = vld [vmem:[%s169 + $0x108] sm:$0xff]
      %v212 = vld [vmem:[%s169 + $0x110] sm:$0xff]
      %v213 = vld [vmem:[%s169 + $0x118] sm:$0xff]
      %v214 = vld [vmem:[%s169 + $0x120] sm:$0xff]
      %v215 = vld [vmem:[%s169 + $0x128] sm:$0xff]
      %v216 = vld [vmem:[%s169 + $0x130] sm:$0xff]
      %v217 = vld [vmem:[%s169 + $0x138] sm:$0xff]
      %v218 = vld [vmem:[%s169 + $0x140] sm:$0xff]
      %v219 = vld [vmem:[%s169 + $0x148] sm:$0xff]
      %v220 = vld [vmem:[%s169 + $0x150] sm:$0xff]
      %v221 = vld [vmem:[%s169 + $0x158] sm:$0xff]
      %v222 = vld [vmem:[%s169 + $0x160] sm:$0xff]
      %v223 = vld [vmem:[%s169 + $0x168] sm:$0xff]
      %v224 = vld [vmem:[%s169 + $0x170] sm:$0xff]
      %v225 = vld [vmem:[%s169 + $0x178] sm:$0xff]
      %v226 = vld [vmem:[%s169 + $0x180] sm:$0xff]
      %v227 = vld [vmem:[%s169 + $0x188] sm:$0xff]
      %v228 = vld [vmem:[%s1] sm:$0xf]
      %v229 = vld [vmem:[%s1 + $0x4] sm:$0xf]
      %v230 = vld [vmem:[%s1 + $0x8] sm:$0xf]
      %v231 = vld [vmem:[%s1 + $0xc] sm:$0xf]
      %v232 = vld [vmem:[%s1 + $0x10] sm:$0xf]
      %v233 = vld [vmem:[%s1 + $0x14] sm:$0xf]
      %v234 = vld [vmem:[%s1 + $0x18] sm:$0xf]
      %v235 = vld [vmem:[%s1 + $0x1c] sm:$0xf]
      %v236 = vld [vmem:[%s1 + $0x20] sm:$0xf]
      %v237 = vld [vmem:[%s1 + $0x24] sm:$0xf]
      %v238 = vld [vmem:[%s1 + $0x28] sm:$0xf]
      %v239 = vld [vmem:[%s1 + $0x2c] sm:$0xf]
      %v240 = vld [vmem:[%s1 + $0x30] sm:$0xf]
      %v241 = vld [vmem:[%s1 + $0x34] sm:$0xf]
      %v242 = vld [vmem:[%s1 + $0x38] sm:$0xf]
      %v243 = vld [vmem:[%s1 + $0x3c] sm:$0xf]
      %v244 = vld [vmem:[%s1 + $0x40] sm:$0xf]
      %v245 = vld [vmem:[%s1 + $0x44] sm:$0xf]
      %v246 = vld [vmem:[%s1 + $0x48] sm:$0xf]
      %v247 = vld [vmem:[%s1 + $0x4c] sm:$0xf]
      %v248 = vld [vmem:[%s1 + $0x50] sm:$0xf]
      %v249 = vld [vmem:[%s1 + $0x54] sm:$0xf]
      %v250 = vld [vmem:[%s1 + $0x58] sm:$0xf]
      %v251 = vld [vmem:[%s1 + $0x5c] sm:$0xf]
      %v252 = vld [vmem:[%s1 + $0x60] sm:$0xf]
      %v253 = vld [vmem:[%s1 + $0x64] sm:$0xf]
      %v254 = vld [vmem:[%s1 + $0x68] sm:$0xf]
      %v255 = vld [vmem:[%s1 + $0x6c] sm:$0xf]
      %v256 = vld [vmem:[%s1 + $0x70] sm:$0xf]
      %v257 = vld [vmem:[%s1 + $0x74] sm:$0xf]
      %v258 = vld [vmem:[%s1 + $0x78] sm:$0xf]
      %v259 = vld [vmem:[%s1 + $0x7c] sm:$0xf]
      %v260 = vld [vmem:[%s2] sm:$0x1]
      %v262 = vlaneseq
      %v263 = vshrl.u32 %v262, 7
      %v264 = vsub.s32 0, %v263
      %v265 = vrot.slane %v260, %v264
      %v317 = vunpack.c.l.b16 %v178
      %v318 = vunpack.c.h.b16 %v178
      %v319 = vunpack.c.l.b16 %v179
      %v320 = vunpack.c.h.b16 %v179
      %v321 = vunpack.c.l.b16 %v180
      %v322 = vunpack.c.h.b16 %v180
      %v323 = vunpack.c.l.b16 %v181
      %v324 = vunpack.c.h.b16 %v181
      %v325 = vunpack.c.l.b16 %v182
      %v326 = vunpack.c.h.b16 %v182
      %v327 = vunpack.c.l.b16 %v183
      %v328 = vunpack.c.h.b16 %v183
      %v329 = vunpack.c.l.b16 %v184
      %v330 = vunpack.c.h.b16 %v184
      %v331 = vunpack.c.l.b16 %v185
      %v332 = vunpack.c.h.b16 %v185
      %v333 = vunpack.c.l.b16 %v186
      %v334 = vunpack.c.h.b16 %v186
      %v335 = vunpack.c.l.b16 %v187
      %v336 = vunpack.c.h.b16 %v187
      %v337 = vunpack.c.l.b16 %v188
      %v338 = vunpack.c.h.b16 %v188
      %v339 = vunpack.c.l.b16 %v189
      %v340 = vunpack.c.h.b16 %v189
      %v341 = vunpack.c.l.b16 %v190
      %v342 = vunpack.c.h.b16 %v190
      %v343 = vunpack.c.l.b16 %v191
      %v344 = vunpack.c.h.b16 %v191
      %v345 = vunpack.c.l.b16 %v192
      %v346 = vunpack.c.h.b16 %v192
      %v347 = vunpack.c.l.b16 %v193
      %v348 = vunpack.c.h.b16 %v193
      %v349 = vunpack.c.l.b16 %v194
      %v350 = vunpack.c.h.b16 %v194
      %v351 = vunpack.c.l.b16 %v195
      %v352 = vunpack.c.h.b16 %v195
      %v353 = vunpack.c.l.b16 %v196
      %v354 = vunpack.c.h.b16 %v196
      %v355 = vunpack.c.l.b16 %v197
      %v356 = vunpack.c.h.b16 %v197
      %v357 = vunpack.c.l.b16 %v198
      %v358 = vunpack.c.h.b16 %v198
      %v359 = vunpack.c.l.b16 %v199
      %v360 = vunpack.c.h.b16 %v199
      %v361 = vunpack.c.l.b16 %v200
      %v362 = vunpack.c.h.b16 %v200
      %v363 = vunpack.c.l.b16 %v201
      %v364 = vunpack.c.h.b16 %v201
      %v365 = vunpack.c.l.b16 %v202
      %v366 = vunpack.c.h.b16 %v202
      %v367 = vunpack.c.l.b16 %v203
      %v368 = vunpack.c.h.b16 %v203
      %v369 = vunpack.c.l.b16 %v204
      %v370 = vunpack.c.h.b16 %v204
      %v371 = vunpack.c.l.b16 %v205
      %v372 = vunpack.c.h.b16 %v205
      %v373 = vunpack.c.l.b16 %v206
      %v374 = vunpack.c.h.b16 %v206
      %v375 = vunpack.c.l.b16 %v207
      %v376 = vunpack.c.h.b16 %v207
      %v377 = vunpack.c.l.b16 %v208
      %v378 = vunpack.c.h.b16 %v208
      %v379 = vunpack.c.l.b16 %v209
      %v380 = vunpack.c.h.b16 %v209
      %v381 = vunpack.c.l.b16 %v210
      %v382 = vunpack.c.h.b16 %v210
      %v383 = vunpack.c.l.b16 %v211
      %v384 = vunpack.c.h.b16 %v211
      %v385 = vunpack.c.l.b16 %v212
      %v386 = vunpack.c.h.b16 %v212
      %v387 = vunpack.c.l.b16 %v213
      %v388 = vunpack.c.h.b16 %v213
      %v389 = vunpack.c.l.b16 %v214
      %v390 = vunpack.c.h.b16 %v214
      %v391 = vunpack.c.l.b16 %v215
      %v392 = vunpack.c.h.b16 %v215
      %v393 = vunpack.c.l.b16 %v216
      %v394 = vunpack.c.h.b16 %v216
      %v395 = vunpack.c.l.b16 %v217
      %v396 = vunpack.c.h.b16 %v217
      %v397 = vunpack.c.l.b16 %v218
      %v398 = vunpack.c.h.b16 %v218
      %v399 = vunpack.c.l.b16 %v219
      %v400 = vunpack.c.h.b16 %v219
      %v401 = vunpack.c.l.b16 %v220
      %v402 = vunpack.c.h.b16 %v220
      %v403 = vunpack.c.l.b16 %v221
      %v404 = vunpack.c.h.b16 %v221
      %v405 = vunpack.c.l.b16 %v222
      %v406 = vunpack.c.h.b16 %v222
      %v407 = vunpack.c.l.b16 %v223
      %v408 = vunpack.c.h.b16 %v223
      %v409 = vunpack.c.l.b16 %v224
      %v410 = vunpack.c.h.b16 %v224
      %v411 = vunpack.c.l.b16 %v225
      %v412 = vunpack.c.h.b16 %v225
      %v413 = vunpack.c.l.b16 %v226
      %v414 = vunpack.c.h.b16 %v226
      %v415 = vunpack.c.l.b16 %v227
      %v416 = vunpack.c.h.b16 %v227
      %v417 = vpack.c.b16 %v319, %v317
      %v418 = vpack.c.b16 %v320, %v318
      %v419 = vpack.c.b16 %v323, %v321
      %v420 = vpack.c.b16 %v324, %v322
      %v421 = vpack.c.b16 %v327, %v325
      %v422 = vpack.c.b16 %v328, %v326
      %v423 = vpack.c.b16 %v331, %v329
      %v424 = vpack.c.b16 %v332, %v330
      %v425 = vpack.c.b16 %v335, %v333
      %v426 = vpack.c.b16 %v336, %v334
      %v427 = vpack.c.b16 %v339, %v337
      %v428 = vpack.c.b16 %v340, %v338
      %v429 = vpack.c.b16 %v343, %v341
      %v430 = vpack.c.b16 %v344, %v342
      %v431 = vpack.c.b16 %v347, %v345
      %v432 = vpack.c.b16 %v348, %v346
      %v433 = vpack.c.b16 %v351, %v349
      %v434 = vpack.c.b16 %v352, %v350
      %v435 = vpack.c.b16 %v355, %v353
      %v436 = vpack.c.b16 %v356, %v354
      %v437 = vpack.c.b16 %v359, %v357
      %v438 = vpack.c.b16 %v360, %v358
      %v439 = vpack.c.b16 %v363, %v361
      %v440 = vpack.c.b16 %v364, %v362
      %v441 = vpack.c.b16 %v367, %v365
      %v442 = vpack.c.b16 %v368, %v366
      %v443 = vpack.c.b16 %v371, %v369
      %v444 = vpack.c.b16 %v372, %v370
      %v445 = vpack.c.b16 %v375, %v373
      %v446 = vpack.c.b16 %v376, %v374
      %v447 = vpack.c.b16 %v379, %v377
      %v448 = vpack.c.b16 %v380, %v378
      %v449 = vpack.c.b16 %v383, %v381
      %v450 = vpack.c.b16 %v384, %v382
      %v451 = vpack.c.b16 %v387, %v385
      %v452 = vpack.c.b16 %v388, %v386
      %v453 = vpack.c.b16 %v391, %v389
      %v454 = vpack.c.b16 %v392, %v390
      %v455 = vpack.c.b16 %v395, %v393
      %v456 = vpack.c.b16 %v396, %v394
      %v457 = vpack.c.b16 %v399, %v397
      %v458 = vpack.c.b16 %v400, %v398
      %v459 = vpack.c.b16 %v403, %v401
      %v460 = vpack.c.b16 %v404, %v402
      %v461 = vpack.c.b16 %v407, %v405
      %v462 = vpack.c.b16 %v408, %v406
      %v463 = vpack.c.b16 %v411, %v409
      %v464 = vpack.c.b16 %v412, %v410
      %v465 = vpack.c.b16 %v415, %v413
      %v466 = vpack.c.b16 %v416, %v414
      %v549 = vunpack.c.l.b16 %v228
      %v550 = vunpack.c.l.b16 %v229
      %v551 = vunpack.c.l.b16 %v230
      %v552 = vunpack.c.l.b16 %v231
      %v553 = vunpack.c.l.b16 %v232
      %v554 = vunpack.c.l.b16 %v233
      %v555 = vunpack.c.l.b16 %v234
      %v556 = vunpack.c.l.b16 %v235
      %v557 = vunpack.c.l.b16 %v236
      %v558 = vunpack.c.l.b16 %v237
      %v559 = vunpack.c.l.b16 %v238
      %v560 = vunpack.c.l.b16 %v239
      %v561 = vunpack.c.l.b16 %v240
      %v562 = vunpack.c.l.b16 %v241
      %v563 = vunpack.c.l.b16 %v242
      %v564 = vunpack.c.l.b16 %v243
      %v565 = vunpack.c.l.b16 %v244
      %v566 = vunpack.c.l.b16 %v245
      %v567 = vunpack.c.l.b16 %v246
      %v568 = vunpack.c.l.b16 %v247
      %v569 = vunpack.c.l.b16 %v248
      %v570 = vunpack.c.l.b16 %v249
      %v571 = vunpack.c.l.b16 %v250
      %v572 = vunpack.c.l.b16 %v251
      %v573 = vunpack.c.l.b16 %v252
      %v574 = vunpack.c.l.b16 %v253
      %v575 = vunpack.c.l.b16 %v254
      %v576 = vunpack.c.l.b16 %v255
      %v577 = vunpack.c.l.b16 %v256
      %v578 = vunpack.c.l.b16 %v257
      %v579 = vunpack.c.l.b16 %v258
      %v580 = vunpack.c.l.b16 %v259
      %v581 = vpack.c.b16 %v550, %v549
      %v582 = vpack.c.b16 %v552, %v551
      %v583 = vpack.c.b16 %v554, %v553
      %v584 = vpack.c.b16 %v556, %v555
      %v585 = vpack.c.b16 %v558, %v557
      %v586 = vpack.c.b16 %v560, %v559
      %v587 = vpack.c.b16 %v562, %v561
      %v588 = vpack.c.b16 %v564, %v563
      %v589 = vpack.c.b16 %v566, %v565
      %v590 = vpack.c.b16 %v568, %v567
      %v591 = vpack.c.b16 %v570, %v569
      %v592 = vpack.c.b16 %v572, %v571
      %v593 = vpack.c.b16 %v574, %v573
      %v594 = vpack.c.b16 %v576, %v575
      %v595 = vpack.c.b16 %v578, %v577
      %v596 = vpack.c.b16 %v580, %v579
      %613 = vmatprep.subr.bf16.mxu0 0
      %614 = vmatpush1.bf16.msra.mxu0 %v581
      %615 = vmatprep.subr.bf16.mxu0 0
      %616 = vmatpush1.bf16.msra.mxu0 %v582
      %617 = vmatprep.subr.bf16.mxu0 0
      %618 = vmatpush1.bf16.msra.mxu0 %v583
      %619 = vmatprep.subr.bf16.mxu0 0
      %620 = vmatpush1.bf16.msra.mxu0 %v584
      %621 = vmatprep.subr.bf16.mxu0 0
      %622 = vmatpush1.bf16.msra.mxu0 %v585
      %623 = vmatprep.subr.bf16.mxu0 0
      %624 = vmatpush1.bf16.msra.mxu0 %v586
      %625 = vmatprep.subr.bf16.mxu0 0
      %626 = vmatpush1.bf16.msra.mxu0 %v587
      %627 = vmatprep.subr.bf16.mxu0 0
      %628 = vmatpush1.bf16.msra.mxu0 %v588
      %629 = vmatprep.subr.bf16.mxu0 0
      %630 = vmatpush1.bf16.msra.mxu0 %v589
      %631 = vmatprep.subr.bf16.mxu0 0
      %632 = vmatpush1.bf16.msra.mxu0 %v590
      %633 = vmatprep.subr.bf16.mxu0 0
      %634 = vmatpush1.bf16.msra.mxu0 %v591
      %635 = vmatprep.subr.bf16.mxu0 0
      %636 = vmatpush1.bf16.msra.mxu0 %v592
      %637 = vmatprep.subr.bf16.mxu0 0
      %638 = vmatpush1.bf16.msra.mxu0 %v593
      %639 = vmatprep.subr.bf16.mxu0 0
      %640 = vmatpush1.bf16.msra.mxu0 %v594
      %641 = vmatprep.subr.bf16.mxu0 0
      %642 = vmatpush1.bf16.msra.mxu0 %v595
      %643 = vmatprep.subr.bf16.mxu0 0
      %644 = vmatpush1.bf16.msra.mxu0 %v596
      %645 = vmatprep.mubr.bf16.mxu0 %v418
      %646 = vmatmul.mubr.bf16.gmra.mrb[0].mxu0 %v417
      %v647 = vpop.f32.mrb[0].mxu0
      %v648 = vadd.f32 %v265, %v647
      %v649 = vpop.f32.mrb[0].mxu0
      %v650 = vpop.f32.mrb[0].mxu0
      %v651 = vadd.f32 %v265, %v650
      %v652 = vpop.f32.mrb[0].mxu0
      %653 = vmatprep.mubr.bf16.mxu0 %v420
      %654 = vmatmul.mubr.bf16.gmra.mrb[0].mxu0 %v419
      %v655 = vpop.f32.mrb[0].mxu0
      %v656 = vadd.f32 %v265, %v655
      %v657 = vpop.f32.mrb[0].mxu0
      %v658 = vpop.f32.mrb[0].mxu0
      %v659 = vadd.f32 %v265, %v658
      %v660 = vpop.f32.mrb[0].mxu0
      %661 = vmatprep.mubr.bf16.mxu0 %v422
      %662 = vmatmul.mubr.bf16.gmra.mrb[0].mxu0 %v421
      %v663 = vpop.f32.mrb[0].mxu0
      %v664 = vadd.f32 %v265, %v663
      %v665 = vpop.f32.mrb[0].mxu0
      %v666 = vpop.f32.mrb[0].mxu0
      %v667 = vadd.f32 %v265, %v666
      %v668 = vpop.f32.mrb[0].mxu0
      %669 = vmatprep.mubr.bf16.mxu0 %v424
      %670 = vmatmul.mubr.bf16.gmra.mrb[0].mxu0 %v423
      %v671 = vpop.f32.mrb[0].mxu0
      %v672 = vadd.f32 %v265, %v671
      %v673 = vpop.f32.mrb[0].mxu0
      %v674 = vpop.f32.mrb[0].mxu0
      %v675 = vadd.f32 %v265, %v674
      %v676 = vpop.f32.mrb[0].mxu0
      %677 = vmatprep.mubr.bf16.mxu0 %v426
      %678 = vmatmul.mubr.bf16.gmra.mrb[0].mxu0 %v425
      %v679 = vpop.f32.mrb[0].mxu0
      %v680 = vadd.f32 %v265, %v679
      %v681 = vpop.f32.mrb[0].mxu0
      %v682 = vpop.f32.mrb[0].mxu0
      %v683 = vadd.f32 %v265, %v682
      %v684 = vpop.f32.mrb[0].mxu0
      %685 = vmatprep.mubr.bf16.mxu0 %v428
      %686 = vmatmul.mubr.bf16.gmra.mrb[0].mxu0 %v427
      %v687 = vpop.f32.mrb[0].mxu0
      %v688 = vadd.f32 %v265, %v687
      %v689 = vpop.f32.mrb[0].mxu0
      %v690 = vpop.f32.mrb[0].mxu0
      %v691 = vadd.f32 %v265, %v690
      %v692 = vpop.f32.mrb[0].mxu0
      %693 = vmatprep.mubr.bf16.mxu0 %v430
      %694 = vmatmul.mubr.bf16.gmra.mrb[0].mxu0 %v429
      %v695 = vpop.f32.mrb[0].mxu0
      %v696 = vadd.f32 %v265, %v695
      %v697 = vpop.f32.mrb[0].mxu0
      %v698 = vpop.f32.mrb[0].mxu0
      %v699 = vadd.f32 %v265, %v698
      %v700 = vpop.f32.mrb[0].mxu0
      %701 = vmatprep.mubr.bf16.mxu0 %v432
      %702 = vmatmul.mubr.bf16.gmra.mrb[0].mxu0 %v431
      %v703 = vpop.f32.mrb[0].mxu0
      %v704 = vadd.f32 %v265, %v703
      %v705 = vpop.f32.mrb[0].mxu0
      %v706 = vpop.f32.mrb[0].mxu0
      %v707 = vadd.f32 %v265, %v706
      %v708 = vpop.f32.mrb[0].mxu0
      %709 = vmatprep.mubr.bf16.mxu0 %v434
      %710 = vmatmul.mubr.bf16.gmra.mrb[0].mxu0 %v433
      %v711 = vpop.f32.mrb[0].mxu0
      %v712 = vadd.f32 %v265, %v711
      %v713 = vpop.f32.mrb[0].mxu0
      %v714 = vpop.f32.mrb[0].mxu0
      %v715 = vadd.f32 %v265, %v714
      %v716 = vpop.f32.mrb[0].mxu0
      %717 = vmatprep.mubr.bf16.mxu0 %v436
      %718 = vmatmul.mubr.bf16.gmra.mrb[0].mxu0 %v435
      %v719 = vpop.f32.mrb[0].mxu0
      %v720 = vadd.f32 %v265, %v719
      %v721 = vpop.f32.mrb[0].mxu0
      %v722 = vpop.f32.mrb[0].mxu0
      %v723 = vadd.f32 %v265, %v722
      %v724 = vpop.f32.mrb[0].mxu0
      %725 = vmatprep.mubr.bf16.mxu0 %v438
      %726 = vmatmul.mubr.bf16.gmra.mrb[0].mxu0 %v437
      %v727 = vpop.f32.mrb[0].mxu0
      %v728 = vadd.f32 %v265, %v727
      %v729 = vpop.f32.mrb[0].mxu0
      %v730 = vpop.f32.mrb[0].mxu0
      %v731 = vadd.f32 %v265, %v730
      %v732 = vpop.f32.mrb[0].mxu0
      %733 = vmatprep.mubr.bf16.mxu0 %v440
      %734 = vmatmul.mubr.bf16.gmra.mrb[0].mxu0 %v439
      %v735 = vpop.f32.mrb[0].mxu0
      %v736 = vadd.f32 %v265, %v735
      %v737 = vpop.f32.mrb[0].mxu0
      %v738 = vpop.f32.mrb[0].mxu0
      %v739 = vadd.f32 %v265, %v738
      %v740 = vpop.f32.mrb[0].mxu0
      %741 = vmatprep.mubr.bf16.mxu0 %v442
      %742 = vmatmul.mubr.bf16.gmra.mrb[0].mxu0 %v441
      %v743 = vpop.f32.mrb[0].mxu0
      %v744 = vadd.f32 %v265, %v743
      %v745 = vpop.f32.mrb[0].mxu0
      %v746 = vpop.f32.mrb[0].mxu0
      %v747 = vadd.f32 %v265, %v746
      %v748 = vpop.f32.mrb[0].mxu0
      %749 = vmatprep.mubr.bf16.mxu0 %v444
      %750 = vmatmul.mubr.bf16.gmra.mrb[0].mxu0 %v443
      %v751 = vpop.f32.mrb[0].mxu0
      %v752 = vadd.f32 %v265, %v751
      %v753 = vpop.f32.mrb[0].mxu0
      %v754 = vpop.f32.mrb[0].mxu0
      %v755 = vadd.f32 %v265, %v754
      %v756 = vpop.f32.mrb[0].mxu0
      %757 = vmatprep.mubr.bf16.mxu0 %v446
      %758 = vmatmul.mubr.bf16.gmra.mrb[0].mxu0 %v445
      %v759 = vpop.f32.mrb[0].mxu0
      %v760 = vadd.f32 %v265, %v759
      %v761 = vpop.f32.mrb[0].mxu0
      %v762 = vpop.f32.mrb[0].mxu0
      %v763 = vadd.f32 %v265, %v762
      %v764 = vpop.f32.mrb[0].mxu0
      %765 = vmatprep.mubr.bf16.mxu0 %v448
      %766 = vmatmul.mubr.bf16.gmra.mrb[0].mxu0 %v447
      %v767 = vpop.f32.mrb[0].mxu0
      %v768 = vadd.f32 %v265, %v767
      %v769 = vpop.f32.mrb[0].mxu0
      %v770 = vpop.f32.mrb[0].mxu0
      %v771 = vadd.f32 %v265, %v770
      %v772 = vpop.f32.mrb[0].mxu0
      %773 = vmatprep.mubr.bf16.mxu0 %v450
      %774 = vmatmul.mubr.bf16.gmra.mrb[0].mxu0 %v449
      %v775 = vpop.f32.mrb[0].mxu0
      %v776 = vadd.f32 %v265, %v775
      %v777 = vpop.f32.mrb[0].mxu0
      %v778 = vpop.f32.mrb[0].mxu0
      %v779 = vadd.f32 %v265, %v778
      %v780 = vpop.f32.mrb[0].mxu0
      %781 = vmatprep.mubr.bf16.mxu0 %v452
      %782 = vmatmul.mubr.bf16.gmra.mrb[0].mxu0 %v451
      %v783 = vpop.f32.mrb[0].mxu0
      %v784 = vadd.f32 %v265, %v783
      %v785 = vpop.f32.mrb[0].mxu0
      %v786 = vpop.f32.mrb[0].mxu0
      %v787 = vadd.f32 %v265, %v786
      %v788 = vpop.f32.mrb[0].mxu0
      %789 = vmatprep.mubr.bf16.mxu0 %v454
      %790 = vmatmul.mubr.bf16.gmra.mrb[0].mxu0 %v453
      %v791 = vpop.f32.mrb[0].mxu0
      %v792 = vadd.f32 %v265, %v791
      %v793 = vpop.f32.mrb[0].mxu0
      %v794 = vpop.f32.mrb[0].mxu0
      %v795 = vadd.f32 %v265, %v794
      %v796 = vpop.f32.mrb[0].mxu0
      %797 = vmatprep.mubr.bf16.mxu0 %v456
      %798 = vmatmul.mubr.bf16.gmra.mrb[0].mxu0 %v455
      %v799 = vpop.f32.mrb[0].mxu0
      %v800 = vadd.f32 %v265, %v799
      %v801 = vpop.f32.mrb[0].mxu0
      %v802 = vpop.f32.mrb[0].mxu0
      %v803 = vadd.f32 %v265, %v802
      %v804 = vpop.f32.mrb[0].mxu0
      %805 = vmatprep.mubr.bf16.mxu0 %v458
      %806 = vmatmul.mubr.bf16.gmra.mrb[0].mxu0 %v457
      %v807 = vpop.f32.mrb[0].mxu0
      %v808 = vadd.f32 %v265, %v807
      %v809 = vpop.f32.mrb[0].mxu0
      %v810 = vpop.f32.mrb[0].mxu0
      %v811 = vadd.f32 %v265, %v810
      %v812 = vpop.f32.mrb[0].mxu0
      %813 = vmatprep.mubr.bf16.mxu0 %v460
      %814 = vmatmul.mubr.bf16.gmra.mrb[0].mxu0 %v459
      %v815 = vpop.f32.mrb[0].mxu0
      %v816 = vadd.f32 %v265, %v815
      %v817 = vpop.f32.mrb[0].mxu0
      %v818 = vpop.f32.mrb[0].mxu0
      %v819 = vadd.f32 %v265, %v818
      %v820 = vpop.f32.mrb[0].mxu0
      %821 = vmatprep.mubr.bf16.mxu0 %v462
      %822 = vmatmul.mubr.bf16.gmra.mrb[0].mxu0 %v461
      %v823 = vpop.f32.mrb[0].mxu0
      %v824 = vadd.f32 %v265, %v823
      %v825 = vpop.f32.mrb[0].mxu0
      %v826 = vpop.f32.mrb[0].mxu0
      %v827 = vadd.f32 %v265, %v826
      %v828 = vpop.f32.mrb[0].mxu0
      %829 = vmatprep.mubr.bf16.mxu0 %v464
      %830 = vmatmul.mubr.bf16.gmra.mrb[0].mxu0 %v463
      %v831 = vpop.f32.mrb[0].mxu0
      %v832 = vadd.f32 %v265, %v831
      %v833 = vpop.f32.mrb[0].mxu0
      %v834 = vpop.f32.mrb[0].mxu0
      %v835 = vadd.f32 %v265, %v834
      %v836 = vpop.f32.mrb[0].mxu0
      %837 = vmatprep.mubr.bf16.mxu0 %v466
      %838 = vmatmul.mubr.bf16.gmra.mrb[0].mxu0 %v465
      %v839 = vpop.f32.mrb[0].mxu0
      %v840 = vadd.f32 %v265, %v839
      %v841 = vpop.f32.mrb[0].mxu0
      %v842 = vpop.f32.mrb[0].mxu0
      %v843 = vadd.f32 %v265, %v842
      %v844 = vpop.f32.mrb[0].mxu0
      %845 = vdwg.mxu0
      %v846 = vmax.f32 %v648, 0.0
      %v847 = vmax.f32 %v651, 0.0
      %v848 = vmax.f32 %v656, 0.0
      %v849 = vmax.f32 %v659, 0.0
      %v850 = vmax.f32 %v664, 0.0
      %v851 = vmax.f32 %v667, 0.0
      %v852 = vmax.f32 %v672, 0.0
      %v853 = vmax.f32 %v675, 0.0
      %v854 = vmax.f32 %v680, 0.0
      %v855 = vmax.f32 %v683, 0.0
      %v856 = vmax.f32 %v688, 0.0
      %v857 = vmax.f32 %v691, 0.0
      %v858 = vmax.f32 %v696, 0.0
      %v859 = vmax.f32 %v699, 0.0
      %v860 = vmax.f32 %v704, 0.0
      %v861 = vmax.f32 %v707, 0.0
      %v862 = vmax.f32 %v712, 0.0
      %v863 = vmax.f32 %v715, 0.0
      %v864 = vmax.f32 %v720, 0.0
      %v865 = vmax.f32 %v723, 0.0
      %v866 = vmax.f32 %v728, 0.0
      %v867 = vmax.f32 %v731, 0.0
      %v868 = vmax.f32 %v736, 0.0
      %v869 = vmax.f32 %v739, 0.0
      %v870 = vmax.f32 %v744, 0.0
      %v871 = vmax.f32 %v747, 0.0
      %v872 = vmax.f32 %v752, 0.0
      %v873 = vmax.f32 %v755, 0.0
      %v874 = vmax.f32 %v760, 0.0
      %v875 = vmax.f32 %v763, 0.0
      %v876 = vmax.f32 %v768, 0.0
      %v877 = vmax.f32 %v771, 0.0
      %v878 = vmax.f32 %v776, 0.0
      %v879 = vmax.f32 %v779, 0.0
      %v880 = vmax.f32 %v784, 0.0
      %v881 = vmax.f32 %v787, 0.0
      %v882 = vmax.f32 %v792, 0.0
      %v883 = vmax.f32 %v795, 0.0
      %v884 = vmax.f32 %v800, 0.0
      %v885 = vmax.f32 %v803, 0.0
      %v886 = vmax.f32 %v808, 0.0
      %v887 = vmax.f32 %v811, 0.0
      %v888 = vmax.f32 %v816, 0.0
      %v889 = vmax.f32 %v819, 0.0
      %v890 = vmax.f32 %v824, 0.0
      %v891 = vmax.f32 %v827, 0.0
      %v892 = vmax.f32 %v832, 0.0
      %v893 = vmax.f32 %v835, 0.0
      %v894 = vmax.f32 %v840, 0.0
      %v895 = vmax.f32 %v843, 0.0
      %v896 = vpack.c.bf16 %v847, %v846
      %v897 = vpack.c.bf16 %v849, %v848
      %v898 = vpack.c.bf16 %v851, %v850
      %v899 = vpack.c.bf16 %v853, %v852
      %v900 = vpack.c.bf16 %v855, %v854
      %v901 = vpack.c.bf16 %v857, %v856
      %v902 = vpack.c.bf16 %v859, %v858
      %v903 = vpack.c.bf16 %v861, %v860
      %v904 = vpack.c.bf16 %v863, %v862
      %v905 = vpack.c.bf16 %v865, %v864
      %v906 = vpack.c.bf16 %v867, %v866
      %v907 = vpack.c.bf16 %v869, %v868
      %v908 = vpack.c.bf16 %v871, %v870
      %v909 = vpack.c.bf16 %v873, %v872
      %v910 = vpack.c.bf16 %v875, %v874
      %v911 = vpack.c.bf16 %v877, %v876
      %v912 = vpack.c.bf16 %v879, %v878
      %v913 = vpack.c.bf16 %v881, %v880
      %v914 = vpack.c.bf16 %v883, %v882
      %v915 = vpack.c.bf16 %v885, %v884
      %v916 = vpack.c.bf16 %v887, %v886
      %v917 = vpack.c.bf16 %v889, %v888
      %v918 = vpack.c.bf16 %v891, %v890
      %v919 = vpack.c.bf16 %v893, %v892
      %v920 = vpack.c.bf16 %v895, %v894
      %v946 = vunpack.c.l.b16 %v896
      %v947 = vunpack.c.h.b16 %v896
      %v948 = vunpack.c.l.b16 %v897
      %v949 = vunpack.c.h.b16 %v897
      %v950 = vunpack.c.l.b16 %v898
      %v951 = vunpack.c.h.b16 %v898
      %v952 = vunpack.c.l.b16 %v899
      %v953 = vunpack.c.h.b16 %v899
      %v954 = vunpack.c.l.b16 %v900
      %v955 = vunpack.c.h.b16 %v900
      %v956 = vunpack.c.l.b16 %v901
      %v957 = vunpack.c.h.b16 %v901
      %v958 = vunpack.c.l.b16 %v902
      %v959 = vunpack.c.h.b16 %v902
      %v960 = vunpack.c.l.b16 %v903
      %v961 = vunpack.c.h.b16 %v903
      %v962 = vunpack.c.l.b16 %v904
      %v963 = vunpack.c.h.b16 %v904
      %v964 = vunpack.c.l.b16 %v905
      %v965 = vunpack.c.h.b16 %v905
      %v966 = vunpack.c.l.b16 %v906
      %v967 = vunpack.c.h.b16 %v906
      %v968 = vunpack.c.l.b16 %v907
      %v969 = vunpack.c.h.b16 %v907
      %v970 = vunpack.c.l.b16 %v908
      %v971 = vunpack.c.h.b16 %v908
      %v972 = vunpack.c.l.b16 %v909
      %v973 = vunpack.c.h.b16 %v909
      %v974 = vunpack.c.l.b16 %v910
      %v975 = vunpack.c.h.b16 %v910
      %v976 = vunpack.c.l.b16 %v911
      %v977 = vunpack.c.h.b16 %v911
      %v978 = vunpack.c.l.b16 %v912
      %v979 = vunpack.c.h.b16 %v912
      %v980 = vunpack.c.l.b16 %v913
      %v981 = vunpack.c.h.b16 %v913
      %v982 = vunpack.c.l.b16 %v914
      %v983 = vunpack.c.h.b16 %v914
      %v984 = vunpack.c.l.b16 %v915
      %v985 = vunpack.c.h.b16 %v915
      %v986 = vunpack.c.l.b16 %v916
      %v987 = vunpack.c.h.b16 %v916
      %v988 = vunpack.c.l.b16 %v917
      %v989 = vunpack.c.h.b16 %v917
      %v990 = vunpack.c.l.b16 %v918
      %v991 = vunpack.c.h.b16 %v918
      %v992 = vunpack.c.l.b16 %v919
      %v993 = vunpack.c.h.b16 %v919
      %v994 = vunpack.c.l.b16 %v920
      %v995 = vunpack.c.h.b16 %v920
      %v996 = vpack.c.b16 %v946, %v946
      %v997 = vpack.c.b16 %v947, %v947
      %v998 = vpack.c.b16 %v948, %v948
      %v999 = vpack.c.b16 %v949, %v949
      %v1000 = vpack.c.b16 %v950, %v950
      %v1001 = vpack.c.b16 %v951, %v951
      %v1002 = vpack.c.b16 %v952, %v952
      %v1003 = vpack.c.b16 %v953, %v953
      %v1004 = vpack.c.b16 %v954, %v954
      %v1005 = vpack.c.b16 %v955, %v955
      %v1006 = vpack.c.b16 %v956, %v956
      %v1007 = vpack.c.b16 %v957, %v957
      %v1008 = vpack.c.b16 %v958, %v958
      %v1009 = vpack.c.b16 %v959, %v959
      %v1010 = vpack.c.b16 %v960, %v960
      %v1011 = vpack.c.b16 %v961, %v961
      %v1012 = vpack.c.b16 %v962, %v962
      %v1013 = vpack.c.b16 %v963, %v963
      %v1014 = vpack.c.b16 %v964, %v964
      %v1015 = vpack.c.b16 %v965, %v965
      %v1016 = vpack.c.b16 %v966, %v966
      %v1017 = vpack.c.b16 %v967, %v967
      %v1018 = vpack.c.b16 %v968, %v968
      %v1019 = vpack.c.b16 %v969, %v969
      %v1020 = vpack.c.b16 %v970, %v970
      %v1021 = vpack.c.b16 %v971, %v971
      %v1022 = vpack.c.b16 %v972, %v972
      %v1023 = vpack.c.b16 %v973, %v973
      %v1024 = vpack.c.b16 %v974, %v974
      %v1025 = vpack.c.b16 %v975, %v975
      %v1026 = vpack.c.b16 %v976, %v976
      %v1027 = vpack.c.b16 %v977, %v977
      %v1028 = vpack.c.b16 %v978, %v978
      %v1029 = vpack.c.b16 %v979, %v979
      %v1030 = vpack.c.b16 %v980, %v980
      %v1031 = vpack.c.b16 %v981, %v981
      %v1032 = vpack.c.b16 %v982, %v982
      %v1033 = vpack.c.b16 %v983, %v983
      %v1034 = vpack.c.b16 %v984, %v984
      %v1035 = vpack.c.b16 %v985, %v985
      %v1036 = vpack.c.b16 %v986, %v986
      %v1037 = vpack.c.b16 %v987, %v987
      %v1038 = vpack.c.b16 %v988, %v988
      %v1039 = vpack.c.b16 %v989, %v989
      %v1040 = vpack.c.b16 %v990, %v990
      %v1041 = vpack.c.b16 %v991, %v991
      %v1042 = vpack.c.b16 %v992, %v992
      %v1043 = vpack.c.b16 %v993, %v993
      %v1044 = vpack.c.b16 %v994, %v994
      %v1045 = vpack.c.b16 %v995, %v995
      %1096 = vst [vmem:[%s175] sm:$0xf] %v996
      %1097 = vst [vmem:[%s175 + $0x4] sm:$0xf] %v997
      %1098 = vst [vmem:[%s175 + $0x8] sm:$0xf] %v998
      %1099 = vst [vmem:[%s175 + $0xc] sm:$0xf] %v999
      %1100 = vst [vmem:[%s175 + $0x10] sm:$0xf] %v1000
      %1101 = vst [vmem:[%s175 + $0x14] sm:$0xf] %v1001
      %1102 = vst [vmem:[%s175 + $0x18] sm:$0xf] %v1002
      %1103 = vst [vmem:[%s175 + $0x1c] sm:$0xf] %v1003
      %1104 = vst [vmem:[%s175 + $0x20] sm:$0xf] %v1004
      %1105 = vst [vmem:[%s175 + $0x24] sm:$0xf] %v1005
      %1106 = vst [vmem:[%s175 + $0x28] sm:$0xf] %v1006
      %1107 = vst [vmem:[%s175 + $0x2c] sm:$0xf] %v1007
      %1108 = vst [vmem:[%s175 + $0x30] sm:$0xf] %v1008
      %1109 = vst [vmem:[%s175 + $0x34] sm:$0xf] %v1009
      %1110 = vst [vmem:[%s175 + $0x38] sm:$0xf] %v1010
      %1111 = vst [vmem:[%s175 + $0x3c] sm:$0xf] %v1011
      %1112 = vst [vmem:[%s175 + $0x40] sm:$0xf] %v1012
      %1113 = vst [vmem:[%s175 + $0x44] sm:$0xf] %v1013
      %1114 = vst [vmem:[%s175 + $0x48] sm:$0xf] %v1014
      %1115 = vst [vmem:[%s175 + $0x4c] sm:$0xf] %v1015
      %1116 = vst [vmem:[%s175 + $0x50] sm:$0xf] %v1016
      %1117 = vst [vmem:[%s175 + $0x54] sm:$0xf] %v1017
      %1118 = vst [vmem:[%s175 + $0x58] sm:$0xf] %v1018
      %1119 = vst [vmem:[%s175 + $0x5c] sm:$0xf] %v1019
      %1120 = vst [vmem:[%s175 + $0x60] sm:$0xf] %v1020
      %1121 = vst [vmem:[%s175 + $0x64] sm:$0xf] %v1021
      %1122 = vst [vmem:[%s175 + $0x68] sm:$0xf] %v1022
      %1123 = vst [vmem:[%s175 + $0x6c] sm:$0xf] %v1023
      %1124 = vst [vmem:[%s175 + $0x70] sm:$0xf] %v1024
      %1125 = vst [vmem:[%s175 + $0x74] sm:$0xf] %v1025
      %1126 = vst [vmem:[%s175 + $0x78] sm:$0xf] %v1026
      %1127 = vst [vmem:[%s175 + $0x7c] sm:$0xf] %v1027
      %1128 = vst [vmem:[%s175 + $0x80] sm:$0xf] %v1028
      %1129 = vst [vmem:[%s175 + $0x84] sm:$0xf] %v1029
      %1130 = vst [vmem:[%s175 + $0x88] sm:$0xf] %v1030
      %1131 = vst [vmem:[%s175 + $0x8c] sm:$0xf] %v1031
      %1132 = vst [vmem:[%s175 + $0x90] sm:$0xf] %v1032
      %1133 = vst [vmem:[%s175 + $0x94] sm:$0xf] %v1033
      %1134 = vst [vmem:[%s175 + $0x98] sm:$0xf] %v1034
      %1135 = vst [vmem:[%s175 + $0x9c] sm:$0xf] %v1035
      %1136 = vst [vmem:[%s175 + $0xa0] sm:$0xf] %v1036
      %1137 = vst [vmem:[%s175 + $0xa4] sm:$0xf] %v1037
      %1138 = vst [vmem:[%s175 + $0xa8] sm:$0xf] %v1038
      %1139 = vst [vmem:[%s175 + $0xac] sm:$0xf] %v1039
      %1140 = vst [vmem:[%s175 + $0xb0] sm:$0xf] %v1040
      %1141 = vst [vmem:[%s175 + $0xb4] sm:$0xf] %v1041
      %1142 = vst [vmem:[%s175 + $0xb8] sm:$0xf] %v1042
      %1143 = vst [vmem:[%s175 + $0xbc] sm:$0xf] %v1043
      %1144 = vst [vmem:[%s175 + $0xc0] sm:$0xf] %v1044
      %1145 = vst [vmem:[%s175 + $0xc4] sm:$0xf] %v1045
      %s1146 = smul.u32 50, %s14
      %p1147 = scmp.lt.s32.totalorder %s1146, 99
      %s1148 = scalar_select %p1147, %s1146, 99
      %s1149 = smul.addr %s1148, 4
      %s1150 = scalar_lea.vmem %s3, %s1149
      // Predicated region
      $region33: #{_lambda_.4} parent=31 // pred_check
        %p1151 = pneg %p100
      $region34: #{_lambda_.4} parent=31 // pred_check_branch
        %1153 = sbr.rel (%p1151) target = $region36
      $region35: #{_lambda_.4} parent=31 // pred_region
        %s1154 = smul.u32 50, %s14
      $region36: #{_lambda_.4} parent=31 // pred_fallthru
        _
    $region32: #{_lambda_.4} parent=5 // pred_fallthru
      _
    %p1155 = scmp.le.s32.totalorder 2, %s9
    // Predicated region
    $region37: #{_lambda_.4} parent=5 // pred_check
      %p1156 = pneg %p1155
    $region38: #{_lambda_.4} parent=5 // pred_check_branch
      %1158 = sbr.rel (%p1156) target = $region40
    $region39: #{_lambda_.4} parent=5 // pred_region
      %s1159 = ssub.s32 %s9, 2
      // Predicated region
      $region41: #{_lambda_.4} parent=39 // pred_check
        %p1160 = pneg %p106
      $region42: #{_lambda_.4} parent=39 // pred_check_branch
        %1162 = sbr.rel (%p1160) target = $region44
      $region43: #{_lambda_.4} parent=39 // pred_region
        %s1163 = smul.u32 50, %s15
        %p1164 = scmp.lt.s32.totalorder %s1163, 99
        %s1165 = scalar_select %p1164, %s1163, 99
        %s1166 = smul.addr %s1165, 4
        %s1167 = scalar_lea.vmem %s3, %s1166
      $region44: #{_lambda_.4} parent=39 // pred_fallthru
        _
    $region40: #{_lambda_.4} parent=5 // pred_fallthru
      _
  $region6: #{_lambda_.4} parent=0 // loop_footer
    %s13 = sadd.s32 1, %s9
  $region7: #{_lambda_.4} parent=0 // loop_footer_branch
    %8 = sbr.rel target = $region3
  $region8: #{_lambda_.4} parent=0 // loop_exit
    _

// kernel: _lambda_.5
$region0: #{_lambda_.5}
  #allocation0 [shape = 'u32[]', space=smem, size = 0x4, offset = 0x4, fixed_abs, tag = 'smem constant byte address 0x4 - core index']
  #allocation1 [shape = 'u32[144,128]{1,0:T(1,128)}', space=vmem, size = 0x12000, scoped, tag = 'internal scratch']
  %s0 = inlined_call_operand.vmem [shape: bf16[162,512], index: 0, kind: input, shape index: {}]
  %s1 = inlined_call_operand.vmem [shape: bf16[512,128], index: 1, kind: input, shape index: {}]
  %s2 = inlined_call_operand.vmem [shape: f32[1,128], index: 2, kind: input, shape index: {}]
  %s3 = inlined_call_operand.vmem [shape: bf16[162,128], index: 3, kind: output, shape index: {}]
  %s4 = sld [smem:[#allocation0]]
  $region22: #{_lambda_.5} parent=0
    _
  %s6 = ssub.s32 1, %s4
  %s7 = scalar_select 0, %s6, %s4
  // Predicated region
  $region2: #{_lambda_.5} parent=0 // pred_check
    _
  $region3: #{_lambda_.5} parent=0 // pred_check_branch
    %9 = sbr.rel (0) target = $region5
  $region4: #{_lambda_.5} parent=0 // pred_region
    _
  $region5: #{_lambda_.5} parent=0 // pred_fallthru
    _
  // Predicated region
  $region6: #{_lambda_.5} parent=0 // pred_check
    _
  $region7: #{_lambda_.5} parent=0 // pred_check_branch
    %11 = sbr.rel (0) target = $region9
  $region8: #{_lambda_.5} parent=0 // pred_region
    _
  $region9: #{_lambda_.5} parent=0 // pred_fallthru
    _
  // Predicated region
  $region10: #{_lambda_.5} parent=0 // pred_check
    _
  $region11: #{_lambda_.5} parent=0 // pred_check_branch
    %13 = sbr.rel (0) target = $region13
  $region12: #{_lambda_.5} parent=0 // pred_region
    _
  $region13: #{_lambda_.5} parent=0 // pred_fallthru
    _
  %v15 = vld [vmem:[%s0] sm:$0xff]
  %v16 = vld [vmem:[%s0 + $0x8] sm:$0xff]
  %v17 = vld [vmem:[%s0 + $0x10] sm:$0xff]
  %v18 = vld [vmem:[%s0 + $0x18] sm:$0xff]
  %v19 = vld [vmem:[%s0 + $0x20] sm:$0xff]
  %v20 = vld [vmem:[%s0 + $0x28] sm:$0xff]
  %v21 = vld [vmem:[%s0 + $0x30] sm:$0xff]
  %v22 = vld [vmem:[%s0 + $0x38] sm:$0xff]
  %v23 = vld [vmem:[%s0 + $0x40] sm:$0xff]
  %v24 = vld [vmem:[%s0 + $0x48] sm:$0xff]
  %v25 = vld [vmem:[%s0 + $0x50] sm:$0xff]
  %v26 = vld [vmem:[%s0 + $0x58] sm:$0xff]
  %v27 = vld [vmem:[%s0 + $0x60] sm:$0xff]
  %v28 = vld [vmem:[%s0 + $0x68] sm:$0xff]
  %v29 = vld [vmem:[%s0 + $0x70] sm:$0xff]
  %v30 = vld [vmem:[%s0 + $0x78] sm:$0xff]
  %v31 = vld [vmem:[%s0 + $0x80] sm:$0xff]
  %v32 = vld [vmem:[%s0 + $0x88] sm:$0xff]
  %v33 = vld [vmem:[%s0 + $0x90] sm:$0xff]
  %v34 = vld [vmem:[%s0 + $0x98] sm:$0xff]
  %v35 = vld [vmem:[%s0 + $0xa0] sm:$0xff]
  %v36 = vld [vmem:[%s0 + $0xa8] sm:$0xff]
  %v37 = vld [vmem:[%s0 + $0xb0] sm:$0xff]
  %v38 = vld [vmem:[%s0 + $0xb8] sm:$0xff]
  %v39 = vld [vmem:[%s0 + $0xc0] sm:$0xff]
  %v40 = vld [vmem:[%s0 + $0xc8] sm:$0xff]
  %v41 = vld [vmem:[%s0 + $0xd0] sm:$0xff]
  %v42 = vld [vmem:[%s0 + $0xd8] sm:$0xff]
  %v43 = vld [vmem:[%s0 + $0xe0] sm:$0xff]
  %v44 = vld [vmem:[%s0 + $0xe8] sm:$0xff]
  %v45 = vld [vmem:[%s0 + $0xf0] sm:$0xff]
  %v46 = vld [vmem:[%s0 + $0xf8] sm:$0xff]
  %v47 = vld [vmem:[%s0 + $0x100] sm:$0xff]
  %v48 = vld [vmem:[%s0 + $0x108] sm:$0xff]
  %v49 = vld [vmem:[%s0 + $0x110] sm:$0xff]
  %v50 = vld [vmem:[%s0 + $0x118] sm:$0xff]
  %v51 = vld [vmem:[%s0 + $0x120] sm:$0xff]
  %v52 = vld [vmem:[%s0 + $0x128] sm:$0xff]
  %v53 = vld [vmem:[%s0 + $0x130] sm:$0xff]
  %v54 = vld [vmem:[%s0 + $0x138] sm:$0xff]
  %v55 = vld [vmem:[%s0 + $0x140] sm:$0x11]
  %v56 = vld [vmem:[%s0 + $0x148] sm:$0x11]
  %v57 = vld [vmem:[%s1] sm:$0xf]
  %v58 = vld [vmem:[%s1 + $0x4] sm:$0xf]
  %v59 = vld [vmem:[%s1 + $0x8] sm:$0xf]
  %v60 = vld [vmem:[%s1 + $0xc] sm:$0xf]
  %v61 = vld [vmem:[%s1 + $0x10] sm:$0xf]
  %v62 = vld [vmem:[%s1 + $0x14] sm:$0xf]
  %v63 = vld [vmem:[%s1 + $0x18] sm:$0xf]
  %v64 = vld [vmem:[%s1 + $0x1c] sm:$0xf]
  %v65 = vld [vmem:[%s1 + $0x20] sm:$0xf]
  %v66 = vld [vmem:[%s1 + $0x24] sm:$0xf]
  %v67 = vld [vmem:[%s1 + $0x28] sm:$0xf]
  %v68 = vld [vmem:[%s1 + $0x2c] sm:$0xf]
  %v69 = vld [vmem:[%s1 + $0x30] sm:$0xf]
  %v70 = vld [vmem:[%s1 + $0x34] sm:$0xf]
  %v71 = vld [vmem:[%s1 + $0x38] sm:$0xf]
  %v72 = vld [vmem:[%s1 + $0x3c] sm:$0xf]
  %v73 = vld [vmem:[%s1 + $0x40] sm:$0xf]
  %v74 = vld [vmem:[%s1 + $0x44] sm:$0xf]
  %v75 = vld [vmem:[%s1 + $0x48] sm:$0xf]
  %v76 = vld [vmem:[%s1 + $0x4c] sm:$0xf]
  %v77 = vld [vmem:[%s1 + $0x50] sm:$0xf]
  %v78 = vld [vmem:[%s1 + $0x54] sm:$0xf]
  %v79 = vld [vmem:[%s1 + $0x58] sm:$0xf]
  %v80 = vld [vmem:[%s1 + $0x5c] sm:$0xf]
  %v81 = vld [vmem:[%s1 + $0x60] sm:$0xf]
  %v82 = vld [vmem:[%s1 + $0x64] sm:$0xf]
  %v83 = vld [vmem:[%s1 + $0x68] sm:$0xf]
  %v84 = vld [vmem:[%s1 + $0x6c] sm:$0xf]
  %v85 = vld [vmem:[%s1 + $0x70] sm:$0xf]
  %v86 = vld [vmem:[%s1 + $0x74] sm:$0xf]
  %v87 = vld [vmem:[%s1 + $0x78] sm:$0xf]
  %v88 = vld [vmem:[%s1 + $0x7c] sm:$0xf]
  %v89 = vld [vmem:[%s1 + $0x80] sm:$0xf]
  %v90 = vld [vmem:[%s1 + $0x84] sm:$0xf]
  %v91 = vld [vmem:[%s1 + $0x88] sm:$0xf]
  %v92 = vld [vmem:[%s1 + $0x8c] sm:$0xf]
  %v93 = vld [vmem:[%s1 + $0x90] sm:$0xf]
  %v94 = vld [vmem:[%s1 + $0x94] sm:$0xf]
  %v95 = vld [vmem:[%s1 + $0x98] sm:$0xf]
  %v96 = vld [vmem:[%s1 + $0x9c] sm:$0xf]
  %v97 = vld [vmem:[%s1 + $0xa0] sm:$0xf]
  %v98 = vld [vmem:[%s1 + $0xa4] sm:$0xf]
  %v99 = vld [vmem:[%s1 + $0xa8] sm:$0xf]
  %v100 = vld [vmem:[%s1 + $0xac] sm:$0xf]
  %v101 = vld [vmem:[%s1 + $0xb0] sm:$0xf]
  %v102 = vld [vmem:[%s1 + $0xb4] sm:$0xf]
  %v103 = vld [vmem:[%s1 + $0xb8] sm:$0xf]
  %v104 = vld [vmem:[%s1 + $0xbc] sm:$0xf]
  %v105 = vld [vmem:[%s1 + $0xc0] sm:$0xf]
  %v106 = vld [vmem:[%s1 + $0xc4] sm:$0xf]
  %v107 = vld [vmem:[%s1 + $0xc8] sm:$0xf]
  %v108 = vld [vmem:[%s1 + $0xcc] sm:$0xf]
  %v109 = vld [vmem:[%s1 + $0xd0] sm:$0xf]
  %v110 = vld [vmem:[%s1 + $0xd4] sm:$0xf]
  %v111 = vld [vmem:[%s1 + $0xd8] sm:$0xf]
  %v112 = vld [vmem:[%s1 + $0xdc] sm:$0xf]
  %v113 = vld [vmem:[%s1 + $0xe0] sm:$0xf]
  %v114 = vld [vmem:[%s1 + $0xe4] sm:$0xf]
  %v115 = vld [vmem:[%s1 + $0xe8] sm:$0xf]
  %v116 = vld [vmem:[%s1 + $0xec] sm:$0xf]
  %v117 = vld [vmem:[%s1 + $0xf0] sm:$0xf]
  %v118 = vld [vmem:[%s1 + $0xf4] sm:$0xf]
  %v119 = vld [vmem:[%s1 + $0xf8] sm:$0xf]
  %v120 = vld [vmem:[%s1 + $0xfc] sm:$0xf]
  %v121 = vld [vmem:[%s2] sm:$0x1]
  %v123 = vlaneseq
  %v124 = vshrl.u32 %v123, 7
  %v125 = vsub.s32 0, %v124
  %v126 = vrot.slane %v121, %v125
  %v170 = vunpack.c.l.b16 %v15
  %v171 = vunpack.c.h.b16 %v15
  %v172 = vunpack.c.l.b16 %v16
  %v173 = vunpack.c.h.b16 %v16
  %v174 = vunpack.c.l.b16 %v17
  %v175 = vunpack.c.h.b16 %v17
  %v176 = vunpack.c.l.b16 %v18
  %v177 = vunpack.c.h.b16 %v18
  %v178 = vunpack.c.l.b16 %v19
  %v179 = vunpack.c.h.b16 %v19
  %v180 = vunpack.c.l.b16 %v20
  %v181 = vunpack.c.h.b16 %v20
  %v182 = vunpack.c.l.b16 %v21
  %v183 = vunpack.c.h.b16 %v21
  %v184 = vunpack.c.l.b16 %v22
  %v185 = vunpack.c.h.b16 %v22
  %v186 = vunpack.c.l.b16 %v23
  %v187 = vunpack.c.h.b16 %v23
  %v188 = vunpack.c.l.b16 %v24
  %v189 = vunpack.c.h.b16 %v24
  %v190 = vunpack.c.l.b16 %v25
  %v191 = vunpack.c.h.b16 %v25
  %v192 = vunpack.c.l.b16 %v26
  %v193 = vunpack.c.h.b16 %v26
  %v194 = vunpack.c.l.b16 %v27
  %v195 = vunpack.c.h.b16 %v27
  %v196 = vunpack.c.l.b16 %v28
  %v197 = vunpack.c.h.b16 %v28
  %v198 = vunpack.c.l.b16 %v29
  %v199 = vunpack.c.h.b16 %v29
  %v200 = vunpack.c.l.b16 %v30
  %v201 = vunpack.c.h.b16 %v30
  %v202 = vunpack.c.l.b16 %v31
  %v203 = vunpack.c.h.b16 %v31
  %v204 = vunpack.c.l.b16 %v32
  %v205 = vunpack.c.h.b16 %v32
  %v206 = vunpack.c.l.b16 %v33
  %v207 = vunpack.c.h.b16 %v33
  %v208 = vunpack.c.l.b16 %v34
  %v209 = vunpack.c.h.b16 %v34
  %v210 = vunpack.c.l.b16 %v35
  %v211 = vunpack.c.h.b16 %v35
  %v212 = vunpack.c.l.b16 %v36
  %v213 = vunpack.c.h.b16 %v36
  %v214 = vunpack.c.l.b16 %v37
  %v215 = vunpack.c.h.b16 %v37
  %v216 = vunpack.c.l.b16 %v38
  %v217 = vunpack.c.h.b16 %v38
  %v218 = vunpack.c.l.b16 %v39
  %v219 = vunpack.c.h.b16 %v39
  %v220 = vunpack.c.l.b16 %v40
  %v221 = vunpack.c.h.b16 %v40
  %v222 = vunpack.c.l.b16 %v41
  %v223 = vunpack.c.h.b16 %v41
  %v224 = vunpack.c.l.b16 %v42
  %v225 = vunpack.c.h.b16 %v42
  %v226 = vunpack.c.l.b16 %v43
  %v227 = vunpack.c.h.b16 %v43
  %v228 = vunpack.c.l.b16 %v44
  %v229 = vunpack.c.h.b16 %v44
  %v230 = vunpack.c.l.b16 %v45
  %v231 = vunpack.c.h.b16 %v45
  %v232 = vunpack.c.l.b16 %v46
  %v233 = vunpack.c.h.b16 %v46
  %v234 = vunpack.c.l.b16 %v47
  %v235 = vunpack.c.h.b16 %v47
  %v236 = vunpack.c.l.b16 %v48
  %v237 = vunpack.c.h.b16 %v48
  %v238 = vunpack.c.l.b16 %v49
  %v239 = vunpack.c.h.b16 %v49
  %v240 = vunpack.c.l.b16 %v50
  %v241 = vunpack.c.h.b16 %v50
  %v242 = vunpack.c.l.b16 %v51
  %v243 = vunpack.c.h.b16 %v51
  %v244 = vunpack.c.l.b16 %v52
  %v245 = vunpack.c.h.b16 %v52
  %v246 = vunpack.c.l.b16 %v53
  %v247 = vunpack.c.h.b16 %v53
  %v248 = vunpack.c.l.b16 %v54
  %v249 = vunpack.c.h.b16 %v54
  %v250 = vunpack.c.l.b16 %v55
  %v251 = vunpack.c.h.b16 %v55
  %v252 = vunpack.c.l.b16 %v56
  %v253 = vunpack.c.h.b16 %v56
  %v254 = vpack.c.b16 %v174, %v170
  %v255 = vpack.c.b16 %v175, %v171
  %v256 = vpack.c.b16 %v176, %v172
  %v257 = vpack.c.b16 %v177, %v173
  %v258 = vpack.c.b16 %v182, %v178
  %v259 = vpack.c.b16 %v183, %v179
  %v260 = vpack.c.b16 %v184, %v180
  %v261 = vpack.c.b16 %v185, %v181
  %v262 = vpack.c.b16 %v190, %v186
  %v263 = vpack.c.b16 %v191, %v187
  %v264 = vpack.c.b16 %v192, %v188
  %v265 = vpack.c.b16 %v193, %v189
  %v266 = vpack.c.b16 %v198, %v194
  %v267 = vpack.c.b16 %v199, %v195
  %v268 = vpack.c.b16 %v200, %v196
  %v269 = vpack.c.b16 %v201, %v197
  %v270 = vpack.c.b16 %v206, %v202
  %v271 = vpack.c.b16 %v207, %v203
  %v272 = vpack.c.b16 %v208, %v204
  %v273 = vpack.c.b16 %v209, %v205
  %v274 = vpack.c.b16 %v214, %v210
  %v275 = vpack.c.b16 %v215, %v211
  %v276 = vpack.c.b16 %v216, %v212
  %v277 = vpack.c.b16 %v217, %v213
  %v278 = vpack.c.b16 %v222, %v218
  %v279 = vpack.c.b16 %v223, %v219
  %v280 = vpack.c.b16 %v224, %v220
  %v281 = vpack.c.b16 %v225, %v221
  %v282 = vpack.c.b16 %v230, %v226
  %v283 = vpack.c.b16 %v231, %v227
  %v284 = vpack.c.b16 %v232, %v228
  %v285 = vpack.c.b16 %v233, %v229
  %v286 = vpack.c.b16 %v238, %v234
  %v287 = vpack.c.b16 %v239, %v235
  %v288 = vpack.c.b16 %v240, %v236
  %v289 = vpack.c.b16 %v241, %v237
  %v290 = vpack.c.b16 %v246, %v242
  %v291 = vpack.c.b16 %v247, %v243
  %v292 = vpack.c.b16 %v248, %v244
  %v293 = vpack.c.b16 %v249, %v245
  %v294 = vpack.c.b16 %v250, %v250
  %v295 = vpack.c.b16 %v251, %v251
  %v296 = vpack.c.b16 %v252, %v252
  %v297 = vpack.c.b16 %v253, %v253
  %v406 = vunpack.c.l.b16 %v57
  %v407 = vunpack.c.l.b16 %v58
  %v408 = vunpack.c.l.b16 %v59
  %v409 = vunpack.c.l.b16 %v60
  %v410 = vunpack.c.l.b16 %v61
  %v411 = vunpack.c.l.b16 %v62
  %v412 = vunpack.c.l.b16 %v63
  %v413 = vunpack.c.l.b16 %v64
  %v414 = vunpack.c.l.b16 %v65
  %v415 = vunpack.c.l.b16 %v66
  %v416 = vunpack.c.l.b16 %v67
  %v417 = vunpack.c.l.b16 %v68
  %v418 = vunpack.c.l.b16 %v69
  %v419 = vunpack.c.l.b16 %v70
  %v420 = vunpack.c.l.b16 %v71
  %v421 = vunpack.c.l.b16 %v72
  %v422 = vunpack.c.l.b16 %v73
  %v423 = vunpack.c.l.b16 %v74
  %v424 = vunpack.c.l.b16 %v75
  %v425 = vunpack.c.l.b16 %v76
  %v426 = vunpack.c.l.b16 %v77
  %v427 = vunpack.c.l.b16 %v78
  %v428 = vunpack.c.l.b16 %v79
  %v429 = vunpack.c.l.b16 %v80
  %v430 = vunpack.c.l.b16 %v81
  %v431 = vunpack.c.l.b16 %v82
  %v432 = vunpack.c.l.b16 %v83
  %v433 = vunpack.c.l.b16 %v84
  %v434 = vunpack.c.l.b16 %v85
  %v435 = vunpack.c.l.b16 %v86
  %v436 = vunpack.c.l.b16 %v87
  %v437 = vunpack.c.l.b16 %v88
  %v438 = vunpack.c.l.b16 %v89
  %v439 = vunpack.c.l.b16 %v90
  %v440 = vunpack.c.l.b16 %v91
  %v441 = vunpack.c.l.b16 %v92
  %v442 = vunpack.c.l.b16 %v93
  %v443 = vunpack.c.l.b16 %v94
  %v444 = vunpack.c.l.b16 %v95
  %v445 = vunpack.c.l.b16 %v96
  %v446 = vunpack.c.l.b16 %v97
  %v447 = vunpack.c.l.b16 %v98
  %v448 = vunpack.c.l.b16 %v99
  %v449 = vunpack.c.l.b16 %v100
  %v450 = vunpack.c.l.b16 %v101
  %v451 = vunpack.c.l.b16 %v102
  %v452 = vunpack.c.l.b16 %v103
  %v453 = vunpack.c.l.b16 %v104
  %v454 = vunpack.c.l.b16 %v105
  %v455 = vunpack.c.l.b16 %v106
  %v456 = vunpack.c.l.b16 %v107
  %v457 = vunpack.c.l.b16 %v108
  %v458 = vunpack.c.l.b16 %v109
  %v459 = vunpack.c.l.b16 %v110
  %v460 = vunpack.c.l.b16 %v111
  %v461 = vunpack.c.l.b16 %v112
  %v462 = vunpack.c.l.b16 %v113
  %v463 = vunpack.c.l.b16 %v114
  %v464 = vunpack.c.l.b16 %v115
  %v465 = vunpack.c.l.b16 %v116
  %v466 = vunpack.c.l.b16 %v117
  %v467 = vunpack.c.l.b16 %v118
  %v468 = vunpack.c.l.b16 %v119
  %v469 = vunpack.c.l.b16 %v120
  %v470 = vpack.c.b16 %v407, %v406
  %v471 = vpack.c.b16 %v409, %v408
  %v472 = vpack.c.b16 %v411, %v410
  %v473 = vpack.c.b16 %v413, %v412
  %v474 = vpack.c.b16 %v415, %v414
  %v475 = vpack.c.b16 %v417, %v416
  %v476 = vpack.c.b16 %v419, %v418
  %v477 = vpack.c.b16 %v421, %v420
  %v478 = vpack.c.b16 %v423, %v422
  %v479 = vpack.c.b16 %v425, %v424
  %v480 = vpack.c.b16 %v427, %v426
  %v481 = vpack.c.b16 %v429, %v428
  %v482 = vpack.c.b16 %v431, %v430
  %v483 = vpack.c.b16 %v433, %v432
  %v484 = vpack.c.b16 %v435, %v434
  %v485 = vpack.c.b16 %v437, %v436
  %v486 = vpack.c.b16 %v439, %v438
  %v487 = vpack.c.b16 %v441, %v440
  %v488 = vpack.c.b16 %v443, %v442
  %v489 = vpack.c.b16 %v445, %v444
  %v490 = vpack.c.b16 %v447, %v446
  %v491 = vpack.c.b16 %v449, %v448
  %v492 = vpack.c.b16 %v451, %v450
  %v493 = vpack.c.b16 %v453, %v452
  %v494 = vpack.c.b16 %v455, %v454
  %v495 = vpack.c.b16 %v457, %v456
  %v496 = vpack.c.b16 %v459, %v458
  %v497 = vpack.c.b16 %v461, %v460
  %v498 = vpack.c.b16 %v463, %v462
  %v499 = vpack.c.b16 %v465, %v464
  %v500 = vpack.c.b16 %v467, %v466
  %v501 = vpack.c.b16 %v469, %v468
  %534 = vmatprep.subr.bf16.mxu0 0
  %535 = vmatpush1.bf16.msra.mxu0 %v470
  %536 = vmatprep.subr.bf16.mxu0 0
  %537 = vmatpush1.bf16.msra.mxu0 %v471
  %538 = vmatprep.subr.bf16.mxu0 0
  %539 = vmatpush1.bf16.msra.mxu0 %v472
  %540 = vmatprep.subr.bf16.mxu0 0
  %541 = vmatpush1.bf16.msra.mxu0 %v473
  %542 = vmatprep.subr.bf16.mxu0 0
  %543 = vmatpush1.bf16.msra.mxu0 %v474
  %544 = vmatprep.subr.bf16.mxu0 0
  %545 = vmatpush1.bf16.msra.mxu0 %v475
  %546 = vmatprep.subr.bf16.mxu0 0
  %547 = vmatpush1.bf16.msra.mxu0 %v476
  %548 = vmatprep.subr.bf16.mxu0 0
  %549 = vmatpush1.bf16.msra.mxu0 %v477
  %550 = vmatprep.subr.bf16.mxu0 0
  %551 = vmatpush1.bf16.msra.mxu0 %v478
  %552 = vmatprep.subr.bf16.mxu0 0
  %553 = vmatpush1.bf16.msra.mxu0 %v479
  %554 = vmatprep.subr.bf16.mxu0 0
  %555 = vmatpush1.bf16.msra.mxu0 %v480
  %556 = vmatprep.subr.bf16.mxu0 0
  %557 = vmatpush1.bf16.msra.mxu0 %v481
  %558 = vmatprep.subr.bf16.mxu0 0
  %559 = vmatpush1.bf16.msra.mxu0 %v482
  %560 = vmatprep.subr.bf16.mxu0 0
  %561 = vmatpush1.bf16.msra.mxu0 %v483
  %562 = vmatprep.subr.bf16.mxu0 0
  %563 = vmatpush1.bf16.msra.mxu0 %v484
  %564 = vmatprep.subr.bf16.mxu0 0
  %565 = vmatpush1.bf16.msra.mxu0 %v485
  %566 = vmatprep.mubr.bf16.mxu0 %v255
  %567 = vmatmul.mubr.bf16.gmra.mrb[0].mxu0 %v254
  %v568 = vpop.f32.mrb[0].mxu0
  %v569 = vadd.f32 %v126, %v568
  %v570 = vpop.f32.mrb[0].mxu0
  %v571 = vpop.f32.mrb[0].mxu0
  %v572 = vadd.f32 %v126, %v571
  %v573 = vpop.f32.mrb[0].mxu0
  %574 = vmatprep.mubr.bf16.mxu0 %v259
  %575 = vmatmul.mubr.bf16.gmra.mrb[0].mxu0 %v258
  %v576 = vpop.f32.mrb[0].mxu0
  %v577 = vadd.f32 %v126, %v576
  %v578 = vpop.f32.mrb[0].mxu0
  %v579 = vpop.f32.mrb[0].mxu0
  %v580 = vadd.f32 %v126, %v579
  %v581 = vpop.f32.mrb[0].mxu0
  %582 = vmatprep.mubr.bf16.mxu0 %v263
  %583 = vmatmul.mubr.bf16.gmra.mrb[0].mxu0 %v262
  %v584 = vpop.f32.mrb[0].mxu0
  %v585 = vadd.f32 %v126, %v584
  %v586 = vpop.f32.mrb[0].mxu0
  %v587 = vpop.f32.mrb[0].mxu0
  %v588 = vadd.f32 %v126, %v587
  %v589 = vpop.f32.mrb[0].mxu0
  %590 = vmatprep.mubr.bf16.mxu0 %v267
  %591 = vmatmul.mubr.bf16.gmra.mrb[0].mxu0 %v266
  %v592 = vpop.f32.mrb[0].mxu0
  %v593 = vadd.f32 %v126, %v592
  %v594 = vpop.f32.mrb[0].mxu0
  %v595 = vpop.f32.mrb[0].mxu0
  %v596 = vadd.f32 %v126, %v595
  %v597 = vpop.f32.mrb[0].mxu0
  %598 = vmatprep.mubr.bf16.mxu0 %v271
  %599 = vmatmul.mubr.bf16.gmra.mrb[0].mxu0 %v270
  %v600 = vpop.f32.mrb[0].mxu0
  %v601 = vadd.f32 %v126, %v600
  %v602 = vpop.f32.mrb[0].mxu0
  %v603 = vpop.f32.mrb[0].mxu0
  %v604 = vadd.f32 %v126, %v603
  %v605 = vpop.f32.mrb[0].mxu0
  %606 = vmatprep.mubr.bf16.mxu0 %v275
  %607 = vmatmul.mubr.bf16.gmra.mrb[0].mxu0 %v274
  %v608 = vpop.f32.mrb[0].mxu0
  %v609 = vadd.f32 %v126, %v608
  %v610 = vpop.f32.mrb[0].mxu0
  %v611 = vpop.f32.mrb[0].mxu0
  %v612 = vadd.f32 %v126, %v611
  %v613 = vpop.f32.mrb[0].mxu0
  %614 = vmatprep.mubr.bf16.mxu0 %v279
  %615 = vmatmul.mubr.bf16.gmra.mrb[0].mxu0 %v278
  %v616 = vpop.f32.mrb[0].mxu0
  %v617 = vadd.f32 %v126, %v616
  %v618 = vpop.f32.mrb[0].mxu0
  %v619 = vpop.f32.mrb[0].mxu0
  %v620 = vadd.f32 %v126, %v619
  %v621 = vpop.f32.mrb[0].mxu0
  %622 = vmatprep.mubr.bf16.mxu0 %v283
  %623 = vmatmul.mubr.bf16.gmra.mrb[0].mxu0 %v282
  %v624 = vpop.f32.mrb[0].mxu0
  %v625 = vadd.f32 %v126, %v624
  %v626 = vpop.f32.mrb[0].mxu0
  %v627 = vpop.f32.mrb[0].mxu0
  %v628 = vadd.f32 %v126, %v627
  %v629 = vpop.f32.mrb[0].mxu0
  %630 = vmatprep.mubr.bf16.mxu0 %v287
  %631 = vmatmul.mubr.bf16.gmra.mrb[0].mxu0 %v286
  %v632 = vpop.f32.mrb[0].mxu0
  %v633 = vadd.f32 %v126, %v632
  %v634 = vpop.f32.mrb[0].mxu0
  %v635 = vpop.f32.mrb[0].mxu0
  %v636 = vadd.f32 %v126, %v635
  %v637 = vpop.f32.mrb[0].mxu0
  %638 = vmatprep.mubr.bf16.mxu0 %v291
  %639 = vmatmul.mubr.bf16.gmra.mrb[0].mxu0 %v290
  %v640 = vpop.f32.mrb[0].mxu0
  %v641 = vadd.f32 %v126, %v640
  %v642 = vpop.f32.mrb[0].mxu0
  %v643 = vpop.f32.mrb[0].mxu0
  %v644 = vadd.f32 %v126, %v643
  %v645 = vpop.f32.mrb[0].mxu0
  %646 = vmatprep.mubr.bf16.mxu0 %v295
  %647 = vmatmul.mubr.bf16.gmra.mrb[0].mxu0 %v294
  %v648 = vpop.f32.mrb[0].mxu0
  %v649 = vadd.f32 %v126, %v648
  %v650 = vpop.f32.mrb[0].mxu0
  %v651 = vpop.f32.mrb[0].mxu0
  %v652 = vpop.f32.mrb[0].mxu0
  %653 = vdwg.mxu0
  %654 = vmatprep.subr.bf16.mxu0 0
  %655 = vmatpush1.bf16.msra.mxu0 %v486
  %656 = vmatprep.subr.bf16.mxu0 0
  %657 = vmatpush1.bf16.msra.mxu0 %v487
  %658 = vmatprep.subr.bf16.mxu0 0
  %659 = vmatpush1.bf16.msra.mxu0 %v488
  %660 = vmatprep.subr.bf16.mxu0 0
  %661 = vmatpush1.bf16.msra.mxu0 %v489
  %662 = vmatprep.subr.bf16.mxu0 0
  %663 = vmatpush1.bf16.msra.mxu0 %v490
  %664 = vmatprep.subr.bf16.mxu0 0
  %665 = vmatpush1.bf16.msra.mxu0 %v491
  %666 = vmatprep.subr.bf16.mxu0 0
  %667 = vmatpush1.bf16.msra.mxu0 %v492
  %668 = vmatprep.subr.bf16.mxu0 0
  %669 = vmatpush1.bf16.msra.mxu0 %v493
  %670 = vmatprep.subr.bf16.mxu0 0
  %671 = vmatpush1.bf16.msra.mxu0 %v494
  %672 = vmatprep.subr.bf16.mxu0 0
  %673 = vmatpush1.bf16.msra.mxu0 %v495
  %674 = vmatprep.subr.bf16.mxu0 0
  %675 = vmatpush1.bf16.msra.mxu0 %v496
  %676 = vmatprep.subr.bf16.mxu0 0
  %677 = vmatpush1.bf16.msra.mxu0 %v497
  %678 = vmatprep.subr.bf16.mxu0 0
  %679 = vmatpush1.bf16.msra.mxu0 %v498
  %680 = vmatprep.subr.bf16.mxu0 0
  %681 = vmatpush1.bf16.msra.mxu0 %v499
  %682 = vmatprep.subr.bf16.mxu0 0
  %683 = vmatpush1.bf16.msra.mxu0 %v500
  %684 = vmatprep.subr.bf16.mxu0 0
  %685 = vmatpush1.bf16.msra.mxu0 %v501
  %686 = vmatprep.mubr.bf16.mxu0 %v257
  %687 = vmatmul.mubr.bf16.gmra.mrb[0].mxu0 %v256
  %v688 = vpop.f32.mrb[0].mxu0
  %v689 = vadd.f32 %v569, %v688
  %v690 = vpop.f32.mrb[0].mxu0
  %v691 = vpop.f32.mrb[0].mxu0
  %v692 = vadd.f32 %v572, %v691
  %v693 = vpop.f32.mrb[0].mxu0
  %694 = vmatprep.mubr.bf16.mxu0 %v261
  %695 = vmatmul.mubr.bf16.gmra.mrb[0].mxu0 %v260
  %v696 = vpop.f32.mrb[0].mxu0
  %v697 = vadd.f32 %v577, %v696
  %v698 = vpop.f32.mrb[0].mxu0
  %v699 = vpop.f32.mrb[0].mxu0
  %v700 = vadd.f32 %v580, %v699
  %v701 = vpop.f32.mrb[0].mxu0
  %702 = vmatprep.mubr.bf16.mxu0 %v265
  %703 = vmatmul.mubr.bf16.gmra.mrb[0].mxu0 %v264
  %v704 = vpop.f32.mrb[0].mxu0
  %v705 = vadd.f32 %v585, %v704
  %v706 = vpop.f32.mrb[0].mxu0
  %v707 = vpop.f32.mrb[0].mxu0
  %v708 = vadd.f32 %v588, %v707
  %v709 = vpop.f32.mrb[0].mxu0
  %710 = vmatprep.mubr.bf16.mxu0 %v269
  %711 = vmatmul.mubr.bf16.gmra.mrb[0].mxu0 %v268
  %v712 = vpop.f32.mrb[0].mxu0
  %v713 = vadd.f32 %v593, %v712
  %v714 = vpop.f32.mrb[0].mxu0
  %v715 = vpop.f32.mrb[0].mxu0
  %v716 = vadd.f32 %v596, %v715
  %v717 = vpop.f32.mrb[0].mxu0
  %718 = vmatprep.mubr.bf16.mxu0 %v273
  %719 = vmatmul.mubr.bf16.gmra.mrb[0].mxu0 %v272
  %v720 = vpop.f32.mrb[0].mxu0
  %v721 = vadd.f32 %v601, %v720
  %v722 = vpop.f32.mrb[0].mxu0
  %v723 = vpop.f32.mrb[0].mxu0
  %v724 = vadd.f32 %v604, %v723
  %v725 = vpop.f32.mrb[0].mxu0
  %726 = vmatprep.mubr.bf16.mxu0 %v277
  %727 = vmatmul.mubr.bf16.gmra.mrb[0].mxu0 %v276
  %v728 = vpop.f32.mrb[0].mxu0
  %v729 = vadd.f32 %v609, %v728
  %v730 = vpop.f32.mrb[0].mxu0
  %v731 = vpop.f32.mrb[0].mxu0
  %v732 = vadd.f32 %v612, %v731
  %v733 = vpop.f32.mrb[0].mxu0
  %734 = vmatprep.mubr.bf16.mxu0 %v281
  %735 = vmatmul.mubr.bf16.gmra.mrb[0].mxu0 %v280
  %v736 = vpop.f32.mrb[0].mxu0
  %v737 = vadd.f32 %v617, %v736
  %v738 = vpop.f32.mrb[0].mxu0
  %v739 = vpop.f32.mrb[0].mxu0
  %v740 = vadd.f32 %v620, %v739
  %v741 = vpop.f32.mrb[0].mxu0
  %742 = vmatprep.mubr.bf16.mxu0 %v285
  %743 = vmatmul.mubr.bf16.gmra.mrb[0].mxu0 %v284
  %v744 = vpop.f32.mrb[0].mxu0
  %v745 = vadd.f32 %v625, %v744
  %v746 = vpop.f32.mrb[0].mxu0
  %v747 = vpop.f32.mrb[0].mxu0
  %v748 = vadd.f32 %v628, %v747
  %v749 = vpop.f32.mrb[0].mxu0
  %750 = vmatprep.mubr.bf16.mxu0 %v289
  %751 = vmatmul.mubr.bf16.gmra.mrb[0].mxu0 %v288
  %v752 = vpop.f32.mrb[0].mxu0
  %v753 = vadd.f32 %v633, %v752
  %v754 = vpop.f32.mrb[0].mxu0
  %v755 = vpop.f32.mrb[0].mxu0
  %v756 = vadd.f32 %v636, %v755
  %v757 = vpop.f32.mrb[0].mxu0
  %758 = vmatprep.mubr.bf16.mxu0 %v293
  %759 = vmatmul.mubr.bf16.gmra.mrb[0].mxu0 %v292
  %v760 = vpop.f32.mrb[0].mxu0
  %v761 = vadd.f32 %v641, %v760
  %v762 = vpop.f32.mrb[0].mxu0
  %v763 = vpop.f32.mrb[0].mxu0
  %v764 = vadd.f32 %v644, %v763
  %v765 = vpop.f32.mrb[0].mxu0
  %766 = vmatprep.mubr.bf16.mxu0 %v297
  %767 = vmatmul.mubr.bf16.gmra.mrb[0].mxu0 %v296
  %v768 = vpop.f32.mrb[0].mxu0
  %v769 = vadd.f32 %v649, %v768
  %v770 = vpop.f32.mrb[0].mxu0
  %v771 = vpop.f32.mrb[0].mxu0
  %v772 = vpop.f32.mrb[0].mxu0
  %773 = vdwg.mxu0
  %v774 = vmax.f32 %v689, 0.0
  %v775 = vmax.f32 %v692, 0.0
  %v776 = vmax.f32 %v697, 0.0
  %v777 = vmax.f32 %v700, 0.0
  %v778 = vmax.f32 %v705, 0.0
  %v779 = vmax.f32 %v708, 0.0
  %v780 = vmax.f32 %v713, 0.0
  %v781 = vmax.f32 %v716, 0.0
  %v782 = vmax.f32 %v721, 0.0
  %v783 = vmax.f32 %v724, 0.0
  %v784 = vmax.f32 %v729, 0.0
  %v785 = vmax.f32 %v732, 0.0
  %v786 = vmax.f32 %v737, 0.0
  %v787 = vmax.f32 %v740, 0.0
  %v788 = vmax.f32 %v745, 0.0
  %v789 = vmax.f32 %v748, 0.0
  %v790 = vmax.f32 %v753, 0.0
  %v791 = vmax.f32 %v756, 0.0
  %v792 = vmax.f32 %v761, 0.0
  %v793 = vmax.f32 %v764, 0.0
  %v794 = vmax.f32 %v769, 0.0
  %v795 = vpack.c.bf16 %v775, %v774
  %v796 = vpack.c.bf16 %v777, %v776
  %v797 = vpack.c.bf16 %v779, %v778
  %v798 = vpack.c.bf16 %v781, %v780
  %v799 = vpack.c.bf16 %v783, %v782
  %v800 = vpack.c.bf16 %v785, %v784
  %v801 = vpack.c.bf16 %v787, %v786
  %v802 = vpack.c.bf16 %v789, %v788
  %v803 = vpack.c.bf16 %v791, %v790
  %v804 = vpack.c.bf16 %v793, %v792
  %v805 = vpack.c.bf16 %v794, %v794
  %v817 = vunpack.c.l.b16 %v795
  %v818 = vunpack.c.h.b16 %v795
  %v819 = vunpack.c.l.b16 %v796
  %v820 = vunpack.c.h.b16 %v796
  %v821 = vunpack.c.l.b16 %v797
  %v822 = vunpack.c.h.b16 %v797
  %v823 = vunpack.c.l.b16 %v798
  %v824 = vunpack.c.h.b16 %v798
  %v825 = vunpack.c.l.b16 %v799
  %v826 = vunpack.c.h.b16 %v799
  %v827 = vunpack.c.l.b16 %v800
  %v828 = vunpack.c.h.b16 %v800
  %v829 = vunpack.c.l.b16 %v801
  %v830 = vunpack.c.h.b16 %v801
  %v831 = vunpack.c.l.b16 %v802
  %v832 = vunpack.c.h.b16 %v802
  %v833 = vunpack.c.l.b16 %v803
  %v834 = vunpack.c.h.b16 %v803
  %v835 = vunpack.c.l.b16 %v804
  %v836 = vunpack.c.h.b16 %v804
  %v837 = vunpack.c.l.b16 %v805
  %v838 = vpack.c.b16 %v817, %v817
  %v839 = vpack.c.b16 %v818, %v818
  %v840 = vpack.c.b16 %v819, %v819
  %v841 = vpack.c.b16 %v820, %v820
  %v842 = vpack.c.b16 %v821, %v821
  %v843 = vpack.c.b16 %v822, %v822
  %v844 = vpack.c.b16 %v823, %v823
  %v845 = vpack.c.b16 %v824, %v824
  %v846 = vpack.c.b16 %v825, %v825
  %v847 = vpack.c.b16 %v826, %v826
  %v848 = vpack.c.b16 %v827, %v827
  %v849 = vpack.c.b16 %v828, %v828
  %v850 = vpack.c.b16 %v829, %v829
  %v851 = vpack.c.b16 %v830, %v830
  %v852 = vpack.c.b16 %v831, %v831
  %v853 = vpack.c.b16 %v832, %v832
  %v854 = vpack.c.b16 %v833, %v833
  %v855 = vpack.c.b16 %v834, %v834
  %v856 = vpack.c.b16 %v835, %v835
  %v857 = vpack.c.b16 %v836, %v836
  %v858 = vpack.c.b16 %v837, %v837
  %880 = vst [vmem:[%s3] sm:$0xf] %v838
  %881 = vst [vmem:[%s3 + $0x4] sm:$0xf] %v839
  %882 = vst [vmem:[%s3 + $0x8] sm:$0xf] %v840
  %883 = vst [vmem:[%s3 + $0xc] sm:$0xf] %v841
  %884 = vst [vmem:[%s3 + $0x10] sm:$0xf] %v842
  %885 = vst [vmem:[%s3 + $0x14] sm:$0xf] %v843
  %886 = vst [vmem:[%s3 + $0x18] sm:$0xf] %v844
  %887 = vst [vmem:[%s3 + $0x1c] sm:$0xf] %v845
  %888 = vst [vmem:[%s3 + $0x20] sm:$0xf] %v846
  %889 = vst [vmem:[%s3 + $0x24] sm:$0xf] %v847
  %890 = vst [vmem:[%s3 + $0x28] sm:$0xf] %v848
  %891 = vst [vmem:[%s3 + $0x2c] sm:$0xf] %v849
  %892 = vst [vmem:[%s3 + $0x30] sm:$0xf] %v850
  %893 = vst [vmem:[%s3 + $0x34] sm:$0xf] %v851
  %894 = vst [vmem:[%s3 + $0x38] sm:$0xf] %v852
  %895 = vst [vmem:[%s3 + $0x3c] sm:$0xf] %v853
  %896 = vst [vmem:[%s3 + $0x40] sm:$0xf] %v854
  %897 = vst [vmem:[%s3 + $0x44] sm:$0xf] %v855
  %898 = vst [vmem:[%s3 + $0x48] sm:$0xf] %v856
  %899 = vst [vmem:[%s3 + $0x4c] sm:$0xf] %v857
  %900 = vst [vmem:[%s3 + $0x50] sm:$0x1] %v858
  // Predicated region
  $region14: #{_lambda_.5} parent=0 // pred_check
    _
  $region15: #{_lambda_.5} parent=0 // pred_check_branch
    %902 = sbr.rel (0) target = $region17
  $region16: #{_lambda_.5} parent=0 // pred_region
    _
  $region17: #{_lambda_.5} parent=0 // pred_fallthru
    _
  // Predicated region
  $region18: #{_lambda_.5} parent=0 // pred_check
    _
  $region19: #{_lambda_.5} parent=0 // pred_check_branch
    %904 = sbr.rel (0) target = $region21
  $region20: #{_lambda_.5} parent=0 // pred_region
    _
  $region21: #{_lambda_.5} parent=0 // pred_fallthru
    _

// kernel: _lambda_.6
$region0: #{_lambda_.6}
  #allocation0 [shape = 'u32[]', space=smem, size = 0x4, offset = 0x4, fixed_abs, tag = 'smem constant byte address 0x4 - core index']
  #allocation1 [shape = 'u32[144,128]{1,0:T(1,128)}', space=vmem, size = 0x12000, scoped, tag = 'internal scratch']
  %s0 = inlined_call_operand.vmem [shape: bf16[98,576], index: 0, kind: input, shape index: {}]
  %s1 = inlined_call_operand.vmem [shape: bf16[576,128], index: 1, kind: input, shape index: {}]
  %s2 = inlined_call_operand.vmem [shape: f32[1,128], index: 2, kind: input, shape index: {}]
  %s3 = inlined_call_operand.vmem [shape: bf16[98,128], index: 3, kind: output, shape index: {}]
  %s4 = sld [smem:[#allocation0]]
  $region22: #{_lambda_.6} parent=0
    _
  %s6 = ssub.s32 1, %s4
  %s7 = scalar_select 0, %s6, %s4
  // Predicated region
  $region2: #{_lambda_.6} parent=0 // pred_check
    _
  $region3: #{_lambda_.6} parent=0 // pred_check_branch
    %9 = sbr.rel (0) target = $region5
  $region4: #{_lambda_.6} parent=0 // pred_region
    _
  $region5: #{_lambda_.6} parent=0 // pred_fallthru
    _
  // Predicated region
  $region6: #{_lambda_.6} parent=0 // pred_check
    _
  $region7: #{_lambda_.6} parent=0 // pred_check_branch
    %11 = sbr.rel (0) target = $region9
  $region8: #{_lambda_.6} parent=0 // pred_region
    _
  $region9: #{_lambda_.6} parent=0 // pred_fallthru
    _
  // Predicated region
  $region10: #{_lambda_.6} parent=0 // pred_check
    _
  $region11: #{_lambda_.6} parent=0 // pred_check_branch
    %13 = sbr.rel (0) target = $region13
  $region12: #{_lambda_.6} parent=0 // pred_region
    _
  $region13: #{_lambda_.6} parent=0 // pred_fallthru
    _
  %v15 = vld [vmem:[%s0] sm:$0xff]
  %v16 = vld [vmem:[%s0 + $0x8] sm:$0xff]
  %v17 = vld [vmem:[%s0 + $0x10] sm:$0xf]
  %v18 = vld [vmem:[%s0 + $0x14] sm:$0xff]
  %v19 = vld [vmem:[%s0 + $0x1c] sm:$0xff]
  %v20 = vld [vmem:[%s0 + $0x24] sm:$0xf]
  %v21 = vld [vmem:[%s0 + $0x28] sm:$0xff]
  %v22 = vld [vmem:[%s0 + $0x30] sm:$0xff]
  %v23 = vld [vmem:[%s0 + $0x38] sm:$0xf]
  %v24 = vld [vmem:[%s0 + $0x3c] sm:$0xff]
  %v25 = vld [vmem:[%s0 + $0x44] sm:$0xff]
  %v26 = vld [vmem:[%s0 + $0x4c] sm:$0xf]
  %v27 = vld [vmem:[%s0 + $0x50] sm:$0xff]
  %v28 = vld [vmem:[%s0 + $0x58] sm:$0xff]
  %v29 = vld [vmem:[%s0 + $0x60] sm:$0xf]
  %v30 = vld [vmem:[%s0 + $0x64] sm:$0xff]
  %v31 = vld [vmem:[%s0 + $0x6c] sm:$0xff]
  %v32 = vld [vmem:[%s0 + $0x74] sm:$0xf]
  %v33 = vld [vmem:[%s0 + $0x78] sm:$0xff]
  %v34 = vld [vmem:[%s0 + $0x80] sm:$0xff]
  %v35 = vld [vmem:[%s0 + $0x88] sm:$0xf]
  %v36 = vld [vmem:[%s0 + $0x8c] sm:$0xff]
  %v37 = vld [vmem:[%s0 + $0x94] sm:$0xff]
  %v38 = vld [vmem:[%s0 + $0x9c] sm:$0xf]
  %v39 = vld [vmem:[%s0 + $0xa0] sm:$0xff]
  %v40 = vld [vmem:[%s0 + $0xa8] sm:$0xff]
  %v41 = vld [vmem:[%s0 + $0xb0] sm:$0xf]
  %v42 = vld [vmem:[%s0 + $0xb4] sm:$0xff]
  %v43 = vld [vmem:[%s0 + $0xbc] sm:$0xff]
  %v44 = vld [vmem:[%s0 + $0xc4] sm:$0xf]
  %v45 = vld [vmem:[%s0 + $0xc8] sm:$0xff]
  %v46 = vld [vmem:[%s0 + $0xd0] sm:$0xff]
  %v47 = vld [vmem:[%s0 + $0xd8] sm:$0xf]
  %v48 = vld [vmem:[%s0 + $0xdc] sm:$0xff]
  %v49 = vld [vmem:[%s0 + $0xe4] sm:$0xff]
  %v50 = vld [vmem:[%s0 + $0xec] sm:$0xf]
  %v51 = vld [vmem:[%s0 + $0xf0] sm:$0x11]
  %v52 = vld [vmem:[%s0 + $0xf8] sm:$0x11]
  %v53 = vld [vmem:[%s0 + $0x100] sm:$0x1]
  %v54 = vld [vmem:[%s1] sm:$0xf]
  %v55 = vld [vmem:[%s1 + $0x4] sm:$0xf]
  %v56 = vld [vmem:[%s1 + $0x8] sm:$0xf]
  %v57 = vld [vmem:[%s1 + $0xc] sm:$0xf]
  %v58 = vld [vmem:[%s1 + $0x10] sm:$0xf]
  %v59 = vld [vmem:[%s1 + $0x14] sm:$0xf]
  %v60 = vld [vmem:[%s1 + $0x18] sm:$0xf]
  %v61 = vld [vmem:[%s1 + $0x1c] sm:$0xf]
  %v62 = vld [vmem:[%s1 + $0x20] sm:$0xf]
  %v63 = vld [vmem:[%s1 + $0x24] sm:$0xf]
  %v64 = vld [vmem:[%s1 + $0x28] sm:$0xf]
  %v65 = vld [vmem:[%s1 + $0x2c] sm:$0xf]
  %v66 = vld [vmem:[%s1 + $0x30] sm:$0xf]
  %v67 = vld [vmem:[%s1 + $0x34] sm:$0xf]
  %v68 = vld [vmem:[%s1 + $0x38] sm:$0xf]
  %v69 = vld [vmem:[%s1 + $0x3c] sm:$0xf]
  %v70 = vld [vmem:[%s1 + $0x40] sm:$0xf]
  %v71 = vld [vmem:[%s1 + $0x44] sm:$0xf]
  %v72 = vld [vmem:[%s1 + $0x48] sm:$0xf]
  %v73 = vld [vmem:[%s1 + $0x4c] sm:$0xf]
  %v74 = vld [vmem:[%s1 + $0x50] sm:$0xf]
  %v75 = vld [vmem:[%s1 + $0x54] sm:$0xf]
  %v76 = vld [vmem:[%s1 + $0x58] sm:$0xf]
  %v77 = vld [vmem:[%s1 + $0x5c] sm:$0xf]
  %v78 = vld [vmem:[%s1 + $0x60] sm:$0xf]
  %v79 = vld [vmem:[%s1 + $0x64] sm:$0xf]
  %v80 = vld [vmem:[%s1 + $0x68] sm:$0xf]
  %v81 = vld [vmem:[%s1 + $0x6c] sm:$0xf]
  %v82 = vld [vmem:[%s1 + $0x70] sm:$0xf]
  %v83 = vld [vmem:[%s1 + $0x74] sm:$0xf]
  %v84 = vld [vmem:[%s1 + $0x78] sm:$0xf]
  %v85 = vld [vmem:[%s1 + $0x7c] sm:$0xf]
  %v86 = vld [vmem:[%s1 + $0x80] sm:$0xf]
  %v87 = vld [vmem:[%s1 + $0x84] sm:$0xf]
  %v88 = vld [vmem:[%s1 + $0x88] sm:$0xf]
  %v89 = vld [vmem:[%s1 + $0x8c] sm:$0xf]
  %v90 = vld [vmem:[%s1 + $0x90] sm:$0xf]
  %v91 = vld [vmem:[%s1 + $0x94] sm:$0xf]
  %v92 = vld [vmem:[%s1 + $0x98] sm:$0xf]
  %v93 = vld [vmem:[%s1 + $0x9c] sm:$0xf]
  %v94 = vld [vmem:[%s1 + $0xa0] sm:$0xf]
  %v95 = vld [vmem:[%s1 + $0xa4] sm:$0xf]
  %v96 = vld [vmem:[%s1 + $0xa8] sm:$0xf]
  %v97 = vld [vmem:[%s1 + $0xac] sm:$0xf]
  %v98 = vld [vmem:[%s1 + $0xb0] sm:$0xf]
  %v99 = vld [vmem:[%s1 + $0xb4] sm:$0xf]
  %v100 = vld [vmem:[%s1 + $0xb8] sm:$0xf]
  %v101 = vld [vmem:[%s1 + $0xbc] sm:$0xf]
  %v102 = vld [vmem:[%s1 + $0xc0] sm:$0xf]
  %v103 = vld [vmem:[%s1 + $0xc4] sm:$0xf]
  %v104 = vld [vmem:[%s1 + $0xc8] sm:$0xf]
  %v105 = vld [vmem:[%s1 + $0xcc] sm:$0xf]
  %v106 = vld [vmem:[%s1 + $0xd0] sm:$0xf]
  %v107 = vld [vmem:[%s1 + $0xd4] sm:$0xf]
  %v108 = vld [vmem:[%s1 + $0xd8] sm:$0xf]
  %v109 = vld [vmem:[%s1 + $0xdc] sm:$0xf]
  %v110 = vld [vmem:[%s1 + $0xe0] sm:$0xf]
  %v111 = vld [vmem:[%s1 + $0xe4] sm:$0xf]
  %v112 = vld [vmem:[%s1 + $0xe8] sm:$0xf]
  %v113 = vld [vmem:[%s1 + $0xec] sm:$0xf]
  %v114 = vld [vmem:[%s1 + $0xf0] sm:$0xf]
  %v115 = vld [vmem:[%s1 + $0xf4] sm:$0xf]
  %v116 = vld [vmem:[%s1 + $0xf8] sm:$0xf]
  %v117 = vld [vmem:[%s1 + $0xfc] sm:$0xf]
  %v118 = vld [vmem:[%s1 + $0x100] sm:$0xf]
  %v119 = vld [vmem:[%s1 + $0x104] sm:$0xf]
  %v120 = vld [vmem:[%s1 + $0x108] sm:$0xf]
  %v121 = vld [vmem:[%s1 + $0x10c] sm:$0xf]
  %v122 = vld [vmem:[%s1 + $0x110] sm:$0xf]
  %v123 = vld [vmem:[%s1 + $0x114] sm:$0xf]
  %v124 = vld [vmem:[%s1 + $0x118] sm:$0xf]
  %v125 = vld [vmem:[%s1 + $0x11c] sm:$0xf]
  %v126 = vld [vmem:[%s2] sm:$0x1]
  %v128 = vlaneseq
  %v129 = vshrl.u32 %v128, 7
  %v130 = vsub.s32 0, %v129
  %v131 = vrot.slane %v126, %v130
  %v172 = vunpack.c.l.b16 %v15
  %v173 = vunpack.c.h.b16 %v15
  %v174 = vunpack.c.l.b16 %v16
  %v175 = vunpack.c.h.b16 %v16
  %v176 = vunpack.c.l.b16 %v17
  %v177 = vunpack.c.l.b16 %v18
  %v178 = vunpack.c.h.b16 %v18
  %v179 = vunpack.c.l.b16 %v19
  %v180 = vunpack.c.h.b16 %v19
  %v181 = vunpack.c.l.b16 %v20
  %v182 = vunpack.c.l.b16 %v21
  %v183 = vunpack.c.h.b16 %v21
  %v184 = vunpack.c.l.b16 %v22
  %v185 = vunpack.c.h.b16 %v22
  %v186 = vunpack.c.l.b16 %v23
  %v187 = vunpack.c.l.b16 %v24
  %v188 = vunpack.c.h.b16 %v24
  %v189 = vunpack.c.l.b16 %v25
  %v190 = vunpack.c.h.b16 %v25
  %v191 = vunpack.c.l.b16 %v26
  %v192 = vunpack.c.l.b16 %v27
  %v193 = vunpack.c.h.b16 %v27
  %v194 = vunpack.c.l.b16 %v28
  %v195 = vunpack.c.h.b16 %v28
  %v196 = vunpack.c.l.b16 %v29
  %v197 = vunpack.c.l.b16 %v30
  %v198 = vunpack.c.h.b16 %v30
  %v199 = vunpack.c.l.b16 %v31
  %v200 = vunpack.c.h.b16 %v31
  %v201 = vunpack.c.l.b16 %v32
  %v202 = vunpack.c.l.b16 %v33
  %v203 = vunpack.c.h.b16 %v33
  %v204 = vunpack.c.l.b16 %v34
  %v205 = vunpack.c.h.b16 %v34
  %v206 = vunpack.c.l.b16 %v35
  %v207 = vunpack.c.l.b16 %v36
  %v208 = vunpack.c.h.b16 %v36
  %v209 = vunpack.c.l.b16 %v37
  %v210 = vunpack.c.h.b16 %v37
  %v211 = vunpack.c.l.b16 %v38
  %v212 = vunpack.c.l.b16 %v39
  %v213 = vunpack.c.h.b16 %v39
  %v214 = vunpack.c.l.b16 %v40
  %v215 = vunpack.c.h.b16 %v40
  %v216 = vunpack.c.l.b16 %v41
  %v217 = vunpack.c.l.b16 %v42
  %v218 = vunpack.c.h.b16 %v42
  %v219 = vunpack.c.l.b16 %v43
  %v220 = vunpack.c.h.b16 %v43
  %v221 = vunpack.c.l.b16 %v44
  %v222 = vunpack.c.l.b16 %v45
  %v223 = vunpack.c.h.b16 %v45
  %v224 = vunpack.c.l.b16 %v46
  %v225 = vunpack.c.h.b16 %v46
  %v226 = vunpack.c.l.b16 %v47
  %v227 = vunpack.c.l.b16 %v48
  %v228 = vunpack.c.h.b16 %v48
  %v229 = vunpack.c.l.b16 %v49
  %v230 = vunpack.c.h.b16 %v49
  %v231 = vunpack.c.l.b16 %v50
  %v232 = vunpack.c.l.b16 %v51
  %v233 = vunpack.c.h.b16 %v51
  %v234 = vunpack.c.l.b16 %v52
  %v235 = vunpack.c.h.b16 %v52
  %v236 = vunpack.c.l.b16 %v53
  %v237 = vpack.c.b16 %v177, %v172
  %v238 = vpack.c.b16 %v178, %v173
  %v239 = vpack.c.b16 %v179, %v174
  %v240 = vpack.c.b16 %v180, %v175
  %v241 = vpack.c.b16 %v181, %v176
  %v242 = vpack.c.b16 %v187, %v182
  %v243 = vpack.c.b16 %v188, %v183
  %v244 = vpack.c.b16 %v189, %v184
  %v245 = vpack.c.b16 %v190, %v185
  %v246 = vpack.c.b16 %v191, %v186
  %v247 = vpack.c.b16 %v197, %v192
  %v248 = vpack.c.b16 %v198, %v193
  %v249 = vpack.c.b16 %v199, %v194
  %v250 = vpack.c.b16 %v200, %v195
  %v251 = vpack.c.b16 %v201, %v196
  %v252 = vpack.c.b16 %v207, %v202
  %v253 = vpack.c.b16 %v208, %v203
  %v254 = vpack.c.b16 %v209, %v204
  %v255 = vpack.c.b16 %v210, %v205
  %v256 = vpack.c.b16 %v211, %v206
  %v257 = vpack.c.b16 %v217, %v212
  %v258 = vpack.c.b16 %v218, %v213
  %v259 = vpack.c.b16 %v219, %v214
  %v260 = vpack.c.b16 %v220, %v215
  %v261 = vpack.c.b16 %v221, %v216
  %v262 = vpack.c.b16 %v227, %v222
  %v263 = vpack.c.b16 %v228, %v223
  %v264 = vpack.c.b16 %v229, %v224
  %v265 = vpack.c.b16 %v230, %v225
  %v266 = vpack.c.b16 %v231, %v226
  %v267 = vpack.c.b16 %v232, %v232
  %v268 = vpack.c.b16 %v233, %v233
  %v269 = vpack.c.b16 %v234, %v234
  %v270 = vpack.c.b16 %v235, %v235
  %v271 = vpack.c.b16 %v236, %v236
  %v372 = vunpack.c.l.b16 %v54
  %v373 = vunpack.c.l.b16 %v55
  %v374 = vunpack.c.l.b16 %v56
  %v375 = vunpack.c.l.b16 %v57
  %v376 = vunpack.c.l.b16 %v58
  %v377 = vunpack.c.l.b16 %v59
  %v378 = vunpack.c.l.b16 %v60
  %v379 = vunpack.c.l.b16 %v61
  %v380 = vunpack.c.l.b16 %v62
  %v381 = vunpack.c.l.b16 %v63
  %v382 = vunpack.c.l.b16 %v64
  %v383 = vunpack.c.l.b16 %v65
  %v384 = vunpack.c.l.b16 %v66
  %v385 = vunpack.c.l.b16 %v67
  %v386 = vunpack.c.l.b16 %v68
  %v387 = vunpack.c.l.b16 %v69
  %v388 = vunpack.c.l.b16 %v70
  %v389 = vunpack.c.l.b16 %v71
  %v390 = vunpack.c.l.b16 %v72
  %v391 = vunpack.c.l.b16 %v73
  %v392 = vunpack.c.l.b16 %v74
  %v393 = vunpack.c.l.b16 %v75
  %v394 = vunpack.c.l.b16 %v76
  %v395 = vunpack.c.l.b16 %v77
  %v396 = vunpack.c.l.b16 %v78
  %v397 = vunpack.c.l.b16 %v79
  %v398 = vunpack.c.l.b16 %v80
  %v399 = vunpack.c.l.b16 %v81
  %v400 = vunpack.c.l.b16 %v82
  %v401 = vunpack.c.l.b16 %v83
  %v402 = vunpack.c.l.b16 %v84
  %v403 = vunpack.c.l.b16 %v85
  %v404 = vunpack.c.l.b16 %v86
  %v405 = vunpack.c.l.b16 %v87
  %v406 = vunpack.c.l.b16 %v88
  %v407 = vunpack.c.l.b16 %v89
  %v408 = vunpack.c.l.b16 %v90
  %v409 = vunpack.c.l.b16 %v91
  %v410 = vunpack.c.l.b16 %v92
  %v411 = vunpack.c.l.b16 %v93
  %v412 = vunpack.c.l.b16 %v94
  %v413 = vunpack.c.l.b16 %v95
  %v414 = vunpack.c.l.b16 %v96
  %v415 = vunpack.c.l.b16 %v97
  %v416 = vunpack.c.l.b16 %v98
  %v417 = vunpack.c.l.b16 %v99
  %v418 = vunpack.c.l.b16 %v100
  %v419 = vunpack.c.l.b16 %v101
  %v420 = vunpack.c.l.b16 %v102
  %v421 = vunpack.c.l.b16 %v103
  %v422 = vunpack.c.l.b16 %v104
  %v423 = vunpack.c.l.b16 %v105
  %v424 = vunpack.c.l.b16 %v106
  %v425 = vunpack.c.l.b16 %v107
  %v426 = vunpack.c.l.b16 %v108
  %v427 = vunpack.c.l.b16 %v109
  %v428 = vunpack.c.l.b16 %v110
  %v429 = vunpack.c.l.b16 %v111
  %v430 = vunpack.c.l.b16 %v112
  %v431 = vunpack.c.l.b16 %v113
  %v432 = vunpack.c.l.b16 %v114
  %v433 = vunpack.c.l.b16 %v115
  %v434 = vunpack.c.l.b16 %v116
  %v435 = vunpack.c.l.b16 %v117
  %v436 = vunpack.c.l.b16 %v118
  %v437 = vunpack.c.l.b16 %v119
  %v438 = vunpack.c.l.b16 %v120
  %v439 = vunpack.c.l.b16 %v121
  %v440 = vunpack.c.l.b16 %v122
  %v441 = vunpack.c.l.b16 %v123
  %v442 = vunpack.c.l.b16 %v124
  %v443 = vunpack.c.l.b16 %v125
  %v444 = vpack.c.b16 %v373, %v372
  %v445 = vpack.c.b16 %v375, %v374
  %v446 = vpack.c.b16 %v377, %v376
  %v447 = vpack.c.b16 %v379, %v378
  %v448 = vpack.c.b16 %v381, %v380
  %v449 = vpack.c.b16 %v383, %v382
  %v450 = vpack.c.b16 %v385, %v384
  %v451 = vpack.c.b16 %v387, %v386
  %v452 = vpack.c.b16 %v389, %v388
  %v453 = vpack.c.b16 %v391, %v390
  %v454 = vpack.c.b16 %v393, %v392
  %v455 = vpack.c.b16 %v395, %v394
  %v456 = vpack.c.b16 %v397, %v396
  %v457 = vpack.c.b16 %v399, %v398
  %v458 = vpack.c.b16 %v401, %v400
  %v459 = vpack.c.b16 %v403, %v402
  %v460 = vpack.c.b16 %v405, %v404
  %v461 = vpack.c.b16 %v407, %v406
  %v462 = vpack.c.b16 %v409, %v408
  %v463 = vpack.c.b16 %v411, %v410
  %v464 = vpack.c.b16 %v413, %v412
  %v465 = vpack.c.b16 %v415, %v414
  %v466 = vpack.c.b16 %v417, %v416
  %v467 = vpack.c.b16 %v419, %v418
  %v468 = vpack.c.b16 %v421, %v420
  %v469 = vpack.c.b16 %v423, %v422
  %v470 = vpack.c.b16 %v425, %v424
  %v471 = vpack.c.b16 %v427, %v426
  %v472 = vpack.c.b16 %v429, %v428
  %v473 = vpack.c.b16 %v431, %v430
  %v474 = vpack.c.b16 %v433, %v432
  %v475 = vpack.c.b16 %v435, %v434
  %v476 = vpack.c.b16 %v437, %v436
  %v477 = vpack.c.b16 %v439, %v438
  %v478 = vpack.c.b16 %v441, %v440
  %v479 = vpack.c.b16 %v443, %v442
  %vm516 = vcmask 523264
  %v518 = vsel %vm516, %v241, 0
  %v521 = vsel %vm516, %v246, 0
  %v524 = vsel %vm516, %v251, 0
  %v527 = vsel %vm516, %v256, 0
  %v530 = vsel %vm516, %v261, 0
  %v533 = vsel %vm516, %v266, 0
  %v536 = vsel %vm516, %v271, 0
  %538 = vmatprep.subr.bf16.mxu0 0
  %539 = vmatpush1.bf16.msra.mxu0 %v444
  %540 = vmatprep.subr.bf16.mxu0 0
  %541 = vmatpush1.bf16.msra.mxu0 %v445
  %542 = vmatprep.subr.bf16.mxu0 0
  %543 = vmatpush1.bf16.msra.mxu0 %v446
  %544 = vmatprep.subr.bf16.mxu0 0
  %545 = vmatpush1.bf16.msra.mxu0 %v447
  %546 = vmatprep.subr.bf16.mxu0 0
  %547 = vmatpush1.bf16.msra.mxu0 %v448
  %548 = vmatprep.subr.bf16.mxu0 0
  %549 = vmatpush1.bf16.msra.mxu0 %v449
  %550 = vmatprep.subr.bf16.mxu0 0
  %551 = vmatpush1.bf16.msra.mxu0 %v450
  %552 = vmatprep.subr.bf16.mxu0 0
  %553 = vmatpush1.bf16.msra.mxu0 %v451
  %554 = vmatprep.subr.bf16.mxu0 0
  %555 = vmatpush1.bf16.msra.mxu0 %v452
  %556 = vmatprep.subr.bf16.mxu0 0
  %557 = vmatpush1.bf16.msra.mxu0 %v453
  %558 = vmatprep.subr.bf16.mxu0 0
  %559 = vmatpush1.bf16.msra.mxu0 %v454
  %560 = vmatprep.subr.bf16.mxu0 0
  %561 = vmatpush1.bf16.msra.mxu0 %v455
  %562 = vmatprep.subr.bf16.mxu0 0
  %563 = vmatpush1.bf16.msra.mxu0 %v456
  %564 = vmatprep.subr.bf16.mxu0 0
  %565 = vmatpush1.bf16.msra.mxu0 %v457
  %566 = vmatprep.subr.bf16.mxu0 0
  %567 = vmatpush1.bf16.msra.mxu0 %v458
  %568 = vmatprep.subr.bf16.mxu0 0
  %569 = vmatpush1.bf16.msra.mxu0 %v459
  %570 = vmatprep.mubr.bf16.mxu0 %v238
  %571 = vmatmul.mubr.bf16.gmra.mrb[0].mxu0 %v237
  %v572 = vpop.f32.mrb[0].mxu0
  %v573 = vadd.f32 %v131, %v572
  %v574 = vpop.f32.mrb[0].mxu0
  %v575 = vpop.f32.mrb[0].mxu0
  %v576 = vadd.f32 %v131, %v575
  %v577 = vpop.f32.mrb[0].mxu0
  %578 = vmatprep.mubr.bf16.mxu0 %v243
  %579 = vmatmul.mubr.bf16.gmra.mrb[0].mxu0 %v242
  %v580 = vpop.f32.mrb[0].mxu0
  %v581 = vadd.f32 %v131, %v580
  %v582 = vpop.f32.mrb[0].mxu0
  %v583 = vpop.f32.mrb[0].mxu0
  %v584 = vadd.f32 %v131, %v583
  %v585 = vpop.f32.mrb[0].mxu0
  %586 = vmatprep.mubr.bf16.mxu0 %v248
  %587 = vmatmul.mubr.bf16.gmra.mrb[0].mxu0 %v247
  %v588 = vpop.f32.mrb[0].mxu0
  %v589 = vadd.f32 %v131, %v588
  %v590 = vpop.f32.mrb[0].mxu0
  %v591 = vpop.f32.mrb[0].mxu0
  %v592 = vadd.f32 %v131, %v591
  %v593 = vpop.f32.mrb[0].mxu0
  %594 = vmatprep.mubr.bf16.mxu0 %v253
  %595 = vmatmul.mubr.bf16.gmra.mrb[0].mxu0 %v252
  %v596 = vpop.f32.mrb[0].mxu0
  %v597 = vadd.f32 %v131, %v596
  %v598 = vpop.f32.mrb[0].mxu0
  %v599 = vpop.f32.mrb[0].mxu0
  %v600 = vadd.f32 %v131, %v599
  %v601 = vpop.f32.mrb[0].mxu0
  %602 = vmatprep.mubr.bf16.mxu0 %v258
  %603 = vmatmul.mubr.bf16.gmra.mrb[0].mxu0 %v257
  %v604 = vpop.f32.mrb[0].mxu0
  %v605 = vadd.f32 %v131, %v604
  %v606 = vpop.f32.mrb[0].mxu0
  %v607 = vpop.f32.mrb[0].mxu0
  %v608 = vadd.f32 %v131, %v607
  %v609 = vpop.f32.mrb[0].mxu0
  %610 = vmatprep.mubr.bf16.mxu0 %v263
  %611 = vmatmul.mubr.bf16.gmra.mrb[0].mxu0 %v262
  %v612 = vpop.f32.mrb[0].mxu0
  %v613 = vadd.f32 %v131, %v612
  %v614 = vpop.f32.mrb[0].mxu0
  %v615 = vpop.f32.mrb[0].mxu0
  %v616 = vadd.f32 %v131, %v615
  %v617 = vpop.f32.mrb[0].mxu0
  %618 = vmatprep.mubr.bf16.mxu0 %v268
  %619 = vmatmul.mubr.bf16.gmra.mrb[0].mxu0 %v267
  %v620 = vpop.f32.mrb[0].mxu0
  %v621 = vadd.f32 %v131, %v620
  %v622 = vpop.f32.mrb[0].mxu0
  %v623 = vpop.f32.mrb[0].mxu0
  %v624 = vpop.f32.mrb[0].mxu0
  %625 = vdwg.mxu0
  %626 = vmatprep.subr.bf16.mxu0 0
  %627 = vmatpush1.bf16.msra.mxu0 %v460
  %628 = vmatprep.subr.bf16.mxu0 0
  %629 = vmatpush1.bf16.msra.mxu0 %v461
  %630 = vmatprep.subr.bf16.mxu0 0
  %631 = vmatpush1.bf16.msra.mxu0 %v462
  %632 = vmatprep.subr.bf16.mxu0 0
  %633 = vmatpush1.bf16.msra.mxu0 %v463
  %634 = vmatprep.subr.bf16.mxu0 0
  %635 = vmatpush1.bf16.msra.mxu0 %v464
  %636 = vmatprep.subr.bf16.mxu0 0
  %637 = vmatpush1.bf16.msra.mxu0 %v465
  %638 = vmatprep.subr.bf16.mxu0 0
  %639 = vmatpush1.bf16.msra.mxu0 %v466
  %640 = vmatprep.subr.bf16.mxu0 0
  %641 = vmatpush1.bf16.msra.mxu0 %v467
  %642 = vmatprep.subr.bf16.mxu0 0
  %643 = vmatpush1.bf16.msra.mxu0 %v468
  %644 = vmatprep.subr.bf16.mxu0 0
  %645 = vmatpush1.bf16.msra.mxu0 %v469
  %646 = vmatprep.subr.bf16.mxu0 0
  %647 = vmatpush1.bf16.msra.mxu0 %v470
  %648 = vmatprep.subr.bf16.mxu0 0
  %649 = vmatpush1.bf16.msra.mxu0 %v471
  %650 = vmatprep.subr.bf16.mxu0 0
  %651 = vmatpush1.bf16.msra.mxu0 %v472
  %652 = vmatprep.subr.bf16.mxu0 0
  %653 = vmatpush1.bf16.msra.mxu0 %v473
  %654 = vmatprep.subr.bf16.mxu0 0
  %655 = vmatpush1.bf16.msra.mxu0 %v474
  %656 = vmatprep.subr.bf16.mxu0 0
  %657 = vmatpush1.bf16.msra.mxu0 %v475
  %658 = vmatprep.mubr.bf16.mxu0 %v240
  %659 = vmatmul.mubr.bf16.gmra.mrb[0].mxu0 %v239
  %v660 = vpop.f32.mrb[0].mxu0
  %v661 = vadd.f32 %v573, %v660
  %v662 = vpop.f32.mrb[0].mxu0
  %v663 = vpop.f32.mrb[0].mxu0
  %v664 = vadd.f32 %v576, %v663
  %v665 = vpop.f32.mrb[0].mxu0
  %666 = vmatprep.mubr.bf16.mxu0 %v245
  %667 = vmatmul.mubr.bf16.gmra.mrb[0].mxu0 %v244
  %v668 = vpop.f32.mrb[0].mxu0
  %v669 = vadd.f32 %v581, %v668
  %v670 = vpop.f32.mrb[0].mxu0
  %v671 = vpop.f32.mrb[0].mxu0
  %v672 = vadd.f32 %v584, %v671
  %v673 = vpop.f32.mrb[0].mxu0
  %674 = vmatprep.mubr.bf16.mxu0 %v250
  %675 = vmatmul.mubr.bf16.gmra.mrb[0].mxu0 %v249
  %v676 = vpop.f32.mrb[0].mxu0
  %v677 = vadd.f32 %v589, %v676
  %v678 = vpop.f32.mrb[0].mxu0
  %v679 = vpop.f32.mrb[0].mxu0
  %v680 = vadd.f32 %v592, %v679
  %v681 = vpop.f32.mrb[0].mxu0
  %682 = vmatprep.mubr.bf16.mxu0 %v255
  %683 = vmatmul.mubr.bf16.gmra.mrb[0].mxu0 %v254
  %v684 = vpop.f32.mrb[0].mxu0
  %v685 = vadd.f32 %v597, %v684
  %v686 = vpop.f32.mrb[0].mxu0
  %v687 = vpop.f32.mrb[0].mxu0
  %v688 = vadd.f32 %v600, %v687
  %v689 = vpop.f32.mrb[0].mxu0
  %690 = vmatprep.mubr.bf16.mxu0 %v260
  %691 = vmatmul.mubr.bf16.gmra.mrb[0].mxu0 %v259
  %v692 = vpop.f32.mrb[0].mxu0
  %v693 = vadd.f32 %v605, %v692
  %v694 = vpop.f32.mrb[0].mxu0
  %v695 = vpop.f32.mrb[0].mxu0
  %v696 = vadd.f32 %v608, %v695
  %v697 = vpop.f32.mrb[0].mxu0
  %698 = vmatprep.mubr.bf16.mxu0 %v265
  %699 = vmatmul.mubr.bf16.gmra.mrb[0].mxu0 %v264
  %v700 = vpop.f32.mrb[0].mxu0
  %v701 = vadd.f32 %v613, %v700
  %v702 = vpop.f32.mrb[0].mxu0
  %v703 = vpop.f32.mrb[0].mxu0
  %v704 = vadd.f32 %v616, %v703
  %v705 = vpop.f32.mrb[0].mxu0
  %706 = vmatprep.mubr.bf16.mxu0 %v270
  %707 = vmatmul.mubr.bf16.gmra.mrb[0].mxu0 %v269
  %v708 = vpop.f32.mrb[0].mxu0
  %v709 = vadd.f32 %v621, %v708
  %v710 = vpop.f32.mrb[0].mxu0
  %v711 = vpop.f32.mrb[0].mxu0
  %v712 = vpop.f32.mrb[0].mxu0
  %713 = vdwg.mxu0
  %714 = vmatprep.subr.bf16.mxu0 0
  %715 = vmatpush1.bf16.msra.mxu0 %v476
  %716 = vmatprep.subr.bf16.mxu0 0
  %717 = vmatpush1.bf16.msra.mxu0 %v477
  %718 = vmatprep.subr.bf16.mxu0 0
  %719 = vmatpush1.bf16.msra.mxu0 %v478
  %720 = vmatprep.subr.bf16.mxu0 0
  %721 = vmatpush1.bf16.msra.mxu0 %v479
  %722 = vmatprep.subr.bf16.mxu0 0
  %723 = vmatpush1.bf16.msra.mxu0 0
  %724 = vmatprep.subr.bf16.mxu0 0
  %725 = vmatpush1.bf16.msra.mxu0 0
  %726 = vmatprep.subr.bf16.mxu0 0
  %727 = vmatpush1.bf16.msra.mxu0 0
  %728 = vmatprep.subr.bf16.mxu0 0
  %729 = vmatpush1.bf16.msra.mxu0 0
  %730 = vmatprep.subr.bf16.mxu0 0
  %731 = vmatpush1.bf16.msra.mxu0 0
  %732 = vmatprep.subr.bf16.mxu0 0
  %733 = vmatpush1.bf16.msra.mxu0 0
  %734 = vmatprep.subr.bf16.mxu0 0
  %735 = vmatpush1.bf16.msra.mxu0 0
  %736 = vmatprep.subr.bf16.mxu0 0
  %737 = vmatpush1.bf16.msra.mxu0 0
  %738 = vmatprep.subr.bf16.mxu0 0
  %739 = vmatpush1.bf16.msra.mxu0 0
  %740 = vmatprep.subr.bf16.mxu0 0
  %741 = vmatpush1.bf16.msra.mxu0 0
  %742 = vmatprep.subr.bf16.mxu0 0
  %743 = vmatpush1.bf16.msra.mxu0 0
  %744 = vmatprep.subr.bf16.mxu0 0
  %745 = vmatpush1.bf16.msra.mxu0 0
  %746 = vmatprep.mubr.bf16.mxu0 0
  %747 = vmatmul.mubr.bf16.gmra.mrb[0].mxu0 %v518
  %v748 = vpop.f32.mrb[0].mxu0
  %v749 = vadd.f32 %v661, %v748
  %v750 = vpop.f32.mrb[0].mxu0
  %v751 = vpop.f32.mrb[0].mxu0
  %v752 = vadd.f32 %v664, %v751
  %v753 = vpop.f32.mrb[0].mxu0
  %754 = vmatprep.mubr.bf16.mxu0 0
  %755 = vmatmul.mubr.bf16.gmra.mrb[0].mxu0 %v521
  %v756 = vpop.f32.mrb[0].mxu0
  %v757 = vadd.f32 %v669, %v756
  %v758 = vpop.f32.mrb[0].mxu0
  %v759 = vpop.f32.mrb[0].mxu0
  %v760 = vadd.f32 %v672, %v759
  %v761 = vpop.f32.mrb[0].mxu0
  %762 = vmatprep.mubr.bf16.mxu0 0
  %763 = vmatmul.mubr.bf16.gmra.mrb[0].mxu0 %v524
  %v764 = vpop.f32.mrb[0].mxu0
  %v765 = vadd.f32 %v677, %v764
  %v766 = vpop.f32.mrb[0].mxu0
  %v767 = vpop.f32.mrb[0].mxu0
  %v768 = vadd.f32 %v680, %v767
  %v769 = vpop.f32.mrb[0].mxu0
  %770 = vmatprep.mubr.bf16.mxu0 0
  %771 = vmatmul.mubr.bf16.gmra.mrb[0].mxu0 %v527
  %v772 = vpop.f32.mrb[0].mxu0
  %v773 = vadd.f32 %v685, %v772
  %v774 = vpop.f32.mrb[0].mxu0
  %v775 = vpop.f32.mrb[0].mxu0
  %v776 = vadd.f32 %v688, %v775
  %v777 = vpop.f32.mrb[0].mxu0
  %778 = vmatprep.mubr.bf16.mxu0 0
  %779 = vmatmul.mubr.bf16.gmra.mrb[0].mxu0 %v530
  %v780 = vpop.f32.mrb[0].mxu0
  %v781 = vadd.f32 %v693, %v780
  %v782 = vpop.f32.mrb[0].mxu0
  %v783 = vpop.f32.mrb[0].mxu0
  %v784 = vadd.f32 %v696, %v783
  %v785 = vpop.f32.mrb[0].mxu0
  %786 = vmatprep.mubr.bf16.mxu0 0
  %787 = vmatmul.mubr.bf16.gmra.mrb[0].mxu0 %v533
  %v788 = vpop.f32.mrb[0].mxu0
  %v789 = vadd.f32 %v701, %v788
  %v790 = vpop.f32.mrb[0].mxu0
  %v791 = vpop.f32.mrb[0].mxu0
  %v792 = vadd.f32 %v704, %v791
  %v793 = vpop.f32.mrb[0].mxu0
  %794 = vmatprep.mubr.bf16.mxu0 0
  %795 = vmatmul.mubr.bf16.gmra.mrb[0].mxu0 %v536
  %v796 = vpop.f32.mrb[0].mxu0
  %v797 = vadd.f32 %v709, %v796
  %v798 = vpop.f32.mrb[0].mxu0
  %v799 = vpop.f32.mrb[0].mxu0
  %v800 = vpop.f32.mrb[0].mxu0
  %801 = vdwg.mxu0
  %v802 = vmax.f32 %v749, 0.0
  %v803 = vmax.f32 %v752, 0.0
  %v804 = vmax.f32 %v757, 0.0
  %v805 = vmax.f32 %v760, 0.0
  %v806 = vmax.f32 %v765, 0.0
  %v807 = vmax.f32 %v768, 0.0
  %v808 = vmax.f32 %v773, 0.0
  %v809 = vmax.f32 %v776, 0.0
  %v810 = vmax.f32 %v781, 0.0
  %v811 = vmax.f32 %v784, 0.0
  %v812 = vmax.f32 %v789, 0.0
  %v813 = vmax.f32 %v792, 0.0
  %v814 = vmax.f32 %v797, 0.0
  %v815 = vpack.c.bf16 %v803, %v802
  %v816 = vpack.c.bf16 %v805, %v804
  %v817 = vpack.c.bf16 %v807, %v806
  %v818 = vpack.c.bf16 %v809, %v808
  %v819 = vpack.c.bf16 %v811, %v810
  %v820 = vpack.c.bf16 %v813, %v812
  %v821 = vpack.c.bf16 %v814, %v814
  %v829 = vunpack.c.l.b16 %v815
  %v830 = vunpack.c.h.b16 %v815
  %v831 = vunpack.c.l.b16 %v816
  %v832 = vunpack.c.h.b16 %v816
  %v833 = vunpack.c.l.b16 %v817
  %v834 = vunpack.c.h.b16 %v817
  %v835 = vunpack.c.l.b16 %v818
  %v836 = vunpack.c.h.b16 %v818
  %v837 = vunpack.c.l.b16 %v819
  %v838 = vunpack.c.h.b16 %v819
  %v839 = vunpack.c.l.b16 %v820
  %v840 = vunpack.c.h.b16 %v820
  %v841 = vunpack.c.l.b16 %v821
  %v842 = vpack.c.b16 %v829, %v829
  %v843 = vpack.c.b16 %v830, %v830
  %v844 = vpack.c.b16 %v831, %v831
  %v845 = vpack.c.b16 %v832, %v832
  %v846 = vpack.c.b16 %v833, %v833
  %v847 = vpack.c.b16 %v834, %v834
  %v848 = vpack.c.b16 %v835, %v835
  %v849 = vpack.c.b16 %v836, %v836
  %v850 = vpack.c.b16 %v837, %v837
  %v851 = vpack.c.b16 %v838, %v838
  %v852 = vpack.c.b16 %v839, %v839
  %v853 = vpack.c.b16 %v840, %v840
  %v854 = vpack.c.b16 %v841, %v841
  %868 = vst [vmem:[%s3] sm:$0xf] %v842
  %869 = vst [vmem:[%s3 + $0x4] sm:$0xf] %v843
  %870 = vst [vmem:[%s3 + $0x8] sm:$0xf] %v844
  %871 = vst [vmem:[%s3 + $0xc] sm:$0xf] %v845
  %872 = vst [vmem:[%s3 + $0x10] sm:$0xf] %v846
  %873 = vst [vmem:[%s3 + $0x14] sm:$0xf] %v847
  %874 = vst [vmem:[%s3 + $0x18] sm:$0xf] %v848
  %875 = vst [vmem:[%s3 + $0x1c] sm:$0xf] %v849
  %876 = vst [vmem:[%s3 + $0x20] sm:$0xf] %v850
  %877 = vst [vmem:[%s3 + $0x24] sm:$0xf] %v851
  %878 = vst [vmem:[%s3 + $0x28] sm:$0xf] %v852
  %879 = vst [vmem:[%s3 + $0x2c] sm:$0xf] %v853
  %880 = vst [vmem:[%s3 + $0x30] sm:$0x1] %v854
  // Predicated region
  $region14: #{_lambda_.6} parent=0 // pred_check
    _
  $region15: #{_lambda_.6} parent=0 // pred_check_branch
    %882 = sbr.rel (0) target = $region17
  $region16: #{_lambda_.6} parent=0 // pred_region
    _
  $region17: #{_lambda_.6} parent=0 // pred_fallthru
    _
  // Predicated region
  $region18: #{_lambda_.6} parent=0 // pred_check
    _
  $region19: #{_lambda_.6} parent=0 // pred_check_branch
    %884 = sbr.rel (0) target = $region21
  $region20: #{_lambda_.6} parent=0 // pred_region
    _
  $region21: #{_lambda_.6} parent=0 // pred_fallthru
    _

// kernel: _lambda_.7
$region0: #{_lambda_.7}
  #allocation0 [shape = 'u32[]', space=smem, size = 0x4, offset = 0x4, fixed_abs, tag = 'smem constant byte address 0x4 - core index']
  #allocation1 [shape = 'u32[144,128]{1,0:T(1,128)}', space=vmem, size = 0x12000, scoped, tag = 'internal scratch']
  %s0 = inlined_call_operand.vmem [shape: bf16[2,3136], index: 0, kind: input, shape index: {}]
  %s1 = inlined_call_operand.vmem [shape: bf16[3136,512], index: 1, kind: input, shape index: {}]
  %s2 = inlined_call_operand.vmem [shape: f32[1,512], index: 2, kind: input, shape index: {}]
  %s3 = inlined_call_operand.vmem [shape: bf16[512,18], index: 3, kind: input, shape index: {}]
  %s4 = inlined_call_operand.vmem [shape: f32[1,18], index: 4, kind: input, shape index: {}]
  %s5 = inlined_call_operand.hbm [shape: f32[2,18], index: 5, kind: output, shape index: {}]
  %s6 = sld [smem:[#allocation0]]
  $region99: #{_lambda_.7} parent=0
    _
  %s8 = ssub.s32 1, %s6
  %s9 = scalar_select 0, %s8, %s6
  $region1: #{_lambda_.7} parent=0
    #allocation2 [shape = 'u8[3211264]{0}', space=vmem, size = 0x310000, scoped, tag = 'input window, operand 1']
    #allocation3 [shape = 'u8[1024]{0}', space=vmem, size = 0x400, scoped, tag = 'output window, operand 0, single buffered']
    #allocation4 [shape = 's32[2]{0}', space=sflag, size = 0x8, scoped, tag = 'scoped memory for _lambda_.7']
    %10 = vsyncpa [#allocation4], 0
    loop: start=0, step=1, limit=4
    $region2: #{_lambda_.7} parent=1 // loop_pre_header
      _
    $region3: #{_lambda_.7} parent=1 // loop_header
      %s12 = sphi 0, %s16
      %p13 = scmp.ge.s32.totalorder %s12, 4
      %s20 = sphi 0, %s20
      %s22 = sphi 0, %s20
      %s23 = sphi 0, %s22
      %s37 = sphi 0, %s23
      %s43 = sphi 0, %s45
      %s46 = sphi 0, %s43
      %s47 = sphi 0, %s46
      %s63 = sphi 0, %s47
      %s69 = sphi 0, %s71
      %s72 = sphi 0, %s69
      %s73 = sphi 0, %s72
      %s89 = sphi 0, %s73
      %s95 = sphi 0, %s97
      %s98 = sphi 0, %s95
      %s99 = sphi 0, %s98
      %s115 = sphi 0, %s99
      %s119 = sphi 0, %s119
      %s121 = sphi 0, %s119
      %s122 = sphi 0, %s121
      %s136 = sphi 0, %s122
      %s140 = sphi 0, %s140
      %s142 = sphi 0, %s140
      %s143 = sphi 0, %s142
      %s157 = sphi 0, %s143
    $region4: #{_lambda_.7} parent=1 // loop_header_branch
      %15 = sbr.rel (%p13) target = $region8
    $region5: #{_lambda_.7} parent=1 // loop_body
      %s17 = ssub.s32 %s12, 1
      %s18 = ssub.s32 %s12, 2
      %s19 = sadd.s32 %s12, 1
      %s21 = sadd.s32 %s20, 1
      %p24 = scmp.eq.s32.totalorder %s12, 1
      %p25 = scmp.ne.s32.totalorder %s20, %s22
      %p26 = scmp.eq.s32.totalorder %s12, 0
      %p27 = por %p25, %p26
      %p28 = scmp.ne.s32.totalorder %s20, %s22
      %p29 = scmp.eq.s32.totalorder %s17, 1
      %p30 = por %p28, %p29
      %p31 = scmp.ne.s32.totalorder %s22, %s23
      %p32 = scmp.eq.s32.totalorder %s17, 0
      %p33 = por %p31, %p32
      %p34 = scmp.ne.s32.totalorder %s22, %s23
      %p35 = scmp.eq.s32.totalorder %s18, 1
      %p36 = por %p34, %p35
      %p38 = scmp.ne.s32.totalorder %s23, %s37
      %p39 = scmp.eq.s32.totalorder %s18, 0
      %p40 = por %p38, %p39
      %s41 = ssub.s32 %s12, %s19
      %p42 = scmp.eq.s32.totalorder %s41, 0
      %s44 = sadd.s32 %s43, 1
      %s45 = scalar_select %p42, %s43, %s44
      %p48 = pneg %p42
      %p49 = scmp.eq.s32.totalorder %s12, 1
      %p50 = por %p48, %p49
      %p51 = scmp.ne.s32.totalorder %s43, %s46
      %p52 = scmp.eq.s32.totalorder %s12, 0
      %p53 = por %p51, %p52
      %p54 = scmp.ne.s32.totalorder %s43, %s46
      %p55 = scmp.eq.s32.totalorder %s17, 1
      %p56 = por %p54, %p55
      %p57 = scmp.ne.s32.totalorder %s46, %s47
      %p58 = scmp.eq.s32.totalorder %s17, 0
      %p59 = por %p57, %p58
      %p60 = scmp.ne.s32.totalorder %s46, %s47
      %p61 = scmp.eq.s32.totalorder %s18, 1
      %p62 = por %p60, %p61
      %p64 = scmp.ne.s32.totalorder %s47, %s63
      %p65 = scmp.eq.s32.totalorder %s18, 0
      %p66 = por %p64, %p65
      %s67 = ssub.s32 %s12, %s19
      %p68 = scmp.eq.s32.totalorder %s67, 0
      %s70 = sadd.s32 %s69, 1
      %s71 = scalar_select %p68, %s69, %s70
      %p74 = pneg %p68
      %p75 = scmp.eq.s32.totalorder %s12, 1
      %p76 = por %p74, %p75
      %p77 = scmp.ne.s32.totalorder %s69, %s72
      %p78 = scmp.eq.s32.totalorder %s12, 0
      %p79 = por %p77, %p78
      %p80 = scmp.ne.s32.totalorder %s69, %s72
      %p81 = scmp.eq.s32.totalorder %s17, 1
      %p82 = por %p80, %p81
      %p83 = scmp.ne.s32.totalorder %s72, %s73
      %p84 = scmp.eq.s32.totalorder %s17, 0
      %p85 = por %p83, %p84
      %p86 = scmp.ne.s32.totalorder %s72, %s73
      %p87 = scmp.eq.s32.totalorder %s18, 1
      %p88 = por %p86, %p87
      %p90 = scmp.ne.s32.totalorder %s73, %s89
      %p91 = scmp.eq.s32.totalorder %s18, 0
      %p92 = por %p90, %p91
      %s93 = ssub.s32 %s12, %s19
      %p94 = scmp.eq.s32.totalorder %s93, 0
      %s96 = sadd.s32 %s95, 1
      %s97 = scalar_select %p94, %s95, %s96
      %p100 = pneg %p94
      %p101 = scmp.eq.s32.totalorder %s12, 1
      %p102 = por %p100, %p101
      %p103 = scmp.ne.s32.totalorder %s95, %s98
      %p104 = scmp.eq.s32.totalorder %s12, 0
      %p105 = por %p103, %p104
      %p106 = scmp.ne.s32.totalorder %s95, %s98
      %p107 = scmp.eq.s32.totalorder %s17, 1
      %p108 = por %p106, %p107
      %p109 = scmp.ne.s32.totalorder %s98, %s99
      %p110 = scmp.eq.s32.totalorder %s17, 0
      %p111 = por %p109, %p110
      %p112 = scmp.ne.s32.totalorder %s98, %s99
      %p113 = scmp.eq.s32.totalorder %s18, 1
      %p114 = por %p112, %p113
      %p116 = scmp.ne.s32.totalorder %s99, %s115
      %p117 = scmp.eq.s32.totalorder %s18, 0
      %p118 = por %p116, %p117
      %s120 = sadd.s32 %s119, 1
      %p123 = scmp.eq.s32.totalorder %s12, 1
      %p124 = scmp.ne.s32.totalorder %s119, %s121
      %p125 = scmp.eq.s32.totalorder %s12, 0
      %p126 = por %p124, %p125
      %p127 = scmp.ne.s32.totalorder %s119, %s121
      %p128 = scmp.eq.s32.totalorder %s17, 1
      %p129 = por %p127, %p128
      %p130 = scmp.ne.s32.totalorder %s121, %s122
      %p131 = scmp.eq.s32.totalorder %s17, 0
      %p132 = por %p130, %p131
      %p133 = scmp.ne.s32.totalorder %s121, %s122
      %p134 = scmp.eq.s32.totalorder %s18, 1
      %p135 = por %p133, %p134
      %p137 = scmp.ne.s32.totalorder %s122, %s136
      %p138 = scmp.eq.s32.totalorder %s18, 0
      %p139 = por %p137, %p138
      %s141 = sadd.s32 %s140, 1
      %p144 = scmp.eq.s32.totalorder %s12, 1
      %p145 = scmp.ne.s32.totalorder %s140, %s142
      %p146 = scmp.eq.s32.totalorder %s12, 0
      %p147 = por %p145, %p146
      %p148 = scmp.ne.s32.totalorder %s140, %s142
      %p149 = scmp.eq.s32.totalorder %s17, 1
      %p150 = por %p148, %p149
      %p151 = scmp.ne.s32.totalorder %s142, %s143
      %p152 = scmp.eq.s32.totalorder %s17, 0
      %p153 = por %p151, %p152
      %p154 = scmp.ne.s32.totalorder %s142, %s143
      %p155 = scmp.eq.s32.totalorder %s18, 1
      %p156 = por %p154, %p155
      %p158 = scmp.ne.s32.totalorder %s143, %s157
      %p159 = scmp.eq.s32.totalorder %s18, 0
      %p160 = por %p158, %p159
      %p161 = scmp.le.s32.totalorder 1, %s12
      %p162 = scmp.lt.s32.totalorder %s12, 3
      %p163 = pnand %p161, %p162
      %p164 = pneg %p163
      // Predicated region
      $region9: #{_lambda_.7} parent=5 // pred_check
        _
      $region10: #{_lambda_.7} parent=5 // pred_check_branch
        %166 = sbr.rel (%p163) target = $region12
      $region11: #{_lambda_.7} parent=5 // pred_region
        %s167 = ssub.s32 %s12, 1
        // Predicated region
        $region13: #{_lambda_.7} parent=11 // pred_check
          %p168 = pneg %p33
        $region14: #{_lambda_.7} parent=11 // pred_check_branch
          %170 = sbr.rel (%p168) target = $region16
        $region15: #{_lambda_.7} parent=11 // pred_region
          _
        $region16: #{_lambda_.7} parent=11 // pred_fallthru
          _
        // Predicated region
        $region17: #{_lambda_.7} parent=11 // pred_check
          %p171 = pneg %p132
        $region18: #{_lambda_.7} parent=11 // pred_check_branch
          %173 = sbr.rel (%p171) target = $region20
        $region19: #{_lambda_.7} parent=11 // pred_region
          _
        $region20: #{_lambda_.7} parent=11 // pred_fallthru
          _
      $region12: #{_lambda_.7} parent=5 // pred_fallthru
        _
      %p174 = scmp.lt.s32.totalorder %s12, 2
      // Predicated region
      $region21: #{_lambda_.7} parent=5 // pred_check
        %p175 = pneg %p174
      $region22: #{_lambda_.7} parent=5 // pred_check_branch
        %177 = sbr.rel (%p175) target = $region24
      $region23: #{_lambda_.7} parent=5 // pred_region
        // Predicated region
        $region25: #{_lambda_.7} parent=23 // pred_check
          %p178 = pneg %p53
        $region26: #{_lambda_.7} parent=23 // pred_check_branch
          %180 = sbr.rel (%p178) target = $region28
        $region27: #{_lambda_.7} parent=23 // pred_region
          %s181 = sand.u32 %s43, 1
          %s182 = sand.u32 %s43, 1
          %s183 = smul.addr %s182, 3136
          %s184 = scalar_lea.vmem [#allocation2], %s183
          %s185 = smul.u32 2, %s12
          %s186 = smul.addr %s185, 4
          %s187 = scalar_lea.vmem %s1, %s186
          // Predicated region
          $region29: #{_lambda_.7} parent=27 // pred_check
            _
          $region30: #{_lambda_.7} parent=27 // pred_check_branch
            %189 = sbr.rel (0) target = $region32
          $region31: #{_lambda_.7} parent=27 // pred_region
            // Predicated region
            $region33: #{_lambda_.7} parent=31 // pred_check
              _
            $region34: #{_lambda_.7} parent=31 // pred_check_branch
              %191 = sbr.rel (0) target = $region36
            $region35: #{_lambda_.7} parent=31 // pred_region
              // Predicated region
              $region48: #{_lambda_.7} parent=35 // pred_check
                _
              $region49: #{_lambda_.7} parent=35 // pred_check_branch
                %988 = sbr.rel (0) target = $region51
              $region50: #{_lambda_.7} parent=35 // pred_region
                loop: start=0, step=1, limit=1
                $region52: #{_lambda_.7} parent=50 // loop_pre_header
                  _
                $region53: #{_lambda_.7} parent=50 // loop_header
                  %s990 = sphi 0, %s994
                  %p991 = scmp.ge.s32.totalorder %s990, 1
                  %s995 = sphi %s187, %s187
                  %s996 = sphi %s184, %s184
                $region54: #{_lambda_.7} parent=50 // loop_header_branch
                  %993 = sbr.rel (%p991) target = $region58
                $region55: #{_lambda_.7} parent=50 // loop_body
                  %v997 = vld [vmem:[%s995] sm:$0xff]
                  %998 = vst [vmem:[%s996] sm:$0xff] %v997
                  %v999 = vld [vmem:[%s995 + $0x10] sm:$0xff]
                  %1000 = vst [vmem:[%s996 + $0x8] sm:$0xff] %v999
                  %v1001 = vld [vmem:[%s995 + $0x20] sm:$0xff]
                  %1002 = vst [vmem:[%s996 + $0x10] sm:$0xff] %v1001
                  %v1003 = vld [vmem:[%s995 + $0x30] sm:$0xff]
                  %1004 = vst [vmem:[%s996 + $0x18] sm:$0xff] %v1003
                  %v1005 = vld [vmem:[%s995 + $0x40] sm:$0xff]
                  %1006 = vst [vmem:[%s996 + $0x20] sm:$0xff] %v1005
                  %v1007 = vld [vmem:[%s995 + $0x50] sm:$0xff]
                  %1008 = vst [vmem:[%s996 + $0x28] sm:$0xff] %v1007
                  %v1009 = vld [vmem:[%s995 + $0x60] sm:$0xff]
                  %1010 = vst [vmem:[%s996 + $0x30] sm:$0xff] %v1009
                  %v1011 = vld [vmem:[%s995 + $0x70] sm:$0xff]
                  %1012 = vst [vmem:[%s996 + $0x38] sm:$0xff] %v1011
                  %v1013 = vld [vmem:[%s995 + $0x80] sm:$0xff]
                  %1014 = vst [vmem:[%s996 + $0x40] sm:$0xff] %v1013
                  %v1015 = vld [vmem:[%s995 + $0x90] sm:$0xff]
                  %1016 = vst [vmem:[%s996 + $0x48] sm:$0xff] %v1015
                  %v1017 = vld [vmem:[%s995 + $0xa0] sm:$0xff]
                  %1018 = vst [vmem:[%s996 + $0x50] sm:$0xff] %v1017
                  %v1019 = vld [vmem:[%s995 + $0xb0] sm:$0xff]
                  %1020 = vst [vmem:[%s996 + $0x58] sm:$0xff] %v1019
                  %v1021 = vld [vmem:[%s995 + $0xc0] sm:$0xff]
                  %1022 = vst [vmem:[%s996 + $0x60] sm:$0xff] %v1021
                  %v1023 = vld [vmem:[%s995 + $0xd0] sm:$0xff]
                  %1024 = vst [vmem:[%s996 + $0x68] sm:$0xff] %v1023
                  %v1025 = vld [vmem:[%s995 + $0xe0] sm:$0xff]
                  %1026 = vst [vmem:[%s996 + $0x70] sm:$0xff] %v1025
                  %v1027 = vld [vmem:[%s995 + $0xf0] sm:$0xff]
                  %1028 = vst [vmem:[%s996 + $0x78] sm:$0xff] %v1027
                  %v1029 = vld [vmem:[%s995 + $0x100] sm:$0xff]
                  %1030 = vst [vmem:[%s996 + $0x80] sm:$0xff] %v1029
                  %v1031 = vld [vmem:[%s995 + $0x110] sm:$0xff]
                  %1032 = vst [vmem:[%s996 + $0x88] sm:$0xff] %v1031
                  %v1033 = vld [vmem:[%s995 + $0x120] sm:$0xff]
                  %1034 = vst [vmem:[%s996 + $0x90] sm:$0xff] %v1033
                  %v1035 = vld [vmem:[%s995 + $0x130] sm:$0xff]
                  %1036 = vst [vmem:[%s996 + $0x98] sm:$0xff] %v1035
                  %v1037 = vld [vmem:[%s995 + $0x140] sm:$0xff]
                  %1038 = vst [vmem:[%s996 + $0xa0] sm:$0xff] %v1037
                  %v1039 = vld [vmem:[%s995 + $0x150] sm:$0xff]
                  %1040 = vst [vmem:[%s996 + $0xa8] sm:$0xff] %v1039
                  %v1041 = vld [vmem:[%s995 + $0x160] sm:$0xff]
                  %1042 = vst [vmem:[%s996 + $0xb0] sm:$0xff] %v1041
                  %v1043 = vld [vmem:[%s995 + $0x170] sm:$0xff]
                  %1044 = vst [vmem:[%s996 + $0xb8] sm:$0xff] %v1043
                  %v1045 = vld [vmem:[%s995 + $0x180] sm:$0xff]
                  %1046 = vst [vmem:[%s996 + $0xc0] sm:$0xff] %v1045
                  %v1047 = vld [vmem:[%s995 + $0x190] sm:$0xff]
                  %1048 = vst [vmem:[%s996 + $0xc8] sm:$0xff] %v1047
                  %v1049 = vld [vmem:[%s995 + $0x1a0] sm:$0xff]
                  %1050 = vst [vmem:[%s996 + $0xd0] sm:$0xff] %v1049
                  %v1051 = vld [vmem:[%s995 + $0x1b0] sm:$0xff]
                  %1052 = vst [vmem:[%s996 + $0xd8] sm:$0xff] %v1051
                  %v1053 = vld [vmem:[%s995 + $0x1c0] sm:$0xff]
                  %1054 = vst [vmem:[%s996 + $0xe0] sm:$0xff] %v1053
                  %v1055 = vld [vmem:[%s995 + $0x1d0] sm:$0xff]
                  %1056 = vst [vmem:[%s996 + $0xe8] sm:$0xff] %v1055
                  %v1057 = vld [vmem:[%s995 + $0x1e0] sm:$0xff]
                  %1058 = vst [vmem:[%s996 + $0xf0] sm:$0xff] %v1057
                  %v1059 = vld [vmem:[%s995 + $0x1f0] sm:$0xff]
                  %1060 = vst [vmem:[%s996 + $0xf8] sm:$0xff] %v1059
                  %v1061 = vld [vmem:[%s995 + $0x200] sm:$0xff]
                  %1062 = vst [vmem:[%s996 + $0x100] sm:$0xff] %v1061
                  %v1063 = vld [vmem:[%s995 + $0x210] sm:$0xff]
                  %1064 = vst [vmem:[%s996 + $0x108] sm:$0xff] %v1063
                  %v1065 = vld [vmem:[%s995 + $0x220] sm:$0xff]
                  %1066 = vst [vmem:[%s996 + $0x110] sm:$0xff] %v1065
                  %v1067 = vld [vmem:[%s995 + $0x230] sm:$0xff]
                  %1068 = vst [vmem:[%s996 + $0x118] sm:$0xff] %v1067
                  %v1069 = vld [vmem:[%s995 + $0x240] sm:$0xff]
                  %1070 = vst [vmem:[%s996 + $0x120] sm:$0xff] %v1069
                  %v1071 = vld [vmem:[%s995 + $0x250] sm:$0xff]
                  %1072 = vst [vmem:[%s996 + $0x128] sm:$0xff] %v1071
                  %v1073 = vld [vmem:[%s995 + $0x260] sm:$0xff]
                  %1074 = vst [vmem:[%s996 + $0x130] sm:$0xff] %v1073
                  %v1075 = vld [vmem:[%s995 + $0x270] sm:$0xff]
                  %1076 = vst [vmem:[%s996 + $0x138] sm:$0xff] %v1075
                  %v1077 = vld [vmem:[%s995 + $0x280] sm:$0xff]
                  %1078 = vst [vmem:[%s996 + $0x140] sm:$0xff] %v1077
                  %v1079 = vld [vmem:[%s995 + $0x290] sm:$0xff]
                  %1080 = vst [vmem:[%s996 + $0x148] sm:$0xff] %v1079
                  %v1081 = vld [vmem:[%s995 + $0x2a0] sm:$0xff]
                  %1082 = vst [vmem:[%s996 + $0x150] sm:$0xff] %v1081
                  %v1083 = vld [vmem:[%s995 + $0x2b0] sm:$0xff]
                  %1084 = vst [vmem:[%s996 + $0x158] sm:$0xff] %v1083
                  %v1085 = vld [vmem:[%s995 + $0x2c0] sm:$0xff]
                  %1086 = vst [vmem:[%s996 + $0x160] sm:$0xff] %v1085
                  %v1087 = vld [vmem:[%s995 + $0x2d0] sm:$0xff]
                  %1088 = vst [vmem:[%s996 + $0x168] sm:$0xff] %v1087
                  %v1089 = vld [vmem:[%s995 + $0x2e0] sm:$0xff]
                  %1090 = vst [vmem:[%s996 + $0x170] sm:$0xff] %v1089
                  %v1091 = vld [vmem:[%s995 + $0x2f0] sm:$0xff]
                  %1092 = vst [vmem:[%s996 + $0x178] sm:$0xff] %v1091
                  %v1093 = vld [vmem:[%s995 + $0x300] sm:$0xff]
                  %1094 = vst [vmem:[%s996 + $0x180] sm:$0xff] %v1093
                  %v1095 = vld [vmem:[%s995 + $0x310] sm:$0xff]
                  %1096 = vst [vmem:[%s996 + $0x188] sm:$0xff] %v1095
                  %v1097 = vld [vmem:[%s995 + $0x320] sm:$0xff]
                  %1098 = vst [vmem:[%s996 + $0x190] sm:$0xff] %v1097
                  %v1099 = vld [vmem:[%s995 + $0x330] sm:$0xff]
                  %1100 = vst [vmem:[%s996 + $0x198] sm:$0xff] %v1099
                  %v1101 = vld [vmem:[%s995 + $0x340] sm:$0xff]
                  %1102 = vst [vmem:[%s996 + $0x1a0] sm:$0xff] %v1101
                  %v1103 = vld [vmem:[%s995 + $0x350] sm:$0xff]
                  %1104 = vst [vmem:[%s996 + $0x1a8] sm:$0xff] %v1103
                  %v1105 = vld [vmem:[%s995 + $0x360] sm:$0xff]
                  %1106 = vst [vmem:[%s996 + $0x1b0] sm:$0xff] %v1105
                  %v1107 = vld [vmem:[%s995 + $0x370] sm:$0xff]
                  %1108 = vst [vmem:[%s996 + $0x1b8] sm:$0xff] %v1107
                  %v1109 = vld [vmem:[%s995 + $0x380] sm:$0xff]
                  %1110 = vst [vmem:[%s996 + $0x1c0] sm:$0xff] %v1109
                  %v1111 = vld [vmem:[%s995 + $0x390] sm:$0xff]
                  %1112 = vst [vmem:[%s996 + $0x1c8] sm:$0xff] %v1111
                  %v1113 = vld [vmem:[%s995 + $0x3a0] sm:$0xff]
                  %1114 = vst [vmem:[%s996 + $0x1d0] sm:$0xff] %v1113
                  %v1115 = vld [vmem:[%s995 + $0x3b0] sm:$0xff]
                  %1116 = vst [vmem:[%s996 + $0x1d8] sm:$0xff] %v1115
                  %v1117 = vld [vmem:[%s995 + $0x3c0] sm:$0xff]
                  %1118 = vst [vmem:[%s996 + $0x1e0] sm:$0xff] %v1117
                  %v1119 = vld [vmem:[%s995 + $0x3d0] sm:$0xff]
                  %1120 = vst [vmem:[%s996 + $0x1e8] sm:$0xff] %v1119
                  %v1121 = vld [vmem:[%s995 + $0x3e0] sm:$0xff]
                  %1122 = vst [vmem:[%s996 + $0x1f0] sm:$0xff] %v1121
                  %v1123 = vld [vmem:[%s995 + $0x3f0] sm:$0xff]
                  %1124 = vst [vmem:[%s996 + $0x1f8] sm:$0xff] %v1123
                  %v1125 = vld [vmem:[%s995 + $0x400] sm:$0xff]
                  %1126 = vst [vmem:[%s996 + $0x200] sm:$0xff] %v1125
                  %v1127 = vld [vmem:[%s995 + $0x410] sm:$0xff]
                  %1128 = vst [vmem:[%s996 + $0x208] sm:$0xff] %v1127
                  %v1129 = vld [vmem:[%s995 + $0x420] sm:$0xff]
                  %1130 = vst [vmem:[%s996 + $0x210] sm:$0xff] %v1129
                  %v1131 = vld [vmem:[%s995 + $0x430] sm:$0xff]
                  %1132 = vst [vmem:[%s996 + $0x218] sm:$0xff] %v1131
                  %v1133 = vld [vmem:[%s995 + $0x440] sm:$0xff]
                  %1134 = vst [vmem:[%s996 + $0x220] sm:$0xff] %v1133
                  %v1135 = vld [vmem:[%s995 + $0x450] sm:$0xff]
                  %1136 = vst [vmem:[%s996 + $0x228] sm:$0xff] %v1135
                  %v1137 = vld [vmem:[%s995 + $0x460] sm:$0xff]
                  %1138 = vst [vmem:[%s996 + $0x230] sm:$0xff] %v1137
                  %v1139 = vld [vmem:[%s995 + $0x470] sm:$0xff]
                  %1140 = vst [vmem:[%s996 + $0x238] sm:$0xff] %v1139
                  %v1141 = vld [vmem:[%s995 + $0x480] sm:$0xff]
                  %1142 = vst [vmem:[%s996 + $0x240] sm:$0xff] %v1141
                  %v1143 = vld [vmem:[%s995 + $0x490] sm:$0xff]
                  %1144 = vst [vmem:[%s996 + $0x248] sm:$0xff] %v1143
                  %v1145 = vld [vmem:[%s995 + $0x4a0] sm:$0xff]
                  %1146 = vst [vmem:[%s996 + $0x250] sm:$0xff] %v1145
                  %v1147 = vld [vmem:[%s995 + $0x4b0] sm:$0xff]
                  %1148 = vst [vmem:[%s996 + $0x258] sm:$0xff] %v1147
                  %v1149 = vld [vmem:[%s995 + $0x4c0] sm:$0xff]
                  %1150 = vst [vmem:[%s996 + $0x260] sm:$0xff] %v1149
                  %v1151 = vld [vmem:[%s995 + $0x4d0] sm:$0xff]
                  %1152 = vst [vmem:[%s996 + $0x268] sm:$0xff] %v1151
                  %v1153 = vld [vmem:[%s995 + $0x4e0] sm:$0xff]
                  %1154 = vst [vmem:[%s996 + $0x270] sm:$0xff] %v1153
                  %v1155 = vld [vmem:[%s995 + $0x4f0] sm:$0xff]
                  %1156 = vst [vmem:[%s996 + $0x278] sm:$0xff] %v1155
                  %v1157 = vld [vmem:[%s995 + $0x500] sm:$0xff]
                  %1158 = vst [vmem:[%s996 + $0x280] sm:$0xff] %v1157
                  %v1159 = vld [vmem:[%s995 + $0x510] sm:$0xff]
                  %1160 = vst [vmem:[%s996 + $0x288] sm:$0xff] %v1159
                  %v1161 = vld [vmem:[%s995 + $0x520] sm:$0xff]
                  %1162 = vst [vmem:[%s996 + $0x290] sm:$0xff] %v1161
                  %v1163 = vld [vmem:[%s995 + $0x530] sm:$0xff]
                  %1164 = vst [vmem:[%s996 + $0x298] sm:$0xff] %v1163
                  %v1165 = vld [vmem:[%s995 + $0x540] sm:$0xff]
                  %1166 = vst [vmem:[%s996 + $0x2a0] sm:$0xff] %v1165
                  %v1167 = vld [vmem:[%s995 + $0x550] sm:$0xff]
                  %1168 = vst [vmem:[%s996 + $0x2a8] sm:$0xff] %v1167
                  %v1169 = vld [vmem:[%s995 + $0x560] sm:$0xff]
                  %1170 = vst [vmem:[%s996 + $0x2b0] sm:$0xff] %v1169
                  %v1171 = vld [vmem:[%s995 + $0x570] sm:$0xff]
                  %1172 = vst [vmem:[%s996 + $0x2b8] sm:$0xff] %v1171
                  %v1173 = vld [vmem:[%s995 + $0x580] sm:$0xff]
                  %1174 = vst [vmem:[%s996 + $0x2c0] sm:$0xff] %v1173
                  %v1175 = vld [vmem:[%s995 + $0x590] sm:$0xff]
                  %1176 = vst [vmem:[%s996 + $0x2c8] sm:$0xff] %v1175
                  %v1177 = vld [vmem:[%s995 + $0x5a0] sm:$0xff]
                  %1178 = vst [vmem:[%s996 + $0x2d0] sm:$0xff] %v1177
                  %v1179 = vld [vmem:[%s995 + $0x5b0] sm:$0xff]
                  %1180 = vst [vmem:[%s996 + $0x2d8] sm:$0xff] %v1179
                  %v1181 = vld [vmem:[%s995 + $0x5c0] sm:$0xff]
                  %1182 = vst [vmem:[%s996 + $0x2e0] sm:$0xff] %v1181
                  %v1183 = vld [vmem:[%s995 + $0x5d0] sm:$0xff]
                  %1184 = vst [vmem:[%s996 + $0x2e8] sm:$0xff] %v1183
                  %v1185 = vld [vmem:[%s995 + $0x5e0] sm:$0xff]
                  %1186 = vst [vmem:[%s996 + $0x2f0] sm:$0xff] %v1185
                  %v1187 = vld [vmem:[%s995 + $0x5f0] sm:$0xff]
                  %1188 = vst [vmem:[%s996 + $0x2f8] sm:$0xff] %v1187
                  %v1189 = vld [vmem:[%s995 + $0x600] sm:$0xff]
                  %1190 = vst [vmem:[%s996 + $0x300] sm:$0xff] %v1189
                  %v1191 = vld [vmem:[%s995 + $0x610] sm:$0xff]
                  %1192 = vst [vmem:[%s996 + $0x308] sm:$0xff] %v1191
                  %v1193 = vld [vmem:[%s995 + $0x620] sm:$0xff]
                  %1194 = vst [vmem:[%s996 + $0x310] sm:$0xff] %v1193
                  %v1195 = vld [vmem:[%s995 + $0x630] sm:$0xff]
                  %1196 = vst [vmem:[%s996 + $0x318] sm:$0xff] %v1195
                  %v1197 = vld [vmem:[%s995 + $0x640] sm:$0xff]
                  %1198 = vst [vmem:[%s996 + $0x320] sm:$0xff] %v1197
                  %v1199 = vld [vmem:[%s995 + $0x650] sm:$0xff]
                  %1200 = vst [vmem:[%s996 + $0x328] sm:$0xff] %v1199
                  %v1201 = vld [vmem:[%s995 + $0x660] sm:$0xff]
                  %1202 = vst [vmem:[%s996 + $0x330] sm:$0xff] %v1201
                  %v1203 = vld [vmem:[%s995 + $0x670] sm:$0xff]
                  %1204 = vst [vmem:[%s996 + $0x338] sm:$0xff] %v1203
                  %v1205 = vld [vmem:[%s995 + $0x680] sm:$0xff]
                  %1206 = vst [vmem:[%s996 + $0x340] sm:$0xff] %v1205
                  %v1207 = vld [vmem:[%s995 + $0x690] sm:$0xff]
                  %1208 = vst [vmem:[%s996 + $0x348] sm:$0xff] %v1207
                  %v1209 = vld [vmem:[%s995 + $0x6a0] sm:$0xff]
                  %1210 = vst [vmem:[%s996 + $0x350] sm:$0xff] %v1209
                  %v1211 = vld [vmem:[%s995 + $0x6b0] sm:$0xff]
                  %1212 = vst [vmem:[%s996 + $0x358] sm:$0xff] %v1211
                  %v1213 = vld [vmem:[%s995 + $0x6c0] sm:$0xff]
                  %1214 = vst [vmem:[%s996 + $0x360] sm:$0xff] %v1213
                  %v1215 = vld [vmem:[%s995 + $0x6d0] sm:$0xff]
                  %1216 = vst [vmem:[%s996 + $0x368] sm:$0xff] %v1215
                  %v1217 = vld [vmem:[%s995 + $0x6e0] sm:$0xff]
                  %1218 = vst [vmem:[%s996 + $0x370] sm:$0xff] %v1217
                  %v1219 = vld [vmem:[%s995 + $0x6f0] sm:$0xff]
                  %1220 = vst [vmem:[%s996 + $0x378] sm:$0xff] %v1219
                  %v1221 = vld [vmem:[%s995 + $0x700] sm:$0xff]
                  %1222 = vst [vmem:[%s996 + $0x380] sm:$0xff] %v1221
                  %v1223 = vld [vmem:[%s995 + $0x710] sm:$0xff]
                  %1224 = vst [vmem:[%s996 + $0x388] sm:$0xff] %v1223
                  %v1225 = vld [vmem:[%s995 + $0x720] sm:$0xff]
                  %1226 = vst [vmem:[%s996 + $0x390] sm:$0xff] %v1225
                  %v1227 = vld [vmem:[%s995 + $0x730] sm:$0xff]
                  %1228 = vst [vmem:[%s996 + $0x398] sm:$0xff] %v1227
                  %v1229 = vld [vmem:[%s995 + $0x740] sm:$0xff]
                  %1230 = vst [vmem:[%s996 + $0x3a0] sm:$0xff] %v1229
                  %v1231 = vld [vmem:[%s995 + $0x750] sm:$0xff]
                  %1232 = vst [vmem:[%s996 + $0x3a8] sm:$0xff] %v1231
                  %v1233 = vld [vmem:[%s995 + $0x760] sm:$0xff]
                  %1234 = vst [vmem:[%s996 + $0x3b0] sm:$0xff] %v1233
                  %v1235 = vld [vmem:[%s995 + $0x770] sm:$0xff]
                  %1236 = vst [vmem:[%s996 + $0x3b8] sm:$0xff] %v1235
                  %v1237 = vld [vmem:[%s995 + $0x780] sm:$0xff]
                  %1238 = vst [vmem:[%s996 + $0x3c0] sm:$0xff] %v1237
                  %v1239 = vld [vmem:[%s995 + $0x790] sm:$0xff]
                  %1240 = vst [vmem:[%s996 + $0x3c8] sm:$0xff] %v1239
                  %v1241 = vld [vmem:[%s995 + $0x7a0] sm:$0xff]
                  %1242 = vst [vmem:[%s996 + $0x3d0] sm:$0xff] %v1241
                  %v1243 = vld [vmem:[%s995 + $0x7b0] sm:$0xff]
                  %1244 = vst [vmem:[%s996 + $0x3d8] sm:$0xff] %v1243
                  %v1245 = vld [vmem:[%s995 + $0x7c0] sm:$0xff]
                  %1246 = vst [vmem:[%s996 + $0x3e0] sm:$0xff] %v1245
                  %v1247 = vld [vmem:[%s995 + $0x7d0] sm:$0xff]
                  %1248 = vst [vmem:[%s996 + $0x3e8] sm:$0xff] %v1247
                  %v1249 = vld [vmem:[%s995 + $0x7e0] sm:$0xff]
                  %1250 = vst [vmem:[%s996 + $0x3f0] sm:$0xff] %v1249
                  %v1251 = vld [vmem:[%s995 + $0x7f0] sm:$0xff]
                  %1252 = vst [vmem:[%s996 + $0x3f8] sm:$0xff] %v1251
                  %v1253 = vld [vmem:[%s995 + $0x800] sm:$0xff]
                  %1254 = vst [vmem:[%s996 + $0x400] sm:$0xff] %v1253
                  %v1255 = vld [vmem:[%s995 + $0x810] sm:$0xff]
                  %1256 = vst [vmem:[%s996 + $0x408] sm:$0xff] %v1255
                  %v1257 = vld [vmem:[%s995 + $0x820] sm:$0xff]
                  %1258 = vst [vmem:[%s996 + $0x410] sm:$0xff] %v1257
                  %v1259 = vld [vmem:[%s995 + $0x830] sm:$0xff]
                  %1260 = vst [vmem:[%s996 + $0x418] sm:$0xff] %v1259
                  %v1261 = vld [vmem:[%s995 + $0x840] sm:$0xff]
                  %1262 = vst [vmem:[%s996 + $0x420] sm:$0xff] %v1261
                  %v1263 = vld [vmem:[%s995 + $0x850] sm:$0xff]
                  %1264 = vst [vmem:[%s996 + $0x428] sm:$0xff] %v1263
                  %v1265 = vld [vmem:[%s995 + $0x860] sm:$0xff]
                  %1266 = vst [vmem:[%s996 + $0x430] sm:$0xff] %v1265
                  %v1267 = vld [vmem:[%s995 + $0x870] sm:$0xff]
                  %1268 = vst [vmem:[%s996 + $0x438] sm:$0xff] %v1267
                  %v1269 = vld [vmem:[%s995 + $0x880] sm:$0xff]
                  %1270 = vst [vmem:[%s996 + $0x440] sm:$0xff] %v1269
                  %v1271 = vld [vmem:[%s995 + $0x890] sm:$0xff]
                  %1272 = vst [vmem:[%s996 + $0x448] sm:$0xff] %v1271
                  %v1273 = vld [vmem:[%s995 + $0x8a0] sm:$0xff]
                  %1274 = vst [vmem:[%s996 + $0x450] sm:$0xff] %v1273
                  %v1275 = vld [vmem:[%s995 + $0x8b0] sm:$0xff]
                  %1276 = vst [vmem:[%s996 + $0x458] sm:$0xff] %v1275
                  %v1277 = vld [vmem:[%s995 + $0x8c0] sm:$0xff]
                  %1278 = vst [vmem:[%s996 + $0x460] sm:$0xff] %v1277
                  %v1279 = vld [vmem:[%s995 + $0x8d0] sm:$0xff]
                  %1280 = vst [vmem:[%s996 + $0x468] sm:$0xff] %v1279
                  %v1281 = vld [vmem:[%s995 + $0x8e0] sm:$0xff]
                  %1282 = vst [vmem:[%s996 + $0x470] sm:$0xff] %v1281
                  %v1283 = vld [vmem:[%s995 + $0x8f0] sm:$0xff]
                  %1284 = vst [vmem:[%s996 + $0x478] sm:$0xff] %v1283
                  %v1285 = vld [vmem:[%s995 + $0x900] sm:$0xff]
                  %1286 = vst [vmem:[%s996 + $0x480] sm:$0xff] %v1285
                  %v1287 = vld [vmem:[%s995 + $0x910] sm:$0xff]
                  %1288 = vst [vmem:[%s996 + $0x488] sm:$0xff] %v1287
                  %v1289 = vld [vmem:[%s995 + $0x920] sm:$0xff]
                  %1290 = vst [vmem:[%s996 + $0x490] sm:$0xff] %v1289
                  %v1291 = vld [vmem:[%s995 + $0x930] sm:$0xff]
                  %1292 = vst [vmem:[%s996 + $0x498] sm:$0xff] %v1291
                  %v1293 = vld [vmem:[%s995 + $0x940] sm:$0xff]
                  %1294 = vst [vmem:[%s996 + $0x4a0] sm:$0xff] %v1293
                  %v1295 = vld [vmem:[%s995 + $0x950] sm:$0xff]
                  %1296 = vst [vmem:[%s996 + $0x4a8] sm:$0xff] %v1295
                  %v1297 = vld [vmem:[%s995 + $0x960] sm:$0xff]
                  %1298 = vst [vmem:[%s996 + $0x4b0] sm:$0xff] %v1297
                  %v1299 = vld [vmem:[%s995 + $0x970] sm:$0xff]
                  %1300 = vst [vmem:[%s996 + $0x4b8] sm:$0xff] %v1299
                  %v1301 = vld [vmem:[%s995 + $0x980] sm:$0xff]
                  %1302 = vst [vmem:[%s996 + $0x4c0] sm:$0xff] %v1301
                  %v1303 = vld [vmem:[%s995 + $0x990] sm:$0xff]
                  %1304 = vst [vmem:[%s996 + $0x4c8] sm:$0xff] %v1303
                  %v1305 = vld [vmem:[%s995 + $0x9a0] sm:$0xff]
                  %1306 = vst [vmem:[%s996 + $0x4d0] sm:$0xff] %v1305
                  %v1307 = vld [vmem:[%s995 + $0x9b0] sm:$0xff]
                  %1308 = vst [vmem:[%s996 + $0x4d8] sm:$0xff] %v1307
                  %v1309 = vld [vmem:[%s995 + $0x9c0] sm:$0xff]
                  %1310 = vst [vmem:[%s996 + $0x4e0] sm:$0xff] %v1309
                  %v1311 = vld [vmem:[%s995 + $0x9d0] sm:$0xff]
                  %1312 = vst [vmem:[%s996 + $0x4e8] sm:$0xff] %v1311
                  %v1313 = vld [vmem:[%s995 + $0x9e0] sm:$0xff]
                  %1314 = vst [vmem:[%s996 + $0x4f0] sm:$0xff] %v1313
                  %v1315 = vld [vmem:[%s995 + $0x9f0] sm:$0xff]
                  %1316 = vst [vmem:[%s996 + $0x4f8] sm:$0xff] %v1315
                  %v1317 = vld [vmem:[%s995 + $0xa00] sm:$0xff]
                  %1318 = vst [vmem:[%s996 + $0x500] sm:$0xff] %v1317
                  %v1319 = vld [vmem:[%s995 + $0xa10] sm:$0xff]
                  %1320 = vst [vmem:[%s996 + $0x508] sm:$0xff] %v1319
                  %v1321 = vld [vmem:[%s995 + $0xa20] sm:$0xff]
                  %1322 = vst [vmem:[%s996 + $0x510] sm:$0xff] %v1321
                  %v1323 = vld [vmem:[%s995 + $0xa30] sm:$0xff]
                  %1324 = vst [vmem:[%s996 + $0x518] sm:$0xff] %v1323
                  %v1325 = vld [vmem:[%s995 + $0xa40] sm:$0xff]
                  %1326 = vst [vmem:[%s996 + $0x520] sm:$0xff] %v1325
                  %v1327 = vld [vmem:[%s995 + $0xa50] sm:$0xff]
                  %1328 = vst [vmem:[%s996 + $0x528] sm:$0xff] %v1327
                  %v1329 = vld [vmem:[%s995 + $0xa60] sm:$0xff]
                  %1330 = vst [vmem:[%s996 + $0x530] sm:$0xff] %v1329
                  %v1331 = vld [vmem:[%s995 + $0xa70] sm:$0xff]
                  %1332 = vst [vmem:[%s996 + $0x538] sm:$0xff] %v1331
                  %v1333 = vld [vmem:[%s995 + $0xa80] sm:$0xff]
                  %1334 = vst [vmem:[%s996 + $0x540] sm:$0xff] %v1333
                  %v1335 = vld [vmem:[%s995 + $0xa90] sm:$0xff]
                  %1336 = vst [vmem:[%s996 + $0x548] sm:$0xff] %v1335
                  %v1337 = vld [vmem:[%s995 + $0xaa0] sm:$0xff]
                  %1338 = vst [vmem:[%s996 + $0x550] sm:$0xff] %v1337
                  %v1339 = vld [vmem:[%s995 + $0xab0] sm:$0xff]
                  %1340 = vst [vmem:[%s996 + $0x558] sm:$0xff] %v1339
                  %v1341 = vld [vmem:[%s995 + $0xac0] sm:$0xff]
                  %1342 = vst [vmem:[%s996 + $0x560] sm:$0xff] %v1341
                  %v1343 = vld [vmem:[%s995 + $0xad0] sm:$0xff]
                  %1344 = vst [vmem:[%s996 + $0x568] sm:$0xff] %v1343
                  %v1345 = vld [vmem:[%s995 + $0xae0] sm:$0xff]
                  %1346 = vst [vmem:[%s996 + $0x570] sm:$0xff] %v1345
                  %v1347 = vld [vmem:[%s995 + $0xaf0] sm:$0xff]
                  %1348 = vst [vmem:[%s996 + $0x578] sm:$0xff] %v1347
                  %v1349 = vld [vmem:[%s995 + $0xb00] sm:$0xff]
                  %1350 = vst [vmem:[%s996 + $0x580] sm:$0xff] %v1349
                  %v1351 = vld [vmem:[%s995 + $0xb10] sm:$0xff]
                  %1352 = vst [vmem:[%s996 + $0x588] sm:$0xff] %v1351
                  %v1353 = vld [vmem:[%s995 + $0xb20] sm:$0xff]
                  %1354 = vst [vmem:[%s996 + $0x590] sm:$0xff] %v1353
                  %v1355 = vld [vmem:[%s995 + $0xb30] sm:$0xff]
                  %1356 = vst [vmem:[%s996 + $0x598] sm:$0xff] %v1355
                  %v1357 = vld [vmem:[%s995 + $0xb40] sm:$0xff]
                  %1358 = vst [vmem:[%s996 + $0x5a0] sm:$0xff] %v1357
                  %v1359 = vld [vmem:[%s995 + $0xb50] sm:$0xff]
                  %1360 = vst [vmem:[%s996 + $0x5a8] sm:$0xff] %v1359
                  %v1361 = vld [vmem:[%s995 + $0xb60] sm:$0xff]
                  %1362 = vst [vmem:[%s996 + $0x5b0] sm:$0xff] %v1361
                  %v1363 = vld [vmem:[%s995 + $0xb70] sm:$0xff]
                  %1364 = vst [vmem:[%s996 + $0x5b8] sm:$0xff] %v1363
                  %v1365 = vld [vmem:[%s995 + $0xb80] sm:$0xff]
                  %1366 = vst [vmem:[%s996 + $0x5c0] sm:$0xff] %v1365
                  %v1367 = vld [vmem:[%s995 + $0xb90] sm:$0xff]
                  %1368 = vst [vmem:[%s996 + $0x5c8] sm:$0xff] %v1367
                  %v1369 = vld [vmem:[%s995 + $0xba0] sm:$0xff]
                  %1370 = vst [vmem:[%s996 + $0x5d0] sm:$0xff] %v1369
                  %v1371 = vld [vmem:[%s995 + $0xbb0] sm:$0xff]
                  %1372 = vst [vmem:[%s996 + $0x5d8] sm:$0xff] %v1371
                  %v1373 = vld [vmem:[%s995 + $0xbc0] sm:$0xff]
                  %1374 = vst [vmem:[%s996 + $0x5e0] sm:$0xff] %v1373
                  %v1375 = vld [vmem:[%s995 + $0xbd0] sm:$0xff]
                  %1376 = vst [vmem:[%s996 + $0x5e8] sm:$0xff] %v1375
                  %v1377 = vld [vmem:[%s995 + $0xbe0] sm:$0xff]
                  %1378 = vst [vmem:[%s996 + $0x5f0] sm:$0xff] %v1377
                  %v1379 = vld [vmem:[%s995 + $0xbf0] sm:$0xff]
                  %1380 = vst [vmem:[%s996 + $0x5f8] sm:$0xff] %v1379
                  %v1381 = vld [vmem:[%s995 + $0xc00] sm:$0xff]
                  %1382 = vst [vmem:[%s996 + $0x600] sm:$0xff] %v1381
                  %v1383 = vld [vmem:[%s995 + $0xc10] sm:$0xff]
                  %1384 = vst [vmem:[%s996 + $0x608] sm:$0xff] %v1383
                  %v1385 = vld [vmem:[%s995 + $0xc20] sm:$0xff]
                  %1386 = vst [vmem:[%s996 + $0x610] sm:$0xff] %v1385
                  %v1387 = vld [vmem:[%s995 + $0xc30] sm:$0xff]
                  %1388 = vst [vmem:[%s996 + $0x618] sm:$0xff] %v1387
                  %v1389 = vld [vmem:[%s995 + $0xc40] sm:$0xff]
                  %1390 = vst [vmem:[%s996 + $0x620] sm:$0xff] %v1389
                  %v1391 = vld [vmem:[%s995 + $0xc50] sm:$0xff]
                  %1392 = vst [vmem:[%s996 + $0x628] sm:$0xff] %v1391
                  %v1393 = vld [vmem:[%s995 + $0xc60] sm:$0xff]
                  %1394 = vst [vmem:[%s996 + $0x630] sm:$0xff] %v1393
                  %v1395 = vld [vmem:[%s995 + $0xc70] sm:$0xff]
                  %1396 = vst [vmem:[%s996 + $0x638] sm:$0xff] %v1395
                  %v1397 = vld [vmem:[%s995 + $0xc80] sm:$0xff]
                  %1398 = vst [vmem:[%s996 + $0x640] sm:$0xff] %v1397
                  %v1399 = vld [vmem:[%s995 + $0xc90] sm:$0xff]
                  %1400 = vst [vmem:[%s996 + $0x648] sm:$0xff] %v1399
                  %v1401 = vld [vmem:[%s995 + $0xca0] sm:$0xff]
                  %1402 = vst [vmem:[%s996 + $0x650] sm:$0xff] %v1401
                  %v1403 = vld [vmem:[%s995 + $0xcb0] sm:$0xff]
                  %1404 = vst [vmem:[%s996 + $0x658] sm:$0xff] %v1403
                  %v1405 = vld [vmem:[%s995 + $0xcc0] sm:$0xff]
                  %1406 = vst [vmem:[%s996 + $0x660] sm:$0xff] %v1405
                  %v1407 = vld [vmem:[%s995 + $0xcd0] sm:$0xff]
                  %1408 = vst [vmem:[%s996 + $0x668] sm:$0xff] %v1407
                  %v1409 = vld [vmem:[%s995 + $0xce0] sm:$0xff]
                  %1410 = vst [vmem:[%s996 + $0x670] sm:$0xff] %v1409
                  %v1411 = vld [vmem:[%s995 + $0xcf0] sm:$0xff]
                  %1412 = vst [vmem:[%s996 + $0x678] sm:$0xff] %v1411
                  %v1413 = vld [vmem:[%s995 + $0xd00] sm:$0xff]
                  %1414 = vst [vmem:[%s996 + $0x680] sm:$0xff] %v1413
                  %v1415 = vld [vmem:[%s995 + $0xd10] sm:$0xff]
                  %1416 = vst [vmem:[%s996 + $0x688] sm:$0xff] %v1415
                  %v1417 = vld [vmem:[%s995 + $0xd20] sm:$0xff]
                  %1418 = vst [vmem:[%s996 + $0x690] sm:$0xff] %v1417
                  %v1419 = vld [vmem:[%s995 + $0xd30] sm:$0xff]
                  %1420 = vst [vmem:[%s996 + $0x698] sm:$0xff] %v1419
                  %v1421 = vld [vmem:[%s995 + $0xd40] sm:$0xff]
                  %1422 = vst [vmem:[%s996 + $0x6a0] sm:$0xff] %v1421
                  %v1423 = vld [vmem:[%s995 + $0xd50] sm:$0xff]
                  %1424 = vst [vmem:[%s996 + $0x6a8] sm:$0xff] %v1423
                  %v1425 = vld [vmem:[%s995 + $0xd60] sm:$0xff]
                  %1426 = vst [vmem:[%s996 + $0x6b0] sm:$0xff] %v1425
                  %v1427 = vld [vmem:[%s995 + $0xd70] sm:$0xff]
                  %1428 = vst [vmem:[%s996 + $0x6b8] sm:$0xff] %v1427
                  %v1429 = vld [vmem:[%s995 + $0xd80] sm:$0xff]
                  %1430 = vst [vmem:[%s996 + $0x6c0] sm:$0xff] %v1429
                  %v1431 = vld [vmem:[%s995 + $0xd90] sm:$0xff]
                  %1432 = vst [vmem:[%s996 + $0x6c8] sm:$0xff] %v1431
                  %v1433 = vld [vmem:[%s995 + $0xda0] sm:$0xff]
                  %1434 = vst [vmem:[%s996 + $0x6d0] sm:$0xff] %v1433
                  %v1435 = vld [vmem:[%s995 + $0xdb0] sm:$0xff]
                  %1436 = vst [vmem:[%s996 + $0x6d8] sm:$0xff] %v1435
                  %v1437 = vld [vmem:[%s995 + $0xdc0] sm:$0xff]
                  %1438 = vst [vmem:[%s996 + $0x6e0] sm:$0xff] %v1437
                  %v1439 = vld [vmem:[%s995 + $0xdd0] sm:$0xff]
                  %1440 = vst [vmem:[%s996 + $0x6e8] sm:$0xff] %v1439
                  %v1441 = vld [vmem:[%s995 + $0xde0] sm:$0xff]
                  %1442 = vst [vmem:[%s996 + $0x6f0] sm:$0xff] %v1441
                  %v1443 = vld [vmem:[%s995 + $0xdf0] sm:$0xff]
                  %1444 = vst [vmem:[%s996 + $0x6f8] sm:$0xff] %v1443
                  %v1445 = vld [vmem:[%s995 + $0xe00] sm:$0xff]
                  %1446 = vst [vmem:[%s996 + $0x700] sm:$0xff] %v1445
                  %v1447 = vld [vmem:[%s995 + $0xe10] sm:$0xff]
                  %1448 = vst [vmem:[%s996 + $0x708] sm:$0xff] %v1447
                  %v1449 = vld [vmem:[%s995 + $0xe20] sm:$0xff]
                  %1450 = vst [vmem:[%s996 + $0x710] sm:$0xff] %v1449
                  %v1451 = vld [vmem:[%s995 + $0xe30] sm:$0xff]
                  %1452 = vst [vmem:[%s996 + $0x718] sm:$0xff] %v1451
                  %v1453 = vld [vmem:[%s995 + $0xe40] sm:$0xff]
                  %1454 = vst [vmem:[%s996 + $0x720] sm:$0xff] %v1453
                  %v1455 = vld [vmem:[%s995 + $0xe50] sm:$0xff]
                  %1456 = vst [vmem:[%s996 + $0x728] sm:$0xff] %v1455
                  %v1457 = vld [vmem:[%s995 + $0xe60] sm:$0xff]
                  %1458 = vst [vmem:[%s996 + $0x730] sm:$0xff] %v1457
                  %v1459 = vld [vmem:[%s995 + $0xe70] sm:$0xff]
                  %1460 = vst [vmem:[%s996 + $0x738] sm:$0xff] %v1459
                  %v1461 = vld [vmem:[%s995 + $0xe80] sm:$0xff]
                  %1462 = vst [vmem:[%s996 + $0x740] sm:$0xff] %v1461
                  %v1463 = vld [vmem:[%s995 + $0xe90] sm:$0xff]
                  %1464 = vst [vmem:[%s996 + $0x748] sm:$0xff] %v1463
                  %v1465 = vld [vmem:[%s995 + $0xea0] sm:$0xff]
                  %1466 = vst [vmem:[%s996 + $0x750] sm:$0xff] %v1465
                  %v1467 = vld [vmem:[%s995 + $0xeb0] sm:$0xff]
                  %1468 = vst [vmem:[%s996 + $0x758] sm:$0xff] %v1467
                  %v1469 = vld [vmem:[%s995 + $0xec0] sm:$0xff]
                  %1470 = vst [vmem:[%s996 + $0x760] sm:$0xff] %v1469
                  %v1471 = vld [vmem:[%s995 + $0xed0] sm:$0xff]
                  %1472 = vst [vmem:[%s996 + $0x768] sm:$0xff] %v1471
                  %v1473 = vld [vmem:[%s995 + $0xee0] sm:$0xff]
                  %1474 = vst [vmem:[%s996 + $0x770] sm:$0xff] %v1473
                  %v1475 = vld [vmem:[%s995 + $0xef0] sm:$0xff]
                  %1476 = vst [vmem:[%s996 + $0x778] sm:$0xff] %v1475
                  %v1477 = vld [vmem:[%s995 + $0xf00] sm:$0xff]
                  %1478 = vst [vmem:[%s996 + $0x780] sm:$0xff] %v1477
                  %v1479 = vld [vmem:[%s995 + $0xf10] sm:$0xff]
                  %1480 = vst [vmem:[%s996 + $0x788] sm:$0xff] %v1479
                  %v1481 = vld [vmem:[%s995 + $0xf20] sm:$0xff]
                  %1482 = vst [vmem:[%s996 + $0x790] sm:$0xff] %v1481
                  %v1483 = vld [vmem:[%s995 + $0xf30] sm:$0xff]
                  %1484 = vst [vmem:[%s996 + $0x798] sm:$0xff] %v1483
                  %v1485 = vld [vmem:[%s995 + $0xf40] sm:$0xff]
                  %1486 = vst [vmem:[%s996 + $0x7a0] sm:$0xff] %v1485
                  %v1487 = vld [vmem:[%s995 + $0xf50] sm:$0xff]
                  %1488 = vst [vmem:[%s996 + $0x7a8] sm:$0xff] %v1487
                  %v1489 = vld [vmem:[%s995 + $0xf60] sm:$0xff]
                  %1490 = vst [vmem:[%s996 + $0x7b0] sm:$0xff] %v1489
                  %v1491 = vld [vmem:[%s995 + $0xf70] sm:$0xff]
                  %1492 = vst [vmem:[%s996 + $0x7b8] sm:$0xff] %v1491
                  %v1493 = vld [vmem:[%s995 + $0xf80] sm:$0xff]
                  %1494 = vst [vmem:[%s996 + $0x7c0] sm:$0xff] %v1493
                  %v1495 = vld [vmem:[%s995 + $0xf90] sm:$0xff]
                  %1496 = vst [vmem:[%s996 + $0x7c8] sm:$0xff] %v1495
                  %v1497 = vld [vmem:[%s995 + $0xfa0] sm:$0xff]
                  %1498 = vst [vmem:[%s996 + $0x7d0] sm:$0xff] %v1497
                  %v1499 = vld [vmem:[%s995 + $0xfb0] sm:$0xff]
                  %1500 = vst [vmem:[%s996 + $0x7d8] sm:$0xff] %v1499
                  %v1501 = vld [vmem:[%s995 + $0xfc0] sm:$0xff]
                  %1502 = vst [vmem:[%s996 + $0x7e0] sm:$0xff] %v1501
                  %v1503 = vld [vmem:[%s995 + $0xfd0] sm:$0xff]
                  %1504 = vst [vmem:[%s996 + $0x7e8] sm:$0xff] %v1503
                  %v1505 = vld [vmem:[%s995 + $0xfe0] sm:$0xff]
                  %1506 = vst [vmem:[%s996 + $0x7f0] sm:$0xff] %v1505
                  %v1507 = vld [vmem:[%s995 + $0xff0] sm:$0xff]
                  %1508 = vst [vmem:[%s996 + $0x7f8] sm:$0xff] %v1507
                  %v1509 = vld [vmem:[%s995 + $0x1000] sm:$0xff]
                  %1510 = vst [vmem:[%s996 + $0x800] sm:$0xff] %v1509
                  %v1511 = vld [vmem:[%s995 + $0x1010] sm:$0xff]
                  %1512 = vst [vmem:[%s996 + $0x808] sm:$0xff] %v1511
                  %v1513 = vld [vmem:[%s995 + $0x1020] sm:$0xff]
                  %1514 = vst [vmem:[%s996 + $0x810] sm:$0xff] %v1513
                  %v1515 = vld [vmem:[%s995 + $0x1030] sm:$0xff]
                  %1516 = vst [vmem:[%s996 + $0x818] sm:$0xff] %v1515
                  %v1517 = vld [vmem:[%s995 + $0x1040] sm:$0xff]
                  %1518 = vst [vmem:[%s996 + $0x820] sm:$0xff] %v1517
                  %v1519 = vld [vmem:[%s995 + $0x1050] sm:$0xff]
                  %1520 = vst [vmem:[%s996 + $0x828] sm:$0xff] %v1519
                  %v1521 = vld [vmem:[%s995 + $0x1060] sm:$0xff]
                  %1522 = vst [vmem:[%s996 + $0x830] sm:$0xff] %v1521
                  %v1523 = vld [vmem:[%s995 + $0x1070] sm:$0xff]
                  %1524 = vst [vmem:[%s996 + $0x838] sm:$0xff] %v1523
                  %v1525 = vld [vmem:[%s995 + $0x1080] sm:$0xff]
                  %1526 = vst [vmem:[%s996 + $0x840] sm:$0xff] %v1525
                  %v1527 = vld [vmem:[%s995 + $0x1090] sm:$0xff]
                  %1528 = vst [vmem:[%s996 + $0x848] sm:$0xff] %v1527
                  %v1529 = vld [vmem:[%s995 + $0x10a0] sm:$0xff]
                  %1530 = vst [vmem:[%s996 + $0x850] sm:$0xff] %v1529
                  %v1531 = vld [vmem:[%s995 + $0x10b0] sm:$0xff]
                  %1532 = vst [vmem:[%s996 + $0x858] sm:$0xff] %v1531
                  %v1533 = vld [vmem:[%s995 + $0x10c0] sm:$0xff]
                  %1534 = vst [vmem:[%s996 + $0x860] sm:$0xff] %v1533
                  %v1535 = vld [vmem:[%s995 + $0x10d0] sm:$0xff]
                  %1536 = vst [vmem:[%s996 + $0x868] sm:$0xff] %v1535
                  %v1537 = vld [vmem:[%s995 + $0x10e0] sm:$0xff]
                  %1538 = vst [vmem:[%s996 + $0x870] sm:$0xff] %v1537
                  %v1539 = vld [vmem:[%s995 + $0x10f0] sm:$0xff]
                  %1540 = vst [vmem:[%s996 + $0x878] sm:$0xff] %v1539
                  %v1541 = vld [vmem:[%s995 + $0x1100] sm:$0xff]
                  %1542 = vst [vmem:[%s996 + $0x880] sm:$0xff] %v1541
                  %v1543 = vld [vmem:[%s995 + $0x1110] sm:$0xff]
                  %1544 = vst [vmem:[%s996 + $0x888] sm:$0xff] %v1543
                  %v1545 = vld [vmem:[%s995 + $0x1120] sm:$0xff]
                  %1546 = vst [vmem:[%s996 + $0x890] sm:$0xff] %v1545
                  %v1547 = vld [vmem:[%s995 + $0x1130] sm:$0xff]
                  %1548 = vst [vmem:[%s996 + $0x898] sm:$0xff] %v1547
                  %v1549 = vld [vmem:[%s995 + $0x1140] sm:$0xff]
                  %1550 = vst [vmem:[%s996 + $0x8a0] sm:$0xff] %v1549
                  %v1551 = vld [vmem:[%s995 + $0x1150] sm:$0xff]
                  %1552 = vst [vmem:[%s996 + $0x8a8] sm:$0xff] %v1551
                  %v1553 = vld [vmem:[%s995 + $0x1160] sm:$0xff]
                  %1554 = vst [vmem:[%s996 + $0x8b0] sm:$0xff] %v1553
                  %v1555 = vld [vmem:[%s995 + $0x1170] sm:$0xff]
                  %1556 = vst [vmem:[%s996 + $0x8b8] sm:$0xff] %v1555
                  %v1557 = vld [vmem:[%s995 + $0x1180] sm:$0xff]
                  %1558 = vst [vmem:[%s996 + $0x8c0] sm:$0xff] %v1557
                  %v1559 = vld [vmem:[%s995 + $0x1190] sm:$0xff]
                  %1560 = vst [vmem:[%s996 + $0x8c8] sm:$0xff] %v1559
                  %v1561 = vld [vmem:[%s995 + $0x11a0] sm:$0xff]
                  %1562 = vst [vmem:[%s996 + $0x8d0] sm:$0xff] %v1561
                  %v1563 = vld [vmem:[%s995 + $0x11b0] sm:$0xff]
                  %1564 = vst [vmem:[%s996 + $0x8d8] sm:$0xff] %v1563
                  %v1565 = vld [vmem:[%s995 + $0x11c0] sm:$0xff]
                  %1566 = vst [vmem:[%s996 + $0x8e0] sm:$0xff] %v1565
                  %v1567 = vld [vmem:[%s995 + $0x11d0] sm:$0xff]
                  %1568 = vst [vmem:[%s996 + $0x8e8] sm:$0xff] %v1567
                  %v1569 = vld [vmem:[%s995 + $0x11e0] sm:$0xff]
                  %1570 = vst [vmem:[%s996 + $0x8f0] sm:$0xff] %v1569
                  %v1571 = vld [vmem:[%s995 + $0x11f0] sm:$0xff]
                  %1572 = vst [vmem:[%s996 + $0x8f8] sm:$0xff] %v1571
                  %v1573 = vld [vmem:[%s995 + $0x1200] sm:$0xff]
                  %1574 = vst [vmem:[%s996 + $0x900] sm:$0xff] %v1573
                  %v1575 = vld [vmem:[%s995 + $0x1210] sm:$0xff]
                  %1576 = vst [vmem:[%s996 + $0x908] sm:$0xff] %v1575
                  %v1577 = vld [vmem:[%s995 + $0x1220] sm:$0xff]
                  %1578 = vst [vmem:[%s996 + $0x910] sm:$0xff] %v1577
                  %v1579 = vld [vmem:[%s995 + $0x1230] sm:$0xff]
                  %1580 = vst [vmem:[%s996 + $0x918] sm:$0xff] %v1579
                  %v1581 = vld [vmem:[%s995 + $0x1240] sm:$0xff]
                  %1582 = vst [vmem:[%s996 + $0x920] sm:$0xff] %v1581
                  %v1583 = vld [vmem:[%s995 + $0x1250] sm:$0xff]
                  %1584 = vst [vmem:[%s996 + $0x928] sm:$0xff] %v1583
                  %v1585 = vld [vmem:[%s995 + $0x1260] sm:$0xff]
                  %1586 = vst [vmem:[%s996 + $0x930] sm:$0xff] %v1585
                  %v1587 = vld [vmem:[%s995 + $0x1270] sm:$0xff]
                  %1588 = vst [vmem:[%s996 + $0x938] sm:$0xff] %v1587
                  %v1589 = vld [vmem:[%s995 + $0x1280] sm:$0xff]
                  %1590 = vst [vmem:[%s996 + $0x940] sm:$0xff] %v1589
                  %v1591 = vld [vmem:[%s995 + $0x1290] sm:$0xff]
                  %1592 = vst [vmem:[%s996 + $0x948] sm:$0xff] %v1591
                  %v1593 = vld [vmem:[%s995 + $0x12a0] sm:$0xff]
                  %1594 = vst [vmem:[%s996 + $0x950] sm:$0xff] %v1593
                  %v1595 = vld [vmem:[%s995 + $0x12b0] sm:$0xff]
                  %1596 = vst [vmem:[%s996 + $0x958] sm:$0xff] %v1595
                  %v1597 = vld [vmem:[%s995 + $0x12c0] sm:$0xff]
                  %1598 = vst [vmem:[%s996 + $0x960] sm:$0xff] %v1597
                  %v1599 = vld [vmem:[%s995 + $0x12d0] sm:$0xff]
                  %1600 = vst [vmem:[%s996 + $0x968] sm:$0xff] %v1599
                  %v1601 = vld [vmem:[%s995 + $0x12e0] sm:$0xff]
                  %1602 = vst [vmem:[%s996 + $0x970] sm:$0xff] %v1601
                  %v1603 = vld [vmem:[%s995 + $0x12f0] sm:$0xff]
                  %1604 = vst [vmem:[%s996 + $0x978] sm:$0xff] %v1603
                  %v1605 = vld [vmem:[%s995 + $0x1300] sm:$0xff]
                  %1606 = vst [vmem:[%s996 + $0x980] sm:$0xff] %v1605
                  %v1607 = vld [vmem:[%s995 + $0x1310] sm:$0xff]
                  %1608 = vst [vmem:[%s996 + $0x988] sm:$0xff] %v1607
                  %v1609 = vld [vmem:[%s995 + $0x1320] sm:$0xff]
                  %1610 = vst [vmem:[%s996 + $0x990] sm:$0xff] %v1609
                  %v1611 = vld [vmem:[%s995 + $0x1330] sm:$0xff]
                  %1612 = vst [vmem:[%s996 + $0x998] sm:$0xff] %v1611
                  %v1613 = vld [vmem:[%s995 + $0x1340] sm:$0xff]
                  %1614 = vst [vmem:[%s996 + $0x9a0] sm:$0xff] %v1613
                  %v1615 = vld [vmem:[%s995 + $0x1350] sm:$0xff]
                  %1616 = vst [vmem:[%s996 + $0x9a8] sm:$0xff] %v1615
                  %v1617 = vld [vmem:[%s995 + $0x1360] sm:$0xff]
                  %1618 = vst [vmem:[%s996 + $0x9b0] sm:$0xff] %v1617
                  %v1619 = vld [vmem:[%s995 + $0x1370] sm:$0xff]
                  %1620 = vst [vmem:[%s996 + $0x9b8] sm:$0xff] %v1619
                  %v1621 = vld [vmem:[%s995 + $0x1380] sm:$0xff]
                  %1622 = vst [vmem:[%s996 + $0x9c0] sm:$0xff] %v1621
                  %v1623 = vld [vmem:[%s995 + $0x1390] sm:$0xff]
                  %1624 = vst [vmem:[%s996 + $0x9c8] sm:$0xff] %v1623
                  %v1625 = vld [vmem:[%s995 + $0x13a0] sm:$0xff]
                  %1626 = vst [vmem:[%s996 + $0x9d0] sm:$0xff] %v1625
                  %v1627 = vld [vmem:[%s995 + $0x13b0] sm:$0xff]
                  %1628 = vst [vmem:[%s996 + $0x9d8] sm:$0xff] %v1627
                  %v1629 = vld [vmem:[%s995 + $0x13c0] sm:$0xff]
                  %1630 = vst [vmem:[%s996 + $0x9e0] sm:$0xff] %v1629
                  %v1631 = vld [vmem:[%s995 + $0x13d0] sm:$0xff]
                  %1632 = vst [vmem:[%s996 + $0x9e8] sm:$0xff] %v1631
                  %v1633 = vld [vmem:[%s995 + $0x13e0] sm:$0xff]
                  %1634 = vst [vmem:[%s996 + $0x9f0] sm:$0xff] %v1633
                  %v1635 = vld [vmem:[%s995 + $0x13f0] sm:$0xff]
                  %1636 = vst [vmem:[%s996 + $0x9f8] sm:$0xff] %v1635
                  %v1637 = vld [vmem:[%s995 + $0x1400] sm:$0xff]
                  %1638 = vst [vmem:[%s996 + $0xa00] sm:$0xff] %v1637
                  %v1639 = vld [vmem:[%s995 + $0x1410] sm:$0xff]
                  %1640 = vst [vmem:[%s996 + $0xa08] sm:$0xff] %v1639
                  %v1641 = vld [vmem:[%s995 + $0x1420] sm:$0xff]
                  %1642 = vst [vmem:[%s996 + $0xa10] sm:$0xff] %v1641
                  %v1643 = vld [vmem:[%s995 + $0x1430] sm:$0xff]
                  %1644 = vst [vmem:[%s996 + $0xa18] sm:$0xff] %v1643
                  %v1645 = vld [vmem:[%s995 + $0x1440] sm:$0xff]
                  %1646 = vst [vmem:[%s996 + $0xa20] sm:$0xff] %v1645
                  %v1647 = vld [vmem:[%s995 + $0x1450] sm:$0xff]
                  %1648 = vst [vmem:[%s996 + $0xa28] sm:$0xff] %v1647
                  %v1649 = vld [vmem:[%s995 + $0x1460] sm:$0xff]
                  %1650 = vst [vmem:[%s996 + $0xa30] sm:$0xff] %v1649
                  %v1651 = vld [vmem:[%s995 + $0x1470] sm:$0xff]
                  %1652 = vst [vmem:[%s996 + $0xa38] sm:$0xff] %v1651
                  %v1653 = vld [vmem:[%s995 + $0x1480] sm:$0xff]
                  %1654 = vst [vmem:[%s996 + $0xa40] sm:$0xff] %v1653
                  %v1655 = vld [vmem:[%s995 + $0x1490] sm:$0xff]
                  %1656 = vst [vmem:[%s996 + $0xa48] sm:$0xff] %v1655
                  %v1657 = vld [vmem:[%s995 + $0x14a0] sm:$0xff]
                  %1658 = vst [vmem:[%s996 + $0xa50] sm:$0xff] %v1657
                  %v1659 = vld [vmem:[%s995 + $0x14b0] sm:$0xff]
                  %1660 = vst [vmem:[%s996 + $0xa58] sm:$0xff] %v1659
                  %v1661 = vld [vmem:[%s995 + $0x14c0] sm:$0xff]
                  %1662 = vst [vmem:[%s996 + $0xa60] sm:$0xff] %v1661
                  %v1663 = vld [vmem:[%s995 + $0x14d0] sm:$0xff]
                  %1664 = vst [vmem:[%s996 + $0xa68] sm:$0xff] %v1663
                  %v1665 = vld [vmem:[%s995 + $0x14e0] sm:$0xff]
                  %1666 = vst [vmem:[%s996 + $0xa70] sm:$0xff] %v1665
                  %v1667 = vld [vmem:[%s995 + $0x14f0] sm:$0xff]
                  %1668 = vst [vmem:[%s996 + $0xa78] sm:$0xff] %v1667
                  %v1669 = vld [vmem:[%s995 + $0x1500] sm:$0xff]
                  %1670 = vst [vmem:[%s996 + $0xa80] sm:$0xff] %v1669
                  %v1671 = vld [vmem:[%s995 + $0x1510] sm:$0xff]
                  %1672 = vst [vmem:[%s996 + $0xa88] sm:$0xff] %v1671
                  %v1673 = vld [vmem:[%s995 + $0x1520] sm:$0xff]
                  %1674 = vst [vmem:[%s996 + $0xa90] sm:$0xff] %v1673
                  %v1675 = vld [vmem:[%s995 + $0x1530] sm:$0xff]
                  %1676 = vst [vmem:[%s996 + $0xa98] sm:$0xff] %v1675
                  %v1677 = vld [vmem:[%s995 + $0x1540] sm:$0xff]
                  %1678 = vst [vmem:[%s996 + $0xaa0] sm:$0xff] %v1677
                  %v1679 = vld [vmem:[%s995 + $0x1550] sm:$0xff]
                  %1680 = vst [vmem:[%s996 + $0xaa8] sm:$0xff] %v1679
                  %v1681 = vld [vmem:[%s995 + $0x1560] sm:$0xff]
                  %1682 = vst [vmem:[%s996 + $0xab0] sm:$0xff] %v1681
                  %v1683 = vld [vmem:[%s995 + $0x1570] sm:$0xff]
                  %1684 = vst [vmem:[%s996 + $0xab8] sm:$0xff] %v1683
                  %v1685 = vld [vmem:[%s995 + $0x1580] sm:$0xff]
                  %1686 = vst [vmem:[%s996 + $0xac0] sm:$0xff] %v1685
                  %v1687 = vld [vmem:[%s995 + $0x1590] sm:$0xff]
                  %1688 = vst [vmem:[%s996 + $0xac8] sm:$0xff] %v1687
                  %v1689 = vld [vmem:[%s995 + $0x15a0] sm:$0xff]
                  %1690 = vst [vmem:[%s996 + $0xad0] sm:$0xff] %v1689
                  %v1691 = vld [vmem:[%s995 + $0x15b0] sm:$0xff]
                  %1692 = vst [vmem:[%s996 + $0xad8] sm:$0xff] %v1691
                  %v1693 = vld [vmem:[%s995 + $0x15c0] sm:$0xff]
                  %1694 = vst [vmem:[%s996 + $0xae0] sm:$0xff] %v1693
                  %v1695 = vld [vmem:[%s995 + $0x15d0] sm:$0xff]
                  %1696 = vst [vmem:[%s996 + $0xae8] sm:$0xff] %v1695
                  %v1697 = vld [vmem:[%s995 + $0x15e0] sm:$0xff]
                  %1698 = vst [vmem:[%s996 + $0xaf0] sm:$0xff] %v1697
                  %v1699 = vld [vmem:[%s995 + $0x15f0] sm:$0xff]
                  %1700 = vst [vmem:[%s996 + $0xaf8] sm:$0xff] %v1699
                  %v1701 = vld [vmem:[%s995 + $0x1600] sm:$0xff]
                  %1702 = vst [vmem:[%s996 + $0xb00] sm:$0xff] %v1701
                  %v1703 = vld [vmem:[%s995 + $0x1610] sm:$0xff]
                  %1704 = vst [vmem:[%s996 + $0xb08] sm:$0xff] %v1703
                  %v1705 = vld [vmem:[%s995 + $0x1620] sm:$0xff]
                  %1706 = vst [vmem:[%s996 + $0xb10] sm:$0xff] %v1705
                  %v1707 = vld [vmem:[%s995 + $0x1630] sm:$0xff]
                  %1708 = vst [vmem:[%s996 + $0xb18] sm:$0xff] %v1707
                  %v1709 = vld [vmem:[%s995 + $0x1640] sm:$0xff]
                  %1710 = vst [vmem:[%s996 + $0xb20] sm:$0xff] %v1709
                  %v1711 = vld [vmem:[%s995 + $0x1650] sm:$0xff]
                  %1712 = vst [vmem:[%s996 + $0xb28] sm:$0xff] %v1711
                  %v1713 = vld [vmem:[%s995 + $0x1660] sm:$0xff]
                  %1714 = vst [vmem:[%s996 + $0xb30] sm:$0xff] %v1713
                  %v1715 = vld [vmem:[%s995 + $0x1670] sm:$0xff]
                  %1716 = vst [vmem:[%s996 + $0xb38] sm:$0xff] %v1715
                  %v1717 = vld [vmem:[%s995 + $0x1680] sm:$0xff]
                  %1718 = vst [vmem:[%s996 + $0xb40] sm:$0xff] %v1717
                  %v1719 = vld [vmem:[%s995 + $0x1690] sm:$0xff]
                  %1720 = vst [vmem:[%s996 + $0xb48] sm:$0xff] %v1719
                  %v1721 = vld [vmem:[%s995 + $0x16a0] sm:$0xff]
                  %1722 = vst [vmem:[%s996 + $0xb50] sm:$0xff] %v1721
                  %v1723 = vld [vmem:[%s995 + $0x16b0] sm:$0xff]
                  %1724 = vst [vmem:[%s996 + $0xb58] sm:$0xff] %v1723
                  %v1725 = vld [vmem:[%s995 + $0x16c0] sm:$0xff]
                  %1726 = vst [vmem:[%s996 + $0xb60] sm:$0xff] %v1725
                  %v1727 = vld [vmem:[%s995 + $0x16d0] sm:$0xff]
                  %1728 = vst [vmem:[%s996 + $0xb68] sm:$0xff] %v1727
                  %v1729 = vld [vmem:[%s995 + $0x16e0] sm:$0xff]
                  %1730 = vst [vmem:[%s996 + $0xb70] sm:$0xff] %v1729
                  %v1731 = vld [vmem:[%s995 + $0x16f0] sm:$0xff]
                  %1732 = vst [vmem:[%s996 + $0xb78] sm:$0xff] %v1731
                  %v1733 = vld [vmem:[%s995 + $0x1700] sm:$0xff]
                  %1734 = vst [vmem:[%s996 + $0xb80] sm:$0xff] %v1733
                  %v1735 = vld [vmem:[%s995 + $0x1710] sm:$0xff]
                  %1736 = vst [vmem:[%s996 + $0xb88] sm:$0xff] %v1735
                  %v1737 = vld [vmem:[%s995 + $0x1720] sm:$0xff]
                  %1738 = vst [vmem:[%s996 + $0xb90] sm:$0xff] %v1737
                  %v1739 = vld [vmem:[%s995 + $0x1730] sm:$0xff]
                  %1740 = vst [vmem:[%s996 + $0xb98] sm:$0xff] %v1739
                  %v1741 = vld [vmem:[%s995 + $0x1740] sm:$0xff]
                  %1742 = vst [vmem:[%s996 + $0xba0] sm:$0xff] %v1741
                  %v1743 = vld [vmem:[%s995 + $0x1750] sm:$0xff]
                  %1744 = vst [vmem:[%s996 + $0xba8] sm:$0xff] %v1743
                  %v1745 = vld [vmem:[%s995 + $0x1760] sm:$0xff]
                  %1746 = vst [vmem:[%s996 + $0xbb0] sm:$0xff] %v1745
                  %v1747 = vld [vmem:[%s995 + $0x1770] sm:$0xff]
                  %1748 = vst [vmem:[%s996 + $0xbb8] sm:$0xff] %v1747
                  %v1749 = vld [vmem:[%s995 + $0x1780] sm:$0xff]
                  %1750 = vst [vmem:[%s996 + $0xbc0] sm:$0xff] %v1749
                  %v1751 = vld [vmem:[%s995 + $0x1790] sm:$0xff]
                  %1752 = vst [vmem:[%s996 + $0xbc8] sm:$0xff] %v1751
                  %v1753 = vld [vmem:[%s995 + $0x17a0] sm:$0xff]
                  %1754 = vst [vmem:[%s996 + $0xbd0] sm:$0xff] %v1753
                  %v1755 = vld [vmem:[%s995 + $0x17b0] sm:$0xff]
                  %1756 = vst [vmem:[%s996 + $0xbd8] sm:$0xff] %v1755
                  %v1757 = vld [vmem:[%s995 + $0x17c0] sm:$0xff]
                  %1758 = vst [vmem:[%s996 + $0xbe0] sm:$0xff] %v1757
                  %v1759 = vld [vmem:[%s995 + $0x17d0] sm:$0xff]
                  %1760 = vst [vmem:[%s996 + $0xbe8] sm:$0xff] %v1759
                  %v1761 = vld [vmem:[%s995 + $0x17e0] sm:$0xff]
                  %1762 = vst [vmem:[%s996 + $0xbf0] sm:$0xff] %v1761
                  %v1763 = vld [vmem:[%s995 + $0x17f0] sm:$0xff]
                  %1764 = vst [vmem:[%s996 + $0xbf8] sm:$0xff] %v1763
                  %v1765 = vld [vmem:[%s995 + $0x1800] sm:$0xff]
                  %1766 = vst [vmem:[%s996 + $0xc00] sm:$0xff] %v1765
                  %v1767 = vld [vmem:[%s995 + $0x1810] sm:$0xff]
                  %1768 = vst [vmem:[%s996 + $0xc08] sm:$0xff] %v1767
                  %v1769 = vld [vmem:[%s995 + $0x1820] sm:$0xff]
                  %1770 = vst [vmem:[%s996 + $0xc10] sm:$0xff] %v1769
                  %v1771 = vld [vmem:[%s995 + $0x1830] sm:$0xff]
                  %1772 = vst [vmem:[%s996 + $0xc18] sm:$0xff] %v1771
                  %v1773 = vld [vmem:[%s995 + $0x1840] sm:$0xff]
                  %1774 = vst [vmem:[%s996 + $0xc20] sm:$0xff] %v1773
                  %v1775 = vld [vmem:[%s995 + $0x1850] sm:$0xff]
                  %1776 = vst [vmem:[%s996 + $0xc28] sm:$0xff] %v1775
                  %v1777 = vld [vmem:[%s995 + $0x1860] sm:$0xff]
                  %1778 = vst [vmem:[%s996 + $0xc30] sm:$0xff] %v1777
                  %v1779 = vld [vmem:[%s995 + $0x1870] sm:$0xff]
                  %1780 = vst [vmem:[%s996 + $0xc38] sm:$0xff] %v1779
                $region56: #{_lambda_.7} parent=50 // loop_footer
                  %s994 = sadd.s32 1, %s990
                $region57: #{_lambda_.7} parent=50 // loop_footer_branch
                  %989 = sbr.rel target = $region53
                $region58: #{_lambda_.7} parent=50 // loop_exit
                  _
              $region51: #{_lambda_.7} parent=35 // pred_fallthru
                _
              // Predicated region
              $region59: #{_lambda_.7} parent=35 // pred_check
                _
              $region60: #{_lambda_.7} parent=35 // pred_check_branch
                %1782 = sbr.rel target = $region62
              $region61: #{_lambda_.7} parent=35 // pred_region
                _
              $region62: #{_lambda_.7} parent=35 // pred_fallthru
                _
            $region36: #{_lambda_.7} parent=31 // pred_fallthru
              _
            // Predicated region
            $region37: #{_lambda_.7} parent=31 // pred_check
              _
            $region38: #{_lambda_.7} parent=31 // pred_check_branch
              %193 = sbr.rel target = $region40
            $region39: #{_lambda_.7} parent=31 // pred_region
              loop: start=0, step=1, limit=1
              $region41: #{_lambda_.7} parent=39 // loop_pre_header
                _
              $region42: #{_lambda_.7} parent=39 // loop_header
                %s196 = sphi 0, %s200
                %p197 = scmp.ge.s32.totalorder %s196, 1
                %s201 = sphi %s187, %s187
                %s202 = sphi %s184, %s184
              $region43: #{_lambda_.7} parent=39 // loop_header_branch
                %199 = sbr.rel (%p197) target = $region47
              $region44: #{_lambda_.7} parent=39 // loop_body
                %v203 = vld [vmem:[%s201] sm:$0xff]
                %204 = vst [vmem:[%s202] sm:$0xff] %v203
                %v205 = vld [vmem:[%s201 + $0x10] sm:$0xff]
                %206 = vst [vmem:[%s202 + $0x8] sm:$0xff] %v205
                %v207 = vld [vmem:[%s201 + $0x20] sm:$0xff]
                %208 = vst [vmem:[%s202 + $0x10] sm:$0xff] %v207
                %v209 = vld [vmem:[%s201 + $0x30] sm:$0xff]
                %210 = vst [vmem:[%s202 + $0x18] sm:$0xff] %v209
                %v211 = vld [vmem:[%s201 + $0x40] sm:$0xff]
                %212 = vst [vmem:[%s202 + $0x20] sm:$0xff] %v211
                %v213 = vld [vmem:[%s201 + $0x50] sm:$0xff]
                %214 = vst [vmem:[%s202 + $0x28] sm:$0xff] %v213
                %v215 = vld [vmem:[%s201 + $0x60] sm:$0xff]
                %216 = vst [vmem:[%s202 + $0x30] sm:$0xff] %v215
                %v217 = vld [vmem:[%s201 + $0x70] sm:$0xff]
                %218 = vst [vmem:[%s202 + $0x38] sm:$0xff] %v217
                %v219 = vld [vmem:[%s201 + $0x80] sm:$0xff]
                %220 = vst [vmem:[%s202 + $0x40] sm:$0xff] %v219
                %v221 = vld [vmem:[%s201 + $0x90] sm:$0xff]
                %222 = vst [vmem:[%s202 + $0x48] sm:$0xff] %v221
                %v223 = vld [vmem:[%s201 + $0xa0] sm:$0xff]
                %224 = vst [vmem:[%s202 + $0x50] sm:$0xff] %v223
                %v225 = vld [vmem:[%s201 + $0xb0] sm:$0xff]
                %226 = vst [vmem:[%s202 + $0x58] sm:$0xff] %v225
                %v227 = vld [vmem:[%s201 + $0xc0] sm:$0xff]
                %228 = vst [vmem:[%s202 + $0x60] sm:$0xff] %v227
                %v229 = vld [vmem:[%s201 + $0xd0] sm:$0xff]
                %230 = vst [vmem:[%s202 + $0x68] sm:$0xff] %v229
                %v231 = vld [vmem:[%s201 + $0xe0] sm:$0xff]
                %232 = vst [vmem:[%s202 + $0x70] sm:$0xff] %v231
                %v233 = vld [vmem:[%s201 + $0xf0] sm:$0xff]
                %234 = vst [vmem:[%s202 + $0x78] sm:$0xff] %v233
                %v235 = vld [vmem:[%s201 + $0x100] sm:$0xff]
                %236 = vst [vmem:[%s202 + $0x80] sm:$0xff] %v235
                %v237 = vld [vmem:[%s201 + $0x110] sm:$0xff]
                %238 = vst [vmem:[%s202 + $0x88] sm:$0xff] %v237
                %v239 = vld [vmem:[%s201 + $0x120] sm:$0xff]
                %240 = vst [vmem:[%s202 + $0x90] sm:$0xff] %v239
                %v241 = vld [vmem:[%s201 + $0x130] sm:$0xff]
                %242 = vst [vmem:[%s202 + $0x98] sm:$0xff] %v241
                %v243 = vld [vmem:[%s201 + $0x140] sm:$0xff]
                %244 = vst [vmem:[%s202 + $0xa0] sm:$0xff] %v243
                %v245 = vld [vmem:[%s201 + $0x150] sm:$0xff]
                %246 = vst [vmem:[%s202 + $0xa8] sm:$0xff] %v245
                %v247 = vld [vmem:[%s201 + $0x160] sm:$0xff]
                %248 = vst [vmem:[%s202 + $0xb0] sm:$0xff] %v247
                %v249 = vld [vmem:[%s201 + $0x170] sm:$0xff]
                %250 = vst [vmem:[%s202 + $0xb8] sm:$0xff] %v249
                %v251 = vld [vmem:[%s201 + $0x180] sm:$0xff]
                %252 = vst [vmem:[%s202 + $0xc0] sm:$0xff] %v251
                %v253 = vld [vmem:[%s201 + $0x190] sm:$0xff]
                %254 = vst [vmem:[%s202 + $0xc8] sm:$0xff] %v253
                %v255 = vld [vmem:[%s201 + $0x1a0] sm:$0xff]
                %256 = vst [vmem:[%s202 + $0xd0] sm:$0xff] %v255
                %v257 = vld [vmem:[%s201 + $0x1b0] sm:$0xff]
                %258 = vst [vmem:[%s202 + $0xd8] sm:$0xff] %v257
                %v259 = vld [vmem:[%s201 + $0x1c0] sm:$0xff]
                %260 = vst [vmem:[%s202 + $0xe0] sm:$0xff] %v259
                %v261 = vld [vmem:[%s201 + $0x1d0] sm:$0xff]
                %262 = vst [vmem:[%s202 + $0xe8] sm:$0xff] %v261
                %v263 = vld [vmem:[%s201 + $0x1e0] sm:$0xff]
                %264 = vst [vmem:[%s202 + $0xf0] sm:$0xff] %v263
                %v265 = vld [vmem:[%s201 + $0x1f0] sm:$0xff]
                %266 = vst [vmem:[%s202 + $0xf8] sm:$0xff] %v265
                %v267 = vld [vmem:[%s201 + $0x200] sm:$0xff]
                %268 = vst [vmem:[%s202 + $0x100] sm:$0xff] %v267
                %v269 = vld [vmem:[%s201 + $0x210] sm:$0xff]
                %270 = vst [vmem:[%s202 + $0x108] sm:$0xff] %v269
                %v271 = vld [vmem:[%s201 + $0x220] sm:$0xff]
                %272 = vst [vmem:[%s202 + $0x110] sm:$0xff] %v271
                %v273 = vld [vmem:[%s201 + $0x230] sm:$0xff]
                %274 = vst [vmem:[%s202 + $0x118] sm:$0xff] %v273
                %v275 = vld [vmem:[%s201 + $0x240] sm:$0xff]
                %276 = vst [vmem:[%s202 + $0x120] sm:$0xff] %v275
                %v277 = vld [vmem:[%s201 + $0x250] sm:$0xff]
                %278 = vst [vmem:[%s202 + $0x128] sm:$0xff] %v277
                %v279 = vld [vmem:[%s201 + $0x260] sm:$0xff]
                %280 = vst [vmem:[%s202 + $0x130] sm:$0xff] %v279
                %v281 = vld [vmem:[%s201 + $0x270] sm:$0xff]
                %282 = vst [vmem:[%s202 + $0x138] sm:$0xff] %v281
                %v283 = vld [vmem:[%s201 + $0x280] sm:$0xff]
                %284 = vst [vmem:[%s202 + $0x140] sm:$0xff] %v283
                %v285 = vld [vmem:[%s201 + $0x290] sm:$0xff]
                %286 = vst [vmem:[%s202 + $0x148] sm:$0xff] %v285
                %v287 = vld [vmem:[%s201 + $0x2a0] sm:$0xff]
                %288 = vst [vmem:[%s202 + $0x150] sm:$0xff] %v287
                %v289 = vld [vmem:[%s201 + $0x2b0] sm:$0xff]
                %290 = vst [vmem:[%s202 + $0x158] sm:$0xff] %v289
                %v291 = vld [vmem:[%s201 + $0x2c0] sm:$0xff]
                %292 = vst [vmem:[%s202 + $0x160] sm:$0xff] %v291
                %v293 = vld [vmem:[%s201 + $0x2d0] sm:$0xff]
                %294 = vst [vmem:[%s202 + $0x168] sm:$0xff] %v293
                %v295 = vld [vmem:[%s201 + $0x2e0] sm:$0xff]
                %296 = vst [vmem:[%s202 + $0x170] sm:$0xff] %v295
                %v297 = vld [vmem:[%s201 + $0x2f0] sm:$0xff]
                %298 = vst [vmem:[%s202 + $0x178] sm:$0xff] %v297
                %v299 = vld [vmem:[%s201 + $0x300] sm:$0xff]
                %300 = vst [vmem:[%s202 + $0x180] sm:$0xff] %v299
                %v301 = vld [vmem:[%s201 + $0x310] sm:$0xff]
                %302 = vst [vmem:[%s202 + $0x188] sm:$0xff] %v301
                %v303 = vld [vmem:[%s201 + $0x320] sm:$0xff]
                %304 = vst [vmem:[%s202 + $0x190] sm:$0xff] %v303
                %v305 = vld [vmem:[%s201 + $0x330] sm:$0xff]
                %306 = vst [vmem:[%s202 + $0x198] sm:$0xff] %v305
                %v307 = vld [vmem:[%s201 + $0x340] sm:$0xff]
                %308 = vst [vmem:[%s202 + $0x1a0] sm:$0xff] %v307
                %v309 = vld [vmem:[%s201 + $0x350] sm:$0xff]
                %310 = vst [vmem:[%s202 + $0x1a8] sm:$0xff] %v309
                %v311 = vld [vmem:[%s201 + $0x360] sm:$0xff]
                %312 = vst [vmem:[%s202 + $0x1b0] sm:$0xff] %v311
                %v313 = vld [vmem:[%s201 + $0x370] sm:$0xff]
                %314 = vst [vmem:[%s202 + $0x1b8] sm:$0xff] %v313
                %v315 = vld [vmem:[%s201 + $0x380] sm:$0xff]
                %316 = vst [vmem:[%s202 + $0x1c0] sm:$0xff] %v315
                %v317 = vld [vmem:[%s201 + $0x390] sm:$0xff]
                %318 = vst [vmem:[%s202 + $0x1c8] sm:$0xff] %v317
                %v319 = vld [vmem:[%s201 + $0x3a0] sm:$0xff]
                %320 = vst [vmem:[%s202 + $0x1d0] sm:$0xff] %v319
                %v321 = vld [vmem:[%s201 + $0x3b0] sm:$0xff]
                %322 = vst [vmem:[%s202 + $0x1d8] sm:$0xff] %v321
                %v323 = vld [vmem:[%s201 + $0x3c0] sm:$0xff]
                %324 = vst [vmem:[%s202 + $0x1e0] sm:$0xff] %v323
                %v325 = vld [vmem:[%s201 + $0x3d0] sm:$0xff]
                %326 = vst [vmem:[%s202 + $0x1e8] sm:$0xff] %v325
                %v327 = vld [vmem:[%s201 + $0x3e0] sm:$0xff]
                %328 = vst [vmem:[%s202 + $0x1f0] sm:$0xff] %v327
                %v329 = vld [vmem:[%s201 + $0x3f0] sm:$0xff]
                %330 = vst [vmem:[%s202 + $0x1f8] sm:$0xff] %v329
                %v331 = vld [vmem:[%s201 + $0x400] sm:$0xff]
                %332 = vst [vmem:[%s202 + $0x200] sm:$0xff] %v331
                %v333 = vld [vmem:[%s201 + $0x410] sm:$0xff]
                %334 = vst [vmem:[%s202 + $0x208] sm:$0xff] %v333
                %v335 = vld [vmem:[%s201 + $0x420] sm:$0xff]
                %336 = vst [vmem:[%s202 + $0x210] sm:$0xff] %v335
                %v337 = vld [vmem:[%s201 + $0x430] sm:$0xff]
                %338 = vst [vmem:[%s202 + $0x218] sm:$0xff] %v337
                %v339 = vld [vmem:[%s201 + $0x440] sm:$0xff]
                %340 = vst [vmem:[%s202 + $0x220] sm:$0xff] %v339
                %v341 = vld [vmem:[%s201 + $0x450] sm:$0xff]
                %342 = vst [vmem:[%s202 + $0x228] sm:$0xff] %v341
                %v343 = vld [vmem:[%s201 + $0x460] sm:$0xff]
                %344 = vst [vmem:[%s202 + $0x230] sm:$0xff] %v343
                %v345 = vld [vmem:[%s201 + $0x470] sm:$0xff]
                %346 = vst [vmem:[%s202 + $0x238] sm:$0xff] %v345
                %v347 = vld [vmem:[%s201 + $0x480] sm:$0xff]
                %348 = vst [vmem:[%s202 + $0x240] sm:$0xff] %v347
                %v349 = vld [vmem:[%s201 + $0x490] sm:$0xff]
                %350 = vst [vmem:[%s202 + $0x248] sm:$0xff] %v349
                %v351 = vld [vmem:[%s201 + $0x4a0] sm:$0xff]
                %352 = vst [vmem:[%s202 + $0x250] sm:$0xff] %v351
                %v353 = vld [vmem:[%s201 + $0x4b0] sm:$0xff]
                %354 = vst [vmem:[%s202 + $0x258] sm:$0xff] %v353
                %v355 = vld [vmem:[%s201 + $0x4c0] sm:$0xff]
                %356 = vst [vmem:[%s202 + $0x260] sm:$0xff] %v355
                %v357 = vld [vmem:[%s201 + $0x4d0] sm:$0xff]
                %358 = vst [vmem:[%s202 + $0x268] sm:$0xff] %v357
                %v359 = vld [vmem:[%s201 + $0x4e0] sm:$0xff]
                %360 = vst [vmem:[%s202 + $0x270] sm:$0xff] %v359
                %v361 = vld [vmem:[%s201 + $0x4f0] sm:$0xff]
                %362 = vst [vmem:[%s202 + $0x278] sm:$0xff] %v361
                %v363 = vld [vmem:[%s201 + $0x500] sm:$0xff]
                %364 = vst [vmem:[%s202 + $0x280] sm:$0xff] %v363
                %v365 = vld [vmem:[%s201 + $0x510] sm:$0xff]
                %366 = vst [vmem:[%s202 + $0x288] sm:$0xff] %v365
                %v367 = vld [vmem:[%s201 + $0x520] sm:$0xff]
                %368 = vst [vmem:[%s202 + $0x290] sm:$0xff] %v367
                %v369 = vld [vmem:[%s201 + $0x530] sm:$0xff]
                %370 = vst [vmem:[%s202 + $0x298] sm:$0xff] %v369
                %v371 = vld [vmem:[%s201 + $0x540] sm:$0xff]
                %372 = vst [vmem:[%s202 + $0x2a0] sm:$0xff] %v371
                %v373 = vld [vmem:[%s201 + $0x550] sm:$0xff]
                %374 = vst [vmem:[%s202 + $0x2a8] sm:$0xff] %v373
                %v375 = vld [vmem:[%s201 + $0x560] sm:$0xff]
                %376 = vst [vmem:[%s202 + $0x2b0] sm:$0xff] %v375
                %v377 = vld [vmem:[%s201 + $0x570] sm:$0xff]
                %378 = vst [vmem:[%s202 + $0x2b8] sm:$0xff] %v377
                %v379 = vld [vmem:[%s201 + $0x580] sm:$0xff]
                %380 = vst [vmem:[%s202 + $0x2c0] sm:$0xff] %v379
                %v381 = vld [vmem:[%s201 + $0x590] sm:$0xff]
                %382 = vst [vmem:[%s202 + $0x2c8] sm:$0xff] %v381
                %v383 = vld [vmem:[%s201 + $0x5a0] sm:$0xff]
                %384 = vst [vmem:[%s202 + $0x2d0] sm:$0xff] %v383
                %v385 = vld [vmem:[%s201 + $0x5b0] sm:$0xff]
                %386 = vst [vmem:[%s202 + $0x2d8] sm:$0xff] %v385
                %v387 = vld [vmem:[%s201 + $0x5c0] sm:$0xff]
                %388 = vst [vmem:[%s202 + $0x2e0] sm:$0xff] %v387
                %v389 = vld [vmem:[%s201 + $0x5d0] sm:$0xff]
                %390 = vst [vmem:[%s202 + $0x2e8] sm:$0xff] %v389
                %v391 = vld [vmem:[%s201 + $0x5e0] sm:$0xff]
                %392 = vst [vmem:[%s202 + $0x2f0] sm:$0xff] %v391
                %v393 = vld [vmem:[%s201 + $0x5f0] sm:$0xff]
                %394 = vst [vmem:[%s202 + $0x2f8] sm:$0xff] %v393
                %v395 = vld [vmem:[%s201 + $0x600] sm:$0xff]
                %396 = vst [vmem:[%s202 + $0x300] sm:$0xff] %v395
                %v397 = vld [vmem:[%s201 + $0x610] sm:$0xff]
                %398 = vst [vmem:[%s202 + $0x308] sm:$0xff] %v397
                %v399 = vld [vmem:[%s201 + $0x620] sm:$0xff]
                %400 = vst [vmem:[%s202 + $0x310] sm:$0xff] %v399
                %v401 = vld [vmem:[%s201 + $0x630] sm:$0xff]
                %402 = vst [vmem:[%s202 + $0x318] sm:$0xff] %v401
                %v403 = vld [vmem:[%s201 + $0x640] sm:$0xff]
                %404 = vst [vmem:[%s202 + $0x320] sm:$0xff] %v403
                %v405 = vld [vmem:[%s201 + $0x650] sm:$0xff]
                %406 = vst [vmem:[%s202 + $0x328] sm:$0xff] %v405
                %v407 = vld [vmem:[%s201 + $0x660] sm:$0xff]
                %408 = vst [vmem:[%s202 + $0x330] sm:$0xff] %v407
                %v409 = vld [vmem:[%s201 + $0x670] sm:$0xff]
                %410 = vst [vmem:[%s202 + $0x338] sm:$0xff] %v409
                %v411 = vld [vmem:[%s201 + $0x680] sm:$0xff]
                %412 = vst [vmem:[%s202 + $0x340] sm:$0xff] %v411
                %v413 = vld [vmem:[%s201 + $0x690] sm:$0xff]
                %414 = vst [vmem:[%s202 + $0x348] sm:$0xff] %v413
                %v415 = vld [vmem:[%s201 + $0x6a0] sm:$0xff]
                %416 = vst [vmem:[%s202 + $0x350] sm:$0xff] %v415
                %v417 = vld [vmem:[%s201 + $0x6b0] sm:$0xff]
                %418 = vst [vmem:[%s202 + $0x358] sm:$0xff] %v417
                %v419 = vld [vmem:[%s201 + $0x6c0] sm:$0xff]
                %420 = vst [vmem:[%s202 + $0x360] sm:$0xff] %v419
                %v421 = vld [vmem:[%s201 + $0x6d0] sm:$0xff]
                %422 = vst [vmem:[%s202 + $0x368] sm:$0xff] %v421
                %v423 = vld [vmem:[%s201 + $0x6e0] sm:$0xff]
                %424 = vst [vmem:[%s202 + $0x370] sm:$0xff] %v423
                %v425 = vld [vmem:[%s201 + $0x6f0] sm:$0xff]
                %426 = vst [vmem:[%s202 + $0x378] sm:$0xff] %v425
                %v427 = vld [vmem:[%s201 + $0x700] sm:$0xff]
                %428 = vst [vmem:[%s202 + $0x380] sm:$0xff] %v427
                %v429 = vld [vmem:[%s201 + $0x710] sm:$0xff]
                %430 = vst [vmem:[%s202 + $0x388] sm:$0xff] %v429
                %v431 = vld [vmem:[%s201 + $0x720] sm:$0xff]
                %432 = vst [vmem:[%s202 + $0x390] sm:$0xff] %v431
                %v433 = vld [vmem:[%s201 + $0x730] sm:$0xff]
                %434 = vst [vmem:[%s202 + $0x398] sm:$0xff] %v433
                %v435 = vld [vmem:[%s201 + $0x740] sm:$0xff]
                %436 = vst [vmem:[%s202 + $0x3a0] sm:$0xff] %v435
                %v437 = vld [vmem:[%s201 + $0x750] sm:$0xff]
                %438 = vst [vmem:[%s202 + $0x3a8] sm:$0xff] %v437
                %v439 = vld [vmem:[%s201 + $0x760] sm:$0xff]
                %440 = vst [vmem:[%s202 + $0x3b0] sm:$0xff] %v439
                %v441 = vld [vmem:[%s201 + $0x770] sm:$0xff]
                %442 = vst [vmem:[%s202 + $0x3b8] sm:$0xff] %v441
                %v443 = vld [vmem:[%s201 + $0x780] sm:$0xff]
                %444 = vst [vmem:[%s202 + $0x3c0] sm:$0xff] %v443
                %v445 = vld [vmem:[%s201 + $0x790] sm:$0xff]
                %446 = vst [vmem:[%s202 + $0x3c8] sm:$0xff] %v445
                %v447 = vld [vmem:[%s201 + $0x7a0] sm:$0xff]
                %448 = vst [vmem:[%s202 + $0x3d0] sm:$0xff] %v447
                %v449 = vld [vmem:[%s201 + $0x7b0] sm:$0xff]
                %450 = vst [vmem:[%s202 + $0x3d8] sm:$0xff] %v449
                %v451 = vld [vmem:[%s201 + $0x7c0] sm:$0xff]
                %452 = vst [vmem:[%s202 + $0x3e0] sm:$0xff] %v451
                %v453 = vld [vmem:[%s201 + $0x7d0] sm:$0xff]
                %454 = vst [vmem:[%s202 + $0x3e8] sm:$0xff] %v453
                %v455 = vld [vmem:[%s201 + $0x7e0] sm:$0xff]
                %456 = vst [vmem:[%s202 + $0x3f0] sm:$0xff] %v455
                %v457 = vld [vmem:[%s201 + $0x7f0] sm:$0xff]
                %458 = vst [vmem:[%s202 + $0x3f8] sm:$0xff] %v457
                %v459 = vld [vmem:[%s201 + $0x800] sm:$0xff]
                %460 = vst [vmem:[%s202 + $0x400] sm:$0xff] %v459
                %v461 = vld [vmem:[%s201 + $0x810] sm:$0xff]
                %462 = vst [vmem:[%s202 + $0x408] sm:$0xff] %v461
                %v463 = vld [vmem:[%s201 + $0x820] sm:$0xff]
                %464 = vst [vmem:[%s202 + $0x410] sm:$0xff] %v463
                %v465 = vld [vmem:[%s201 + $0x830] sm:$0xff]
                %466 = vst [vmem:[%s202 + $0x418] sm:$0xff] %v465
                %v467 = vld [vmem:[%s201 + $0x840] sm:$0xff]
                %468 = vst [vmem:[%s202 + $0x420] sm:$0xff] %v467
                %v469 = vld [vmem:[%s201 + $0x850] sm:$0xff]
                %470 = vst [vmem:[%s202 + $0x428] sm:$0xff] %v469
                %v471 = vld [vmem:[%s201 + $0x860] sm:$0xff]
                %472 = vst [vmem:[%s202 + $0x430] sm:$0xff] %v471
                %v473 = vld [vmem:[%s201 + $0x870] sm:$0xff]
                %474 = vst [vmem:[%s202 + $0x438] sm:$0xff] %v473
                %v475 = vld [vmem:[%s201 + $0x880] sm:$0xff]
                %476 = vst [vmem:[%s202 + $0x440] sm:$0xff] %v475
                %v477 = vld [vmem:[%s201 + $0x890] sm:$0xff]
                %478 = vst [vmem:[%s202 + $0x448] sm:$0xff] %v477
                %v479 = vld [vmem:[%s201 + $0x8a0] sm:$0xff]
                %480 = vst [vmem:[%s202 + $0x450] sm:$0xff] %v479
                %v481 = vld [vmem:[%s201 + $0x8b0] sm:$0xff]
                %482 = vst [vmem:[%s202 + $0x458] sm:$0xff] %v481
                %v483 = vld [vmem:[%s201 + $0x8c0] sm:$0xff]
                %484 = vst [vmem:[%s202 + $0x460] sm:$0xff] %v483
                %v485 = vld [vmem:[%s201 + $0x8d0] sm:$0xff]
                %486 = vst [vmem:[%s202 + $0x468] sm:$0xff] %v485
                %v487 = vld [vmem:[%s201 + $0x8e0] sm:$0xff]
                %488 = vst [vmem:[%s202 + $0x470] sm:$0xff] %v487
                %v489 = vld [vmem:[%s201 + $0x8f0] sm:$0xff]
                %490 = vst [vmem:[%s202 + $0x478] sm:$0xff] %v489
                %v491 = vld [vmem:[%s201 + $0x900] sm:$0xff]
                %492 = vst [vmem:[%s202 + $0x480] sm:$0xff] %v491
                %v493 = vld [vmem:[%s201 + $0x910] sm:$0xff]
                %494 = vst [vmem:[%s202 + $0x488] sm:$0xff] %v493
                %v495 = vld [vmem:[%s201 + $0x920] sm:$0xff]
                %496 = vst [vmem:[%s202 + $0x490] sm:$0xff] %v495
                %v497 = vld [vmem:[%s201 + $0x930] sm:$0xff]
                %498 = vst [vmem:[%s202 + $0x498] sm:$0xff] %v497
                %v499 = vld [vmem:[%s201 + $0x940] sm:$0xff]
                %500 = vst [vmem:[%s202 + $0x4a0] sm:$0xff] %v499
                %v501 = vld [vmem:[%s201 + $0x950] sm:$0xff]
                %502 = vst [vmem:[%s202 + $0x4a8] sm:$0xff] %v501
                %v503 = vld [vmem:[%s201 + $0x960] sm:$0xff]
                %504 = vst [vmem:[%s202 + $0x4b0] sm:$0xff] %v503
                %v505 = vld [vmem:[%s201 + $0x970] sm:$0xff]
                %506 = vst [vmem:[%s202 + $0x4b8] sm:$0xff] %v505
                %v507 = vld [vmem:[%s201 + $0x980] sm:$0xff]
                %508 = vst [vmem:[%s202 + $0x4c0] sm:$0xff] %v507
                %v509 = vld [vmem:[%s201 + $0x990] sm:$0xff]
                %510 = vst [vmem:[%s202 + $0x4c8] sm:$0xff] %v509
                %v511 = vld [vmem:[%s201 + $0x9a0] sm:$0xff]
                %512 = vst [vmem:[%s202 + $0x4d0] sm:$0xff] %v511
                %v513 = vld [vmem:[%s201 + $0x9b0] sm:$0xff]
                %514 = vst [vmem:[%s202 + $0x4d8] sm:$0xff] %v513
                %v515 = vld [vmem:[%s201 + $0x9c0] sm:$0xff]
                %516 = vst [vmem:[%s202 + $0x4e0] sm:$0xff] %v515
                %v517 = vld [vmem:[%s201 + $0x9d0] sm:$0xff]
                %518 = vst [vmem:[%s202 + $0x4e8] sm:$0xff] %v517
                %v519 = vld [vmem:[%s201 + $0x9e0] sm:$0xff]
                %520 = vst [vmem:[%s202 + $0x4f0] sm:$0xff] %v519
                %v521 = vld [vmem:[%s201 + $0x9f0] sm:$0xff]
                %522 = vst [vmem:[%s202 + $0x4f8] sm:$0xff] %v521
                %v523 = vld [vmem:[%s201 + $0xa00] sm:$0xff]
                %524 = vst [vmem:[%s202 + $0x500] sm:$0xff] %v523
                %v525 = vld [vmem:[%s201 + $0xa10] sm:$0xff]
                %526 = vst [vmem:[%s202 + $0x508] sm:$0xff] %v525
                %v527 = vld [vmem:[%s201 + $0xa20] sm:$0xff]
                %528 = vst [vmem:[%s202 + $0x510] sm:$0xff] %v527
                %v529 = vld [vmem:[%s201 + $0xa30] sm:$0xff]
                %530 = vst [vmem:[%s202 + $0x518] sm:$0xff] %v529
                %v531 = vld [vmem:[%s201 + $0xa40] sm:$0xff]
                %532 = vst [vmem:[%s202 + $0x520] sm:$0xff] %v531
                %v533 = vld [vmem:[%s201 + $0xa50] sm:$0xff]
                %534 = vst [vmem:[%s202 + $0x528] sm:$0xff] %v533
                %v535 = vld [vmem:[%s201 + $0xa60] sm:$0xff]
                %536 = vst [vmem:[%s202 + $0x530] sm:$0xff] %v535
                %v537 = vld [vmem:[%s201 + $0xa70] sm:$0xff]
                %538 = vst [vmem:[%s202 + $0x538] sm:$0xff] %v537
                %v539 = vld [vmem:[%s201 + $0xa80] sm:$0xff]
                %540 = vst [vmem:[%s202 + $0x540] sm:$0xff] %v539
                %v541 = vld [vmem:[%s201 + $0xa90] sm:$0xff]
                %542 = vst [vmem:[%s202 + $0x548] sm:$0xff] %v541
                %v543 = vld [vmem:[%s201 + $0xaa0] sm:$0xff]
                %544 = vst [vmem:[%s202 + $0x550] sm:$0xff] %v543
                %v545 = vld [vmem:[%s201 + $0xab0] sm:$0xff]
                %546 = vst [vmem:[%s202 + $0x558] sm:$0xff] %v545
                %v547 = vld [vmem:[%s201 + $0xac0] sm:$0xff]
                %548 = vst [vmem:[%s202 + $0x560] sm:$0xff] %v547
                %v549 = vld [vmem:[%s201 + $0xad0] sm:$0xff]
                %550 = vst [vmem:[%s202 + $0x568] sm:$0xff] %v549
                %v551 = vld [vmem:[%s201 + $0xae0] sm:$0xff]
                %552 = vst [vmem:[%s202 + $0x570] sm:$0xff] %v551
                %v553 = vld [vmem:[%s201 + $0xaf0] sm:$0xff]
                %554 = vst [vmem:[%s202 + $0x578] sm:$0xff] %v553
                %v555 = vld [vmem:[%s201 + $0xb00] sm:$0xff]
                %556 = vst [vmem:[%s202 + $0x580] sm:$0xff] %v555
                %v557 = vld [vmem:[%s201 + $0xb10] sm:$0xff]
                %558 = vst [vmem:[%s202 + $0x588] sm:$0xff] %v557
                %v559 = vld [vmem:[%s201 + $0xb20] sm:$0xff]
                %560 = vst [vmem:[%s202 + $0x590] sm:$0xff] %v559
                %v561 = vld [vmem:[%s201 + $0xb30] sm:$0xff]
                %562 = vst [vmem:[%s202 + $0x598] sm:$0xff] %v561
                %v563 = vld [vmem:[%s201 + $0xb40] sm:$0xff]
                %564 = vst [vmem:[%s202 + $0x5a0] sm:$0xff] %v563
                %v565 = vld [vmem:[%s201 + $0xb50] sm:$0xff]
                %566 = vst [vmem:[%s202 + $0x5a8] sm:$0xff] %v565
                %v567 = vld [vmem:[%s201 + $0xb60] sm:$0xff]
                %568 = vst [vmem:[%s202 + $0x5b0] sm:$0xff] %v567
                %v569 = vld [vmem:[%s201 + $0xb70] sm:$0xff]
                %570 = vst [vmem:[%s202 + $0x5b8] sm:$0xff] %v569
                %v571 = vld [vmem:[%s201 + $0xb80] sm:$0xff]
                %572 = vst [vmem:[%s202 + $0x5c0] sm:$0xff] %v571
                %v573 = vld [vmem:[%s201 + $0xb90] sm:$0xff]
                %574 = vst [vmem:[%s202 + $0x5c8] sm:$0xff] %v573
                %v575 = vld [vmem:[%s201 + $0xba0] sm:$0xff]
                %576 = vst [vmem:[%s202 + $0x5d0] sm:$0xff] %v575
                %v577 = vld [vmem:[%s201 + $0xbb0] sm:$0xff]
                %578 = vst [vmem:[%s202 + $0x5d8] sm:$0xff] %v577
                %v579 = vld [vmem:[%s201 + $0xbc0] sm:$0xff]
                %580 = vst [vmem:[%s202 + $0x5e0] sm:$0xff] %v579
                %v581 = vld [vmem:[%s201 + $0xbd0] sm:$0xff]
                %582 = vst [vmem:[%s202 + $0x5e8] sm:$0xff] %v581
                %v583 = vld [vmem:[%s201 + $0xbe0] sm:$0xff]
                %584 = vst [vmem:[%s202 + $0x5f0] sm:$0xff] %v583
                %v585 = vld [vmem:[%s201 + $0xbf0] sm:$0xff]
                %586 = vst [vmem:[%s202 + $0x5f8] sm:$0xff] %v585
                %v587 = vld [vmem:[%s201 + $0xc00] sm:$0xff]
                %588 = vst [vmem:[%s202 + $0x600] sm:$0xff] %v587
                %v589 = vld [vmem:[%s201 + $0xc10] sm:$0xff]
                %590 = vst [vmem:[%s202 + $0x608] sm:$0xff] %v589
                %v591 = vld [vmem:[%s201 + $0xc20] sm:$0xff]
                %592 = vst [vmem:[%s202 + $0x610] sm:$0xff] %v591
                %v593 = vld [vmem:[%s201 + $0xc30] sm:$0xff]
                %594 = vst [vmem:[%s202 + $0x618] sm:$0xff] %v593
                %v595 = vld [vmem:[%s201 + $0xc40] sm:$0xff]
                %596 = vst [vmem:[%s202 + $0x620] sm:$0xff] %v595
                %v597 = vld [vmem:[%s201 + $0xc50] sm:$0xff]
                %598 = vst [vmem:[%s202 + $0x628] sm:$0xff] %v597
                %v599 = vld [vmem:[%s201 + $0xc60] sm:$0xff]
                %600 = vst [vmem:[%s202 + $0x630] sm:$0xff] %v599
                %v601 = vld [vmem:[%s201 + $0xc70] sm:$0xff]
                %602 = vst [vmem:[%s202 + $0x638] sm:$0xff] %v601
                %v603 = vld [vmem:[%s201 + $0xc80] sm:$0xff]
                %604 = vst [vmem:[%s202 + $0x640] sm:$0xff] %v603
                %v605 = vld [vmem:[%s201 + $0xc90] sm:$0xff]
                %606 = vst [vmem:[%s202 + $0x648] sm:$0xff] %v605
                %v607 = vld [vmem:[%s201 + $0xca0] sm:$0xff]
                %608 = vst [vmem:[%s202 + $0x650] sm:$0xff] %v607
                %v609 = vld [vmem:[%s201 + $0xcb0] sm:$0xff]
                %610 = vst [vmem:[%s202 + $0x658] sm:$0xff] %v609
                %v611 = vld [vmem:[%s201 + $0xcc0] sm:$0xff]
                %612 = vst [vmem:[%s202 + $0x660] sm:$0xff] %v611
                %v613 = vld [vmem:[%s201 + $0xcd0] sm:$0xff]
                %614 = vst [vmem:[%s202 + $0x668] sm:$0xff] %v613
                %v615 = vld [vmem:[%s201 + $0xce0] sm:$0xff]
                %616 = vst [vmem:[%s202 + $0x670] sm:$0xff] %v615
                %v617 = vld [vmem:[%s201 + $0xcf0] sm:$0xff]
                %618 = vst [vmem:[%s202 + $0x678] sm:$0xff] %v617
                %v619 = vld [vmem:[%s201 + $0xd00] sm:$0xff]
                %620 = vst [vmem:[%s202 + $0x680] sm:$0xff] %v619
                %v621 = vld [vmem:[%s201 + $0xd10] sm:$0xff]
                %622 = vst [vmem:[%s202 + $0x688] sm:$0xff] %v621
                %v623 = vld [vmem:[%s201 + $0xd20] sm:$0xff]
                %624 = vst [vmem:[%s202 + $0x690] sm:$0xff] %v623
                %v625 = vld [vmem:[%s201 + $0xd30] sm:$0xff]
                %626 = vst [vmem:[%s202 + $0x698] sm:$0xff] %v625
                %v627 = vld [vmem:[%s201 + $0xd40] sm:$0xff]
                %628 = vst [vmem:[%s202 + $0x6a0] sm:$0xff] %v627
                %v629 = vld [vmem:[%s201 + $0xd50] sm:$0xff]
                %630 = vst [vmem:[%s202 + $0x6a8] sm:$0xff] %v629
                %v631 = vld [vmem:[%s201 + $0xd60] sm:$0xff]
                %632 = vst [vmem:[%s202 + $0x6b0] sm:$0xff] %v631
                %v633 = vld [vmem:[%s201 + $0xd70] sm:$0xff]
                %634 = vst [vmem:[%s202 + $0x6b8] sm:$0xff] %v633
                %v635 = vld [vmem:[%s201 + $0xd80] sm:$0xff]
                %636 = vst [vmem:[%s202 + $0x6c0] sm:$0xff] %v635
                %v637 = vld [vmem:[%s201 + $0xd90] sm:$0xff]
                %638 = vst [vmem:[%s202 + $0x6c8] sm:$0xff] %v637
                %v639 = vld [vmem:[%s201 + $0xda0] sm:$0xff]
                %640 = vst [vmem:[%s202 + $0x6d0] sm:$0xff] %v639
                %v641 = vld [vmem:[%s201 + $0xdb0] sm:$0xff]
                %642 = vst [vmem:[%s202 + $0x6d8] sm:$0xff] %v641
                %v643 = vld [vmem:[%s201 + $0xdc0] sm:$0xff]
                %644 = vst [vmem:[%s202 + $0x6e0] sm:$0xff] %v643
                %v645 = vld [vmem:[%s201 + $0xdd0] sm:$0xff]
                %646 = vst [vmem:[%s202 + $0x6e8] sm:$0xff] %v645
                %v647 = vld [vmem:[%s201 + $0xde0] sm:$0xff]
                %648 = vst [vmem:[%s202 + $0x6f0] sm:$0xff] %v647
                %v649 = vld [vmem:[%s201 + $0xdf0] sm:$0xff]
                %650 = vst [vmem:[%s202 + $0x6f8] sm:$0xff] %v649
                %v651 = vld [vmem:[%s201 + $0xe00] sm:$0xff]
                %652 = vst [vmem:[%s202 + $0x700] sm:$0xff] %v651
                %v653 = vld [vmem:[%s201 + $0xe10] sm:$0xff]
                %654 = vst [vmem:[%s202 + $0x708] sm:$0xff] %v653
                %v655 = vld [vmem:[%s201 + $0xe20] sm:$0xff]
                %656 = vst [vmem:[%s202 + $0x710] sm:$0xff] %v655
                %v657 = vld [vmem:[%s201 + $0xe30] sm:$0xff]
                %658 = vst [vmem:[%s202 + $0x718] sm:$0xff] %v657
                %v659 = vld [vmem:[%s201 + $0xe40] sm:$0xff]
                %660 = vst [vmem:[%s202 + $0x720] sm:$0xff] %v659
                %v661 = vld [vmem:[%s201 + $0xe50] sm:$0xff]
                %662 = vst [vmem:[%s202 + $0x728] sm:$0xff] %v661
                %v663 = vld [vmem:[%s201 + $0xe60] sm:$0xff]
                %664 = vst [vmem:[%s202 + $0x730] sm:$0xff] %v663
                %v665 = vld [vmem:[%s201 + $0xe70] sm:$0xff]
                %666 = vst [vmem:[%s202 + $0x738] sm:$0xff] %v665
                %v667 = vld [vmem:[%s201 + $0xe80] sm:$0xff]
                %668 = vst [vmem:[%s202 + $0x740] sm:$0xff] %v667
                %v669 = vld [vmem:[%s201 + $0xe90] sm:$0xff]
                %670 = vst [vmem:[%s202 + $0x748] sm:$0xff] %v669
                %v671 = vld [vmem:[%s201 + $0xea0] sm:$0xff]
                %672 = vst [vmem:[%s202 + $0x750] sm:$0xff] %v671
                %v673 = vld [vmem:[%s201 + $0xeb0] sm:$0xff]
                %674 = vst [vmem:[%s202 + $0x758] sm:$0xff] %v673
                %v675 = vld [vmem:[%s201 + $0xec0] sm:$0xff]
                %676 = vst [vmem:[%s202 + $0x760] sm:$0xff] %v675
                %v677 = vld [vmem:[%s201 + $0xed0] sm:$0xff]
                %678 = vst [vmem:[%s202 + $0x768] sm:$0xff] %v677
                %v679 = vld [vmem:[%s201 + $0xee0] sm:$0xff]
                %680 = vst [vmem:[%s202 + $0x770] sm:$0xff] %v679
                %v681 = vld [vmem:[%s201 + $0xef0] sm:$0xff]
                %682 = vst [vmem:[%s202 + $0x778] sm:$0xff] %v681
                %v683 = vld [vmem:[%s201 + $0xf00] sm:$0xff]
                %684 = vst [vmem:[%s202 + $0x780] sm:$0xff] %v683
                %v685 = vld [vmem:[%s201 + $0xf10] sm:$0xff]
                %686 = vst [vmem:[%s202 + $0x788] sm:$0xff] %v685
                %v687 = vld [vmem:[%s201 + $0xf20] sm:$0xff]
                %688 = vst [vmem:[%s202 + $0x790] sm:$0xff] %v687
                %v689 = vld [vmem:[%s201 + $0xf30] sm:$0xff]
                %690 = vst [vmem:[%s202 + $0x798] sm:$0xff] %v689
                %v691 = vld [vmem:[%s201 + $0xf40] sm:$0xff]
                %692 = vst [vmem:[%s202 + $0x7a0] sm:$0xff] %v691
                %v693 = vld [vmem:[%s201 + $0xf50] sm:$0xff]
                %694 = vst [vmem:[%s202 + $0x7a8] sm:$0xff] %v693
                %v695 = vld [vmem:[%s201 + $0xf60] sm:$0xff]
                %696 = vst [vmem:[%s202 + $0x7b0] sm:$0xff] %v695
                %v697 = vld [vmem:[%s201 + $0xf70] sm:$0xff]
                %698 = vst [vmem:[%s202 + $0x7b8] sm:$0xff] %v697
                %v699 = vld [vmem:[%s201 + $0xf80] sm:$0xff]
                %700 = vst [vmem:[%s202 + $0x7c0] sm:$0xff] %v699
                %v701 = vld [vmem:[%s201 + $0xf90] sm:$0xff]
                %702 = vst [vmem:[%s202 + $0x7c8] sm:$0xff] %v701
                %v703 = vld [vmem:[%s201 + $0xfa0] sm:$0xff]
                %704 = vst [vmem:[%s202 + $0x7d0] sm:$0xff] %v703
                %v705 = vld [vmem:[%s201 + $0xfb0] sm:$0xff]
                %706 = vst [vmem:[%s202 + $0x7d8] sm:$0xff] %v705
                %v707 = vld [vmem:[%s201 + $0xfc0] sm:$0xff]
                %708 = vst [vmem:[%s202 + $0x7e0] sm:$0xff] %v707
                %v709 = vld [vmem:[%s201 + $0xfd0] sm:$0xff]
                %710 = vst [vmem:[%s202 + $0x7e8] sm:$0xff] %v709
                %v711 = vld [vmem:[%s201 + $0xfe0] sm:$0xff]
                %712 = vst [vmem:[%s202 + $0x7f0] sm:$0xff] %v711
                %v713 = vld [vmem:[%s201 + $0xff0] sm:$0xff]
                %714 = vst [vmem:[%s202 + $0x7f8] sm:$0xff] %v713
                %v715 = vld [vmem:[%s201 + $0x1000] sm:$0xff]
                %716 = vst [vmem:[%s202 + $0x800] sm:$0xff] %v715
                %v717 = vld [vmem:[%s201 + $0x1010] sm:$0xff]
                %718 = vst [vmem:[%s202 + $0x808] sm:$0xff] %v717
                %v719 = vld [vmem:[%s201 + $0x1020] sm:$0xff]
                %720 = vst [vmem:[%s202 + $0x810] sm:$0xff] %v719
                %v721 = vld [vmem:[%s201 + $0x1030] sm:$0xff]
                %722 = vst [vmem:[%s202 + $0x818] sm:$0xff] %v721
                %v723 = vld [vmem:[%s201 + $0x1040] sm:$0xff]
                %724 = vst [vmem:[%s202 + $0x820] sm:$0xff] %v723
                %v725 = vld [vmem:[%s201 + $0x1050] sm:$0xff]
                %726 = vst [vmem:[%s202 + $0x828] sm:$0xff] %v725
                %v727 = vld [vmem:[%s201 + $0x1060] sm:$0xff]
                %728 = vst [vmem:[%s202 + $0x830] sm:$0xff] %v727
                %v729 = vld [vmem:[%s201 + $0x1070] sm:$0xff]
                %730 = vst [vmem:[%s202 + $0x838] sm:$0xff] %v729
                %v731 = vld [vmem:[%s201 + $0x1080] sm:$0xff]
                %732 = vst [vmem:[%s202 + $0x840] sm:$0xff] %v731
                %v733 = vld [vmem:[%s201 + $0x1090] sm:$0xff]
                %734 = vst [vmem:[%s202 + $0x848] sm:$0xff] %v733
                %v735 = vld [vmem:[%s201 + $0x10a0] sm:$0xff]
                %736 = vst [vmem:[%s202 + $0x850] sm:$0xff] %v735
                %v737 = vld [vmem:[%s201 + $0x10b0] sm:$0xff]
                %738 = vst [vmem:[%s202 + $0x858] sm:$0xff] %v737
                %v739 = vld [vmem:[%s201 + $0x10c0] sm:$0xff]
                %740 = vst [vmem:[%s202 + $0x860] sm:$0xff] %v739
                %v741 = vld [vmem:[%s201 + $0x10d0] sm:$0xff]
                %742 = vst [vmem:[%s202 + $0x868] sm:$0xff] %v741
                %v743 = vld [vmem:[%s201 + $0x10e0] sm:$0xff]
                %744 = vst [vmem:[%s202 + $0x870] sm:$0xff] %v743
                %v745 = vld [vmem:[%s201 + $0x10f0] sm:$0xff]
                %746 = vst [vmem:[%s202 + $0x878] sm:$0xff] %v745
                %v747 = vld [vmem:[%s201 + $0x1100] sm:$0xff]
                %748 = vst [vmem:[%s202 + $0x880] sm:$0xff] %v747
                %v749 = vld [vmem:[%s201 + $0x1110] sm:$0xff]
                %750 = vst [vmem:[%s202 + $0x888] sm:$0xff] %v749
                %v751 = vld [vmem:[%s201 + $0x1120] sm:$0xff]
                %752 = vst [vmem:[%s202 + $0x890] sm:$0xff] %v751
                %v753 = vld [vmem:[%s201 + $0x1130] sm:$0xff]
                %754 = vst [vmem:[%s202 + $0x898] sm:$0xff] %v753
                %v755 = vld [vmem:[%s201 + $0x1140] sm:$0xff]
                %756 = vst [vmem:[%s202 + $0x8a0] sm:$0xff] %v755
                %v757 = vld [vmem:[%s201 + $0x1150] sm:$0xff]
                %758 = vst [vmem:[%s202 + $0x8a8] sm:$0xff] %v757
                %v759 = vld [vmem:[%s201 + $0x1160] sm:$0xff]
                %760 = vst [vmem:[%s202 + $0x8b0] sm:$0xff] %v759
                %v761 = vld [vmem:[%s201 + $0x1170] sm:$0xff]
                %762 = vst [vmem:[%s202 + $0x8b8] sm:$0xff] %v761
                %v763 = vld [vmem:[%s201 + $0x1180] sm:$0xff]
                %764 = vst [vmem:[%s202 + $0x8c0] sm:$0xff] %v763
                %v765 = vld [vmem:[%s201 + $0x1190] sm:$0xff]
                %766 = vst [vmem:[%s202 + $0x8c8] sm:$0xff] %v765
                %v767 = vld [vmem:[%s201 + $0x11a0] sm:$0xff]
                %768 = vst [vmem:[%s202 + $0x8d0] sm:$0xff] %v767
                %v769 = vld [vmem:[%s201 + $0x11b0] sm:$0xff]
                %770 = vst [vmem:[%s202 + $0x8d8] sm:$0xff] %v769
                %v771 = vld [vmem:[%s201 + $0x11c0] sm:$0xff]
                %772 = vst [vmem:[%s202 + $0x8e0] sm:$0xff] %v771
                %v773 = vld [vmem:[%s201 + $0x11d0] sm:$0xff]
                %774 = vst [vmem:[%s202 + $0x8e8] sm:$0xff] %v773
                %v775 = vld [vmem:[%s201 + $0x11e0] sm:$0xff]
                %776 = vst [vmem:[%s202 + $0x8f0] sm:$0xff] %v775
                %v777 = vld [vmem:[%s201 + $0x11f0] sm:$0xff]
                %778 = vst [vmem:[%s202 + $0x8f8] sm:$0xff] %v777
                %v779 = vld [vmem:[%s201 + $0x1200] sm:$0xff]
                %780 = vst [vmem:[%s202 + $0x900] sm:$0xff] %v779
                %v781 = vld [vmem:[%s201 + $0x1210] sm:$0xff]
                %782 = vst [vmem:[%s202 + $0x908] sm:$0xff] %v781
                %v783 = vld [vmem:[%s201 + $0x1220] sm:$0xff]
                %784 = vst [vmem:[%s202 + $0x910] sm:$0xff] %v783
                %v785 = vld [vmem:[%s201 + $0x1230] sm:$0xff]
                %786 = vst [vmem:[%s202 + $0x918] sm:$0xff] %v785
                %v787 = vld [vmem:[%s201 + $0x1240] sm:$0xff]
                %788 = vst [vmem:[%s202 + $0x920] sm:$0xff] %v787
                %v789 = vld [vmem:[%s201 + $0x1250] sm:$0xff]
                %790 = vst [vmem:[%s202 + $0x928] sm:$0xff] %v789
                %v791 = vld [vmem:[%s201 + $0x1260] sm:$0xff]
                %792 = vst [vmem:[%s202 + $0x930] sm:$0xff] %v791
                %v793 = vld [vmem:[%s201 + $0x1270] sm:$0xff]
                %794 = vst [vmem:[%s202 + $0x938] sm:$0xff] %v793
                %v795 = vld [vmem:[%s201 + $0x1280] sm:$0xff]
                %796 = vst [vmem:[%s202 + $0x940] sm:$0xff] %v795
                %v797 = vld [vmem:[%s201 + $0x1290] sm:$0xff]
                %798 = vst [vmem:[%s202 + $0x948] sm:$0xff] %v797
                %v799 = vld [vmem:[%s201 + $0x12a0] sm:$0xff]
                %800 = vst [vmem:[%s202 + $0x950] sm:$0xff] %v799
                %v801 = vld [vmem:[%s201 + $0x12b0] sm:$0xff]
                %802 = vst [vmem:[%s202 + $0x958] sm:$0xff] %v801
                %v803 = vld [vmem:[%s201 + $0x12c0] sm:$0xff]
                %804 = vst [vmem:[%s202 + $0x960] sm:$0xff] %v803
                %v805 = vld [vmem:[%s201 + $0x12d0] sm:$0xff]
                %806 = vst [vmem:[%s202 + $0x968] sm:$0xff] %v805
                %v807 = vld [vmem:[%s201 + $0x12e0] sm:$0xff]
                %808 = vst [vmem:[%s202 + $0x970] sm:$0xff] %v807
                %v809 = vld [vmem:[%s201 + $0x12f0] sm:$0xff]
                %810 = vst [vmem:[%s202 + $0x978] sm:$0xff] %v809
                %v811 = vld [vmem:[%s201 + $0x1300] sm:$0xff]
                %812 = vst [vmem:[%s202 + $0x980] sm:$0xff] %v811
                %v813 = vld [vmem:[%s201 + $0x1310] sm:$0xff]
                %814 = vst [vmem:[%s202 + $0x988] sm:$0xff] %v813
                %v815 = vld [vmem:[%s201 + $0x1320] sm:$0xff]
                %816 = vst [vmem:[%s202 + $0x990] sm:$0xff] %v815
                %v817 = vld [vmem:[%s201 + $0x1330] sm:$0xff]
                %818 = vst [vmem:[%s202 + $0x998] sm:$0xff] %v817
                %v819 = vld [vmem:[%s201 + $0x1340] sm:$0xff]
                %820 = vst [vmem:[%s202 + $0x9a0] sm:$0xff] %v819
                %v821 = vld [vmem:[%s201 + $0x1350] sm:$0xff]
                %822 = vst [vmem:[%s202 + $0x9a8] sm:$0xff] %v821
                %v823 = vld [vmem:[%s201 + $0x1360] sm:$0xff]
                %824 = vst [vmem:[%s202 + $0x9b0] sm:$0xff] %v823
                %v825 = vld [vmem:[%s201 + $0x1370] sm:$0xff]
                %826 = vst [vmem:[%s202 + $0x9b8] sm:$0xff] %v825
                %v827 = vld [vmem:[%s201 + $0x1380] sm:$0xff]
                %828 = vst [vmem:[%s202 + $0x9c0] sm:$0xff] %v827
                %v829 = vld [vmem:[%s201 + $0x1390] sm:$0xff]
                %830 = vst [vmem:[%s202 + $0x9c8] sm:$0xff] %v829
                %v831 = vld [vmem:[%s201 + $0x13a0] sm:$0xff]
                %832 = vst [vmem:[%s202 + $0x9d0] sm:$0xff] %v831
                %v833 = vld [vmem:[%s201 + $0x13b0] sm:$0xff]
                %834 = vst [vmem:[%s202 + $0x9d8] sm:$0xff] %v833
                %v835 = vld [vmem:[%s201 + $0x13c0] sm:$0xff]
                %836 = vst [vmem:[%s202 + $0x9e0] sm:$0xff] %v835
                %v837 = vld [vmem:[%s201 + $0x13d0] sm:$0xff]
                %838 = vst [vmem:[%s202 + $0x9e8] sm:$0xff] %v837
                %v839 = vld [vmem:[%s201 + $0x13e0] sm:$0xff]
                %840 = vst [vmem:[%s202 + $0x9f0] sm:$0xff] %v839
                %v841 = vld [vmem:[%s201 + $0x13f0] sm:$0xff]
                %842 = vst [vmem:[%s202 + $0x9f8] sm:$0xff] %v841
                %v843 = vld [vmem:[%s201 + $0x1400] sm:$0xff]
                %844 = vst [vmem:[%s202 + $0xa00] sm:$0xff] %v843
                %v845 = vld [vmem:[%s201 + $0x1410] sm:$0xff]
                %846 = vst [vmem:[%s202 + $0xa08] sm:$0xff] %v845
                %v847 = vld [vmem:[%s201 + $0x1420] sm:$0xff]
                %848 = vst [vmem:[%s202 + $0xa10] sm:$0xff] %v847
                %v849 = vld [vmem:[%s201 + $0x1430] sm:$0xff]
                %850 = vst [vmem:[%s202 + $0xa18] sm:$0xff] %v849
                %v851 = vld [vmem:[%s201 + $0x1440] sm:$0xff]
                %852 = vst [vmem:[%s202 + $0xa20] sm:$0xff] %v851
                %v853 = vld [vmem:[%s201 + $0x1450] sm:$0xff]
                %854 = vst [vmem:[%s202 + $0xa28] sm:$0xff] %v853
                %v855 = vld [vmem:[%s201 + $0x1460] sm:$0xff]
                %856 = vst [vmem:[%s202 + $0xa30] sm:$0xff] %v855
                %v857 = vld [vmem:[%s201 + $0x1470] sm:$0xff]
                %858 = vst [vmem:[%s202 + $0xa38] sm:$0xff] %v857
                %v859 = vld [vmem:[%s201 + $0x1480] sm:$0xff]
                %860 = vst [vmem:[%s202 + $0xa40] sm:$0xff] %v859
                %v861 = vld [vmem:[%s201 + $0x1490] sm:$0xff]
                %862 = vst [vmem:[%s202 + $0xa48] sm:$0xff] %v861
                %v863 = vld [vmem:[%s201 + $0x14a0] sm:$0xff]
                %864 = vst [vmem:[%s202 + $0xa50] sm:$0xff] %v863
                %v865 = vld [vmem:[%s201 + $0x14b0] sm:$0xff]
                %866 = vst [vmem:[%s202 + $0xa58] sm:$0xff] %v865
                %v867 = vld [vmem:[%s201 + $0x14c0] sm:$0xff]
                %868 = vst [vmem:[%s202 + $0xa60] sm:$0xff] %v867
                %v869 = vld [vmem:[%s201 + $0x14d0] sm:$0xff]
                %870 = vst [vmem:[%s202 + $0xa68] sm:$0xff] %v869
                %v871 = vld [vmem:[%s201 + $0x14e0] sm:$0xff]
                %872 = vst [vmem:[%s202 + $0xa70] sm:$0xff] %v871
                %v873 = vld [vmem:[%s201 + $0x14f0] sm:$0xff]
                %874 = vst [vmem:[%s202 + $0xa78] sm:$0xff] %v873
                %v875 = vld [vmem:[%s201 + $0x1500] sm:$0xff]
                %876 = vst [vmem:[%s202 + $0xa80] sm:$0xff] %v875
                %v877 = vld [vmem:[%s201 + $0x1510] sm:$0xff]
                %878 = vst [vmem:[%s202 + $0xa88] sm:$0xff] %v877
                %v879 = vld [vmem:[%s201 + $0x1520] sm:$0xff]
                %880 = vst [vmem:[%s202 + $0xa90] sm:$0xff] %v879
                %v881 = vld [vmem:[%s201 + $0x1530] sm:$0xff]
                %882 = vst [vmem:[%s202 + $0xa98] sm:$0xff] %v881
                %v883 = vld [vmem:[%s201 + $0x1540] sm:$0xff]
                %884 = vst [vmem:[%s202 + $0xaa0] sm:$0xff] %v883
                %v885 = vld [vmem:[%s201 + $0x1550] sm:$0xff]
                %886 = vst [vmem:[%s202 + $0xaa8] sm:$0xff] %v885
                %v887 = vld [vmem:[%s201 + $0x1560] sm:$0xff]
                %888 = vst [vmem:[%s202 + $0xab0] sm:$0xff] %v887
                %v889 = vld [vmem:[%s201 + $0x1570] sm:$0xff]
                %890 = vst [vmem:[%s202 + $0xab8] sm:$0xff] %v889
                %v891 = vld [vmem:[%s201 + $0x1580] sm:$0xff]
                %892 = vst [vmem:[%s202 + $0xac0] sm:$0xff] %v891
                %v893 = vld [vmem:[%s201 + $0x1590] sm:$0xff]
                %894 = vst [vmem:[%s202 + $0xac8] sm:$0xff] %v893
                %v895 = vld [vmem:[%s201 + $0x15a0] sm:$0xff]
                %896 = vst [vmem:[%s202 + $0xad0] sm:$0xff] %v895
                %v897 = vld [vmem:[%s201 + $0x15b0] sm:$0xff]
                %898 = vst [vmem:[%s202 + $0xad8] sm:$0xff] %v897
                %v899 = vld [vmem:[%s201 + $0x15c0] sm:$0xff]
                %900 = vst [vmem:[%s202 + $0xae0] sm:$0xff] %v899
                %v901 = vld [vmem:[%s201 + $0x15d0] sm:$0xff]
                %902 = vst [vmem:[%s202 + $0xae8] sm:$0xff] %v901
                %v903 = vld [vmem:[%s201 + $0x15e0] sm:$0xff]
                %904 = vst [vmem:[%s202 + $0xaf0] sm:$0xff] %v903
                %v905 = vld [vmem:[%s201 + $0x15f0] sm:$0xff]
                %906 = vst [vmem:[%s202 + $0xaf8] sm:$0xff] %v905
                %v907 = vld [vmem:[%s201 + $0x1600] sm:$0xff]
                %908 = vst [vmem:[%s202 + $0xb00] sm:$0xff] %v907
                %v909 = vld [vmem:[%s201 + $0x1610] sm:$0xff]
                %910 = vst [vmem:[%s202 + $0xb08] sm:$0xff] %v909
                %v911 = vld [vmem:[%s201 + $0x1620] sm:$0xff]
                %912 = vst [vmem:[%s202 + $0xb10] sm:$0xff] %v911
                %v913 = vld [vmem:[%s201 + $0x1630] sm:$0xff]
                %914 = vst [vmem:[%s202 + $0xb18] sm:$0xff] %v913
                %v915 = vld [vmem:[%s201 + $0x1640] sm:$0xff]
                %916 = vst [vmem:[%s202 + $0xb20] sm:$0xff] %v915
                %v917 = vld [vmem:[%s201 + $0x1650] sm:$0xff]
                %918 = vst [vmem:[%s202 + $0xb28] sm:$0xff] %v917
                %v919 = vld [vmem:[%s201 + $0x1660] sm:$0xff]
                %920 = vst [vmem:[%s202 + $0xb30] sm:$0xff] %v919
                %v921 = vld [vmem:[%s201 + $0x1670] sm:$0xff]
                %922 = vst [vmem:[%s202 + $0xb38] sm:$0xff] %v921
                %v923 = vld [vmem:[%s201 + $0x1680] sm:$0xff]
                %924 = vst [vmem:[%s202 + $0xb40] sm:$0xff] %v923
                %v925 = vld [vmem:[%s201 + $0x1690] sm:$0xff]
                %926 = vst [vmem:[%s202 + $0xb48] sm:$0xff] %v925
                %v927 = vld [vmem:[%s201 + $0x16a0] sm:$0xff]
                %928 = vst [vmem:[%s202 + $0xb50] sm:$0xff] %v927
                %v929 = vld [vmem:[%s201 + $0x16b0] sm:$0xff]
                %930 = vst [vmem:[%s202 + $0xb58] sm:$0xff] %v929
                %v931 = vld [vmem:[%s201 + $0x16c0] sm:$0xff]
                %932 = vst [vmem:[%s202 + $0xb60] sm:$0xff] %v931
                %v933 = vld [vmem:[%s201 + $0x16d0] sm:$0xff]
                %934 = vst [vmem:[%s202 + $0xb68] sm:$0xff] %v933
                %v935 = vld [vmem:[%s201 + $0x16e0] sm:$0xff]
                %936 = vst [vmem:[%s202 + $0xb70] sm:$0xff] %v935
                %v937 = vld [vmem:[%s201 + $0x16f0] sm:$0xff]
                %938 = vst [vmem:[%s202 + $0xb78] sm:$0xff] %v937
                %v939 = vld [vmem:[%s201 + $0x1700] sm:$0xff]
                %940 = vst [vmem:[%s202 + $0xb80] sm:$0xff] %v939
                %v941 = vld [vmem:[%s201 + $0x1710] sm:$0xff]
                %942 = vst [vmem:[%s202 + $0xb88] sm:$0xff] %v941
                %v943 = vld [vmem:[%s201 + $0x1720] sm:$0xff]
                %944 = vst [vmem:[%s202 + $0xb90] sm:$0xff] %v943
                %v945 = vld [vmem:[%s201 + $0x1730] sm:$0xff]
                %946 = vst [vmem:[%s202 + $0xb98] sm:$0xff] %v945
                %v947 = vld [vmem:[%s201 + $0x1740] sm:$0xff]
                %948 = vst [vmem:[%s202 + $0xba0] sm:$0xff] %v947
                %v949 = vld [vmem:[%s201 + $0x1750] sm:$0xff]
                %950 = vst [vmem:[%s202 + $0xba8] sm:$0xff] %v949
                %v951 = vld [vmem:[%s201 + $0x1760] sm:$0xff]
                %952 = vst [vmem:[%s202 + $0xbb0] sm:$0xff] %v951
                %v953 = vld [vmem:[%s201 + $0x1770] sm:$0xff]
                %954 = vst [vmem:[%s202 + $0xbb8] sm:$0xff] %v953
                %v955 = vld [vmem:[%s201 + $0x1780] sm:$0xff]
                %956 = vst [vmem:[%s202 + $0xbc0] sm:$0xff] %v955
                %v957 = vld [vmem:[%s201 + $0x1790] sm:$0xff]
                %958 = vst [vmem:[%s202 + $0xbc8] sm:$0xff] %v957
                %v959 = vld [vmem:[%s201 + $0x17a0] sm:$0xff]
                %960 = vst [vmem:[%s202 + $0xbd0] sm:$0xff] %v959
                %v961 = vld [vmem:[%s201 + $0x17b0] sm:$0xff]
                %962 = vst [vmem:[%s202 + $0xbd8] sm:$0xff] %v961
                %v963 = vld [vmem:[%s201 + $0x17c0] sm:$0xff]
                %964 = vst [vmem:[%s202 + $0xbe0] sm:$0xff] %v963
                %v965 = vld [vmem:[%s201 + $0x17d0] sm:$0xff]
                %966 = vst [vmem:[%s202 + $0xbe8] sm:$0xff] %v965
                %v967 = vld [vmem:[%s201 + $0x17e0] sm:$0xff]
                %968 = vst [vmem:[%s202 + $0xbf0] sm:$0xff] %v967
                %v969 = vld [vmem:[%s201 + $0x17f0] sm:$0xff]
                %970 = vst [vmem:[%s202 + $0xbf8] sm:$0xff] %v969
                %v971 = vld [vmem:[%s201 + $0x1800] sm:$0xff]
                %972 = vst [vmem:[%s202 + $0xc00] sm:$0xff] %v971
                %v973 = vld [vmem:[%s201 + $0x1810] sm:$0xff]
                %974 = vst [vmem:[%s202 + $0xc08] sm:$0xff] %v973
                %v975 = vld [vmem:[%s201 + $0x1820] sm:$0xff]
                %976 = vst [vmem:[%s202 + $0xc10] sm:$0xff] %v975
                %v977 = vld [vmem:[%s201 + $0x1830] sm:$0xff]
                %978 = vst [vmem:[%s202 + $0xc18] sm:$0xff] %v977
                %v979 = vld [vmem:[%s201 + $0x1840] sm:$0xff]
                %980 = vst [vmem:[%s202 + $0xc20] sm:$0xff] %v979
                %v981 = vld [vmem:[%s201 + $0x1850] sm:$0xff]
                %982 = vst [vmem:[%s202 + $0xc28] sm:$0xff] %v981
                %v983 = vld [vmem:[%s201 + $0x1860] sm:$0xff]
                %984 = vst [vmem:[%s202 + $0xc30] sm:$0xff] %v983
                %v985 = vld [vmem:[%s201 + $0x1870] sm:$0xff]
                %986 = vst [vmem:[%s202 + $0xc38] sm:$0xff] %v985
              $region45: #{_lambda_.7} parent=39 // loop_footer
                %s200 = sadd.s32 1, %s196
              $region46: #{_lambda_.7} parent=39 // loop_footer_branch
                %195 = sbr.rel target = $region42
              $region47: #{_lambda_.7} parent=39 // loop_exit
                _
            $region40: #{_lambda_.7} parent=31 // pred_fallthru
              _
          $region32: #{_lambda_.7} parent=27 // pred_fallthru
            _
          %1783 = vnop
        $region28: #{_lambda_.7} parent=23 // pred_fallthru
          _
        // Predicated region
        $region63: #{_lambda_.7} parent=23 // pred_check
          %p1784 = pneg %p79
        $region64: #{_lambda_.7} parent=23 // pred_check_branch
          %1786 = sbr.rel (%p1784) target = $region66
        $region65: #{_lambda_.7} parent=23 // pred_region
          %s1787 = smul.u32 2, %s12
          %p1788 = scmp.lt.s32.totalorder %s1787, 3
          %s1789 = scalar_select %p1788, %s1787, 3
          %s1790 = scalar_lea.vmem %s2, %s1789
          %s1791 = smul.u32 2, %s12
        $region66: #{_lambda_.7} parent=23 // pred_fallthru
          _
        // Predicated region
        $region67: #{_lambda_.7} parent=23 // pred_check
          %p1792 = pneg %p105
        $region68: #{_lambda_.7} parent=23 // pred_check_branch
          %1794 = sbr.rel (%p1792) target = $region70
        $region69: #{_lambda_.7} parent=23 // pred_region
          %s1795 = smul.u32 32, %s12
          %p1796 = scmp.lt.s32.totalorder %s1795, 63
          %s1797 = scalar_select %p1796, %s1795, 63
          %s1798 = smul.addr %s1797, 4
          %s1799 = scalar_lea.vmem %s3, %s1798
          %s1800 = smul.u32 32, %s12
        $region70: #{_lambda_.7} parent=23 // pred_fallthru
          _
      $region24: #{_lambda_.7} parent=5 // pred_fallthru
        _
      %p1801 = scmp.le.s32.totalorder 1, %s12
      %p1802 = scmp.lt.s32.totalorder %s12, 3
      %p1803 = pnand %p1801, %p1802
      %p1804 = pneg %p1803
      // Predicated region
      $region71: #{_lambda_.7} parent=5 // pred_check
        _
      $region72: #{_lambda_.7} parent=5 // pred_check_branch
        %1806 = sbr.rel (%p1803) target = $region74
      $region73: #{_lambda_.7} parent=5 // pred_region
        %s1807 = ssub.s32 %s12, 1
        %s1808 = sand.u32 %s46, 1
        %s1809 = sand.u32 %s46, 1
        %s1810 = smul.addr %s1809, 3136
        %s1811 = scalar_lea.vmem [#allocation2], %s1810
        // Predicated region
        $region75: #{_lambda_.7} parent=73 // pred_check
          %p1812 = pneg %p59
        $region76: #{_lambda_.7} parent=73 // pred_check_branch
          %1814 = sbr.rel (%p1812) target = $region78
        $region77: #{_lambda_.7} parent=73 // pred_region
          _
        $region78: #{_lambda_.7} parent=73 // pred_fallthru
          _
        %p1815 = pneg %p33
        %p1816 = pneg %p30
        %s1817 = sand.u32 %s46, 1
        %s1818 = sand.u32 %s46, 1
        %s1819 = smul.addr %s1818, 3136
        %s1820 = scalar_lea.vmem [#allocation2], %s1819
        %p1821 = pneg %p59
        %p1822 = pneg %p56
        %s1823 = smul.u32 2, %s17
        %p1824 = scmp.lt.s32.totalorder %s1823, 3
        %s1825 = scalar_select %p1824, %s1823, 3
        %s1826 = scalar_lea.vmem %s2, %s1825
        %p1827 = pneg %p85
        %p1828 = pneg %p82
        %s1829 = smul.u32 32, %s17
        %p1830 = scmp.lt.s32.totalorder %s1829, 63
        %s1831 = scalar_select %p1830, %s1829, 63
        %s1832 = smul.addr %s1831, 4
        %s1833 = scalar_lea.vmem %s3, %s1832
        %p1834 = pneg %p111
        %p1835 = pneg %p108
        %p1836 = pneg %p132
        %p1837 = pneg %p129
        %p1838 = pneg %p153
        %p1839 = pneg %p150
        %s1840 = smul.u32 2, %s17
        %s1841 = smul.u32 2, %s17
        %p1842 = scmp.lt.s32.totalorder %s1841, 3
        %s1843 = scalar_select %p1842, %s1841, 3
        %s1844 = scalar_lea.vmem %s2, %s1843
        %s1845 = smul.u32 2, %s17
        %s1846 = smul.u32 32, %s17
        %p1847 = scmp.lt.s32.totalorder %s1846, 63
        %s1848 = scalar_select %p1847, %s1846, 63
        %s1849 = smul.addr %s1848, 4
        %s1850 = scalar_lea.vmem %s3, %s1849
        %s1851 = smul.u32 32, %s17
        %p1853 = scmp.eq.s32.totalorder %s17, 0
        // Predicated region
        $region79: #{_lambda_.7} parent=73 // pred_check
          %p1854 = pneg %p1853
        $region80: #{_lambda_.7} parent=73 // pred_check_branch
          %1856 = sbr.rel (%p1854) target = $region82
        $region81: #{_lambda_.7} parent=73 // pred_region
          %vm1857 = vcmask 140288
          %1858 = vst.msk [vmem:[#allocation3] sm:$0x3] %vm1857, 0.0
        $region82: #{_lambda_.7} parent=73 // pred_fallthru
          _
        %v1859 = vld [vmem:[%s0] sm:$0xff]
        %v1860 = vld [vmem:[%s0 + $0x8] sm:$0xff]
        %v1861 = vld [vmem:[%s0 + $0x10] sm:$0xff]
        %v1862 = vld [vmem:[%s0 + $0x18] sm:$0x1]
        %v1863 = vld [vmem:[%s1811] sm:$0xff]
        %v1864 = vld [vmem:[%s1811 + $0x8] sm:$0xff]
        %v1865 = vld [vmem:[%s1811 + $0x10] sm:$0xff]
        %v1866 = vld [vmem:[%s1811 + $0x18] sm:$0xff]
        %v1867 = vld [vmem:[%s1811 + $0x20] sm:$0xff]
        %v1868 = vld [vmem:[%s1811 + $0x28] sm:$0xff]
        %v1869 = vld [vmem:[%s1811 + $0x30] sm:$0xff]
        %v1870 = vld [vmem:[%s1811 + $0x38] sm:$0xff]
        %v1871 = vld [vmem:[%s1811 + $0x40] sm:$0xff]
        %v1872 = vld [vmem:[%s1811 + $0x48] sm:$0xff]
        %v1873 = vld [vmem:[%s1811 + $0x50] sm:$0xff]
        %v1874 = vld [vmem:[%s1811 + $0x58] sm:$0xff]
        %v1875 = vld [vmem:[%s1811 + $0x60] sm:$0xff]
        %v1876 = vld [vmem:[%s1811 + $0x68] sm:$0xff]
        %v1877 = vld [vmem:[%s1811 + $0x70] sm:$0xff]
        %v1878 = vld [vmem:[%s1811 + $0x78] sm:$0xff]
        %v1879 = vld [vmem:[%s1811 + $0x80] sm:$0xff]
        %v1880 = vld [vmem:[%s1811 + $0x88] sm:$0xff]
        %v1881 = vld [vmem:[%s1811 + $0x90] sm:$0xff]
        %v1882 = vld [vmem:[%s1811 + $0x98] sm:$0xff]
        %v1883 = vld [vmem:[%s1811 + $0xa0] sm:$0xff]
        %v1884 = vld [vmem:[%s1811 + $0xa8] sm:$0xff]
        %v1885 = vld [vmem:[%s1811 + $0xb0] sm:$0xff]
        %v1886 = vld [vmem:[%s1811 + $0xb8] sm:$0xff]
        %v1887 = vld [vmem:[%s1811 + $0xc0] sm:$0xff]
        %v1888 = vld [vmem:[%s1811 + $0xc8] sm:$0xff]
        %v1889 = vld [vmem:[%s1811 + $0xd0] sm:$0xff]
        %v1890 = vld [vmem:[%s1811 + $0xd8] sm:$0xff]
        %v1891 = vld [vmem:[%s1811 + $0xe0] sm:$0xff]
        %v1892 = vld [vmem:[%s1811 + $0xe8] sm:$0xff]
        %v1893 = vld [vmem:[%s1811 + $0xf0] sm:$0xff]
        %v1894 = vld [vmem:[%s1811 + $0xf8] sm:$0xff]
        %v1895 = vld [vmem:[%s1811 + $0x100] sm:$0xff]
        %v1896 = vld [vmem:[%s1811 + $0x108] sm:$0xff]
        %v1897 = vld [vmem:[%s1811 + $0x110] sm:$0xff]
        %v1898 = vld [vmem:[%s1811 + $0x118] sm:$0xff]
        %v1899 = vld [vmem:[%s1811 + $0x120] sm:$0xff]
        %v1900 = vld [vmem:[%s1811 + $0x128] sm:$0xff]
        %v1901 = vld [vmem:[%s1811 + $0x130] sm:$0xff]
        %v1902 = vld [vmem:[%s1811 + $0x138] sm:$0xff]
        %v1903 = vld [vmem:[%s1811 + $0x140] sm:$0xff]
        %v1904 = vld [vmem:[%s1811 + $0x148] sm:$0xff]
        %v1905 = vld [vmem:[%s1811 + $0x150] sm:$0xff]
        %v1906 = vld [vmem:[%s1811 + $0x158] sm:$0xff]
        %v1907 = vld [vmem:[%s1811 + $0x160] sm:$0xff]
        %v1908 = vld [vmem:[%s1811 + $0x168] sm:$0xff]
        %v1909 = vld [vmem:[%s1811 + $0x170] sm:$0xff]
        %v1910 = vld [vmem:[%s1811 + $0x178] sm:$0xff]
        %v1911 = vld [vmem:[%s1811 + $0x180] sm:$0xff]
        %v1912 = vld [vmem:[%s1811 + $0x188] sm:$0xff]
        %v1913 = vld [vmem:[%s1811 + $0x190] sm:$0xff]
        %v1914 = vld [vmem:[%s1811 + $0x198] sm:$0xff]
        %v1915 = vld [vmem:[%s1811 + $0x1a0] sm:$0xff]
        %v1916 = vld [vmem:[%s1811 + $0x1a8] sm:$0xff]
        %v1917 = vld [vmem:[%s1811 + $0x1b0] sm:$0xff]
        %v1918 = vld [vmem:[%s1811 + $0x1b8] sm:$0xff]
        %v1919 = vld [vmem:[%s1811 + $0x1c0] sm:$0xff]
        %v1920 = vld [vmem:[%s1811 + $0x1c8] sm:$0xff]
        %v1921 = vld [vmem:[%s1811 + $0x1d0] sm:$0xff]
        %v1922 = vld [vmem:[%s1811 + $0x1d8] sm:$0xff]
        %v1923 = vld [vmem:[%s1811 + $0x1e0] sm:$0xff]
        %v1924 = vld [vmem:[%s1811 + $0x1e8] sm:$0xff]
        %v1925 = vld [vmem:[%s1811 + $0x1f0] sm:$0xff]
        %v1926 = vld [vmem:[%s1811 + $0x1f8] sm:$0xff]
        %v1927 = vld [vmem:[%s1811 + $0x200] sm:$0xff]
        %v1928 = vld [vmem:[%s1811 + $0x208] sm:$0xff]
        %v1929 = vld [vmem:[%s1811 + $0x210] sm:$0xff]
        %v1930 = vld [vmem:[%s1811 + $0x218] sm:$0xff]
        %v1931 = vld [vmem:[%s1811 + $0x220] sm:$0xff]
        %v1932 = vld [vmem:[%s1811 + $0x228] sm:$0xff]
        %v1933 = vld [vmem:[%s1811 + $0x230] sm:$0xff]
        %v1934 = vld [vmem:[%s1811 + $0x238] sm:$0xff]
        %v1935 = vld [vmem:[%s1811 + $0x240] sm:$0xff]
        %v1936 = vld [vmem:[%s1811 + $0x248] sm:$0xff]
        %v1937 = vld [vmem:[%s1811 + $0x250] sm:$0xff]
        %v1938 = vld [vmem:[%s1811 + $0x258] sm:$0xff]
        %v1939 = vld [vmem:[%s1811 + $0x260] sm:$0xff]
        %v1940 = vld [vmem:[%s1811 + $0x268] sm:$0xff]
        %v1941 = vld [vmem:[%s1811 + $0x270] sm:$0xff]
        %v1942 = vld [vmem:[%s1811 + $0x278] sm:$0xff]
        %v1943 = vld [vmem:[%s1811 + $0x280] sm:$0xff]
        %v1944 = vld [vmem:[%s1811 + $0x288] sm:$0xff]
        %v1945 = vld [vmem:[%s1811 + $0x290] sm:$0xff]
        %v1946 = vld [vmem:[%s1811 + $0x298] sm:$0xff]
        %v1947 = vld [vmem:[%s1811 + $0x2a0] sm:$0xff]
        %v1948 = vld [vmem:[%s1811 + $0x2a8] sm:$0xff]
        %v1949 = vld [vmem:[%s1811 + $0x2b0] sm:$0xff]
        %v1950 = vld [vmem:[%s1811 + $0x2b8] sm:$0xff]
        %v1951 = vld [vmem:[%s1811 + $0x2c0] sm:$0xff]
        %v1952 = vld [vmem:[%s1811 + $0x2c8] sm:$0xff]
        %v1953 = vld [vmem:[%s1811 + $0x2d0] sm:$0xff]
        %v1954 = vld [vmem:[%s1811 + $0x2d8] sm:$0xff]
        %v1955 = vld [vmem:[%s1811 + $0x2e0] sm:$0xff]
        %v1956 = vld [vmem:[%s1811 + $0x2e8] sm:$0xff]
        %v1957 = vld [vmem:[%s1811 + $0x2f0] sm:$0xff]
        %v1958 = vld [vmem:[%s1811 + $0x2f8] sm:$0xff]
        %v1959 = vld [vmem:[%s1811 + $0x300] sm:$0xff]
        %v1960 = vld [vmem:[%s1811 + $0x308] sm:$0xff]
        %v1961 = vld [vmem:[%s1811 + $0x310] sm:$0xff]
        %v1962 = vld [vmem:[%s1811 + $0x318] sm:$0xff]
        %v1963 = vld [vmem:[%s1811 + $0x320] sm:$0xff]
        %v1964 = vld [vmem:[%s1811 + $0x328] sm:$0xff]
        %v1965 = vld [vmem:[%s1811 + $0x330] sm:$0xff]
        %v1966 = vld [vmem:[%s1811 + $0x338] sm:$0xff]
        %v1967 = vld [vmem:[%s1811 + $0x340] sm:$0xff]
        %v1968 = vld [vmem:[%s1811 + $0x348] sm:$0xff]
        %v1969 = vld [vmem:[%s1811 + $0x350] sm:$0xff]
        %v1970 = vld [vmem:[%s1811 + $0x358] sm:$0xff]
        %v1971 = vld [vmem:[%s1811 + $0x360] sm:$0xff]
        %v1972 = vld [vmem:[%s1811 + $0x368] sm:$0xff]
        %v1973 = vld [vmem:[%s1811 + $0x370] sm:$0xff]
        %v1974 = vld [vmem:[%s1811 + $0x378] sm:$0xff]
        %v1975 = vld [vmem:[%s1811 + $0x380] sm:$0xff]
        %v1976 = vld [vmem:[%s1811 + $0x388] sm:$0xff]
        %v1977 = vld [vmem:[%s1811 + $0x390] sm:$0xff]
        %v1978 = vld [vmem:[%s1811 + $0x398] sm:$0xff]
        %v1979 = vld [vmem:[%s1811 + $0x3a0] sm:$0xff]
        %v1980 = vld [vmem:[%s1811 + $0x3a8] sm:$0xff]
        %v1981 = vld [vmem:[%s1811 + $0x3b0] sm:$0xff]
        %v1982 = vld [vmem:[%s1811 + $0x3b8] sm:$0xff]
        %v1983 = vld [vmem:[%s1811 + $0x3c0] sm:$0xff]
        %v1984 = vld [vmem:[%s1811 + $0x3c8] sm:$0xff]
        %v1985 = vld [vmem:[%s1811 + $0x3d0] sm:$0xff]
        %v1986 = vld [vmem:[%s1811 + $0x3d8] sm:$0xff]
        %v1987 = vld [vmem:[%s1811 + $0x3e0] sm:$0xff]
        %v1988 = vld [vmem:[%s1811 + $0x3e8] sm:$0xff]
        %v1989 = vld [vmem:[%s1811 + $0x3f0] sm:$0xff]
        %v1990 = vld [vmem:[%s1811 + $0x3f8] sm:$0xff]
        %v1991 = vld [vmem:[%s1811 + $0x400] sm:$0xff]
        %v1992 = vld [vmem:[%s1811 + $0x408] sm:$0xff]
        %v1993 = vld [vmem:[%s1811 + $0x410] sm:$0xff]
        %v1994 = vld [vmem:[%s1811 + $0x418] sm:$0xff]
        %v1995 = vld [vmem:[%s1811 + $0x420] sm:$0xff]
        %v1996 = vld [vmem:[%s1811 + $0x428] sm:$0xff]
        %v1997 = vld [vmem:[%s1811 + $0x430] sm:$0xff]
        %v1998 = vld [vmem:[%s1811 + $0x438] sm:$0xff]
        %v1999 = vld [vmem:[%s1811 + $0x440] sm:$0xff]
        %v2000 = vld [vmem:[%s1811 + $0x448] sm:$0xff]
        %v2001 = vld [vmem:[%s1811 + $0x450] sm:$0xff]
        %v2002 = vld [vmem:[%s1811 + $0x458] sm:$0xff]
        %v2003 = vld [vmem:[%s1811 + $0x460] sm:$0xff]
        %v2004 = vld [vmem:[%s1811 + $0x468] sm:$0xff]
        %v2005 = vld [vmem:[%s1811 + $0x470] sm:$0xff]
        %v2006 = vld [vmem:[%s1811 + $0x478] sm:$0xff]
        %v2007 = vld [vmem:[%s1811 + $0x480] sm:$0xff]
        %v2008 = vld [vmem:[%s1811 + $0x488] sm:$0xff]
        %v2009 = vld [vmem:[%s1811 + $0x490] sm:$0xff]
        %v2010 = vld [vmem:[%s1811 + $0x498] sm:$0xff]
        %v2011 = vld [vmem:[%s1811 + $0x4a0] sm:$0xff]
        %v2012 = vld [vmem:[%s1811 + $0x4a8] sm:$0xff]
        %v2013 = vld [vmem:[%s1811 + $0x4b0] sm:$0xff]
        %v2014 = vld [vmem:[%s1811 + $0x4b8] sm:$0xff]
        %v2015 = vld [vmem:[%s1811 + $0x4c0] sm:$0xff]
        %v2016 = vld [vmem:[%s1811 + $0x4c8] sm:$0xff]
        %v2017 = vld [vmem:[%s1811 + $0x4d0] sm:$0xff]
        %v2018 = vld [vmem:[%s1811 + $0x4d8] sm:$0xff]
        %v2019 = vld [vmem:[%s1811 + $0x4e0] sm:$0xff]
        %v2020 = vld [vmem:[%s1811 + $0x4e8] sm:$0xff]
        %v2021 = vld [vmem:[%s1811 + $0x4f0] sm:$0xff]
        %v2022 = vld [vmem:[%s1811 + $0x4f8] sm:$0xff]
        %v2023 = vld [vmem:[%s1811 + $0x500] sm:$0xff]
        %v2024 = vld [vmem:[%s1811 + $0x508] sm:$0xff]
        %v2025 = vld [vmem:[%s1811 + $0x510] sm:$0xff]
        %v2026 = vld [vmem:[%s1811 + $0x518] sm:$0xff]
        %v2027 = vld [vmem:[%s1811 + $0x520] sm:$0xff]
        %v2028 = vld [vmem:[%s1811 + $0x528] sm:$0xff]
        %v2029 = vld [vmem:[%s1811 + $0x530] sm:$0xff]
        %v2030 = vld [vmem:[%s1811 + $0x538] sm:$0xff]
        %v2031 = vld [vmem:[%s1811 + $0x540] sm:$0xff]
        %v2032 = vld [vmem:[%s1811 + $0x548] sm:$0xff]
        %v2033 = vld [vmem:[%s1811 + $0x550] sm:$0xff]
        %v2034 = vld [vmem:[%s1811 + $0x558] sm:$0xff]
        %v2035 = vld [vmem:[%s1811 + $0x560] sm:$0xff]
        %v2036 = vld [vmem:[%s1811 + $0x568] sm:$0xff]
        %v2037 = vld [vmem:[%s1811 + $0x570] sm:$0xff]
        %v2038 = vld [vmem:[%s1811 + $0x578] sm:$0xff]
        %v2039 = vld [vmem:[%s1811 + $0x580] sm:$0xff]
        %v2040 = vld [vmem:[%s1811 + $0x588] sm:$0xff]
        %v2041 = vld [vmem:[%s1811 + $0x590] sm:$0xff]
        %v2042 = vld [vmem:[%s1811 + $0x598] sm:$0xff]
        %v2043 = vld [vmem:[%s1811 + $0x5a0] sm:$0xff]
        %v2044 = vld [vmem:[%s1811 + $0x5a8] sm:$0xff]
        %v2045 = vld [vmem:[%s1811 + $0x5b0] sm:$0xff]
        %v2046 = vld [vmem:[%s1811 + $0x5b8] sm:$0xff]
        %v2047 = vld [vmem:[%s1811 + $0x5c0] sm:$0xff]
        %v2048 = vld [vmem:[%s1811 + $0x5c8] sm:$0xff]
        %v2049 = vld [vmem:[%s1811 + $0x5d0] sm:$0xff]
        %v2050 = vld [vmem:[%s1811 + $0x5d8] sm:$0xff]
        %v2051 = vld [vmem:[%s1811 + $0x5e0] sm:$0xff]
        %v2052 = vld [vmem:[%s1811 + $0x5e8] sm:$0xff]
        %v2053 = vld [vmem:[%s1811 + $0x5f0] sm:$0xff]
        %v2054 = vld [vmem:[%s1811 + $0x5f8] sm:$0xff]
        %v2055 = vld [vmem:[%s1811 + $0x600] sm:$0xff]
        %v2056 = vld [vmem:[%s1811 + $0x608] sm:$0xff]
        %v2057 = vld [vmem:[%s1811 + $0x610] sm:$0xff]
        %v2058 = vld [vmem:[%s1811 + $0x618] sm:$0xff]
        %v2059 = vld [vmem:[%s1811 + $0x620] sm:$0xff]
        %v2060 = vld [vmem:[%s1811 + $0x628] sm:$0xff]
        %v2061 = vld [vmem:[%s1811 + $0x630] sm:$0xff]
        %v2062 = vld [vmem:[%s1811 + $0x638] sm:$0xff]
        %v2063 = vld [vmem:[%s1811 + $0x640] sm:$0xff]
        %v2064 = vld [vmem:[%s1811 + $0x648] sm:$0xff]
        %v2065 = vld [vmem:[%s1811 + $0x650] sm:$0xff]
        %v2066 = vld [vmem:[%s1811 + $0x658] sm:$0xff]
        %v2067 = vld [vmem:[%s1811 + $0x660] sm:$0xff]
        %v2068 = vld [vmem:[%s1811 + $0x668] sm:$0xff]
        %v2069 = vld [vmem:[%s1811 + $0x670] sm:$0xff]
        %v2070 = vld [vmem:[%s1811 + $0x678] sm:$0xff]
        %v2071 = vld [vmem:[%s1811 + $0x680] sm:$0xff]
        %v2072 = vld [vmem:[%s1811 + $0x688] sm:$0xff]
        %v2073 = vld [vmem:[%s1811 + $0x690] sm:$0xff]
        %v2074 = vld [vmem:[%s1811 + $0x698] sm:$0xff]
        %v2075 = vld [vmem:[%s1811 + $0x6a0] sm:$0xff]
        %v2076 = vld [vmem:[%s1811 + $0x6a8] sm:$0xff]
        %v2077 = vld [vmem:[%s1811 + $0x6b0] sm:$0xff]
        %v2078 = vld [vmem:[%s1811 + $0x6b8] sm:$0xff]
        %v2079 = vld [vmem:[%s1811 + $0x6c0] sm:$0xff]
        %v2080 = vld [vmem:[%s1811 + $0x6c8] sm:$0xff]
        %v2081 = vld [vmem:[%s1811 + $0x6d0] sm:$0xff]
        %v2082 = vld [vmem:[%s1811 + $0x6d8] sm:$0xff]
        %v2083 = vld [vmem:[%s1811 + $0x6e0] sm:$0xff]
        %v2084 = vld [vmem:[%s1811 + $0x6e8] sm:$0xff]
        %v2085 = vld [vmem:[%s1811 + $0x6f0] sm:$0xff]
        %v2086 = vld [vmem:[%s1811 + $0x6f8] sm:$0xff]
        %v2087 = vld [vmem:[%s1811 + $0x700] sm:$0xff]
        %v2088 = vld [vmem:[%s1811 + $0x708] sm:$0xff]
        %v2089 = vld [vmem:[%s1811 + $0x710] sm:$0xff]
        %v2090 = vld [vmem:[%s1811 + $0x718] sm:$0xff]
        %v2091 = vld [vmem:[%s1811 + $0x720] sm:$0xff]
        %v2092 = vld [vmem:[%s1811 + $0x728] sm:$0xff]
        %v2093 = vld [vmem:[%s1811 + $0x730] sm:$0xff]
        %v2094 = vld [vmem:[%s1811 + $0x738] sm:$0xff]
        %v2095 = vld [vmem:[%s1811 + $0x740] sm:$0xff]
        %v2096 = vld [vmem:[%s1811 + $0x748] sm:$0xff]
        %v2097 = vld [vmem:[%s1811 + $0x750] sm:$0xff]
        %v2098 = vld [vmem:[%s1811 + $0x758] sm:$0xff]
        %v2099 = vld [vmem:[%s1811 + $0x760] sm:$0xff]
        %v2100 = vld [vmem:[%s1811 + $0x768] sm:$0xff]
        %v2101 = vld [vmem:[%s1811 + $0x770] sm:$0xff]
        %v2102 = vld [vmem:[%s1811 + $0x778] sm:$0xff]
        %v2103 = vld [vmem:[%s1811 + $0x780] sm:$0xff]
        %v2104 = vld [vmem:[%s1811 + $0x788] sm:$0xff]
        %v2105 = vld [vmem:[%s1811 + $0x790] sm:$0xff]
        %v2106 = vld [vmem:[%s1811 + $0x798] sm:$0xff]
        %v2107 = vld [vmem:[%s1811 + $0x7a0] sm:$0xff]
        %v2108 = vld [vmem:[%s1811 + $0x7a8] sm:$0xff]
        %v2109 = vld [vmem:[%s1811 + $0x7b0] sm:$0xff]
        %v2110 = vld [vmem:[%s1811 + $0x7b8] sm:$0xff]
        %v2111 = vld [vmem:[%s1811 + $0x7c0] sm:$0xff]
        %v2112 = vld [vmem:[%s1811 + $0x7c8] sm:$0xff]
        %v2113 = vld [vmem:[%s1811 + $0x7d0] sm:$0xff]
        %v2114 = vld [vmem:[%s1811 + $0x7d8] sm:$0xff]
        %v2115 = vld [vmem:[%s1811 + $0x7e0] sm:$0xff]
        %v2116 = vld [vmem:[%s1811 + $0x7e8] sm:$0xff]
        %v2117 = vld [vmem:[%s1811 + $0x7f0] sm:$0xff]
        %v2118 = vld [vmem:[%s1811 + $0x7f8] sm:$0xff]
        %v2119 = vld [vmem:[%s1811 + $0x800] sm:$0xff]
        %v2120 = vld [vmem:[%s1811 + $0x808] sm:$0xff]
        %v2121 = vld [vmem:[%s1811 + $0x810] sm:$0xff]
        %v2122 = vld [vmem:[%s1811 + $0x818] sm:$0xff]
        %v2123 = vld [vmem:[%s1811 + $0x820] sm:$0xff]
        %v2124 = vld [vmem:[%s1811 + $0x828] sm:$0xff]
        %v2125 = vld [vmem:[%s1811 + $0x830] sm:$0xff]
        %v2126 = vld [vmem:[%s1811 + $0x838] sm:$0xff]
        %v2127 = vld [vmem:[%s1811 + $0x840] sm:$0xff]
        %v2128 = vld [vmem:[%s1811 + $0x848] sm:$0xff]
        %v2129 = vld [vmem:[%s1811 + $0x850] sm:$0xff]
        %v2130 = vld [vmem:[%s1811 + $0x858] sm:$0xff]
        %v2131 = vld [vmem:[%s1811 + $0x860] sm:$0xff]
        %v2132 = vld [vmem:[%s1811 + $0x868] sm:$0xff]
        %v2133 = vld [vmem:[%s1811 + $0x870] sm:$0xff]
        %v2134 = vld [vmem:[%s1811 + $0x878] sm:$0xff]
        %v2135 = vld [vmem:[%s1811 + $0x880] sm:$0xff]
        %v2136 = vld [vmem:[%s1811 + $0x888] sm:$0xff]
        %v2137 = vld [vmem:[%s1811 + $0x890] sm:$0xff]
        %v2138 = vld [vmem:[%s1811 + $0x898] sm:$0xff]
        %v2139 = vld [vmem:[%s1811 + $0x8a0] sm:$0xff]
        %v2140 = vld [vmem:[%s1811 + $0x8a8] sm:$0xff]
        %v2141 = vld [vmem:[%s1811 + $0x8b0] sm:$0xff]
        %v2142 = vld [vmem:[%s1811 + $0x8b8] sm:$0xff]
        %v2143 = vld [vmem:[%s1811 + $0x8c0] sm:$0xff]
        %v2144 = vld [vmem:[%s1811 + $0x8c8] sm:$0xff]
        %v2145 = vld [vmem:[%s1811 + $0x8d0] sm:$0xff]
        %v2146 = vld [vmem:[%s1811 + $0x8d8] sm:$0xff]
        %v2147 = vld [vmem:[%s1811 + $0x8e0] sm:$0xff]
        %v2148 = vld [vmem:[%s1811 + $0x8e8] sm:$0xff]
        %v2149 = vld [vmem:[%s1811 + $0x8f0] sm:$0xff]
        %v2150 = vld [vmem:[%s1811 + $0x8f8] sm:$0xff]
        %v2151 = vld [vmem:[%s1811 + $0x900] sm:$0xff]
        %v2152 = vld [vmem:[%s1811 + $0x908] sm:$0xff]
        %v2153 = vld [vmem:[%s1811 + $0x910] sm:$0xff]
        %v2154 = vld [vmem:[%s1811 + $0x918] sm:$0xff]
        %v2155 = vld [vmem:[%s1811 + $0x920] sm:$0xff]
        %v2156 = vld [vmem:[%s1811 + $0x928] sm:$0xff]
        %v2157 = vld [vmem:[%s1811 + $0x930] sm:$0xff]
        %v2158 = vld [vmem:[%s1811 + $0x938] sm:$0xff]
        %v2159 = vld [vmem:[%s1811 + $0x940] sm:$0xff]
        %v2160 = vld [vmem:[%s1811 + $0x948] sm:$0xff]
        %v2161 = vld [vmem:[%s1811 + $0x950] sm:$0xff]
        %v2162 = vld [vmem:[%s1811 + $0x958] sm:$0xff]
        %v2163 = vld [vmem:[%s1811 + $0x960] sm:$0xff]
        %v2164 = vld [vmem:[%s1811 + $0x968] sm:$0xff]
        %v2165 = vld [vmem:[%s1811 + $0x970] sm:$0xff]
        %v2166 = vld [vmem:[%s1811 + $0x978] sm:$0xff]
        %v2167 = vld [vmem:[%s1811 + $0x980] sm:$0xff]
        %v2168 = vld [vmem:[%s1811 + $0x988] sm:$0xff]
        %v2169 = vld [vmem:[%s1811 + $0x990] sm:$0xff]
        %v2170 = vld [vmem:[%s1811 + $0x998] sm:$0xff]
        %v2171 = vld [vmem:[%s1811 + $0x9a0] sm:$0xff]
        %v2172 = vld [vmem:[%s1811 + $0x9a8] sm:$0xff]
        %v2173 = vld [vmem:[%s1811 + $0x9b0] sm:$0xff]
        %v2174 = vld [vmem:[%s1811 + $0x9b8] sm:$0xff]
        %v2175 = vld [vmem:[%s1811 + $0x9c0] sm:$0xff]
        %v2176 = vld [vmem:[%s1811 + $0x9c8] sm:$0xff]
        %v2177 = vld [vmem:[%s1811 + $0x9d0] sm:$0xff]
        %v2178 = vld [vmem:[%s1811 + $0x9d8] sm:$0xff]
        %v2179 = vld [vmem:[%s1811 + $0x9e0] sm:$0xff]
        %v2180 = vld [vmem:[%s1811 + $0x9e8] sm:$0xff]
        %v2181 = vld [vmem:[%s1811 + $0x9f0] sm:$0xff]
        %v2182 = vld [vmem:[%s1811 + $0x9f8] sm:$0xff]
        %v2183 = vld [vmem:[%s1811 + $0xa00] sm:$0xff]
        %v2184 = vld [vmem:[%s1811 + $0xa08] sm:$0xff]
        %v2185 = vld [vmem:[%s1811 + $0xa10] sm:$0xff]
        %v2186 = vld [vmem:[%s1811 + $0xa18] sm:$0xff]
        %v2187 = vld [vmem:[%s1811 + $0xa20] sm:$0xff]
        %v2188 = vld [vmem:[%s1811 + $0xa28] sm:$0xff]
        %v2189 = vld [vmem:[%s1811 + $0xa30] sm:$0xff]
        %v2190 = vld [vmem:[%s1811 + $0xa38] sm:$0xff]
        %v2191 = vld [vmem:[%s1811 + $0xa40] sm:$0xff]
        %v2192 = vld [vmem:[%s1811 + $0xa48] sm:$0xff]
        %v2193 = vld [vmem:[%s1811 + $0xa50] sm:$0xff]
        %v2194 = vld [vmem:[%s1811 + $0xa58] sm:$0xff]
        %v2195 = vld [vmem:[%s1811 + $0xa60] sm:$0xff]
        %v2196 = vld [vmem:[%s1811 + $0xa68] sm:$0xff]
        %v2197 = vld [vmem:[%s1811 + $0xa70] sm:$0xff]
        %v2198 = vld [vmem:[%s1811 + $0xa78] sm:$0xff]
        %v2199 = vld [vmem:[%s1811 + $0xa80] sm:$0xff]
        %v2200 = vld [vmem:[%s1811 + $0xa88] sm:$0xff]
        %v2201 = vld [vmem:[%s1811 + $0xa90] sm:$0xff]
        %v2202 = vld [vmem:[%s1811 + $0xa98] sm:$0xff]
        %v2203 = vld [vmem:[%s1811 + $0xaa0] sm:$0xff]
        %v2204 = vld [vmem:[%s1811 + $0xaa8] sm:$0xff]
        %v2205 = vld [vmem:[%s1811 + $0xab0] sm:$0xff]
        %v2206 = vld [vmem:[%s1811 + $0xab8] sm:$0xff]
        %v2207 = vld [vmem:[%s1811 + $0xac0] sm:$0xff]
        %v2208 = vld [vmem:[%s1811 + $0xac8] sm:$0xff]
        %v2209 = vld [vmem:[%s1811 + $0xad0] sm:$0xff]
        %v2210 = vld [vmem:[%s1811 + $0xad8] sm:$0xff]
        %v2211 = vld [vmem:[%s1811 + $0xae0] sm:$0xff]
        %v2212 = vld [vmem:[%s1811 + $0xae8] sm:$0xff]
        %v2213 = vld [vmem:[%s1811 + $0xaf0] sm:$0xff]
        %v2214 = vld [vmem:[%s1811 + $0xaf8] sm:$0xff]
        %v2215 = vld [vmem:[%s1811 + $0xb00] sm:$0xff]
        %v2216 = vld [vmem:[%s1811 + $0xb08] sm:$0xff]
        %v2217 = vld [vmem:[%s1811 + $0xb10] sm:$0xff]
        %v2218 = vld [vmem:[%s1811 + $0xb18] sm:$0xff]
        %v2219 = vld [vmem:[%s1811 + $0xb20] sm:$0xff]
        %v2220 = vld [vmem:[%s1811 + $0xb28] sm:$0xff]
        %v2221 = vld [vmem:[%s1811 + $0xb30] sm:$0xff]
        %v2222 = vld [vmem:[%s1811 + $0xb38] sm:$0xff]
        %v2223 = vld [vmem:[%s1811 + $0xb40] sm:$0xff]
        %v2224 = vld [vmem:[%s1811 + $0xb48] sm:$0xff]
        %v2225 = vld [vmem:[%s1811 + $0xb50] sm:$0xff]
        %v2226 = vld [vmem:[%s1811 + $0xb58] sm:$0xff]
        %v2227 = vld [vmem:[%s1811 + $0xb60] sm:$0xff]
        %v2228 = vld [vmem:[%s1811 + $0xb68] sm:$0xff]
        %v2229 = vld [vmem:[%s1811 + $0xb70] sm:$0xff]
        %v2230 = vld [vmem:[%s1811 + $0xb78] sm:$0xff]
        %v2231 = vld [vmem:[%s1811 + $0xb80] sm:$0xff]
        %v2232 = vld [vmem:[%s1811 + $0xb88] sm:$0xff]
        %v2233 = vld [vmem:[%s1811 + $0xb90] sm:$0xff]
        %v2234 = vld [vmem:[%s1811 + $0xb98] sm:$0xff]
        %v2235 = vld [vmem:[%s1811 + $0xba0] sm:$0xff]
        %v2236 = vld [vmem:[%s1811 + $0xba8] sm:$0xff]
        %v2237 = vld [vmem:[%s1811 + $0xbb0] sm:$0xff]
        %v2238 = vld [vmem:[%s1811 + $0xbb8] sm:$0xff]
        %v2239 = vld [vmem:[%s1811 + $0xbc0] sm:$0xff]
        %v2240 = vld [vmem:[%s1811 + $0xbc8] sm:$0xff]
        %v2241 = vld [vmem:[%s1811 + $0xbd0] sm:$0xff]
        %v2242 = vld [vmem:[%s1811 + $0xbd8] sm:$0xff]
        %v2243 = vld [vmem:[%s1811 + $0xbe0] sm:$0xff]
        %v2244 = vld [vmem:[%s1811 + $0xbe8] sm:$0xff]
        %v2245 = vld [vmem:[%s1811 + $0xbf0] sm:$0xff]
        %v2246 = vld [vmem:[%s1811 + $0xbf8] sm:$0xff]
        %v2247 = vld [vmem:[%s1811 + $0xc00] sm:$0xff]
        %v2248 = vld [vmem:[%s1811 + $0xc08] sm:$0xff]
        %v2249 = vld [vmem:[%s1811 + $0xc10] sm:$0xff]
        %v2250 = vld [vmem:[%s1811 + $0xc18] sm:$0xff]
        %v2251 = vld [vmem:[%s1811 + $0xc20] sm:$0xff]
        %v2252 = vld [vmem:[%s1811 + $0xc28] sm:$0xff]
        %v2253 = vld [vmem:[%s1811 + $0xc30] sm:$0xff]
        %v2254 = vld [vmem:[%s1811 + $0xc38] sm:$0xff]
        %v2255 = vld [vmem:[%s1844] sm:$0x3]
        %v2257 = vlaneseq
        %v2258 = vshrl.u32 %v2257, 7
        %v2259 = vsub.s32 0, %v2258
        %v2260 = vrot.slane %v2255, %v2259
        %v2261 = vlaneseq
        %v2262 = vshrl.u32 %v2261, 7
        %v2263 = vsub.s32 1, %v2262
        %v2264 = vrot.slane %v2255, %v2263
        %v2271 = vcombine.high %v1859, %v1859
        %v2273 = vunpack.c.l.s4 1966171168
        %v2274 = vunpack.c.0.s8 %v2273
        %v2275 = vlaneseq
        %v2276 = vshrl.u32 %v2275, 7
        %v2277 = vsub.s32 %v2274, %v2276
        %v2278 = vrot.slane %v1859, %v2277
        %v2280 = vunpack.c.l.s4 1966171168
        %v2281 = vunpack.c.0.s8 %v2280
        %v2282 = vlaneseq
        %v2283 = vshrl.u32 %v2282, 7
        %v2284 = vsub.s32 %v2281, %v2283
        %v2285 = vrot.slane %v2271, %v2284
        %v2286 = vcombine.high %v2278, %v2278
        %v2287 = vcombine.high %v2285, %v2285
        %v2289 = vunpack.c.l.s4 1966171168
        %v2290 = vunpack.c.0.s8 %v2289
        %v2291 = vlaneseq
        %v2292 = vshrl.u32 %v2291, 7
        %v2293 = vsub.s32 %v2290, %v2292
        %v2294 = vrot.slane %v2278, %v2293
        %v2296 = vunpack.c.l.s4 1966171168
        %v2297 = vunpack.c.0.s8 %v2296
        %v2298 = vlaneseq
        %v2299 = vshrl.u32 %v2298, 7
        %v2300 = vsub.s32 %v2297, %v2299
        %v2301 = vrot.slane %v2285, %v2300
        %v2303 = vunpack.c.l.s4 1966171168
        %v2304 = vunpack.c.0.s8 %v2303
        %v2305 = vlaneseq
        %v2306 = vshrl.u32 %v2305, 7
        %v2307 = vsub.s32 %v2304, %v2306
        %v2308 = vrot.slane %v2286, %v2307
        %v2310 = vunpack.c.l.s4 1966171168
        %v2311 = vunpack.c.0.s8 %v2310
        %v2312 = vlaneseq
        %v2313 = vshrl.u32 %v2312, 7
        %v2314 = vsub.s32 %v2311, %v2313
        %v2315 = vrot.slane %v2287, %v2314
        %v2316 = vcombine.high %v2294, %v2294
        %v2317 = vcombine.high %v2301, %v2301
        %v2318 = vcombine.high %v2308, %v2308
        %v2319 = vcombine.high %v2315, %v2315
        %v2320 = vcombine.high %v1860, %v1860
        %v2322 = vunpack.c.l.s4 1966171168
        %v2323 = vunpack.c.0.s8 %v2322
        %v2324 = vlaneseq
        %v2325 = vshrl.u32 %v2324, 7
        %v2326 = vsub.s32 %v2323, %v2325
        %v2327 = vrot.slane %v1860, %v2326
        %v2329 = vunpack.c.l.s4 1966171168
        %v2330 = vunpack.c.0.s8 %v2329
        %v2331 = vlaneseq
        %v2332 = vshrl.u32 %v2331, 7
        %v2333 = vsub.s32 %v2330, %v2332
        %v2334 = vrot.slane %v2320, %v2333
        %v2335 = vcombine.high %v2327, %v2327
        %v2336 = vcombine.high %v2334, %v2334
        %v2338 = vunpack.c.l.s4 1966171168
        %v2339 = vunpack.c.0.s8 %v2338
        %v2340 = vlaneseq
        %v2341 = vshrl.u32 %v2340, 7
        %v2342 = vsub.s32 %v2339, %v2341
        %v2343 = vrot.slane %v2327, %v2342
        %v2345 = vunpack.c.l.s4 1966171168
        %v2346 = vunpack.c.0.s8 %v2345
        %v2347 = vlaneseq
        %v2348 = vshrl.u32 %v2347, 7
        %v2349 = vsub.s32 %v2346, %v2348
        %v2350 = vrot.slane %v2334, %v2349
        %v2352 = vunpack.c.l.s4 1966171168
        %v2353 = vunpack.c.0.s8 %v2352
        %v2354 = vlaneseq
        %v2355 = vshrl.u32 %v2354, 7
        %v2356 = vsub.s32 %v2353, %v2355
        %v2357 = vrot.slane %v2335, %v2356
        %v2359 = vunpack.c.l.s4 1966171168
        %v2360 = vunpack.c.0.s8 %v2359
        %v2361 = vlaneseq
        %v2362 = vshrl.u32 %v2361, 7
        %v2363 = vsub.s32 %v2360, %v2362
        %v2364 = vrot.slane %v2336, %v2363
        %v2365 = vcombine.high %v2343, %v2343
        %v2366 = vcombine.high %v2350, %v2350
        %v2367 = vcombine.high %v2357, %v2357
        %v2368 = vcombine.high %v2364, %v2364
        %v2369 = vcombine.high %v1861, %v1861
        %v2371 = vunpack.c.l.s4 1966171168
        %v2372 = vunpack.c.0.s8 %v2371
        %v2373 = vlaneseq
        %v2374 = vshrl.u32 %v2373, 7
        %v2375 = vsub.s32 %v2372, %v2374
        %v2376 = vrot.slane %v1861, %v2375
        %v2378 = vunpack.c.l.s4 1966171168
        %v2379 = vunpack.c.0.s8 %v2378
        %v2380 = vlaneseq
        %v2381 = vshrl.u32 %v2380, 7
        %v2382 = vsub.s32 %v2379, %v2381
        %v2383 = vrot.slane %v2369, %v2382
        %v2384 = vcombine.high %v2376, %v2376
        %v2385 = vcombine.high %v2383, %v2383
        %v2387 = vunpack.c.l.s4 1966171168
        %v2388 = vunpack.c.0.s8 %v2387
        %v2389 = vlaneseq
        %v2390 = vshrl.u32 %v2389, 7
        %v2391 = vsub.s32 %v2388, %v2390
        %v2392 = vrot.slane %v2376, %v2391
        %v2394 = vunpack.c.l.s4 1966171168
        %v2395 = vunpack.c.0.s8 %v2394
        %v2396 = vlaneseq
        %v2397 = vshrl.u32 %v2396, 7
        %v2398 = vsub.s32 %v2395, %v2397
        %v2399 = vrot.slane %v2383, %v2398
        %v2401 = vunpack.c.l.s4 1966171168
        %v2402 = vunpack.c.0.s8 %v2401
        %v2403 = vlaneseq
        %v2404 = vshrl.u32 %v2403, 7
        %v2405 = vsub.s32 %v2402, %v2404
        %v2406 = vrot.slane %v2384, %v2405
        %v2408 = vunpack.c.l.s4 1966171168
        %v2409 = vunpack.c.0.s8 %v2408
        %v2410 = vlaneseq
        %v2411 = vshrl.u32 %v2410, 7
        %v2412 = vsub.s32 %v2409, %v2411
        %v2413 = vrot.slane %v2385, %v2412
        %v2414 = vcombine.high %v2392, %v2392
        %v2415 = vcombine.high %v2399, %v2399
        %v2416 = vcombine.high %v2406, %v2406
        %v2417 = vcombine.high %v2413, %v2413
        %v2419 = vunpack.c.l.s4 1966171168
        %v2420 = vunpack.c.0.s8 %v2419
        %v2421 = vlaneseq
        %v2422 = vshrl.u32 %v2421, 7
        %v2423 = vsub.s32 %v2420, %v2422
        %v2424 = vrot.slane %v1862, %v2423
        %v2426 = vunpack.c.l.s4 1966171168
        %v2427 = vunpack.c.0.s8 %v2426
        %v2428 = vlaneseq
        %v2429 = vshrl.u32 %v2428, 7
        %v2430 = vsub.s32 %v2427, %v2429
        %v2431 = vrot.slane %v2424, %v2430
        %v2848 = vunpack.c.l.b16 %v1863
        %v2849 = vunpack.c.h.b16 %v1863
        %v2850 = vunpack.c.l.b16 %v1864
        %v2851 = vunpack.c.h.b16 %v1864
        %v2852 = vunpack.c.l.b16 %v1865
        %v2853 = vunpack.c.h.b16 %v1865
        %v2854 = vunpack.c.l.b16 %v1866
        %v2855 = vunpack.c.h.b16 %v1866
        %v2856 = vunpack.c.l.b16 %v1867
        %v2857 = vunpack.c.h.b16 %v1867
        %v2858 = vunpack.c.l.b16 %v1868
        %v2859 = vunpack.c.h.b16 %v1868
        %v2860 = vunpack.c.l.b16 %v1869
        %v2861 = vunpack.c.h.b16 %v1869
        %v2862 = vunpack.c.l.b16 %v1870
        %v2863 = vunpack.c.h.b16 %v1870
        %v2864 = vunpack.c.l.b16 %v1871
        %v2865 = vunpack.c.h.b16 %v1871
        %v2866 = vunpack.c.l.b16 %v1872
        %v2867 = vunpack.c.h.b16 %v1872
        %v2868 = vunpack.c.l.b16 %v1873
        %v2869 = vunpack.c.h.b16 %v1873
        %v2870 = vunpack.c.l.b16 %v1874
        %v2871 = vunpack.c.h.b16 %v1874
        %v2872 = vunpack.c.l.b16 %v1875
        %v2873 = vunpack.c.h.b16 %v1875
        %v2874 = vunpack.c.l.b16 %v1876
        %v2875 = vunpack.c.h.b16 %v1876
        %v2876 = vunpack.c.l.b16 %v1877
        %v2877 = vunpack.c.h.b16 %v1877
        %v2878 = vunpack.c.l.b16 %v1878
        %v2879 = vunpack.c.h.b16 %v1878
        %v2880 = vunpack.c.l.b16 %v1879
        %v2881 = vunpack.c.h.b16 %v1879
        %v2882 = vunpack.c.l.b16 %v1880
        %v2883 = vunpack.c.h.b16 %v1880
        %v2884 = vunpack.c.l.b16 %v1881
        %v2885 = vunpack.c.h.b16 %v1881
        %v2886 = vunpack.c.l.b16 %v1882
        %v2887 = vunpack.c.h.b16 %v1882
        %v2888 = vunpack.c.l.b16 %v1883
        %v2889 = vunpack.c.h.b16 %v1883
        %v2890 = vunpack.c.l.b16 %v1884
        %v2891 = vunpack.c.h.b16 %v1884
        %v2892 = vunpack.c.l.b16 %v1885
        %v2893 = vunpack.c.h.b16 %v1885
        %v2894 = vunpack.c.l.b16 %v1886
        %v2895 = vunpack.c.h.b16 %v1886
        %v2896 = vunpack.c.l.b16 %v1887
        %v2897 = vunpack.c.h.b16 %v1887
        %v2898 = vunpack.c.l.b16 %v1888
        %v2899 = vunpack.c.h.b16 %v1888
        %v2900 = vunpack.c.l.b16 %v1889
        %v2901 = vunpack.c.h.b16 %v1889
        %v2902 = vunpack.c.l.b16 %v1890
        %v2903 = vunpack.c.h.b16 %v1890
        %v2904 = vunpack.c.l.b16 %v1891
        %v2905 = vunpack.c.h.b16 %v1891
        %v2906 = vunpack.c.l.b16 %v1892
        %v2907 = vunpack.c.h.b16 %v1892
        %v2908 = vunpack.c.l.b16 %v1893
        %v2909 = vunpack.c.h.b16 %v1893
        %v2910 = vunpack.c.l.b16 %v1894
        %v2911 = vunpack.c.h.b16 %v1894
        %v2912 = vunpack.c.l.b16 %v1895
        %v2913 = vunpack.c.h.b16 %v1895
        %v2914 = vunpack.c.l.b16 %v1896
        %v2915 = vunpack.c.h.b16 %v1896
        %v2916 = vunpack.c.l.b16 %v1897
        %v2917 = vunpack.c.h.b16 %v1897
        %v2918 = vunpack.c.l.b16 %v1898
        %v2919 = vunpack.c.h.b16 %v1898
        %v2920 = vunpack.c.l.b16 %v1899
        %v2921 = vunpack.c.h.b16 %v1899
        %v2922 = vunpack.c.l.b16 %v1900
        %v2923 = vunpack.c.h.b16 %v1900
        %v2924 = vunpack.c.l.b16 %v1901
        %v2925 = vunpack.c.h.b16 %v1901
        %v2926 = vunpack.c.l.b16 %v1902
        %v2927 = vunpack.c.h.b16 %v1902
        %v2928 = vunpack.c.l.b16 %v1903
        %v2929 = vunpack.c.h.b16 %v1903
        %v2930 = vunpack.c.l.b16 %v1904
        %v2931 = vunpack.c.h.b16 %v1904
        %v2932 = vunpack.c.l.b16 %v1905
        %v2933 = vunpack.c.h.b16 %v1905
        %v2934 = vunpack.c.l.b16 %v1906
        %v2935 = vunpack.c.h.b16 %v1906
        %v2936 = vunpack.c.l.b16 %v1907
        %v2937 = vunpack.c.h.b16 %v1907
        %v2938 = vunpack.c.l.b16 %v1908
        %v2939 = vunpack.c.h.b16 %v1908
        %v2940 = vunpack.c.l.b16 %v1909
        %v2941 = vunpack.c.h.b16 %v1909
        %v2942 = vunpack.c.l.b16 %v1910
        %v2943 = vunpack.c.h.b16 %v1910
        %v2944 = vunpack.c.l.b16 %v1911
        %v2945 = vunpack.c.h.b16 %v1911
        %v2946 = vunpack.c.l.b16 %v1912
        %v2947 = vunpack.c.h.b16 %v1912
        %v2948 = vunpack.c.l.b16 %v1913
        %v2949 = vunpack.c.h.b16 %v1913
        %v2950 = vunpack.c.l.b16 %v1914
        %v2951 = vunpack.c.h.b16 %v1914
        %v2952 = vunpack.c.l.b16 %v1915
        %v2953 = vunpack.c.h.b16 %v1915
        %v2954 = vunpack.c.l.b16 %v1916
        %v2955 = vunpack.c.h.b16 %v1916
        %v2956 = vunpack.c.l.b16 %v1917
        %v2957 = vunpack.c.h.b16 %v1917
        %v2958 = vunpack.c.l.b16 %v1918
        %v2959 = vunpack.c.h.b16 %v1918
        %v2960 = vunpack.c.l.b16 %v1919
        %v2961 = vunpack.c.h.b16 %v1919
        %v2962 = vunpack.c.l.b16 %v1920
        %v2963 = vunpack.c.h.b16 %v1920
        %v2964 = vunpack.c.l.b16 %v1921
        %v2965 = vunpack.c.h.b16 %v1921
        %v2966 = vunpack.c.l.b16 %v1922
        %v2967 = vunpack.c.h.b16 %v1922
        %v2968 = vunpack.c.l.b16 %v1923
        %v2969 = vunpack.c.h.b16 %v1923
        %v2970 = vunpack.c.l.b16 %v1924
        %v2971 = vunpack.c.h.b16 %v1924
        %v2972 = vunpack.c.l.b16 %v1925
        %v2973 = vunpack.c.h.b16 %v1925
        %v2974 = vunpack.c.l.b16 %v1926
        %v2975 = vunpack.c.h.b16 %v1926
        %v2976 = vunpack.c.l.b16 %v1927
        %v2977 = vunpack.c.h.b16 %v1927
        %v2978 = vunpack.c.l.b16 %v1928
        %v2979 = vunpack.c.h.b16 %v1928
        %v2980 = vunpack.c.l.b16 %v1929
        %v2981 = vunpack.c.h.b16 %v1929
        %v2982 = vunpack.c.l.b16 %v1930
        %v2983 = vunpack.c.h.b16 %v1930
        %v2984 = vunpack.c.l.b16 %v1931
        %v2985 = vunpack.c.h.b16 %v1931
        %v2986 = vunpack.c.l.b16 %v1932
        %v2987 = vunpack.c.h.b16 %v1932
        %v2988 = vunpack.c.l.b16 %v1933
        %v2989 = vunpack.c.h.b16 %v1933
        %v2990 = vunpack.c.l.b16 %v1934
        %v2991 = vunpack.c.h.b16 %v1934
        %v2992 = vunpack.c.l.b16 %v1935
        %v2993 = vunpack.c.h.b16 %v1935
        %v2994 = vunpack.c.l.b16 %v1936
        %v2995 = vunpack.c.h.b16 %v1936
        %v2996 = vunpack.c.l.b16 %v1937
        %v2997 = vunpack.c.h.b16 %v1937
        %v2998 = vunpack.c.l.b16 %v1938
        %v2999 = vunpack.c.h.b16 %v1938
        %v3000 = vunpack.c.l.b16 %v1939
        %v3001 = vunpack.c.h.b16 %v1939
        %v3002 = vunpack.c.l.b16 %v1940
        %v3003 = vunpack.c.h.b16 %v1940
        %v3004 = vunpack.c.l.b16 %v1941
        %v3005 = vunpack.c.h.b16 %v1941
        %v3006 = vunpack.c.l.b16 %v1942
        %v3007 = vunpack.c.h.b16 %v1942
        %v3008 = vunpack.c.l.b16 %v1943
        %v3009 = vunpack.c.h.b16 %v1943
        %v3010 = vunpack.c.l.b16 %v1944
        %v3011 = vunpack.c.h.b16 %v1944
        %v3012 = vunpack.c.l.b16 %v1945
        %v3013 = vunpack.c.h.b16 %v1945
        %v3014 = vunpack.c.l.b16 %v1946
        %v3015 = vunpack.c.h.b16 %v1946
        %v3016 = vunpack.c.l.b16 %v1947
        %v3017 = vunpack.c.h.b16 %v1947
        %v3018 = vunpack.c.l.b16 %v1948
        %v3019 = vunpack.c.h.b16 %v1948
        %v3020 = vunpack.c.l.b16 %v1949
        %v3021 = vunpack.c.h.b16 %v1949
        %v3022 = vunpack.c.l.b16 %v1950
        %v3023 = vunpack.c.h.b16 %v1950
        %v3024 = vunpack.c.l.b16 %v1951
        %v3025 = vunpack.c.h.b16 %v1951
        %v3026 = vunpack.c.l.b16 %v1952
        %v3027 = vunpack.c.h.b16 %v1952
        %v3028 = vunpack.c.l.b16 %v1953
        %v3029 = vunpack.c.h.b16 %v1953
        %v3030 = vunpack.c.l.b16 %v1954
        %v3031 = vunpack.c.h.b16 %v1954
        %v3032 = vunpack.c.l.b16 %v1955
        %v3033 = vunpack.c.h.b16 %v1955
        %v3034 = vunpack.c.l.b16 %v1956
        %v3035 = vunpack.c.h.b16 %v1956
        %v3036 = vunpack.c.l.b16 %v1957
        %v3037 = vunpack.c.h.b16 %v1957
        %v3038 = vunpack.c.l.b16 %v1958
        %v3039 = vunpack.c.h.b16 %v1958
        %v3040 = vunpack.c.l.b16 %v1959
        %v3041 = vunpack.c.h.b16 %v1959
        %v3042 = vunpack.c.l.b16 %v1960
        %v3043 = vunpack.c.h.b16 %v1960
        %v3044 = vunpack.c.l.b16 %v1961
        %v3045 = vunpack.c.h.b16 %v1961
        %v3046 = vunpack.c.l.b16 %v1962
        %v3047 = vunpack.c.h.b16 %v1962
        %v3048 = vunpack.c.l.b16 %v1963
        %v3049 = vunpack.c.h.b16 %v1963
        %v3050 = vunpack.c.l.b16 %v1964
        %v3051 = vunpack.c.h.b16 %v1964
        %v3052 = vunpack.c.l.b16 %v1965
        %v3053 = vunpack.c.h.b16 %v1965
        %v3054 = vunpack.c.l.b16 %v1966
        %v3055 = vunpack.c.h.b16 %v1966
        %v3056 = vunpack.c.l.b16 %v1967
        %v3057 = vunpack.c.h.b16 %v1967
        %v3058 = vunpack.c.l.b16 %v1968
        %v3059 = vunpack.c.h.b16 %v1968
        %v3060 = vunpack.c.l.b16 %v1969
        %v3061 = vunpack.c.h.b16 %v1969
        %v3062 = vunpack.c.l.b16 %v1970
        %v3063 = vunpack.c.h.b16 %v1970
        %v3064 = vunpack.c.l.b16 %v1971
        %v3065 = vunpack.c.h.b16 %v1971
        %v3066 = vunpack.c.l.b16 %v1972
        %v3067 = vunpack.c.h.b16 %v1972
        %v3068 = vunpack.c.l.b16 %v1973
        %v3069 = vunpack.c.h.b16 %v1973
        %v3070 = vunpack.c.l.b16 %v1974
        %v3071 = vunpack.c.h.b16 %v1974
        %v3072 = vunpack.c.l.b16 %v1975
        %v3073 = vunpack.c.h.b16 %v1975
        %v3074 = vunpack.c.l.b16 %v1976
        %v3075 = vunpack.c.h.b16 %v1976
        %v3076 = vunpack.c.l.b16 %v1977
        %v3077 = vunpack.c.h.b16 %v1977
        %v3078 = vunpack.c.l.b16 %v1978
        %v3079 = vunpack.c.h.b16 %v1978
        %v3080 = vunpack.c.l.b16 %v1979
        %v3081 = vunpack.c.h.b16 %v1979
        %v3082 = vunpack.c.l.b16 %v1980
        %v3083 = vunpack.c.h.b16 %v1980
        %v3084 = vunpack.c.l.b16 %v1981
        %v3085 = vunpack.c.h.b16 %v1981
        %v3086 = vunpack.c.l.b16 %v1982
        %v3087 = vunpack.c.h.b16 %v1982
        %v3088 = vunpack.c.l.b16 %v1983
        %v3089 = vunpack.c.h.b16 %v1983
        %v3090 = vunpack.c.l.b16 %v1984
        %v3091 = vunpack.c.h.b16 %v1984
        %v3092 = vunpack.c.l.b16 %v1985
        %v3093 = vunpack.c.h.b16 %v1985
        %v3094 = vunpack.c.l.b16 %v1986
        %v3095 = vunpack.c.h.b16 %v1986
        %v3096 = vunpack.c.l.b16 %v1987
        %v3097 = vunpack.c.h.b16 %v1987
        %v3098 = vunpack.c.l.b16 %v1988
        %v3099 = vunpack.c.h.b16 %v1988
        %v3100 = vunpack.c.l.b16 %v1989
        %v3101 = vunpack.c.h.b16 %v1989
        %v3102 = vunpack.c.l.b16 %v1990
        %v3103 = vunpack.c.h.b16 %v1990
        %v3104 = vunpack.c.l.b16 %v1991
        %v3105 = vunpack.c.h.b16 %v1991
        %v3106 = vunpack.c.l.b16 %v1992
        %v3107 = vunpack.c.h.b16 %v1992
        %v3108 = vunpack.c.l.b16 %v1993
        %v3109 = vunpack.c.h.b16 %v1993
        %v3110 = vunpack.c.l.b16 %v1994
        %v3111 = vunpack.c.h.b16 %v1994
        %v3112 = vunpack.c.l.b16 %v1995
        %v3113 = vunpack.c.h.b16 %v1995
        %v3114 = vunpack.c.l.b16 %v1996
        %v3115 = vunpack.c.h.b16 %v1996
        %v3116 = vunpack.c.l.b16 %v1997
        %v3117 = vunpack.c.h.b16 %v1997
        %v3118 = vunpack.c.l.b16 %v1998
        %v3119 = vunpack.c.h.b16 %v1998
        %v3120 = vunpack.c.l.b16 %v1999
        %v3121 = vunpack.c.h.b16 %v1999
        %v3122 = vunpack.c.l.b16 %v2000
        %v3123 = vunpack.c.h.b16 %v2000
        %v3124 = vunpack.c.l.b16 %v2001
        %v3125 = vunpack.c.h.b16 %v2001
        %v3126 = vunpack.c.l.b16 %v2002
        %v3127 = vunpack.c.h.b16 %v2002
        %v3128 = vunpack.c.l.b16 %v2003
        %v3129 = vunpack.c.h.b16 %v2003
        %v3130 = vunpack.c.l.b16 %v2004
        %v3131 = vunpack.c.h.b16 %v2004
        %v3132 = vunpack.c.l.b16 %v2005
        %v3133 = vunpack.c.h.b16 %v2005
        %v3134 = vunpack.c.l.b16 %v2006
        %v3135 = vunpack.c.h.b16 %v2006
        %v3136 = vunpack.c.l.b16 %v2007
        %v3137 = vunpack.c.h.b16 %v2007
        %v3138 = vunpack.c.l.b16 %v2008
        %v3139 = vunpack.c.h.b16 %v2008
        %v3140 = vunpack.c.l.b16 %v2009
        %v3141 = vunpack.c.h.b16 %v2009
        %v3142 = vunpack.c.l.b16 %v2010
        %v3143 = vunpack.c.h.b16 %v2010
        %v3144 = vunpack.c.l.b16 %v2011
        %v3145 = vunpack.c.h.b16 %v2011
        %v3146 = vunpack.c.l.b16 %v2012
        %v3147 = vunpack.c.h.b16 %v2012
        %v3148 = vunpack.c.l.b16 %v2013
        %v3149 = vunpack.c.h.b16 %v2013
        %v3150 = vunpack.c.l.b16 %v2014
        %v3151 = vunpack.c.h.b16 %v2014
        %v3152 = vunpack.c.l.b16 %v2015
        %v3153 = vunpack.c.h.b16 %v2015
        %v3154 = vunpack.c.l.b16 %v2016
        %v3155 = vunpack.c.h.b16 %v2016
        %v3156 = vunpack.c.l.b16 %v2017
        %v3157 = vunpack.c.h.b16 %v2017
        %v3158 = vunpack.c.l.b16 %v2018
        %v3159 = vunpack.c.h.b16 %v2018
        %v3160 = vunpack.c.l.b16 %v2019
        %v3161 = vunpack.c.h.b16 %v2019
        %v3162 = vunpack.c.l.b16 %v2020
        %v3163 = vunpack.c.h.b16 %v2020
        %v3164 = vunpack.c.l.b16 %v2021
        %v3165 = vunpack.c.h.b16 %v2021
        %v3166 = vunpack.c.l.b16 %v2022
        %v3167 = vunpack.c.h.b16 %v2022
        %v3168 = vunpack.c.l.b16 %v2023
        %v3169 = vunpack.c.h.b16 %v2023
        %v3170 = vunpack.c.l.b16 %v2024
        %v3171 = vunpack.c.h.b16 %v2024
        %v3172 = vunpack.c.l.b16 %v2025
        %v3173 = vunpack.c.h.b16 %v2025
        %v3174 = vunpack.c.l.b16 %v2026
        %v3175 = vunpack.c.h.b16 %v2026
        %v3176 = vunpack.c.l.b16 %v2027
        %v3177 = vunpack.c.h.b16 %v2027
        %v3178 = vunpack.c.l.b16 %v2028
        %v3179 = vunpack.c.h.b16 %v2028
        %v3180 = vunpack.c.l.b16 %v2029
        %v3181 = vunpack.c.h.b16 %v2029
        %v3182 = vunpack.c.l.b16 %v2030
        %v3183 = vunpack.c.h.b16 %v2030
        %v3184 = vunpack.c.l.b16 %v2031
        %v3185 = vunpack.c.h.b16 %v2031
        %v3186 = vunpack.c.l.b16 %v2032
        %v3187 = vunpack.c.h.b16 %v2032
        %v3188 = vunpack.c.l.b16 %v2033
        %v3189 = vunpack.c.h.b16 %v2033
        %v3190 = vunpack.c.l.b16 %v2034
        %v3191 = vunpack.c.h.b16 %v2034
        %v3192 = vunpack.c.l.b16 %v2035
        %v3193 = vunpack.c.h.b16 %v2035
        %v3194 = vunpack.c.l.b16 %v2036
        %v3195 = vunpack.c.h.b16 %v2036
        %v3196 = vunpack.c.l.b16 %v2037
        %v3197 = vunpack.c.h.b16 %v2037
        %v3198 = vunpack.c.l.b16 %v2038
        %v3199 = vunpack.c.h.b16 %v2038
        %v3200 = vunpack.c.l.b16 %v2039
        %v3201 = vunpack.c.h.b16 %v2039
        %v3202 = vunpack.c.l.b16 %v2040
        %v3203 = vunpack.c.h.b16 %v2040
        %v3204 = vunpack.c.l.b16 %v2041
        %v3205 = vunpack.c.h.b16 %v2041
        %v3206 = vunpack.c.l.b16 %v2042
        %v3207 = vunpack.c.h.b16 %v2042
        %v3208 = vunpack.c.l.b16 %v2043
        %v3209 = vunpack.c.h.b16 %v2043
        %v3210 = vunpack.c.l.b16 %v2044
        %v3211 = vunpack.c.h.b16 %v2044
        %v3212 = vunpack.c.l.b16 %v2045
        %v3213 = vunpack.c.h.b16 %v2045
        %v3214 = vunpack.c.l.b16 %v2046
        %v3215 = vunpack.c.h.b16 %v2046
        %v3216 = vunpack.c.l.b16 %v2047
        %v3217 = vunpack.c.h.b16 %v2047
        %v3218 = vunpack.c.l.b16 %v2048
        %v3219 = vunpack.c.h.b16 %v2048
        %v3220 = vunpack.c.l.b16 %v2049
        %v3221 = vunpack.c.h.b16 %v2049
        %v3222 = vunpack.c.l.b16 %v2050
        %v3223 = vunpack.c.h.b16 %v2050
        %v3224 = vunpack.c.l.b16 %v2051
        %v3225 = vunpack.c.h.b16 %v2051
        %v3226 = vunpack.c.l.b16 %v2052
        %v3227 = vunpack.c.h.b16 %v2052
        %v3228 = vunpack.c.l.b16 %v2053
        %v3229 = vunpack.c.h.b16 %v2053
        %v3230 = vunpack.c.l.b16 %v2054
        %v3231 = vunpack.c.h.b16 %v2054
        %v3232 = vunpack.c.l.b16 %v2055
        %v3233 = vunpack.c.h.b16 %v2055
        %v3234 = vunpack.c.l.b16 %v2056
        %v3235 = vunpack.c.h.b16 %v2056
        %v3236 = vunpack.c.l.b16 %v2057
        %v3237 = vunpack.c.h.b16 %v2057
        %v3238 = vunpack.c.l.b16 %v2058
        %v3239 = vunpack.c.h.b16 %v2058
        %v3240 = vunpack.c.l.b16 %v2059
        %v3241 = vunpack.c.h.b16 %v2059
        %v3242 = vunpack.c.l.b16 %v2060
        %v3243 = vunpack.c.h.b16 %v2060
        %v3244 = vunpack.c.l.b16 %v2061
        %v3245 = vunpack.c.h.b16 %v2061
        %v3246 = vunpack.c.l.b16 %v2062
        %v3247 = vunpack.c.h.b16 %v2062
        %v3248 = vunpack.c.l.b16 %v2063
        %v3249 = vunpack.c.h.b16 %v2063
        %v3250 = vunpack.c.l.b16 %v2064
        %v3251 = vunpack.c.h.b16 %v2064
        %v3252 = vunpack.c.l.b16 %v2065
        %v3253 = vunpack.c.h.b16 %v2065
        %v3254 = vunpack.c.l.b16 %v2066
        %v3255 = vunpack.c.h.b16 %v2066
        %v3256 = vunpack.c.l.b16 %v2067
        %v3257 = vunpack.c.h.b16 %v2067
        %v3258 = vunpack.c.l.b16 %v2068
        %v3259 = vunpack.c.h.b16 %v2068
        %v3260 = vunpack.c.l.b16 %v2069
        %v3261 = vunpack.c.h.b16 %v2069
        %v3262 = vunpack.c.l.b16 %v2070
        %v3263 = vunpack.c.h.b16 %v2070
        %v3264 = vunpack.c.l.b16 %v2071
        %v3265 = vunpack.c.h.b16 %v2071
        %v3266 = vunpack.c.l.b16 %v2072
        %v3267 = vunpack.c.h.b16 %v2072
        %v3268 = vunpack.c.l.b16 %v2073
        %v3269 = vunpack.c.h.b16 %v2073
        %v3270 = vunpack.c.l.b16 %v2074
        %v3271 = vunpack.c.h.b16 %v2074
        %v3272 = vunpack.c.l.b16 %v2075
        %v3273 = vunpack.c.h.b16 %v2075
        %v3274 = vunpack.c.l.b16 %v2076
        %v3275 = vunpack.c.h.b16 %v2076
        %v3276 = vunpack.c.l.b16 %v2077
        %v3277 = vunpack.c.h.b16 %v2077
        %v3278 = vunpack.c.l.b16 %v2078
        %v3279 = vunpack.c.h.b16 %v2078
        %v3280 = vunpack.c.l.b16 %v2079
        %v3281 = vunpack.c.h.b16 %v2079
        %v3282 = vunpack.c.l.b16 %v2080
        %v3283 = vunpack.c.h.b16 %v2080
        %v3284 = vunpack.c.l.b16 %v2081
        %v3285 = vunpack.c.h.b16 %v2081
        %v3286 = vunpack.c.l.b16 %v2082
        %v3287 = vunpack.c.h.b16 %v2082
        %v3288 = vunpack.c.l.b16 %v2083
        %v3289 = vunpack.c.h.b16 %v2083
        %v3290 = vunpack.c.l.b16 %v2084
        %v3291 = vunpack.c.h.b16 %v2084
        %v3292 = vunpack.c.l.b16 %v2085
        %v3293 = vunpack.c.h.b16 %v2085
        %v3294 = vunpack.c.l.b16 %v2086
        %v3295 = vunpack.c.h.b16 %v2086
        %v3296 = vunpack.c.l.b16 %v2087
        %v3297 = vunpack.c.h.b16 %v2087
        %v3298 = vunpack.c.l.b16 %v2088
        %v3299 = vunpack.c.h.b16 %v2088
        %v3300 = vunpack.c.l.b16 %v2089
        %v3301 = vunpack.c.h.b16 %v2089
        %v3302 = vunpack.c.l.b16 %v2090
        %v3303 = vunpack.c.h.b16 %v2090
        %v3304 = vunpack.c.l.b16 %v2091
        %v3305 = vunpack.c.h.b16 %v2091
        %v3306 = vunpack.c.l.b16 %v2092
        %v3307 = vunpack.c.h.b16 %v2092
        %v3308 = vunpack.c.l.b16 %v2093
        %v3309 = vunpack.c.h.b16 %v2093
        %v3310 = vunpack.c.l.b16 %v2094
        %v3311 = vunpack.c.h.b16 %v2094
        %v3312 = vunpack.c.l.b16 %v2095
        %v3313 = vunpack.c.h.b16 %v2095
        %v3314 = vunpack.c.l.b16 %v2096
        %v3315 = vunpack.c.h.b16 %v2096
        %v3316 = vunpack.c.l.b16 %v2097
        %v3317 = vunpack.c.h.b16 %v2097
        %v3318 = vunpack.c.l.b16 %v2098
        %v3319 = vunpack.c.h.b16 %v2098
        %v3320 = vunpack.c.l.b16 %v2099
        %v3321 = vunpack.c.h.b16 %v2099
        %v3322 = vunpack.c.l.b16 %v2100
        %v3323 = vunpack.c.h.b16 %v2100
        %v3324 = vunpack.c.l.b16 %v2101
        %v3325 = vunpack.c.h.b16 %v2101
        %v3326 = vunpack.c.l.b16 %v2102
        %v3327 = vunpack.c.h.b16 %v2102
        %v3328 = vunpack.c.l.b16 %v2103
        %v3329 = vunpack.c.h.b16 %v2103
        %v3330 = vunpack.c.l.b16 %v2104
        %v3331 = vunpack.c.h.b16 %v2104
        %v3332 = vunpack.c.l.b16 %v2105
        %v3333 = vunpack.c.h.b16 %v2105
        %v3334 = vunpack.c.l.b16 %v2106
        %v3335 = vunpack.c.h.b16 %v2106
        %v3336 = vunpack.c.l.b16 %v2107
        %v3337 = vunpack.c.h.b16 %v2107
        %v3338 = vunpack.c.l.b16 %v2108
        %v3339 = vunpack.c.h.b16 %v2108
        %v3340 = vunpack.c.l.b16 %v2109
        %v3341 = vunpack.c.h.b16 %v2109
        %v3342 = vunpack.c.l.b16 %v2110
        %v3343 = vunpack.c.h.b16 %v2110
        %v3344 = vunpack.c.l.b16 %v2111
        %v3345 = vunpack.c.h.b16 %v2111
        %v3346 = vunpack.c.l.b16 %v2112
        %v3347 = vunpack.c.h.b16 %v2112
        %v3348 = vunpack.c.l.b16 %v2113
        %v3349 = vunpack.c.h.b16 %v2113
        %v3350 = vunpack.c.l.b16 %v2114
        %v3351 = vunpack.c.h.b16 %v2114
        %v3352 = vunpack.c.l.b16 %v2115
        %v3353 = vunpack.c.h.b16 %v2115
        %v3354 = vunpack.c.l.b16 %v2116
        %v3355 = vunpack.c.h.b16 %v2116
        %v3356 = vunpack.c.l.b16 %v2117
        %v3357 = vunpack.c.h.b16 %v2117
        %v3358 = vunpack.c.l.b16 %v2118
        %v3359 = vunpack.c.h.b16 %v2118
        %v3360 = vunpack.c.l.b16 %v2119
        %v3361 = vunpack.c.h.b16 %v2119
        %v3362 = vunpack.c.l.b16 %v2120
        %v3363 = vunpack.c.h.b16 %v2120
        %v3364 = vunpack.c.l.b16 %v2121
        %v3365 = vunpack.c.h.b16 %v2121
        %v3366 = vunpack.c.l.b16 %v2122
        %v3367 = vunpack.c.h.b16 %v2122
        %v3368 = vunpack.c.l.b16 %v2123
        %v3369 = vunpack.c.h.b16 %v2123
        %v3370 = vunpack.c.l.b16 %v2124
        %v3371 = vunpack.c.h.b16 %v2124
        %v3372 = vunpack.c.l.b16 %v2125
        %v3373 = vunpack.c.h.b16 %v2125
        %v3374 = vunpack.c.l.b16 %v2126
        %v3375 = vunpack.c.h.b16 %v2126
        %v3376 = vunpack.c.l.b16 %v2127
        %v3377 = vunpack.c.h.b16 %v2127
        %v3378 = vunpack.c.l.b16 %v2128
        %v3379 = vunpack.c.h.b16 %v2128
        %v3380 = vunpack.c.l.b16 %v2129
        %v3381 = vunpack.c.h.b16 %v2129
        %v3382 = vunpack.c.l.b16 %v2130
        %v3383 = vunpack.c.h.b16 %v2130
        %v3384 = vunpack.c.l.b16 %v2131
        %v3385 = vunpack.c.h.b16 %v2131
        %v3386 = vunpack.c.l.b16 %v2132
        %v3387 = vunpack.c.h.b16 %v2132
        %v3388 = vunpack.c.l.b16 %v2133
        %v3389 = vunpack.c.h.b16 %v2133
        %v3390 = vunpack.c.l.b16 %v2134
        %v3391 = vunpack.c.h.b16 %v2134
        %v3392 = vunpack.c.l.b16 %v2135
        %v3393 = vunpack.c.h.b16 %v2135
        %v3394 = vunpack.c.l.b16 %v2136
        %v3395 = vunpack.c.h.b16 %v2136
        %v3396 = vunpack.c.l.b16 %v2137
        %v3397 = vunpack.c.h.b16 %v2137
        %v3398 = vunpack.c.l.b16 %v2138
        %v3399 = vunpack.c.h.b16 %v2138
        %v3400 = vunpack.c.l.b16 %v2139
        %v3401 = vunpack.c.h.b16 %v2139
        %v3402 = vunpack.c.l.b16 %v2140
        %v3403 = vunpack.c.h.b16 %v2140
        %v3404 = vunpack.c.l.b16 %v2141
        %v3405 = vunpack.c.h.b16 %v2141
        %v3406 = vunpack.c.l.b16 %v2142
        %v3407 = vunpack.c.h.b16 %v2142
        %v3408 = vunpack.c.l.b16 %v2143
        %v3409 = vunpack.c.h.b16 %v2143
        %v3410 = vunpack.c.l.b16 %v2144
        %v3411 = vunpack.c.h.b16 %v2144
        %v3412 = vunpack.c.l.b16 %v2145
        %v3413 = vunpack.c.h.b16 %v2145
        %v3414 = vunpack.c.l.b16 %v2146
        %v3415 = vunpack.c.h.b16 %v2146
        %v3416 = vunpack.c.l.b16 %v2147
        %v3417 = vunpack.c.h.b16 %v2147
        %v3418 = vunpack.c.l.b16 %v2148
        %v3419 = vunpack.c.h.b16 %v2148
        %v3420 = vunpack.c.l.b16 %v2149
        %v3421 = vunpack.c.h.b16 %v2149
        %v3422 = vunpack.c.l.b16 %v2150
        %v3423 = vunpack.c.h.b16 %v2150
        %v3424 = vunpack.c.l.b16 %v2151
        %v3425 = vunpack.c.h.b16 %v2151
        %v3426 = vunpack.c.l.b16 %v2152
        %v3427 = vunpack.c.h.b16 %v2152
        %v3428 = vunpack.c.l.b16 %v2153
        %v3429 = vunpack.c.h.b16 %v2153
        %v3430 = vunpack.c.l.b16 %v2154
        %v3431 = vunpack.c.h.b16 %v2154
        %v3432 = vunpack.c.l.b16 %v2155
        %v3433 = vunpack.c.h.b16 %v2155
        %v3434 = vunpack.c.l.b16 %v2156
        %v3435 = vunpack.c.h.b16 %v2156
        %v3436 = vunpack.c.l.b16 %v2157
        %v3437 = vunpack.c.h.b16 %v2157
        %v3438 = vunpack.c.l.b16 %v2158
        %v3439 = vunpack.c.h.b16 %v2158
        %v3440 = vunpack.c.l.b16 %v2159
        %v3441 = vunpack.c.h.b16 %v2159
        %v3442 = vunpack.c.l.b16 %v2160
        %v3443 = vunpack.c.h.b16 %v2160
        %v3444 = vunpack.c.l.b16 %v2161
        %v3445 = vunpack.c.h.b16 %v2161
        %v3446 = vunpack.c.l.b16 %v2162
        %v3447 = vunpack.c.h.b16 %v2162
        %v3448 = vunpack.c.l.b16 %v2163
        %v3449 = vunpack.c.h.b16 %v2163
        %v3450 = vunpack.c.l.b16 %v2164
        %v3451 = vunpack.c.h.b16 %v2164
        %v3452 = vunpack.c.l.b16 %v2165
        %v3453 = vunpack.c.h.b16 %v2165
        %v3454 = vunpack.c.l.b16 %v2166
        %v3455 = vunpack.c.h.b16 %v2166
        %v3456 = vunpack.c.l.b16 %v2167
        %v3457 = vunpack.c.h.b16 %v2167
        %v3458 = vunpack.c.l.b16 %v2168
        %v3459 = vunpack.c.h.b16 %v2168
        %v3460 = vunpack.c.l.b16 %v2169
        %v3461 = vunpack.c.h.b16 %v2169
        %v3462 = vunpack.c.l.b16 %v2170
        %v3463 = vunpack.c.h.b16 %v2170
        %v3464 = vunpack.c.l.b16 %v2171
        %v3465 = vunpack.c.h.b16 %v2171
        %v3466 = vunpack.c.l.b16 %v2172
        %v3467 = vunpack.c.h.b16 %v2172
        %v3468 = vunpack.c.l.b16 %v2173
        %v3469 = vunpack.c.h.b16 %v2173
        %v3470 = vunpack.c.l.b16 %v2174
        %v3471 = vunpack.c.h.b16 %v2174
        %v3472 = vunpack.c.l.b16 %v2175
        %v3473 = vunpack.c.h.b16 %v2175
        %v3474 = vunpack.c.l.b16 %v2176
        %v3475 = vunpack.c.h.b16 %v2176
        %v3476 = vunpack.c.l.b16 %v2177
        %v3477 = vunpack.c.h.b16 %v2177
        %v3478 = vunpack.c.l.b16 %v2178
        %v3479 = vunpack.c.h.b16 %v2178
        %v3480 = vunpack.c.l.b16 %v2179
        %v3481 = vunpack.c.h.b16 %v2179
        %v3482 = vunpack.c.l.b16 %v2180
        %v3483 = vunpack.c.h.b16 %v2180
        %v3484 = vunpack.c.l.b16 %v2181
        %v3485 = vunpack.c.h.b16 %v2181
        %v3486 = vunpack.c.l.b16 %v2182
        %v3487 = vunpack.c.h.b16 %v2182
        %v3488 = vunpack.c.l.b16 %v2183
        %v3489 = vunpack.c.h.b16 %v2183
        %v3490 = vunpack.c.l.b16 %v2184
        %v3491 = vunpack.c.h.b16 %v2184
        %v3492 = vunpack.c.l.b16 %v2185
        %v3493 = vunpack.c.h.b16 %v2185
        %v3494 = vunpack.c.l.b16 %v2186
        %v3495 = vunpack.c.h.b16 %v2186
        %v3496 = vunpack.c.l.b16 %v2187
        %v3497 = vunpack.c.h.b16 %v2187
        %v3498 = vunpack.c.l.b16 %v2188
        %v3499 = vunpack.c.h.b16 %v2188
        %v3500 = vunpack.c.l.b16 %v2189
        %v3501 = vunpack.c.h.b16 %v2189
        %v3502 = vunpack.c.l.b16 %v2190
        %v3503 = vunpack.c.h.b16 %v2190
        %v3504 = vunpack.c.l.b16 %v2191
        %v3505 = vunpack.c.h.b16 %v2191
        %v3506 = vunpack.c.l.b16 %v2192
        %v3507 = vunpack.c.h.b16 %v2192
        %v3508 = vunpack.c.l.b16 %v2193
        %v3509 = vunpack.c.h.b16 %v2193
        %v3510 = vunpack.c.l.b16 %v2194
        %v3511 = vunpack.c.h.b16 %v2194
        %v3512 = vunpack.c.l.b16 %v2195
        %v3513 = vunpack.c.h.b16 %v2195
        %v3514 = vunpack.c.l.b16 %v2196
        %v3515 = vunpack.c.h.b16 %v2196
        %v3516 = vunpack.c.l.b16 %v2197
        %v3517 = vunpack.c.h.b16 %v2197
        %v3518 = vunpack.c.l.b16 %v2198
        %v3519 = vunpack.c.h.b16 %v2198
        %v3520 = vunpack.c.l.b16 %v2199
        %v3521 = vunpack.c.h.b16 %v2199
        %v3522 = vunpack.c.l.b16 %v2200
        %v3523 = vunpack.c.h.b16 %v2200
        %v3524 = vunpack.c.l.b16 %v2201
        %v3525 = vunpack.c.h.b16 %v2201
        %v3526 = vunpack.c.l.b16 %v2202
        %v3527 = vunpack.c.h.b16 %v2202
        %v3528 = vunpack.c.l.b16 %v2203
        %v3529 = vunpack.c.h.b16 %v2203
        %v3530 = vunpack.c.l.b16 %v2204
        %v3531 = vunpack.c.h.b16 %v2204
        %v3532 = vunpack.c.l.b16 %v2205
        %v3533 = vunpack.c.h.b16 %v2205
        %v3534 = vunpack.c.l.b16 %v2206
        %v3535 = vunpack.c.h.b16 %v2206
        %v3536 = vunpack.c.l.b16 %v2207
        %v3537 = vunpack.c.h.b16 %v2207
        %v3538 = vunpack.c.l.b16 %v2208
        %v3539 = vunpack.c.h.b16 %v2208
        %v3540 = vunpack.c.l.b16 %v2209
        %v3541 = vunpack.c.h.b16 %v2209
        %v3542 = vunpack.c.l.b16 %v2210
        %v3543 = vunpack.c.h.b16 %v2210
        %v3544 = vunpack.c.l.b16 %v2211
        %v3545 = vunpack.c.h.b16 %v2211
        %v3546 = vunpack.c.l.b16 %v2212
        %v3547 = vunpack.c.h.b16 %v2212
        %v3548 = vunpack.c.l.b16 %v2213
        %v3549 = vunpack.c.h.b16 %v2213
        %v3550 = vunpack.c.l.b16 %v2214
        %v3551 = vunpack.c.h.b16 %v2214
        %v3552 = vunpack.c.l.b16 %v2215
        %v3553 = vunpack.c.h.b16 %v2215
        %v3554 = vunpack.c.l.b16 %v2216
        %v3555 = vunpack.c.h.b16 %v2216
        %v3556 = vunpack.c.l.b16 %v2217
        %v3557 = vunpack.c.h.b16 %v2217
        %v3558 = vunpack.c.l.b16 %v2218
        %v3559 = vunpack.c.h.b16 %v2218
        %v3560 = vunpack.c.l.b16 %v2219
        %v3561 = vunpack.c.h.b16 %v2219
        %v3562 = vunpack.c.l.b16 %v2220
        %v3563 = vunpack.c.h.b16 %v2220
        %v3564 = vunpack.c.l.b16 %v2221
        %v3565 = vunpack.c.h.b16 %v2221
        %v3566 = vunpack.c.l.b16 %v2222
        %v3567 = vunpack.c.h.b16 %v2222
        %v3568 = vunpack.c.l.b16 %v2223
        %v3569 = vunpack.c.h.b16 %v2223
        %v3570 = vunpack.c.l.b16 %v2224
        %v3571 = vunpack.c.h.b16 %v2224
        %v3572 = vunpack.c.l.b16 %v2225
        %v3573 = vunpack.c.h.b16 %v2225
        %v3574 = vunpack.c.l.b16 %v2226
        %v3575 = vunpack.c.h.b16 %v2226
        %v3576 = vunpack.c.l.b16 %v2227
        %v3577 = vunpack.c.h.b16 %v2227
        %v3578 = vunpack.c.l.b16 %v2228
        %v3579 = vunpack.c.h.b16 %v2228
        %v3580 = vunpack.c.l.b16 %v2229
        %v3581 = vunpack.c.h.b16 %v2229
        %v3582 = vunpack.c.l.b16 %v2230
        %v3583 = vunpack.c.h.b16 %v2230
        %v3584 = vunpack.c.l.b16 %v2231
        %v3585 = vunpack.c.h.b16 %v2231
        %v3586 = vunpack.c.l.b16 %v2232
        %v3587 = vunpack.c.h.b16 %v2232
        %v3588 = vunpack.c.l.b16 %v2233
        %v3589 = vunpack.c.h.b16 %v2233
        %v3590 = vunpack.c.l.b16 %v2234
        %v3591 = vunpack.c.h.b16 %v2234
        %v3592 = vunpack.c.l.b16 %v2235
        %v3593 = vunpack.c.h.b16 %v2235
        %v3594 = vunpack.c.l.b16 %v2236
        %v3595 = vunpack.c.h.b16 %v2236
        %v3596 = vunpack.c.l.b16 %v2237
        %v3597 = vunpack.c.h.b16 %v2237
        %v3598 = vunpack.c.l.b16 %v2238
        %v3599 = vunpack.c.h.b16 %v2238
        %v3600 = vunpack.c.l.b16 %v2239
        %v3601 = vunpack.c.h.b16 %v2239
        %v3602 = vunpack.c.l.b16 %v2240
        %v3603 = vunpack.c.h.b16 %v2240
        %v3604 = vunpack.c.l.b16 %v2241
        %v3605 = vunpack.c.h.b16 %v2241
        %v3606 = vunpack.c.l.b16 %v2242
        %v3607 = vunpack.c.h.b16 %v2242
        %v3608 = vunpack.c.l.b16 %v2243
        %v3609 = vunpack.c.h.b16 %v2243
        %v3610 = vunpack.c.l.b16 %v2244
        %v3611 = vunpack.c.h.b16 %v2244
        %v3612 = vunpack.c.l.b16 %v2245
        %v3613 = vunpack.c.h.b16 %v2245
        %v3614 = vunpack.c.l.b16 %v2246
        %v3615 = vunpack.c.h.b16 %v2246
        %v3616 = vunpack.c.l.b16 %v2247
        %v3617 = vunpack.c.h.b16 %v2247
        %v3618 = vunpack.c.l.b16 %v2248
        %v3619 = vunpack.c.h.b16 %v2248
        %v3620 = vunpack.c.l.b16 %v2249
        %v3621 = vunpack.c.h.b16 %v2249
        %v3622 = vunpack.c.l.b16 %v2250
        %v3623 = vunpack.c.h.b16 %v2250
        %v3624 = vunpack.c.l.b16 %v2251
        %v3625 = vunpack.c.h.b16 %v2251
        %v3626 = vunpack.c.l.b16 %v2252
        %v3627 = vunpack.c.h.b16 %v2252
        %v3628 = vunpack.c.l.b16 %v2253
        %v3629 = vunpack.c.h.b16 %v2253
        %v3630 = vunpack.c.l.b16 %v2254
        %v3631 = vunpack.c.h.b16 %v2254
        %v3632 = vpack.c.b16 %v2850, %v2848
        %v3633 = vpack.c.b16 %v2851, %v2849
        %v3634 = vpack.c.b16 %v2854, %v2852
        %v3635 = vpack.c.b16 %v2855, %v2853
        %v3636 = vpack.c.b16 %v2858, %v2856
        %v3637 = vpack.c.b16 %v2859, %v2857
        %v3638 = vpack.c.b16 %v2862, %v2860
        %v3639 = vpack.c.b16 %v2863, %v2861
        %v3640 = vpack.c.b16 %v2866, %v2864
        %v3641 = vpack.c.b16 %v2867, %v2865
        %v3642 = vpack.c.b16 %v2870, %v2868
        %v3643 = vpack.c.b16 %v2871, %v2869
        %v3644 = vpack.c.b16 %v2874, %v2872
        %v3645 = vpack.c.b16 %v2875, %v2873
        %v3646 = vpack.c.b16 %v2878, %v2876
        %v3647 = vpack.c.b16 %v2879, %v2877
        %v3648 = vpack.c.b16 %v2882, %v2880
        %v3649 = vpack.c.b16 %v2883, %v2881
        %v3650 = vpack.c.b16 %v2886, %v2884
        %v3651 = vpack.c.b16 %v2887, %v2885
        %v3652 = vpack.c.b16 %v2890, %v2888
        %v3653 = vpack.c.b16 %v2891, %v2889
        %v3654 = vpack.c.b16 %v2894, %v2892
        %v3655 = vpack.c.b16 %v2895, %v2893
        %v3656 = vpack.c.b16 %v2898, %v2896
        %v3657 = vpack.c.b16 %v2899, %v2897
        %v3658 = vpack.c.b16 %v2902, %v2900
        %v3659 = vpack.c.b16 %v2903, %v2901
        %v3660 = vpack.c.b16 %v2906, %v2904
        %v3661 = vpack.c.b16 %v2907, %v2905
        %v3662 = vpack.c.b16 %v2910, %v2908
        %v3663 = vpack.c.b16 %v2911, %v2909
        %v3664 = vpack.c.b16 %v2914, %v2912
        %v3665 = vpack.c.b16 %v2915, %v2913
        %v3666 = vpack.c.b16 %v2918, %v2916
        %v3667 = vpack.c.b16 %v2919, %v2917
        %v3668 = vpack.c.b16 %v2922, %v2920
        %v3669 = vpack.c.b16 %v2923, %v2921
        %v3670 = vpack.c.b16 %v2926, %v2924
        %v3671 = vpack.c.b16 %v2927, %v2925
        %v3672 = vpack.c.b16 %v2930, %v2928
        %v3673 = vpack.c.b16 %v2931, %v2929
        %v3674 = vpack.c.b16 %v2934, %v2932
        %v3675 = vpack.c.b16 %v2935, %v2933
        %v3676 = vpack.c.b16 %v2938, %v2936
        %v3677 = vpack.c.b16 %v2939, %v2937
        %v3678 = vpack.c.b16 %v2942, %v2940
        %v3679 = vpack.c.b16 %v2943, %v2941
        %v3680 = vpack.c.b16 %v2946, %v2944
        %v3681 = vpack.c.b16 %v2947, %v2945
        %v3682 = vpack.c.b16 %v2950, %v2948
        %v3683 = vpack.c.b16 %v2951, %v2949
        %v3684 = vpack.c.b16 %v2954, %v2952
        %v3685 = vpack.c.b16 %v2955, %v2953
        %v3686 = vpack.c.b16 %v2958, %v2956
        %v3687 = vpack.c.b16 %v2959, %v2957
        %v3688 = vpack.c.b16 %v2962, %v2960
        %v3689 = vpack.c.b16 %v2963, %v2961
        %v3690 = vpack.c.b16 %v2966, %v2964
        %v3691 = vpack.c.b16 %v2967, %v2965
        %v3692 = vpack.c.b16 %v2970, %v2968
        %v3693 = vpack.c.b16 %v2971, %v2969
        %v3694 = vpack.c.b16 %v2974, %v2972
        %v3695 = vpack.c.b16 %v2975, %v2973
        %v3696 = vpack.c.b16 %v2978, %v2976
        %v3697 = vpack.c.b16 %v2979, %v2977
        %v3698 = vpack.c.b16 %v2982, %v2980
        %v3699 = vpack.c.b16 %v2983, %v2981
        %v3700 = vpack.c.b16 %v2986, %v2984
        %v3701 = vpack.c.b16 %v2987, %v2985
        %v3702 = vpack.c.b16 %v2990, %v2988
        %v3703 = vpack.c.b16 %v2991, %v2989
        %v3704 = vpack.c.b16 %v2994, %v2992
        %v3705 = vpack.c.b16 %v2995, %v2993
        %v3706 = vpack.c.b16 %v2998, %v2996
        %v3707 = vpack.c.b16 %v2999, %v2997
        %v3708 = vpack.c.b16 %v3002, %v3000
        %v3709 = vpack.c.b16 %v3003, %v3001
        %v3710 = vpack.c.b16 %v3006, %v3004
        %v3711 = vpack.c.b16 %v3007, %v3005
        %v3712 = vpack.c.b16 %v3010, %v3008
        %v3713 = vpack.c.b16 %v3011, %v3009
        %v3714 = vpack.c.b16 %v3014, %v3012
        %v3715 = vpack.c.b16 %v3015, %v3013
        %v3716 = vpack.c.b16 %v3018, %v3016
        %v3717 = vpack.c.b16 %v3019, %v3017
        %v3718 = vpack.c.b16 %v3022, %v3020
        %v3719 = vpack.c.b16 %v3023, %v3021
        %v3720 = vpack.c.b16 %v3026, %v3024
        %v3721 = vpack.c.b16 %v3027, %v3025
        %v3722 = vpack.c.b16 %v3030, %v3028
        %v3723 = vpack.c.b16 %v3031, %v3029
        %v3724 = vpack.c.b16 %v3034, %v3032
        %v3725 = vpack.c.b16 %v3035, %v3033
        %v3726 = vpack.c.b16 %v3038, %v3036
        %v3727 = vpack.c.b16 %v3039, %v3037
        %v3728 = vpack.c.b16 %v3042, %v3040
        %v3729 = vpack.c.b16 %v3043, %v3041
        %v3730 = vpack.c.b16 %v3046, %v3044
        %v3731 = vpack.c.b16 %v3047, %v3045
        %v3732 = vpack.c.b16 %v3050, %v3048
        %v3733 = vpack.c.b16 %v3051, %v3049
        %v3734 = vpack.c.b16 %v3054, %v3052
        %v3735 = vpack.c.b16 %v3055, %v3053
        %v3736 = vpack.c.b16 %v3058, %v3056
        %v3737 = vpack.c.b16 %v3059, %v3057
        %v3738 = vpack.c.b16 %v3062, %v3060
        %v3739 = vpack.c.b16 %v3063, %v3061
        %v3740 = vpack.c.b16 %v3066, %v3064
        %v3741 = vpack.c.b16 %v3067, %v3065
        %v3742 = vpack.c.b16 %v3070, %v3068
        %v3743 = vpack.c.b16 %v3071, %v3069
        %v3744 = vpack.c.b16 %v3074, %v3072
        %v3745 = vpack.c.b16 %v3075, %v3073
        %v3746 = vpack.c.b16 %v3078, %v3076
        %v3747 = vpack.c.b16 %v3079, %v3077
        %v3748 = vpack.c.b16 %v3082, %v3080
        %v3749 = vpack.c.b16 %v3083, %v3081
        %v3750 = vpack.c.b16 %v3086, %v3084
        %v3751 = vpack.c.b16 %v3087, %v3085
        %v3752 = vpack.c.b16 %v3090, %v3088
        %v3753 = vpack.c.b16 %v3091, %v3089
        %v3754 = vpack.c.b16 %v3094, %v3092
        %v3755 = vpack.c.b16 %v3095, %v3093
        %v3756 = vpack.c.b16 %v3098, %v3096
        %v3757 = vpack.c.b16 %v3099, %v3097
        %v3758 = vpack.c.b16 %v3102, %v3100
        %v3759 = vpack.c.b16 %v3103, %v3101
        %v3760 = vpack.c.b16 %v3106, %v3104
        %v3761 = vpack.c.b16 %v3107, %v3105
        %v3762 = vpack.c.b16 %v3110, %v3108
        %v3763 = vpack.c.b16 %v3111, %v3109
        %v3764 = vpack.c.b16 %v3114, %v3112
        %v3765 = vpack.c.b16 %v3115, %v3113
        %v3766 = vpack.c.b16 %v3118, %v3116
        %v3767 = vpack.c.b16 %v3119, %v3117
        %v3768 = vpack.c.b16 %v3122, %v3120
        %v3769 = vpack.c.b16 %v3123, %v3121
        %v3770 = vpack.c.b16 %v3126, %v3124
        %v3771 = vpack.c.b16 %v3127, %v3125
        %v3772 = vpack.c.b16 %v3130, %v3128
        %v3773 = vpack.c.b16 %v3131, %v3129
        %v3774 = vpack.c.b16 %v3134, %v3132
        %v3775 = vpack.c.b16 %v3135, %v3133
        %v3776 = vpack.c.b16 %v3138, %v3136
        %v3777 = vpack.c.b16 %v3139, %v3137
        %v3778 = vpack.c.b16 %v3142, %v3140
        %v3779 = vpack.c.b16 %v3143, %v3141
        %v3780 = vpack.c.b16 %v3146, %v3144
        %v3781 = vpack.c.b16 %v3147, %v3145
        %v3782 = vpack.c.b16 %v3150, %v3148
        %v3783 = vpack.c.b16 %v3151, %v3149
        %v3784 = vpack.c.b16 %v3154, %v3152
        %v3785 = vpack.c.b16 %v3155, %v3153
        %v3786 = vpack.c.b16 %v3158, %v3156
        %v3787 = vpack.c.b16 %v3159, %v3157
        %v3788 = vpack.c.b16 %v3162, %v3160
        %v3789 = vpack.c.b16 %v3163, %v3161
        %v3790 = vpack.c.b16 %v3166, %v3164
        %v3791 = vpack.c.b16 %v3167, %v3165
        %v3792 = vpack.c.b16 %v3170, %v3168
        %v3793 = vpack.c.b16 %v3171, %v3169
        %v3794 = vpack.c.b16 %v3174, %v3172
        %v3795 = vpack.c.b16 %v3175, %v3173
        %v3796 = vpack.c.b16 %v3178, %v3176
        %v3797 = vpack.c.b16 %v3179, %v3177
        %v3798 = vpack.c.b16 %v3182, %v3180
        %v3799 = vpack.c.b16 %v3183, %v3181
        %v3800 = vpack.c.b16 %v3186, %v3184
        %v3801 = vpack.c.b16 %v3187, %v3185
        %v3802 = vpack.c.b16 %v3190, %v3188
        %v3803 = vpack.c.b16 %v3191, %v3189
        %v3804 = vpack.c.b16 %v3194, %v3192
        %v3805 = vpack.c.b16 %v3195, %v3193
        %v3806 = vpack.c.b16 %v3198, %v3196
        %v3807 = vpack.c.b16 %v3199, %v3197
        %v3808 = vpack.c.b16 %v3202, %v3200
        %v3809 = vpack.c.b16 %v3203, %v3201
        %v3810 = vpack.c.b16 %v3206, %v3204
        %v3811 = vpack.c.b16 %v3207, %v3205
        %v3812 = vpack.c.b16 %v3210, %v3208
        %v3813 = vpack.c.b16 %v3211, %v3209
        %v3814 = vpack.c.b16 %v3214, %v3212
        %v3815 = vpack.c.b16 %v3215, %v3213
        %v3816 = vpack.c.b16 %v3218, %v3216
        %v3817 = vpack.c.b16 %v3219, %v3217
        %v3818 = vpack.c.b16 %v3222, %v3220
        %v3819 = vpack.c.b16 %v3223, %v3221
        %v3820 = vpack.c.b16 %v3226, %v3224
        %v3821 = vpack.c.b16 %v3227, %v3225
        %v3822 = vpack.c.b16 %v3230, %v3228
        %v3823 = vpack.c.b16 %v3231, %v3229
        %v3824 = vpack.c.b16 %v3234, %v3232
        %v3825 = vpack.c.b16 %v3235, %v3233
        %v3826 = vpack.c.b16 %v3238, %v3236
        %v3827 = vpack.c.b16 %v3239, %v3237
        %v3828 = vpack.c.b16 %v3242, %v3240
        %v3829 = vpack.c.b16 %v3243, %v3241
        %v3830 = vpack.c.b16 %v3246, %v3244
        %v3831 = vpack.c.b16 %v3247, %v3245
        %v3832 = vpack.c.b16 %v3250, %v3248
        %v3833 = vpack.c.b16 %v3251, %v3249
        %v3834 = vpack.c.b16 %v3254, %v3252
        %v3835 = vpack.c.b16 %v3255, %v3253
        %v3836 = vpack.c.b16 %v3258, %v3256
        %v3837 = vpack.c.b16 %v3259, %v3257
        %v3838 = vpack.c.b16 %v3262, %v3260
        %v3839 = vpack.c.b16 %v3263, %v3261
        %v3840 = vpack.c.b16 %v3266, %v3264
        %v3841 = vpack.c.b16 %v3267, %v3265
        %v3842 = vpack.c.b16 %v3270, %v3268
        %v3843 = vpack.c.b16 %v3271, %v3269
        %v3844 = vpack.c.b16 %v3274, %v3272
        %v3845 = vpack.c.b16 %v3275, %v3273
        %v3846 = vpack.c.b16 %v3278, %v3276
        %v3847 = vpack.c.b16 %v3279, %v3277
        %v3848 = vpack.c.b16 %v3282, %v3280
        %v3849 = vpack.c.b16 %v3283, %v3281
        %v3850 = vpack.c.b16 %v3286, %v3284
        %v3851 = vpack.c.b16 %v3287, %v3285
        %v3852 = vpack.c.b16 %v3290, %v3288
        %v3853 = vpack.c.b16 %v3291, %v3289
        %v3854 = vpack.c.b16 %v3294, %v3292
        %v3855 = vpack.c.b16 %v3295, %v3293
        %v3856 = vpack.c.b16 %v3298, %v3296
        %v3857 = vpack.c.b16 %v3299, %v3297
        %v3858 = vpack.c.b16 %v3302, %v3300
        %v3859 = vpack.c.b16 %v3303, %v3301
        %v3860 = vpack.c.b16 %v3306, %v3304
        %v3861 = vpack.c.b16 %v3307, %v3305
        %v3862 = vpack.c.b16 %v3310, %v3308
        %v3863 = vpack.c.b16 %v3311, %v3309
        %v3864 = vpack.c.b16 %v3314, %v3312
        %v3865 = vpack.c.b16 %v3315, %v3313
        %v3866 = vpack.c.b16 %v3318, %v3316
        %v3867 = vpack.c.b16 %v3319, %v3317
        %v3868 = vpack.c.b16 %v3322, %v3320
        %v3869 = vpack.c.b16 %v3323, %v3321
        %v3870 = vpack.c.b16 %v3326, %v3324
        %v3871 = vpack.c.b16 %v3327, %v3325
        %v3872 = vpack.c.b16 %v3330, %v3328
        %v3873 = vpack.c.b16 %v3331, %v3329
        %v3874 = vpack.c.b16 %v3334, %v3332
        %v3875 = vpack.c.b16 %v3335, %v3333
        %v3876 = vpack.c.b16 %v3338, %v3336
        %v3877 = vpack.c.b16 %v3339, %v3337
        %v3878 = vpack.c.b16 %v3342, %v3340
        %v3879 = vpack.c.b16 %v3343, %v3341
        %v3880 = vpack.c.b16 %v3346, %v3344
        %v3881 = vpack.c.b16 %v3347, %v3345
        %v3882 = vpack.c.b16 %v3350, %v3348
        %v3883 = vpack.c.b16 %v3351, %v3349
        %v3884 = vpack.c.b16 %v3354, %v3352
        %v3885 = vpack.c.b16 %v3355, %v3353
        %v3886 = vpack.c.b16 %v3358, %v3356
        %v3887 = vpack.c.b16 %v3359, %v3357
        %v3888 = vpack.c.b16 %v3362, %v3360
        %v3889 = vpack.c.b16 %v3363, %v3361
        %v3890 = vpack.c.b16 %v3366, %v3364
        %v3891 = vpack.c.b16 %v3367, %v3365
        %v3892 = vpack.c.b16 %v3370, %v3368
        %v3893 = vpack.c.b16 %v3371, %v3369
        %v3894 = vpack.c.b16 %v3374, %v3372
        %v3895 = vpack.c.b16 %v3375, %v3373
        %v3896 = vpack.c.b16 %v3378, %v3376
        %v3897 = vpack.c.b16 %v3379, %v3377
        %v3898 = vpack.c.b16 %v3382, %v3380
        %v3899 = vpack.c.b16 %v3383, %v3381
        %v3900 = vpack.c.b16 %v3386, %v3384
        %v3901 = vpack.c.b16 %v3387, %v3385
        %v3902 = vpack.c.b16 %v3390, %v3388
        %v3903 = vpack.c.b16 %v3391, %v3389
        %v3904 = vpack.c.b16 %v3394, %v3392
        %v3905 = vpack.c.b16 %v3395, %v3393
        %v3906 = vpack.c.b16 %v3398, %v3396
        %v3907 = vpack.c.b16 %v3399, %v3397
        %v3908 = vpack.c.b16 %v3402, %v3400
        %v3909 = vpack.c.b16 %v3403, %v3401
        %v3910 = vpack.c.b16 %v3406, %v3404
        %v3911 = vpack.c.b16 %v3407, %v3405
        %v3912 = vpack.c.b16 %v3410, %v3408
        %v3913 = vpack.c.b16 %v3411, %v3409
        %v3914 = vpack.c.b16 %v3414, %v3412
        %v3915 = vpack.c.b16 %v3415, %v3413
        %v3916 = vpack.c.b16 %v3418, %v3416
        %v3917 = vpack.c.b16 %v3419, %v3417
        %v3918 = vpack.c.b16 %v3422, %v3420
        %v3919 = vpack.c.b16 %v3423, %v3421
        %v3920 = vpack.c.b16 %v3426, %v3424
        %v3921 = vpack.c.b16 %v3427, %v3425
        %v3922 = vpack.c.b16 %v3430, %v3428
        %v3923 = vpack.c.b16 %v3431, %v3429
        %v3924 = vpack.c.b16 %v3434, %v3432
        %v3925 = vpack.c.b16 %v3435, %v3433
        %v3926 = vpack.c.b16 %v3438, %v3436
        %v3927 = vpack.c.b16 %v3439, %v3437
        %v3928 = vpack.c.b16 %v3442, %v3440
        %v3929 = vpack.c.b16 %v3443, %v3441
        %v3930 = vpack.c.b16 %v3446, %v3444
        %v3931 = vpack.c.b16 %v3447, %v3445
        %v3932 = vpack.c.b16 %v3450, %v3448
        %v3933 = vpack.c.b16 %v3451, %v3449
        %v3934 = vpack.c.b16 %v3454, %v3452
        %v3935 = vpack.c.b16 %v3455, %v3453
        %v3936 = vpack.c.b16 %v3458, %v3456
        %v3937 = vpack.c.b16 %v3459, %v3457
        %v3938 = vpack.c.b16 %v3462, %v3460
        %v3939 = vpack.c.b16 %v3463, %v3461
        %v3940 = vpack.c.b16 %v3466, %v3464
        %v3941 = vpack.c.b16 %v3467, %v3465
        %v3942 = vpack.c.b16 %v3470, %v3468
        %v3943 = vpack.c.b16 %v3471, %v3469
        %v3944 = vpack.c.b16 %v3474, %v3472
        %v3945 = vpack.c.b16 %v3475, %v3473
        %v3946 = vpack.c.b16 %v3478, %v3476
        %v3947 = vpack.c.b16 %v3479, %v3477
        %v3948 = vpack.c.b16 %v3482, %v3480
        %v3949 = vpack.c.b16 %v3483, %v3481
        %v3950 = vpack.c.b16 %v3486, %v3484
        %v3951 = vpack.c.b16 %v3487, %v3485
        %v3952 = vpack.c.b16 %v3490, %v3488
        %v3953 = vpack.c.b16 %v3491, %v3489
        %v3954 = vpack.c.b16 %v3494, %v3492
        %v3955 = vpack.c.b16 %v3495, %v3493
        %v3956 = vpack.c.b16 %v3498, %v3496
        %v3957 = vpack.c.b16 %v3499, %v3497
        %v3958 = vpack.c.b16 %v3502, %v3500
        %v3959 = vpack.c.b16 %v3503, %v3501
        %v3960 = vpack.c.b16 %v3506, %v3504
        %v3961 = vpack.c.b16 %v3507, %v3505
        %v3962 = vpack.c.b16 %v3510, %v3508
        %v3963 = vpack.c.b16 %v3511, %v3509
        %v3964 = vpack.c.b16 %v3514, %v3512
        %v3965 = vpack.c.b16 %v3515, %v3513
        %v3966 = vpack.c.b16 %v3518, %v3516
        %v3967 = vpack.c.b16 %v3519, %v3517
        %v3968 = vpack.c.b16 %v3522, %v3520
        %v3969 = vpack.c.b16 %v3523, %v3521
        %v3970 = vpack.c.b16 %v3526, %v3524
        %v3971 = vpack.c.b16 %v3527, %v3525
        %v3972 = vpack.c.b16 %v3530, %v3528
        %v3973 = vpack.c.b16 %v3531, %v3529
        %v3974 = vpack.c.b16 %v3534, %v3532
        %v3975 = vpack.c.b16 %v3535, %v3533
        %v3976 = vpack.c.b16 %v3538, %v3536
        %v3977 = vpack.c.b16 %v3539, %v3537
        %v3978 = vpack.c.b16 %v3542, %v3540
        %v3979 = vpack.c.b16 %v3543, %v3541
        %v3980 = vpack.c.b16 %v3546, %v3544
        %v3981 = vpack.c.b16 %v3547, %v3545
        %v3982 = vpack.c.b16 %v3550, %v3548
        %v3983 = vpack.c.b16 %v3551, %v3549
        %v3984 = vpack.c.b16 %v3554, %v3552
        %v3985 = vpack.c.b16 %v3555, %v3553
        %v3986 = vpack.c.b16 %v3558, %v3556
        %v3987 = vpack.c.b16 %v3559, %v3557
        %v3988 = vpack.c.b16 %v3562, %v3560
        %v3989 = vpack.c.b16 %v3563, %v3561
        %v3990 = vpack.c.b16 %v3566, %v3564
        %v3991 = vpack.c.b16 %v3567, %v3565
        %v3992 = vpack.c.b16 %v3570, %v3568
        %v3993 = vpack.c.b16 %v3571, %v3569
        %v3994 = vpack.c.b16 %v3574, %v3572
        %v3995 = vpack.c.b16 %v3575, %v3573
        %v3996 = vpack.c.b16 %v3578, %v3576
        %v3997 = vpack.c.b16 %v3579, %v3577
        %v3998 = vpack.c.b16 %v3582, %v3580
        %v3999 = vpack.c.b16 %v3583, %v3581
        %v4000 = vpack.c.b16 %v3586, %v3584
        %v4001 = vpack.c.b16 %v3587, %v3585
        %v4002 = vpack.c.b16 %v3590, %v3588
        %v4003 = vpack.c.b16 %v3591, %v3589
        %v4004 = vpack.c.b16 %v3594, %v3592
        %v4005 = vpack.c.b16 %v3595, %v3593
        %v4006 = vpack.c.b16 %v3598, %v3596
        %v4007 = vpack.c.b16 %v3599, %v3597
        %v4008 = vpack.c.b16 %v3602, %v3600
        %v4009 = vpack.c.b16 %v3603, %v3601
        %v4010 = vpack.c.b16 %v3606, %v3604
        %v4011 = vpack.c.b16 %v3607, %v3605
        %v4012 = vpack.c.b16 %v3610, %v3608
        %v4013 = vpack.c.b16 %v3611, %v3609
        %v4014 = vpack.c.b16 %v3614, %v3612
        %v4015 = vpack.c.b16 %v3615, %v3613
        %v4016 = vpack.c.b16 %v3618, %v3616
        %v4017 = vpack.c.b16 %v3619, %v3617
        %v4018 = vpack.c.b16 %v3622, %v3620
        %v4019 = vpack.c.b16 %v3623, %v3621
        %v4020 = vpack.c.b16 %v3626, %v3624
        %v4021 = vpack.c.b16 %v3627, %v3625
        %v4022 = vpack.c.b16 %v3630, %v3628
        %v4023 = vpack.c.b16 %v3631, %v3629
        %vm4416 = vcmask 523264
        %v4418 = vsel %vm4416, %v2431, 0
        %4420 = vmatprep.subr.bf16.mxu0 %v3633
        %4421 = vmatpush1.bf16.msra.mxu0 %v3632
        %4422 = vmatprep.subr.bf16.mxu0 %v3635
        %4423 = vmatpush1.bf16.msra.mxu0 %v3634
        %4424 = vmatprep.subr.bf16.mxu0 %v3637
        %4425 = vmatpush1.bf16.msra.mxu0 %v3636
        %4426 = vmatprep.subr.bf16.mxu0 %v3639
        %4427 = vmatpush1.bf16.msra.mxu0 %v3638
        %4428 = vmatprep.subr.bf16.mxu0 %v3641
        %4429 = vmatpush1.bf16.msra.mxu0 %v3640
        %4430 = vmatprep.subr.bf16.mxu0 %v3643
        %4431 = vmatpush1.bf16.msra.mxu0 %v3642
        %4432 = vmatprep.subr.bf16.mxu0 %v3645
        %4433 = vmatpush1.bf16.msra.mxu0 %v3644
        %4434 = vmatprep.subr.bf16.mxu0 %v3647
        %4435 = vmatpush1.bf16.msra.mxu0 %v3646
        %4436 = vmatprep.subr.bf16.mxu0 %v3649
        %4437 = vmatpush1.bf16.msra.mxu0 %v3648
        %4438 = vmatprep.subr.bf16.mxu0 %v3651
        %4439 = vmatpush1.bf16.msra.mxu0 %v3650
        %4440 = vmatprep.subr.bf16.mxu0 %v3653
        %4441 = vmatpush1.bf16.msra.mxu0 %v3652
        %4442 = vmatprep.subr.bf16.mxu0 %v3655
        %4443 = vmatpush1.bf16.msra.mxu0 %v3654
        %4444 = vmatprep.subr.bf16.mxu0 %v3657
        %4445 = vmatpush1.bf16.msra.mxu0 %v3656
        %4446 = vmatprep.subr.bf16.mxu0 %v3659
        %4447 = vmatpush1.bf16.msra.mxu0 %v3658
        %4448 = vmatprep.subr.bf16.mxu0 %v3661
        %4449 = vmatpush1.bf16.msra.mxu0 %v3660
        %4450 = vmatprep.subr.bf16.mxu0 %v3663
        %4451 = vmatpush1.bf16.msra.mxu0 %v3662
        %4452 = vmatprep.mubr.bf16.mxu0 %v2308
        %4453 = vmatmul.mubr.bf16.gmra.mrb[0].mxu0 %v2294
        %v4454 = vpop.f32.mrb[0].mxu0
        %v4455 = vadd.f32 %v2260, %v4454
        %v4456 = vpop.f32.mrb[0].mxu0
        %v4457 = vadd.f32 %v2264, %v4456
        %v4458 = vpop.f32.mrb[0].mxu0
        %v4459 = vpop.f32.mrb[0].mxu0
        %4460 = vdwg.mxu0
        %4461 = vmatprep.subr.bf16.mxu0 %v3665
        %4462 = vmatpush1.bf16.msra.mxu0 %v3664
        %4463 = vmatprep.subr.bf16.mxu0 %v3667
        %4464 = vmatpush1.bf16.msra.mxu0 %v3666
        %4465 = vmatprep.subr.bf16.mxu0 %v3669
        %4466 = vmatpush1.bf16.msra.mxu0 %v3668
        %4467 = vmatprep.subr.bf16.mxu0 %v3671
        %4468 = vmatpush1.bf16.msra.mxu0 %v3670
        %4469 = vmatprep.subr.bf16.mxu0 %v3673
        %4470 = vmatpush1.bf16.msra.mxu0 %v3672
        %4471 = vmatprep.subr.bf16.mxu0 %v3675
        %4472 = vmatpush1.bf16.msra.mxu0 %v3674
        %4473 = vmatprep.subr.bf16.mxu0 %v3677
        %4474 = vmatpush1.bf16.msra.mxu0 %v3676
        %4475 = vmatprep.subr.bf16.mxu0 %v3679
        %4476 = vmatpush1.bf16.msra.mxu0 %v3678
        %4477 = vmatprep.subr.bf16.mxu0 %v3681
        %4478 = vmatpush1.bf16.msra.mxu0 %v3680
        %4479 = vmatprep.subr.bf16.mxu0 %v3683
        %4480 = vmatpush1.bf16.msra.mxu0 %v3682
        %4481 = vmatprep.subr.bf16.mxu0 %v3685
        %4482 = vmatpush1.bf16.msra.mxu0 %v3684
        %4483 = vmatprep.subr.bf16.mxu0 %v3687
        %4484 = vmatpush1.bf16.msra.mxu0 %v3686
        %4485 = vmatprep.subr.bf16.mxu0 %v3689
        %4486 = vmatpush1.bf16.msra.mxu0 %v3688
        %4487 = vmatprep.subr.bf16.mxu0 %v3691
        %4488 = vmatpush1.bf16.msra.mxu0 %v3690
        %4489 = vmatprep.subr.bf16.mxu0 %v3693
        %4490 = vmatpush1.bf16.msra.mxu0 %v3692
        %4491 = vmatprep.subr.bf16.mxu0 %v3695
        %4492 = vmatpush1.bf16.msra.mxu0 %v3694
        %4493 = vmatprep.mubr.bf16.mxu0 %v2318
        %4494 = vmatmul.mubr.bf16.gmra.mrb[0].mxu0 %v2316
        %v4495 = vpop.f32.mrb[0].mxu0
        %v4496 = vadd.f32 %v4455, %v4495
        %v4497 = vpop.f32.mrb[0].mxu0
        %v4498 = vadd.f32 %v4457, %v4497
        %v4499 = vpop.f32.mrb[0].mxu0
        %v4500 = vpop.f32.mrb[0].mxu0
        %4501 = vdwg.mxu0
        %4502 = vmatprep.subr.bf16.mxu0 %v3697
        %4503 = vmatpush1.bf16.msra.mxu0 %v3696
        %4504 = vmatprep.subr.bf16.mxu0 %v3699
        %4505 = vmatpush1.bf16.msra.mxu0 %v3698
        %4506 = vmatprep.subr.bf16.mxu0 %v3701
        %4507 = vmatpush1.bf16.msra.mxu0 %v3700
        %4508 = vmatprep.subr.bf16.mxu0 %v3703
        %4509 = vmatpush1.bf16.msra.mxu0 %v3702
        %4510 = vmatprep.subr.bf16.mxu0 %v3705
        %4511 = vmatpush1.bf16.msra.mxu0 %v3704
        %4512 = vmatprep.subr.bf16.mxu0 %v3707
        %4513 = vmatpush1.bf16.msra.mxu0 %v3706
        %4514 = vmatprep.subr.bf16.mxu0 %v3709
        %4515 = vmatpush1.bf16.msra.mxu0 %v3708
        %4516 = vmatprep.subr.bf16.mxu0 %v3711
        %4517 = vmatpush1.bf16.msra.mxu0 %v3710
        %4518 = vmatprep.subr.bf16.mxu0 %v3713
        %4519 = vmatpush1.bf16.msra.mxu0 %v3712
        %4520 = vmatprep.subr.bf16.mxu0 %v3715
        %4521 = vmatpush1.bf16.msra.mxu0 %v3714
        %4522 = vmatprep.subr.bf16.mxu0 %v3717
        %4523 = vmatpush1.bf16.msra.mxu0 %v3716
        %4524 = vmatprep.subr.bf16.mxu0 %v3719
        %4525 = vmatpush1.bf16.msra.mxu0 %v3718
        %4526 = vmatprep.subr.bf16.mxu0 %v3721
        %4527 = vmatpush1.bf16.msra.mxu0 %v3720
        %4528 = vmatprep.subr.bf16.mxu0 %v3723
        %4529 = vmatpush1.bf16.msra.mxu0 %v3722
        %4530 = vmatprep.subr.bf16.mxu0 %v3725
        %4531 = vmatpush1.bf16.msra.mxu0 %v3724
        %4532 = vmatprep.subr.bf16.mxu0 %v3727
        %4533 = vmatpush1.bf16.msra.mxu0 %v3726
        %4534 = vmatprep.mubr.bf16.mxu0 %v2315
        %4535 = vmatmul.mubr.bf16.gmra.mrb[0].mxu0 %v2301
        %v4536 = vpop.f32.mrb[0].mxu0
        %v4537 = vadd.f32 %v4496, %v4536
        %v4538 = vpop.f32.mrb[0].mxu0
        %v4539 = vadd.f32 %v4498, %v4538
        %v4540 = vpop.f32.mrb[0].mxu0
        %v4541 = vpop.f32.mrb[0].mxu0
        %4542 = vdwg.mxu0
        %4543 = vmatprep.subr.bf16.mxu0 %v3729
        %4544 = vmatpush1.bf16.msra.mxu0 %v3728
        %4545 = vmatprep.subr.bf16.mxu0 %v3731
        %4546 = vmatpush1.bf16.msra.mxu0 %v3730
        %4547 = vmatprep.subr.bf16.mxu0 %v3733
        %4548 = vmatpush1.bf16.msra.mxu0 %v3732
        %4549 = vmatprep.subr.bf16.mxu0 %v3735
        %4550 = vmatpush1.bf16.msra.mxu0 %v3734
        %4551 = vmatprep.subr.bf16.mxu0 %v3737
        %4552 = vmatpush1.bf16.msra.mxu0 %v3736
        %4553 = vmatprep.subr.bf16.mxu0 %v3739
        %4554 = vmatpush1.bf16.msra.mxu0 %v3738
        %4555 = vmatprep.subr.bf16.mxu0 %v3741
        %4556 = vmatpush1.bf16.msra.mxu0 %v3740
        %4557 = vmatprep.subr.bf16.mxu0 %v3743
        %4558 = vmatpush1.bf16.msra.mxu0 %v3742
        %4559 = vmatprep.subr.bf16.mxu0 %v3745
        %4560 = vmatpush1.bf16.msra.mxu0 %v3744
        %4561 = vmatprep.subr.bf16.mxu0 %v3747
        %4562 = vmatpush1.bf16.msra.mxu0 %v3746
        %4563 = vmatprep.subr.bf16.mxu0 %v3749
        %4564 = vmatpush1.bf16.msra.mxu0 %v3748
        %4565 = vmatprep.subr.bf16.mxu0 %v3751
        %4566 = vmatpush1.bf16.msra.mxu0 %v3750
        %4567 = vmatprep.subr.bf16.mxu0 %v3753
        %4568 = vmatpush1.bf16.msra.mxu0 %v3752
        %4569 = vmatprep.subr.bf16.mxu0 %v3755
        %4570 = vmatpush1.bf16.msra.mxu0 %v3754
        %4571 = vmatprep.subr.bf16.mxu0 %v3757
        %4572 = vmatpush1.bf16.msra.mxu0 %v3756
        %4573 = vmatprep.subr.bf16.mxu0 %v3759
        %4574 = vmatpush1.bf16.msra.mxu0 %v3758
        %4575 = vmatprep.mubr.bf16.mxu0 %v2319
        %4576 = vmatmul.mubr.bf16.gmra.mrb[0].mxu0 %v2317
        %v4577 = vpop.f32.mrb[0].mxu0
        %v4578 = vadd.f32 %v4537, %v4577
        %v4579 = vpop.f32.mrb[0].mxu0
        %v4580 = vadd.f32 %v4539, %v4579
        %v4581 = vpop.f32.mrb[0].mxu0
        %v4582 = vpop.f32.mrb[0].mxu0
        %4583 = vdwg.mxu0
        %4584 = vmatprep.subr.bf16.mxu0 %v3761
        %4585 = vmatpush1.bf16.msra.mxu0 %v3760
        %4586 = vmatprep.subr.bf16.mxu0 %v3763
        %4587 = vmatpush1.bf16.msra.mxu0 %v3762
        %4588 = vmatprep.subr.bf16.mxu0 %v3765
        %4589 = vmatpush1.bf16.msra.mxu0 %v3764
        %4590 = vmatprep.subr.bf16.mxu0 %v3767
        %4591 = vmatpush1.bf16.msra.mxu0 %v3766
        %4592 = vmatprep.subr.bf16.mxu0 %v3769
        %4593 = vmatpush1.bf16.msra.mxu0 %v3768
        %4594 = vmatprep.subr.bf16.mxu0 %v3771
        %4595 = vmatpush1.bf16.msra.mxu0 %v3770
        %4596 = vmatprep.subr.bf16.mxu0 %v3773
        %4597 = vmatpush1.bf16.msra.mxu0 %v3772
        %4598 = vmatprep.subr.bf16.mxu0 %v3775
        %4599 = vmatpush1.bf16.msra.mxu0 %v3774
        %4600 = vmatprep.subr.bf16.mxu0 %v3777
        %4601 = vmatpush1.bf16.msra.mxu0 %v3776
        %4602 = vmatprep.subr.bf16.mxu0 %v3779
        %4603 = vmatpush1.bf16.msra.mxu0 %v3778
        %4604 = vmatprep.subr.bf16.mxu0 %v3781
        %4605 = vmatpush1.bf16.msra.mxu0 %v3780
        %4606 = vmatprep.subr.bf16.mxu0 %v3783
        %4607 = vmatpush1.bf16.msra.mxu0 %v3782
        %4608 = vmatprep.subr.bf16.mxu0 %v3785
        %4609 = vmatpush1.bf16.msra.mxu0 %v3784
        %4610 = vmatprep.subr.bf16.mxu0 %v3787
        %4611 = vmatpush1.bf16.msra.mxu0 %v3786
        %4612 = vmatprep.subr.bf16.mxu0 %v3789
        %4613 = vmatpush1.bf16.msra.mxu0 %v3788
        %4614 = vmatprep.subr.bf16.mxu0 %v3791
        %4615 = vmatpush1.bf16.msra.mxu0 %v3790
        %4616 = vmatprep.mubr.bf16.mxu0 %v2357
        %4617 = vmatmul.mubr.bf16.gmra.mrb[0].mxu0 %v2343
        %v4618 = vpop.f32.mrb[0].mxu0
        %v4619 = vadd.f32 %v4578, %v4618
        %v4620 = vpop.f32.mrb[0].mxu0
        %v4621 = vadd.f32 %v4580, %v4620
        %v4622 = vpop.f32.mrb[0].mxu0
        %v4623 = vpop.f32.mrb[0].mxu0
        %4624 = vdwg.mxu0
        %4625 = vmatprep.subr.bf16.mxu0 %v3793
        %4626 = vmatpush1.bf16.msra.mxu0 %v3792
        %4627 = vmatprep.subr.bf16.mxu0 %v3795
        %4628 = vmatpush1.bf16.msra.mxu0 %v3794
        %4629 = vmatprep.subr.bf16.mxu0 %v3797
        %4630 = vmatpush1.bf16.msra.mxu0 %v3796
        %4631 = vmatprep.subr.bf16.mxu0 %v3799
        %4632 = vmatpush1.bf16.msra.mxu0 %v3798
        %4633 = vmatprep.subr.bf16.mxu0 %v3801
        %4634 = vmatpush1.bf16.msra.mxu0 %v3800
        %4635 = vmatprep.subr.bf16.mxu0 %v3803
        %4636 = vmatpush1.bf16.msra.mxu0 %v3802
        %4637 = vmatprep.subr.bf16.mxu0 %v3805
        %4638 = vmatpush1.bf16.msra.mxu0 %v3804
        %4639 = vmatprep.subr.bf16.mxu0 %v3807
        %4640 = vmatpush1.bf16.msra.mxu0 %v3806
        %4641 = vmatprep.subr.bf16.mxu0 %v3809
        %4642 = vmatpush1.bf16.msra.mxu0 %v3808
        %4643 = vmatprep.subr.bf16.mxu0 %v3811
        %4644 = vmatpush1.bf16.msra.mxu0 %v3810
        %4645 = vmatprep.subr.bf16.mxu0 %v3813
        %4646 = vmatpush1.bf16.msra.mxu0 %v3812
        %4647 = vmatprep.subr.bf16.mxu0 %v3815
        %4648 = vmatpush1.bf16.msra.mxu0 %v3814
        %4649 = vmatprep.subr.bf16.mxu0 %v3817
        %4650 = vmatpush1.bf16.msra.mxu0 %v3816
        %4651 = vmatprep.subr.bf16.mxu0 %v3819
        %4652 = vmatpush1.bf16.msra.mxu0 %v3818
        %4653 = vmatprep.subr.bf16.mxu0 %v3821
        %4654 = vmatpush1.bf16.msra.mxu0 %v3820
        %4655 = vmatprep.subr.bf16.mxu0 %v3823
        %4656 = vmatpush1.bf16.msra.mxu0 %v3822
        %4657 = vmatprep.mubr.bf16.mxu0 %v2367
        %4658 = vmatmul.mubr.bf16.gmra.mrb[0].mxu0 %v2365
        %v4659 = vpop.f32.mrb[0].mxu0
        %v4660 = vadd.f32 %v4619, %v4659
        %v4661 = vpop.f32.mrb[0].mxu0
        %v4662 = vadd.f32 %v4621, %v4661
        %v4663 = vpop.f32.mrb[0].mxu0
        %v4664 = vpop.f32.mrb[0].mxu0
        %4665 = vdwg.mxu0
        %4666 = vmatprep.subr.bf16.mxu0 %v3825
        %4667 = vmatpush1.bf16.msra.mxu0 %v3824
        %4668 = vmatprep.subr.bf16.mxu0 %v3827
        %4669 = vmatpush1.bf16.msra.mxu0 %v3826
        %4670 = vmatprep.subr.bf16.mxu0 %v3829
        %4671 = vmatpush1.bf16.msra.mxu0 %v3828
        %4672 = vmatprep.subr.bf16.mxu0 %v3831
        %4673 = vmatpush1.bf16.msra.mxu0 %v3830
        %4674 = vmatprep.subr.bf16.mxu0 %v3833
        %4675 = vmatpush1.bf16.msra.mxu0 %v3832
        %4676 = vmatprep.subr.bf16.mxu0 %v3835
        %4677 = vmatpush1.bf16.msra.mxu0 %v3834
        %4678 = vmatprep.subr.bf16.mxu0 %v3837
        %4679 = vmatpush1.bf16.msra.mxu0 %v3836
        %4680 = vmatprep.subr.bf16.mxu0 %v3839
        %4681 = vmatpush1.bf16.msra.mxu0 %v3838
        %4682 = vmatprep.subr.bf16.mxu0 %v3841
        %4683 = vmatpush1.bf16.msra.mxu0 %v3840
        %4684 = vmatprep.subr.bf16.mxu0 %v3843
        %4685 = vmatpush1.bf16.msra.mxu0 %v3842
        %4686 = vmatprep.subr.bf16.mxu0 %v3845
        %4687 = vmatpush1.bf16.msra.mxu0 %v3844
        %4688 = vmatprep.subr.bf16.mxu0 %v3847
        %4689 = vmatpush1.bf16.msra.mxu0 %v3846
        %4690 = vmatprep.subr.bf16.mxu0 %v3849
        %4691 = vmatpush1.bf16.msra.mxu0 %v3848
        %4692 = vmatprep.subr.bf16.mxu0 %v3851
        %4693 = vmatpush1.bf16.msra.mxu0 %v3850
        %4694 = vmatprep.subr.bf16.mxu0 %v3853
        %4695 = vmatpush1.bf16.msra.mxu0 %v3852
        %4696 = vmatprep.subr.bf16.mxu0 %v3855
        %4697 = vmatpush1.bf16.msra.mxu0 %v3854
        %4698 = vmatprep.mubr.bf16.mxu0 %v2364
        %4699 = vmatmul.mubr.bf16.gmra.mrb[0].mxu0 %v2350
        %v4700 = vpop.f32.mrb[0].mxu0
        %v4701 = vadd.f32 %v4660, %v4700
        %v4702 = vpop.f32.mrb[0].mxu0
        %v4703 = vadd.f32 %v4662, %v4702
        %v4704 = vpop.f32.mrb[0].mxu0
        %v4705 = vpop.f32.mrb[0].mxu0
        %4706 = vdwg.mxu0
        %4707 = vmatprep.subr.bf16.mxu0 %v3857
        %4708 = vmatpush1.bf16.msra.mxu0 %v3856
        %4709 = vmatprep.subr.bf16.mxu0 %v3859
        %4710 = vmatpush1.bf16.msra.mxu0 %v3858
        %4711 = vmatprep.subr.bf16.mxu0 %v3861
        %4712 = vmatpush1.bf16.msra.mxu0 %v3860
        %4713 = vmatprep.subr.bf16.mxu0 %v3863
        %4714 = vmatpush1.bf16.msra.mxu0 %v3862
        %4715 = vmatprep.subr.bf16.mxu0 %v3865
        %4716 = vmatpush1.bf16.msra.mxu0 %v3864
        %4717 = vmatprep.subr.bf16.mxu0 %v3867
        %4718 = vmatpush1.bf16.msra.mxu0 %v3866
        %4719 = vmatprep.subr.bf16.mxu0 %v3869
        %4720 = vmatpush1.bf16.msra.mxu0 %v3868
        %4721 = vmatprep.subr.bf16.mxu0 %v3871
        %4722 = vmatpush1.bf16.msra.mxu0 %v3870
        %4723 = vmatprep.subr.bf16.mxu0 %v3873
        %4724 = vmatpush1.bf16.msra.mxu0 %v3872
        %4725 = vmatprep.subr.bf16.mxu0 %v3875
        %4726 = vmatpush1.bf16.msra.mxu0 %v3874
        %4727 = vmatprep.subr.bf16.mxu0 %v3877
        %4728 = vmatpush1.bf16.msra.mxu0 %v3876
        %4729 = vmatprep.subr.bf16.mxu0 %v3879
        %4730 = vmatpush1.bf16.msra.mxu0 %v3878
        %4731 = vmatprep.subr.bf16.mxu0 %v3881
        %4732 = vmatpush1.bf16.msra.mxu0 %v3880
        %4733 = vmatprep.subr.bf16.mxu0 %v3883
        %4734 = vmatpush1.bf16.msra.mxu0 %v3882
        %4735 = vmatprep.subr.bf16.mxu0 %v3885
        %4736 = vmatpush1.bf16.msra.mxu0 %v3884
        %4737 = vmatprep.subr.bf16.mxu0 %v3887
        %4738 = vmatpush1.bf16.msra.mxu0 %v3886
        %4739 = vmatprep.mubr.bf16.mxu0 %v2368
        %4740 = vmatmul.mubr.bf16.gmra.mrb[0].mxu0 %v2366
        %v4741 = vpop.f32.mrb[0].mxu0
        %v4742 = vadd.f32 %v4701, %v4741
        %v4743 = vpop.f32.mrb[0].mxu0
        %v4744 = vadd.f32 %v4703, %v4743
        %v4745 = vpop.f32.mrb[0].mxu0
        %v4746 = vpop.f32.mrb[0].mxu0
        %4747 = vdwg.mxu0
        %4748 = vmatprep.subr.bf16.mxu0 %v3889
        %4749 = vmatpush1.bf16.msra.mxu0 %v3888
        %4750 = vmatprep.subr.bf16.mxu0 %v3891
        %4751 = vmatpush1.bf16.msra.mxu0 %v3890
        %4752 = vmatprep.subr.bf16.mxu0 %v3893
        %4753 = vmatpush1.bf16.msra.mxu0 %v3892
        %4754 = vmatprep.subr.bf16.mxu0 %v3895
        %4755 = vmatpush1.bf16.msra.mxu0 %v3894
        %4756 = vmatprep.subr.bf16.mxu0 %v3897
        %4757 = vmatpush1.bf16.msra.mxu0 %v3896
        %4758 = vmatprep.subr.bf16.mxu0 %v3899
        %4759 = vmatpush1.bf16.msra.mxu0 %v3898
        %4760 = vmatprep.subr.bf16.mxu0 %v3901
        %4761 = vmatpush1.bf16.msra.mxu0 %v3900
        %4762 = vmatprep.subr.bf16.mxu0 %v3903
        %4763 = vmatpush1.bf16.msra.mxu0 %v3902
        %4764 = vmatprep.subr.bf16.mxu0 %v3905
        %4765 = vmatpush1.bf16.msra.mxu0 %v3904
        %4766 = vmatprep.subr.bf16.mxu0 %v3907
        %4767 = vmatpush1.bf16.msra.mxu0 %v3906
        %4768 = vmatprep.subr.bf16.mxu0 %v3909
        %4769 = vmatpush1.bf16.msra.mxu0 %v3908
        %4770 = vmatprep.subr.bf16.mxu0 %v3911
        %4771 = vmatpush1.bf16.msra.mxu0 %v3910
        %4772 = vmatprep.subr.bf16.mxu0 %v3913
        %4773 = vmatpush1.bf16.msra.mxu0 %v3912
        %4774 = vmatprep.subr.bf16.mxu0 %v3915
        %4775 = vmatpush1.bf16.msra.mxu0 %v3914
        %4776 = vmatprep.subr.bf16.mxu0 %v3917
        %4777 = vmatpush1.bf16.msra.mxu0 %v3916
        %4778 = vmatprep.subr.bf16.mxu0 %v3919
        %4779 = vmatpush1.bf16.msra.mxu0 %v3918
        %4780 = vmatprep.mubr.bf16.mxu0 %v2406
        %4781 = vmatmul.mubr.bf16.gmra.mrb[0].mxu0 %v2392
        %v4782 = vpop.f32.mrb[0].mxu0
        %v4783 = vadd.f32 %v4742, %v4782
        %v4784 = vpop.f32.mrb[0].mxu0
        %v4785 = vadd.f32 %v4744, %v4784
        %v4786 = vpop.f32.mrb[0].mxu0
        %v4787 = vpop.f32.mrb[0].mxu0
        %4788 = vdwg.mxu0
        %4789 = vmatprep.subr.bf16.mxu0 %v3921
        %4790 = vmatpush1.bf16.msra.mxu0 %v3920
        %4791 = vmatprep.subr.bf16.mxu0 %v3923
        %4792 = vmatpush1.bf16.msra.mxu0 %v3922
        %4793 = vmatprep.subr.bf16.mxu0 %v3925
        %4794 = vmatpush1.bf16.msra.mxu0 %v3924
        %4795 = vmatprep.subr.bf16.mxu0 %v3927
        %4796 = vmatpush1.bf16.msra.mxu0 %v3926
        %4797 = vmatprep.subr.bf16.mxu0 %v3929
        %4798 = vmatpush1.bf16.msra.mxu0 %v3928
        %4799 = vmatprep.subr.bf16.mxu0 %v3931
        %4800 = vmatpush1.bf16.msra.mxu0 %v3930
        %4801 = vmatprep.subr.bf16.mxu0 %v3933
        %4802 = vmatpush1.bf16.msra.mxu0 %v3932
        %4803 = vmatprep.subr.bf16.mxu0 %v3935
        %4804 = vmatpush1.bf16.msra.mxu0 %v3934
        %4805 = vmatprep.subr.bf16.mxu0 %v3937
        %4806 = vmatpush1.bf16.msra.mxu0 %v3936
        %4807 = vmatprep.subr.bf16.mxu0 %v3939
        %4808 = vmatpush1.bf16.msra.mxu0 %v3938
        %4809 = vmatprep.subr.bf16.mxu0 %v3941
        %4810 = vmatpush1.bf16.msra.mxu0 %v3940
        %4811 = vmatprep.subr.bf16.mxu0 %v3943
        %4812 = vmatpush1.bf16.msra.mxu0 %v3942
        %4813 = vmatprep.subr.bf16.mxu0 %v3945
        %4814 = vmatpush1.bf16.msra.mxu0 %v3944
        %4815 = vmatprep.subr.bf16.mxu0 %v3947
        %4816 = vmatpush1.bf16.msra.mxu0 %v3946
        %4817 = vmatprep.subr.bf16.mxu0 %v3949
        %4818 = vmatpush1.bf16.msra.mxu0 %v3948
        %4819 = vmatprep.subr.bf16.mxu0 %v3951
        %4820 = vmatpush1.bf16.msra.mxu0 %v3950
        %4821 = vmatprep.mubr.bf16.mxu0 %v2416
        %4822 = vmatmul.mubr.bf16.gmra.mrb[0].mxu0 %v2414
        %v4823 = vpop.f32.mrb[0].mxu0
        %v4824 = vadd.f32 %v4783, %v4823
        %v4825 = vpop.f32.mrb[0].mxu0
        %v4826 = vadd.f32 %v4785, %v4825
        %v4827 = vpop.f32.mrb[0].mxu0
        %v4828 = vpop.f32.mrb[0].mxu0
        %4829 = vdwg.mxu0
        %4830 = vmatprep.subr.bf16.mxu0 %v3953
        %4831 = vmatpush1.bf16.msra.mxu0 %v3952
        %4832 = vmatprep.subr.bf16.mxu0 %v3955
        %4833 = vmatpush1.bf16.msra.mxu0 %v3954
        %4834 = vmatprep.subr.bf16.mxu0 %v3957
        %4835 = vmatpush1.bf16.msra.mxu0 %v3956
        %4836 = vmatprep.subr.bf16.mxu0 %v3959
        %4837 = vmatpush1.bf16.msra.mxu0 %v3958
        %4838 = vmatprep.subr.bf16.mxu0 %v3961
        %4839 = vmatpush1.bf16.msra.mxu0 %v3960
        %4840 = vmatprep.subr.bf16.mxu0 %v3963
        %4841 = vmatpush1.bf16.msra.mxu0 %v3962
        %4842 = vmatprep.subr.bf16.mxu0 %v3965
        %4843 = vmatpush1.bf16.msra.mxu0 %v3964
        %4844 = vmatprep.subr.bf16.mxu0 %v3967
        %4845 = vmatpush1.bf16.msra.mxu0 %v3966
        %4846 = vmatprep.subr.bf16.mxu0 %v3969
        %4847 = vmatpush1.bf16.msra.mxu0 %v3968
        %4848 = vmatprep.subr.bf16.mxu0 %v3971
        %4849 = vmatpush1.bf16.msra.mxu0 %v3970
        %4850 = vmatprep.subr.bf16.mxu0 %v3973
        %4851 = vmatpush1.bf16.msra.mxu0 %v3972
        %4852 = vmatprep.subr.bf16.mxu0 %v3975
        %4853 = vmatpush1.bf16.msra.mxu0 %v3974
        %4854 = vmatprep.subr.bf16.mxu0 %v3977
        %4855 = vmatpush1.bf16.msra.mxu0 %v3976
        %4856 = vmatprep.subr.bf16.mxu0 %v3979
        %4857 = vmatpush1.bf16.msra.mxu0 %v3978
        %4858 = vmatprep.subr.bf16.mxu0 %v3981
        %4859 = vmatpush1.bf16.msra.mxu0 %v3980
        %4860 = vmatprep.subr.bf16.mxu0 %v3983
        %4861 = vmatpush1.bf16.msra.mxu0 %v3982
        %4862 = vmatprep.mubr.bf16.mxu0 %v2413
        %4863 = vmatmul.mubr.bf16.gmra.mrb[0].mxu0 %v2399
        %v4864 = vpop.f32.mrb[0].mxu0
        %v4865 = vadd.f32 %v4824, %v4864
        %v4866 = vpop.f32.mrb[0].mxu0
        %v4867 = vadd.f32 %v4826, %v4866
        %v4868 = vpop.f32.mrb[0].mxu0
        %v4869 = vpop.f32.mrb[0].mxu0
        %4870 = vdwg.mxu0
        %4871 = vmatprep.subr.bf16.mxu0 %v3985
        %4872 = vmatpush1.bf16.msra.mxu0 %v3984
        %4873 = vmatprep.subr.bf16.mxu0 %v3987
        %4874 = vmatpush1.bf16.msra.mxu0 %v3986
        %4875 = vmatprep.subr.bf16.mxu0 %v3989
        %4876 = vmatpush1.bf16.msra.mxu0 %v3988
        %4877 = vmatprep.subr.bf16.mxu0 %v3991
        %4878 = vmatpush1.bf16.msra.mxu0 %v3990
        %4879 = vmatprep.subr.bf16.mxu0 %v3993
        %4880 = vmatpush1.bf16.msra.mxu0 %v3992
        %4881 = vmatprep.subr.bf16.mxu0 %v3995
        %4882 = vmatpush1.bf16.msra.mxu0 %v3994
        %4883 = vmatprep.subr.bf16.mxu0 %v3997
        %4884 = vmatpush1.bf16.msra.mxu0 %v3996
        %4885 = vmatprep.subr.bf16.mxu0 %v3999
        %4886 = vmatpush1.bf16.msra.mxu0 %v3998
        %4887 = vmatprep.subr.bf16.mxu0 %v4001
        %4888 = vmatpush1.bf16.msra.mxu0 %v4000
        %4889 = vmatprep.subr.bf16.mxu0 %v4003
        %4890 = vmatpush1.bf16.msra.mxu0 %v4002
        %4891 = vmatprep.subr.bf16.mxu0 %v4005
        %4892 = vmatpush1.bf16.msra.mxu0 %v4004
        %4893 = vmatprep.subr.bf16.mxu0 %v4007
        %4894 = vmatpush1.bf16.msra.mxu0 %v4006
        %4895 = vmatprep.subr.bf16.mxu0 %v4009
        %4896 = vmatpush1.bf16.msra.mxu0 %v4008
        %4897 = vmatprep.subr.bf16.mxu0 %v4011
        %4898 = vmatpush1.bf16.msra.mxu0 %v4010
        %4899 = vmatprep.subr.bf16.mxu0 %v4013
        %4900 = vmatpush1.bf16.msra.mxu0 %v4012
        %4901 = vmatprep.subr.bf16.mxu0 %v4015
        %4902 = vmatpush1.bf16.msra.mxu0 %v4014
        %4903 = vmatprep.mubr.bf16.mxu0 %v2417
        %4904 = vmatmul.mubr.bf16.gmra.mrb[0].mxu0 %v2415
        %v4905 = vpop.f32.mrb[0].mxu0
        %v4906 = vadd.f32 %v4865, %v4905
        %v4907 = vpop.f32.mrb[0].mxu0
        %v4908 = vadd.f32 %v4867, %v4907
        %v4909 = vpop.f32.mrb[0].mxu0
        %v4910 = vpop.f32.mrb[0].mxu0
        %4911 = vdwg.mxu0
        %4912 = vmatprep.subr.bf16.mxu0 %v4017
        %4913 = vmatpush1.bf16.msra.mxu0 %v4016
        %4914 = vmatprep.subr.bf16.mxu0 %v4019
        %4915 = vmatpush1.bf16.msra.mxu0 %v4018
        %4916 = vmatprep.subr.bf16.mxu0 %v4021
        %4917 = vmatpush1.bf16.msra.mxu0 %v4020
        %4918 = vmatprep.subr.bf16.mxu0 %v4023
        %4919 = vmatpush1.bf16.msra.mxu0 %v4022
        %4920 = vmatprep.subr.bf16.mxu0 0
        %4921 = vmatpush1.bf16.msra.mxu0 0
        %4922 = vmatprep.subr.bf16.mxu0 0
        %4923 = vmatpush1.bf16.msra.mxu0 0
        %4924 = vmatprep.subr.bf16.mxu0 0
        %4925 = vmatpush1.bf16.msra.mxu0 0
        %4926 = vmatprep.subr.bf16.mxu0 0
        %4927 = vmatpush1.bf16.msra.mxu0 0
        %4928 = vmatprep.subr.bf16.mxu0 0
        %4929 = vmatpush1.bf16.msra.mxu0 0
        %4930 = vmatprep.subr.bf16.mxu0 0
        %4931 = vmatpush1.bf16.msra.mxu0 0
        %4932 = vmatprep.subr.bf16.mxu0 0
        %4933 = vmatpush1.bf16.msra.mxu0 0
        %4934 = vmatprep.subr.bf16.mxu0 0
        %4935 = vmatpush1.bf16.msra.mxu0 0
        %4936 = vmatprep.subr.bf16.mxu0 0
        %4937 = vmatpush1.bf16.msra.mxu0 0
        %4938 = vmatprep.subr.bf16.mxu0 0
        %4939 = vmatpush1.bf16.msra.mxu0 0
        %4940 = vmatprep.subr.bf16.mxu0 0
        %4941 = vmatpush1.bf16.msra.mxu0 0
        %4942 = vmatprep.subr.bf16.mxu0 0
        %4943 = vmatpush1.bf16.msra.mxu0 0
        %4944 = vmatprep.mubr.bf16.mxu0 0
        %4945 = vmatmul.mubr.bf16.gmra.mrb[0].mxu0 %v4418
        %v4946 = vpop.f32.mrb[0].mxu0
        %v4947 = vadd.f32 %v4906, %v4946
        %v4948 = vpop.f32.mrb[0].mxu0
        %v4949 = vadd.f32 %v4908, %v4948
        %v4950 = vpop.f32.mrb[0].mxu0
        %v4951 = vpop.f32.mrb[0].mxu0
        %4952 = vdwg.mxu0
        %v4953 = vmax.f32 %v4947, 0.0
        %v4954 = vmax.f32 %v4949, 0.0
        %v4955 = vpack.c.bf16 %v4953, %v4953
        %v4956 = vpack.c.bf16 %v4954, %v4954
        %v4957 = vld [vmem:[#allocation3] sm:$0x3]
        %v4958 = vld [vmem:[%s1850] sm:$0xf]
        %v4959 = vld [vmem:[%s1850 + $0x4] sm:$0xf]
        %v4960 = vld [vmem:[%s1850 + $0x8] sm:$0xf]
        %v4961 = vld [vmem:[%s1850 + $0xc] sm:$0xf]
        %v4962 = vld [vmem:[%s1850 + $0x10] sm:$0xf]
        %v4963 = vld [vmem:[%s1850 + $0x14] sm:$0xf]
        %v4964 = vld [vmem:[%s1850 + $0x18] sm:$0xf]
        %v4965 = vld [vmem:[%s1850 + $0x1c] sm:$0xf]
        %v4966 = vld [vmem:[%s1850 + $0x20] sm:$0xf]
        %v4967 = vld [vmem:[%s1850 + $0x24] sm:$0xf]
        %v4968 = vld [vmem:[%s1850 + $0x28] sm:$0xf]
        %v4969 = vld [vmem:[%s1850 + $0x2c] sm:$0xf]
        %v4970 = vld [vmem:[%s1850 + $0x30] sm:$0xf]
        %v4971 = vld [vmem:[%s1850 + $0x34] sm:$0xf]
        %v4972 = vld [vmem:[%s1850 + $0x38] sm:$0xf]
        %v4973 = vld [vmem:[%s1850 + $0x3c] sm:$0xf]
        %v4974 = vld [vmem:[%s1850 + $0x40] sm:$0xf]
        %v4975 = vld [vmem:[%s1850 + $0x44] sm:$0xf]
        %v4976 = vld [vmem:[%s1850 + $0x48] sm:$0xf]
        %v4977 = vld [vmem:[%s1850 + $0x4c] sm:$0xf]
        %v4978 = vld [vmem:[%s1850 + $0x50] sm:$0xf]
        %v4979 = vld [vmem:[%s1850 + $0x54] sm:$0xf]
        %v4980 = vld [vmem:[%s1850 + $0x58] sm:$0xf]
        %v4981 = vld [vmem:[%s1850 + $0x5c] sm:$0xf]
        %v4982 = vld [vmem:[%s1850 + $0x60] sm:$0xf]
        %v4983 = vld [vmem:[%s1850 + $0x64] sm:$0xf]
        %v4984 = vld [vmem:[%s1850 + $0x68] sm:$0xf]
        %v4985 = vld [vmem:[%s1850 + $0x6c] sm:$0xf]
        %v4986 = vld [vmem:[%s1850 + $0x70] sm:$0xf]
        %v4987 = vld [vmem:[%s1850 + $0x74] sm:$0xf]
        %v4988 = vld [vmem:[%s1850 + $0x78] sm:$0xf]
        %v4989 = vld [vmem:[%s1850 + $0x7c] sm:$0xf]
        %v5022 = vunpack.c.l.b16 %v4958
        %v5023 = vunpack.c.l.b16 %v4959
        %v5024 = vunpack.c.l.b16 %v4960
        %v5025 = vunpack.c.l.b16 %v4961
        %v5026 = vunpack.c.l.b16 %v4962
        %v5027 = vunpack.c.l.b16 %v4963
        %v5028 = vunpack.c.l.b16 %v4964
        %v5029 = vunpack.c.l.b16 %v4965
        %v5030 = vunpack.c.l.b16 %v4966
        %v5031 = vunpack.c.l.b16 %v4967
        %v5032 = vunpack.c.l.b16 %v4968
        %v5033 = vunpack.c.l.b16 %v4969
        %v5034 = vunpack.c.l.b16 %v4970
        %v5035 = vunpack.c.l.b16 %v4971
        %v5036 = vunpack.c.l.b16 %v4972
        %v5037 = vunpack.c.l.b16 %v4973
        %v5038 = vunpack.c.l.b16 %v4974
        %v5039 = vunpack.c.l.b16 %v4975
        %v5040 = vunpack.c.l.b16 %v4976
        %v5041 = vunpack.c.l.b16 %v4977
        %v5042 = vunpack.c.l.b16 %v4978
        %v5043 = vunpack.c.l.b16 %v4979
        %v5044 = vunpack.c.l.b16 %v4980
        %v5045 = vunpack.c.l.b16 %v4981
        %v5046 = vunpack.c.l.b16 %v4982
        %v5047 = vunpack.c.l.b16 %v4983
        %v5048 = vunpack.c.l.b16 %v4984
        %v5049 = vunpack.c.l.b16 %v4985
        %v5050 = vunpack.c.l.b16 %v4986
        %v5051 = vunpack.c.l.b16 %v4987
        %v5052 = vunpack.c.l.b16 %v4988
        %v5053 = vunpack.c.l.b16 %v4989
        %v5054 = vpack.c.b16 %v5023, %v5022
        %v5055 = vpack.c.b16 %v5025, %v5024
        %v5056 = vpack.c.b16 %v5027, %v5026
        %v5057 = vpack.c.b16 %v5029, %v5028
        %v5058 = vpack.c.b16 %v5031, %v5030
        %v5059 = vpack.c.b16 %v5033, %v5032
        %v5060 = vpack.c.b16 %v5035, %v5034
        %v5061 = vpack.c.b16 %v5037, %v5036
        %v5062 = vpack.c.b16 %v5039, %v5038
        %v5063 = vpack.c.b16 %v5041, %v5040
        %v5064 = vpack.c.b16 %v5043, %v5042
        %v5065 = vpack.c.b16 %v5045, %v5044
        %v5066 = vpack.c.b16 %v5047, %v5046
        %v5067 = vpack.c.b16 %v5049, %v5048
        %v5068 = vpack.c.b16 %v5051, %v5050
        %v5069 = vpack.c.b16 %v5053, %v5052
        %5086 = vmatprep.subr.bf16.mxu0 0
        %5087 = vmatpush1.bf16.msra.mxu0 %v5054
        %5088 = vmatprep.subr.bf16.mxu0 0
        %5089 = vmatpush1.bf16.msra.mxu0 %v5055
        %5090 = vmatprep.subr.bf16.mxu0 0
        %5091 = vmatpush1.bf16.msra.mxu0 %v5056
        %5092 = vmatprep.subr.bf16.mxu0 0
        %5093 = vmatpush1.bf16.msra.mxu0 %v5057
        %5094 = vmatprep.subr.bf16.mxu0 0
        %5095 = vmatpush1.bf16.msra.mxu0 %v5058
        %5096 = vmatprep.subr.bf16.mxu0 0
        %5097 = vmatpush1.bf16.msra.mxu0 %v5059
        %5098 = vmatprep.subr.bf16.mxu0 0
        %5099 = vmatpush1.bf16.msra.mxu0 %v5060
        %5100 = vmatprep.subr.bf16.mxu0 0
        %5101 = vmatpush1.bf16.msra.mxu0 %v5061
        %5102 = vmatprep.subr.bf16.mxu0 0
        %5103 = vmatpush1.bf16.msra.mxu0 %v5062
        %5104 = vmatprep.subr.bf16.mxu0 0
        %5105 = vmatpush1.bf16.msra.mxu0 %v5063
        %5106 = vmatprep.subr.bf16.mxu0 0
        %5107 = vmatpush1.bf16.msra.mxu0 %v5064
        %5108 = vmatprep.subr.bf16.mxu0 0
        %5109 = vmatpush1.bf16.msra.mxu0 %v5065
        %5110 = vmatprep.subr.bf16.mxu0 0
        %5111 = vmatpush1.bf16.msra.mxu0 %v5066
        %5112 = vmatprep.subr.bf16.mxu0 0
        %5113 = vmatpush1.bf16.msra.mxu0 %v5067
        %5114 = vmatprep.subr.bf16.mxu0 0
        %5115 = vmatpush1.bf16.msra.mxu0 %v5068
        %5116 = vmatprep.subr.bf16.mxu0 0
        %5117 = vmatpush1.bf16.msra.mxu0 %v5069
        %5118 = vmatprep.mubr.bf16.mxu0 %v4956
        %5119 = vmatmul.mubr.bf16.gmra.mrb[0].mxu0 %v4955
        %v5120 = vpop.f32.mrb[0].mxu0
        %v5121 = vadd.f32 0.0, %v5120
        %v5122 = vpop.f32.mrb[0].mxu0
        %v5123 = vpop.f32.mrb[0].mxu0
        %v5124 = vpop.f32.mrb[0].mxu0
        %5125 = vdwg.mxu0
        %v5126 = vadd.f32 %v4957, %v5121
        %vm5127 = vcmask 140288
        %5128 = vst.msk [vmem:[#allocation3] sm:$0x3] %vm5127, %v5126
        %p5129 = scmp.eq.s32.totalorder %s17, 1
        // Predicated region
        $region83: #{_lambda_.7} parent=73 // pred_check
          %p5130 = pneg %p5129
        $region84: #{_lambda_.7} parent=73 // pred_check_branch
          %5132 = sbr.rel (%p5130) target = $region86
        $region85: #{_lambda_.7} parent=73 // pred_region
          %v5133 = vld [vmem:[#allocation3] sm:$0x3]
          %v5134 = vld [vmem:[%s4] sm:$0x1]
          %v5136 = vlaneseq
          %v5137 = vshrl.u32 %v5136, 7
          %v5138 = vsub.s32 0, %v5137
          %v5139 = vrot.slane %v5134, %v5138
          %v5141 = vadd.f32 %v5133, %v5139
          %5142 = vst.msk [vmem:[#allocation3] sm:$0x3] %vm5127, %v5141
        $region86: #{_lambda_.7} parent=73 // pred_fallthru
          _
        // Predicated region
        $region87: #{_lambda_.7} parent=73 // pred_check
          %p5143 = pneg %p150
        $region88: #{_lambda_.7} parent=73 // pred_check_branch
          %5145 = sbr.rel (%p5143) target = $region90
        $region89: #{_lambda_.7} parent=73 // pred_region
          %s5147 = ssub.s32 32, 32
          %5148 = vsyncadd [#allocation4], %s5147
          %s5150 = sshll.u32 [#allocation3], 4
          %s5151 = int_to_ptr.vmem [resolvable:$true] %s5150
          %5153 = dma.vmem_to_hbm [thread:$0]  %s5151, 32, %s5, [#allocation4]
        $region90: #{_lambda_.7} parent=73 // pred_fallthru
          _
        // Predicated region
        $region91: #{_lambda_.7} parent=73 // pred_check
          %p5154 = pneg %p150
        $region92: #{_lambda_.7} parent=73 // pred_check_branch
          %5156 = sbr.rel (%p5154) target = $region94
        $region93: #{_lambda_.7} parent=73 // pred_region
          %5157 = dma.done [#allocation4], 32
        $region94: #{_lambda_.7} parent=73 // pred_fallthru
          _
      $region74: #{_lambda_.7} parent=5 // pred_fallthru
        _
      %p5158 = scmp.le.s32.totalorder 2, %s12
      // Predicated region
      $region95: #{_lambda_.7} parent=5 // pred_check
        %p5159 = pneg %p5158
      $region96: #{_lambda_.7} parent=5 // pred_check_branch
        %5161 = sbr.rel (%p5159) target = $region98
      $region97: #{_lambda_.7} parent=5 // pred_region
        %s5162 = ssub.s32 %s12, 2
      $region98: #{_lambda_.7} parent=5 // pred_fallthru
        _
    $region6: #{_lambda_.7} parent=1 // loop_footer
      %s16 = sadd.s32 1, %s12
    $region7: #{_lambda_.7} parent=1 // loop_footer_branch
      %11 = sbr.rel target = $region3
    $region8: #{_lambda_.7} parent=1 // loop_exit
      _
    %5163 = vsyncpa [#allocation4], 1
    %s5164 = scalar_lea.sflag [#allocation4], 1
    %5165 = vsyncpa %s5164, 1

</llo_original>
